<compile_context>
chip_gen: v7x
topology: tpu7x:2x2x1
jax: 0.10.0
libtpu: 0.0.40
codegen_flags: <defaults>
</compile_context>

<pallas_src>
import jax
import jax.numpy as jnp
from jax import lax
from jax.experimental import pallas as pl
from jax.experimental.pallas import tpu as pltpu

EPS = 1e-5


def _fused_bn_add_relu_conv1x1_kernel(x_bn_ref, x_res_ref, gamma_ref, beta_ref,
                                      w_ref, o_ref):
    """out = conv1x1(relu(batchnorm(x_bn) + x_res)), channels-last layout.

    x_bn_ref, x_res_ref : (M, Cin) float32, M = N*H*W
    gamma_ref, beta_ref : (1, Cin)  float32 (lane-major)
    w_ref               : (Cin, Cout) float32
    o_ref               : (M, Cout) float32
    """
    x = x_bn_ref[...]                                        # (M, Cin)
    inv_m = 1.0 / x.shape[0]
    # Two-pass batch statistics per channel (channel = lane axis).
    mean = jnp.sum(x, axis=0, keepdims=True) * inv_m         # (1, Cin)
    centered = x - mean
    var = jnp.sum(centered * centered, axis=0, keepdims=True) * inv_m
    # Fold BN affine into per-channel scale / bias: bn(x) = x*scale + bias.
    scale = gamma_ref[...] * lax.rsqrt(var + EPS)            # (1, Cin)
    bias = beta_ref[...] - mean * scale                      # (1, Cin)
    y = jnp.maximum(x * scale + bias + x_res_ref[...], 0.0)  # (M, Cin)
    # 1x1 conv (no bias) as an MXU matmul: (M, Cin) @ (Cin, Cout).
    o_ref[...] = lax.dot_general(
        y, w_ref[...],
        dimension_numbers=(((1,), (0,)), ((), ())),
        precision=lax.Precision.HIGHEST,
        preferred_element_type=jnp.float32)


def fused_forward(x178_nchw, x171_nchw, gamma, beta, conv_weight):
    """Equivalent of M.forward(x178, x171).

    x178_nchw, x171_nchw : (N, Cin, H, W) float32
    gamma, beta          : (Cin,) float32
    conv_weight          : (Cout, Cin, 1, 1) float32 (PyTorch conv layout)
    returns              : (N, Cout, H, W) float32
    """
    # TODO(synk): BatchNorm2d running_mean/running_var momentum update is not
    # emitted; this is a pure forward fusion using batch statistics.
    n, c, h, w = x178_nchw.shape
    c_out = conv_weight.shape[0]
    m = n * h * w

    # Channels-last glue: one small (~78 KB) XLA transpose per activation.
    x_bn = jnp.transpose(x178_nchw, (0, 2, 3, 1)).reshape(m, c)
    x_res = jnp.transpose(x171_nchw, (0, 2, 3, 1)).reshape(m, c)
    w_t = conv_weight.reshape(c_out, c).T          # (Cin, Cout), parameter
    gamma2 = gamma.reshape(1, c)                   # lane-major
    beta2 = beta.reshape(1, c)

    out_mc = pl.pallas_call(
        _fused_bn_add_relu_conv1x1_kernel,
        out_shape=jax.ShapeDtypeStruct((m, c_out), jnp.float32),
        grid=(1,),
        in_specs=[
            pl.BlockSpec((m, c), lambda i: (0, 0)),        # x_bn
            pl.BlockSpec((m, c), lambda i: (0, 0)),        # x_res
            pl.BlockSpec((1, c), lambda i: (0, 0)),        # gamma
            pl.BlockSpec((1, c), lambda i: (0, 0)),        # beta
            pl.BlockSpec((c, c_out), lambda i: (0, 0)),    # weight (Cin, Cout)
        ],
        out_specs=pl.BlockSpec((m, c_out), lambda i: (0, 0)),
        compiler_params=pltpu.CompilerParams(
            dimension_semantics=("arbitrary",)),
    )(x_bn, x_res, gamma2, beta2, w_t)

    # (M, Cout) -> (N, Cout, H, W).
    return jnp.transpose(out_mc.reshape(n, h, w, c_out), (0, 3, 1, 2))


def _reference_forward(x178, x171, gamma, beta, conv_weight):
    """Pure-JAX reference of the PyTorch module (training-mode BN)."""
    mean = jnp.mean(x178, axis=(0, 2, 3), keepdims=True)
    var = jnp.mean((x178 - mean) ** 2, axis=(0, 2, 3), keepdims=True)
    xn = (x178 - mean) * lax.rsqrt(var + EPS)
    y = xn * gamma.reshape(1, -1, 1, 1) + beta.reshape(1, -1, 1, 1)
    y = jnp.maximum(y + x171, 0.0)
    w2 = conv_weight.reshape(conv_weight.shape[0], conv_weight.shape[1])
    return jnp.einsum('nchw,oc->nohw', y, w2)


if __name__ == "__main__":
    key = jax.random.PRNGKey(0)
    k1, k2, k3 = jax.random.split(key, 3)

    N, C, H, W = 1, 400, 7, 7          # shapes implied by the module
    C_OUT = 400

    x178 = jax.random.normal(k1, (N, C, H, W), dtype=jnp.float32)
    x171 = jax.random.normal(k2, (N, C, H, W), dtype=jnp.float32)

    # Deterministic parameter init (PyTorch BN defaults: gamma=1, beta=0).
    gamma = jnp.ones((C,), dtype=jnp.float32)
    beta = jnp.zeros((C,), dtype=jnp.float32)
    conv_weight = (jax.random.normal(k3, (C_OUT, C, 1, 1), dtype=jnp.float32)
                   * (1.0 / jnp.sqrt(C)))

    fused = jax.jit(fused_forward)
    out = fused(x178, x171, gamma, beta, conv_weight)
    out = jax.block_until_ready(out)

    ref = _reference_forward(x178, x171, gamma, beta, conv_weight)
    assert out.shape == (N, C_OUT, H, W)
    assert jnp.allclose(out, ref, atol=1e-3, rtol=1e-3)

    print("KERNEL_OK")
</pallas_src>

<mosaic_0001>
module attributes {stable_mosaic.version = 11 : i64} {
  func.func @_fused_bn_add_relu_conv1x1_kernel(%arg0: i32, %arg1: memref<49x400xf32, #tpu.memory_space<vmem>>, %arg2: memref<49x400xf32, #tpu.memory_space<vmem>>, %arg3: memref<1x400xf32, #tpu.memory_space<vmem>>, %arg4: memref<1x400xf32, #tpu.memory_space<vmem>>, %arg5: memref<400x400xf32, #tpu.memory_space<vmem>>, %arg6: memref<49x400xf32, #tpu.memory_space<vmem>>) attributes {dimension_semantics = [#tpu.dimension_semantics<arbitrary>], iteration_bounds = array<i64: 1>, scalar_prefetch = 0 : i64, scratch_operands = 0 : i64, tpu.core_type = #tpu.core_type<tc>, window_params = [{pipeline_mode = #tpu.pipeline_mode<synchronous>, transform_indices = @transform_0, window_bounds = array<i64: 49, 400>}, {pipeline_mode = #tpu.pipeline_mode<synchronous>, transform_indices = @transform_1, window_bounds = array<i64: 49, 400>}, {pipeline_mode = #tpu.pipeline_mode<synchronous>, transform_indices = @transform_2, window_bounds = array<i64: 1, 400>}, {pipeline_mode = #tpu.pipeline_mode<synchronous>, transform_indices = @transform_3, window_bounds = array<i64: 1, 400>}, {pipeline_mode = #tpu.pipeline_mode<synchronous>, transform_indices = @transform_4, window_bounds = array<i64: 400, 400>}, {pipeline_mode = #tpu.pipeline_mode<synchronous>, transform_indices = @transform_5, window_bounds = array<i64: 49, 400>}]} {
    %c0 = arith.constant 0 : index
    %c0_0 = arith.constant 0 : index
    %0 = vector.load %arg1[%c0, %c0_0] : memref<49x400xf32, #tpu.memory_space<vmem>>, vector<49x400xf32>
    %cst = arith.constant dense<0.000000e+00> : vector<400xf32>
    %1 = vector.multi_reduction <add>, %0, %cst [0] : vector<49x400xf32> to vector<400xf32>
    %2 = vector.shape_cast %1 : vector<400xf32> to vector<1x400xf32>
    %cst_1 = arith.constant 0.0204081628 : f32
    %3 = vector.broadcast %cst_1 : f32 to vector<1x400xf32>
    %4 = arith.mulf %2, %3 : vector<1x400xf32>
    %5 = vector.broadcast %4 : vector<1x400xf32> to vector<49x400xf32>
    %6 = arith.subf %0, %5 : vector<49x400xf32>
    %7 = arith.mulf %6, %6 : vector<49x400xf32>
    %cst_2 = arith.constant dense<0.000000e+00> : vector<400xf32>
    %8 = vector.multi_reduction <add>, %7, %cst_2 [0] : vector<49x400xf32> to vector<400xf32>
    %9 = vector.shape_cast %8 : vector<400xf32> to vector<1x400xf32>
    %cst_3 = arith.constant 0.0204081628 : f32
    %10 = vector.broadcast %cst_3 : f32 to vector<1x400xf32>
    %11 = arith.mulf %9, %10 : vector<1x400xf32>
    %c0_4 = arith.constant 0 : index
    %c0_5 = arith.constant 0 : index
    %12 = vector.load %arg3[%c0_4, %c0_5] : memref<1x400xf32, #tpu.memory_space<vmem>>, vector<1x400xf32>
    %cst_6 = arith.constant 9.99999974E-6 : f32
    %13 = vector.broadcast %cst_6 : f32 to vector<1x400xf32>
    %14 = arith.addf %11, %13 : vector<1x400xf32>
    %15 = math.rsqrt %14 : vector<1x400xf32>
    %16 = arith.mulf %12, %15 : vector<1x400xf32>
    %c0_7 = arith.constant 0 : index
    %c0_8 = arith.constant 0 : index
    %17 = vector.load %arg4[%c0_7, %c0_8] : memref<1x400xf32, #tpu.memory_space<vmem>>, vector<1x400xf32>
    %18 = arith.mulf %4, %16 : vector<1x400xf32>
    %19 = arith.subf %17, %18 : vector<1x400xf32>
    %20 = vector.broadcast %16 : vector<1x400xf32> to vector<49x400xf32>
    %21 = arith.mulf %0, %20 : vector<49x400xf32>
    %22 = vector.broadcast %19 : vector<1x400xf32> to vector<49x400xf32>
    %23 = arith.addf %21, %22 : vector<49x400xf32>
    %c0_9 = arith.constant 0 : index
    %c0_10 = arith.constant 0 : index
    %24 = vector.load %arg2[%c0_9, %c0_10] : memref<49x400xf32, #tpu.memory_space<vmem>>, vector<49x400xf32>
    %25 = arith.addf %23, %24 : vector<49x400xf32>
    %cst_11 = arith.constant 0.000000e+00 : f32
    %26 = vector.broadcast %cst_11 : f32 to vector<49x400xf32>
    %27 = arith.maximumf %25, %26 : vector<49x400xf32>
    %c0_12 = arith.constant 0 : index
    %c0_13 = arith.constant 0 : index
    %28 = vector.load %arg5[%c0_12, %c0_13] : memref<400x400xf32, #tpu.memory_space<vmem>>, vector<400x400xf32>
    %cst_14 = arith.constant dense<0.000000e+00> : vector<49x400xf32>
    %29 = tpu.matmul %27, %28, %cst_14 {dimension_numbers = #tpu.dot_dimension_numbers<[1], [0], [0], [1], [0, 0, 1, 1], [], []>, precision = #tpu.contract_precision<fp32>} : vector<49x400xf32>, vector<400x400xf32>, vector<49x400xf32> -> vector<49x400xf32>
    %c0_15 = arith.constant 0 : index
    %c0_16 = arith.constant 0 : index
    %30 = vector.load %arg6[%c0_15, %c0_16] : memref<49x400xf32, #tpu.memory_space<vmem>>, vector<49x400xf32>
    tpu.vector_store %arg6[%c0_15, %c0_16], %29 {strides = array<i32>} : memref<49x400xf32, #tpu.memory_space<vmem>>, vector<49x400xf32>,
    return
  }
  func.func @transform_0(%arg0: i32) -> (i32, i32) {
    %c0_i32 = arith.constant 0 : i32
    %c0_i32_0 = arith.constant 0 : i32
    %c0_i32_1 = arith.constant 0 : i32
    return %c0_i32, %c0_i32_0 : i32, i32
  }
  func.func @transform_1(%arg0: i32) -> (i32, i32) {
    %c0_i32 = arith.constant 0 : i32
    %c0_i32_0 = arith.constant 0 : i32
    %c0_i32_1 = arith.constant 0 : i32
    return %c0_i32, %c0_i32_0 : i32, i32
  }
  func.func @transform_2(%arg0: i32) -> (i32, i32) {
    %c0_i32 = arith.constant 0 : i32
    %c0_i32_0 = arith.constant 0 : i32
    %c0_i32_1 = arith.constant 0 : i32
    return %c0_i32, %c0_i32_0 : i32, i32
  }
  func.func @transform_3(%arg0: i32) -> (i32, i32) {
    %c0_i32 = arith.constant 0 : i32
    %c0_i32_0 = arith.constant 0 : i32
    %c0_i32_1 = arith.constant 0 : i32
    return %c0_i32, %c0_i32_0 : i32, i32
  }
  func.func @transform_4(%arg0: i32) -> (i32, i32) {
    %c0_i32 = arith.constant 0 : i32
    %c0_i32_0 = arith.constant 0 : i32
    %c0_i32_1 = arith.constant 0 : i32
    return %c0_i32, %c0_i32_0 : i32, i32
  }
  func.func @transform_5(%arg0: i32) -> (i32, i32) {
    %c0_i32 = arith.constant 0 : i32
    %c0_i32_0 = arith.constant 0 : i32
    %c0_i32_1 = arith.constant 0 : i32
    return %c0_i32, %c0_i32_0 : i32, i32
  }
}

</mosaic_0001>

<llo_original>
// kernel: fused_forward.1
$region0: #{fused_forward.1}
  #allocation0 [shape = 'u32[]', space=smem, size = 0x4, offset = 0x4, fixed_abs, tag = 'smem constant byte address 0x4 - core index']
  #allocation1 [shape = 'u32[144,128]{1,0:T(1,128)}', space=vmem, size = 0x12000, scoped, tag = 'internal scratch']
  %s0 = inlined_call_operand.vmem [shape: f32[49,400], index: 0, kind: input, shape index: {}]
  %s1 = inlined_call_operand.vmem [shape: f32[49,400], index: 1, kind: input, shape index: {}]
  %s2 = inlined_call_operand.vmem [shape: f32[1,400], index: 2, kind: input, shape index: {}]
  %s3 = inlined_call_operand.vmem [shape: f32[1,400], index: 3, kind: input, shape index: {}]
  %s4 = inlined_call_operand.vmem [shape: f32[400,400], index: 4, kind: input, shape index: {}]
  %s5 = inlined_call_operand.vmem [shape: f32[49,400], index: 5, kind: output, shape index: {}]
  %s6 = sld [smem:[#allocation0]]
  $region30: #{fused_forward.1} parent=0
    _
  %s8 = ssub.s32 1, %s6
  %s9 = scalar_select 0, %s8, %s6
  // Predicated region
  $region2: #{fused_forward.1} parent=0 // pred_check
    _
  $region3: #{fused_forward.1} parent=0 // pred_check_branch
    %11 = sbr.rel (0) target = $region5
  $region4: #{fused_forward.1} parent=0 // pred_region
    _
  $region5: #{fused_forward.1} parent=0 // pred_fallthru
    _
  // Predicated region
  $region6: #{fused_forward.1} parent=0 // pred_check
    _
  $region7: #{fused_forward.1} parent=0 // pred_check_branch
    %13 = sbr.rel (0) target = $region9
  $region8: #{fused_forward.1} parent=0 // pred_region
    _
  $region9: #{fused_forward.1} parent=0 // pred_fallthru
    _
  // Predicated region
  $region10: #{fused_forward.1} parent=0 // pred_check
    _
  $region11: #{fused_forward.1} parent=0 // pred_check_branch
    %15 = sbr.rel (0) target = $region13
  $region12: #{fused_forward.1} parent=0 // pred_region
    _
  $region13: #{fused_forward.1} parent=0 // pred_fallthru
    _
  // Predicated region
  $region14: #{fused_forward.1} parent=0 // pred_check
    _
  $region15: #{fused_forward.1} parent=0 // pred_check_branch
    %17 = sbr.rel (0) target = $region17
  $region16: #{fused_forward.1} parent=0 // pred_region
    _
  $region17: #{fused_forward.1} parent=0 // pred_fallthru
    _
  // Predicated region
  $region18: #{fused_forward.1} parent=0 // pred_check
    _
  $region19: #{fused_forward.1} parent=0 // pred_check_branch
    %19 = sbr.rel (0) target = $region21
  $region20: #{fused_forward.1} parent=0 // pred_region
    _
  $region21: #{fused_forward.1} parent=0 // pred_fallthru
    _
  %v20 = vld [vmem:[%s0] sm:$0xff]
  %v21 = vld [vmem:[%s0 + $0x8] sm:$0xff]
  %v22 = vld [vmem:[%s0 + $0x10] sm:$0xff]
  %v23 = vld [vmem:[%s0 + $0x18] sm:$0xff]
  %v24 = vld [vmem:[%s0 + $0x20] sm:$0xff]
  %v25 = vld [vmem:[%s0 + $0x28] sm:$0xff]
  %v26 = vld [vmem:[%s0 + $0x30] sm:$0xff]
  %v27 = vld [vmem:[%s0 + $0x38] sm:$0xff]
  %v28 = vld [vmem:[%s0 + $0x40] sm:$0xff]
  %v29 = vld [vmem:[%s0 + $0x48] sm:$0xff]
  %v30 = vld [vmem:[%s0 + $0x50] sm:$0xff]
  %v31 = vld [vmem:[%s0 + $0x58] sm:$0xff]
  %v32 = vld [vmem:[%s0 + $0x60] sm:$0xff]
  %v33 = vld [vmem:[%s0 + $0x68] sm:$0xff]
  %v34 = vld [vmem:[%s0 + $0x70] sm:$0xff]
  %v35 = vld [vmem:[%s0 + $0x78] sm:$0xff]
  %v36 = vld [vmem:[%s0 + $0x80] sm:$0xff]
  %v37 = vld [vmem:[%s0 + $0x88] sm:$0xff]
  %v38 = vld [vmem:[%s0 + $0x90] sm:$0xff]
  %v39 = vld [vmem:[%s0 + $0x98] sm:$0xff]
  %v40 = vld [vmem:[%s0 + $0xa0] sm:$0xff]
  %v41 = vld [vmem:[%s0 + $0xa8] sm:$0xff]
  %v42 = vld [vmem:[%s0 + $0xb0] sm:$0xff]
  %v43 = vld [vmem:[%s0 + $0xb8] sm:$0xff]
  %v44 = vld [vmem:[%s0 + $0xc0] sm:$0x1]
  %v45 = vld [vmem:[%s0 + $0xc8] sm:$0x1]
  %v46 = vld [vmem:[%s0 + $0xd0] sm:$0x1]
  %v47 = vld [vmem:[%s0 + $0xd8] sm:$0x1]
  %v48 = vadd.f32 %v20, %v24
  %v49 = vadd.f32 %v48, %v28
  %v50 = vadd.f32 %v49, %v32
  %v51 = vadd.f32 %v50, %v36
  %v52 = vadd.f32 %v51, %v40
  %vm53 = vcmask 1040384
  %v54 = vsel %vm53, %v44, 0.0
  %v55 = vadd.f32 %v52, %v54
  %v56 = vrot.slane %v55, 4
  %v57 = vadd.f32 %v55, %v56
  %v58 = vrot.slane %v57, 2
  %v59 = vadd.f32 %v57, %v58
  %v60 = vrot.slane %v59, 1
  %v61 = vadd.f32 %v59, %v60
  %v62 = vadd.f32 %v21, %v25
  %v63 = vadd.f32 %v62, %v29
  %v64 = vadd.f32 %v63, %v33
  %v65 = vadd.f32 %v64, %v37
  %v66 = vadd.f32 %v65, %v41
  %v67 = vsel %vm53, %v45, 0.0
  %v68 = vadd.f32 %v66, %v67
  %v69 = vrot.slane %v68, 4
  %v70 = vadd.f32 %v68, %v69
  %v71 = vrot.slane %v70, 2
  %v72 = vadd.f32 %v70, %v71
  %v73 = vrot.slane %v72, 1
  %v74 = vadd.f32 %v72, %v73
  %v75 = vadd.f32 %v22, %v26
  %v76 = vadd.f32 %v75, %v30
  %v77 = vadd.f32 %v76, %v34
  %v78 = vadd.f32 %v77, %v38
  %v79 = vadd.f32 %v78, %v42
  %v80 = vsel %vm53, %v46, 0.0
  %v81 = vadd.f32 %v79, %v80
  %v82 = vrot.slane %v81, 4
  %v83 = vadd.f32 %v81, %v82
  %v84 = vrot.slane %v83, 2
  %v85 = vadd.f32 %v83, %v84
  %v86 = vrot.slane %v85, 1
  %v87 = vadd.f32 %v85, %v86
  %vm88 = vcmask 130048
  %v89 = vsel %vm88, %v23, 0.0
  %v90 = vsel %vm88, %v27, 0.0
  %v91 = vadd.f32 %v89, %v90
  %v92 = vsel %vm88, %v31, 0.0
  %v93 = vadd.f32 %v91, %v92
  %v94 = vsel %vm88, %v35, 0.0
  %v95 = vadd.f32 %v93, %v94
  %v96 = vsel %vm88, %v39, 0.0
  %v97 = vadd.f32 %v95, %v96
  %v98 = vsel %vm88, %v43, 0.0
  %v99 = vadd.f32 %v97, %v98
  %vm100 = vcmask 122880
  %v101 = vsel %vm100, %v47, 0.0
  %v102 = vadd.f32 %v99, %v101
  %v103 = vrot.slane %v102, 4
  %v104 = vadd.f32 %v102, %v103
  %v105 = vrot.slane %v104, 2
  %v106 = vadd.f32 %v104, %v105
  %v107 = vrot.slane %v106, 1
  %v108 = vadd.f32 %v106, %v107
  %v109 = vmul.f32 %v61, 0.020408163
  %v110 = vmul.f32 %v74, 0.020408163
  %v111 = vmul.f32 %v87, 0.020408163
  %v112 = vmul.f32 %v108, 0.020408163
  %v113 = vsub.f32 %v20, %v109
  %v114 = vsub.f32 %v21, %v110
  %v115 = vsub.f32 %v22, %v111
  %v116 = vsub.f32 %v23, %v112
  %v117 = vsub.f32 %v24, %v109
  %v118 = vsub.f32 %v25, %v110
  %v119 = vsub.f32 %v26, %v111
  %v120 = vsub.f32 %v27, %v112
  %v121 = vsub.f32 %v28, %v109
  %v122 = vsub.f32 %v29, %v110
  %v123 = vsub.f32 %v30, %v111
  %v124 = vsub.f32 %v31, %v112
  %v125 = vsub.f32 %v32, %v109
  %v126 = vsub.f32 %v33, %v110
  %v127 = vsub.f32 %v34, %v111
  %v128 = vsub.f32 %v35, %v112
  %v129 = vsub.f32 %v36, %v109
  %v130 = vsub.f32 %v37, %v110
  %v131 = vsub.f32 %v38, %v111
  %v132 = vsub.f32 %v39, %v112
  %v133 = vsub.f32 %v40, %v109
  %v134 = vsub.f32 %v41, %v110
  %v135 = vsub.f32 %v42, %v111
  %v136 = vsub.f32 %v43, %v112
  %v137 = vsub.f32 %v44, %v109
  %v138 = vsub.f32 %v45, %v110
  %v139 = vsub.f32 %v46, %v111
  %v140 = vsub.f32 %v47, %v112
  %v141 = vmul.f32 %v113, %v113
  %v142 = vmul.f32 %v114, %v114
  %v143 = vmul.f32 %v115, %v115
  %v144 = vmul.f32 %v116, %v116
  %v145 = vmul.f32 %v117, %v117
  %v146 = vmul.f32 %v118, %v118
  %v147 = vmul.f32 %v119, %v119
  %v148 = vmul.f32 %v120, %v120
  %v149 = vmul.f32 %v121, %v121
  %v150 = vmul.f32 %v122, %v122
  %v151 = vmul.f32 %v123, %v123
  %v152 = vmul.f32 %v124, %v124
  %v153 = vmul.f32 %v125, %v125
  %v154 = vmul.f32 %v126, %v126
  %v155 = vmul.f32 %v127, %v127
  %v156 = vmul.f32 %v128, %v128
  %v157 = vmul.f32 %v129, %v129
  %v158 = vmul.f32 %v130, %v130
  %v159 = vmul.f32 %v131, %v131
  %v160 = vmul.f32 %v132, %v132
  %v161 = vmul.f32 %v133, %v133
  %v162 = vmul.f32 %v134, %v134
  %v163 = vmul.f32 %v135, %v135
  %v164 = vmul.f32 %v136, %v136
  %v165 = vmul.f32 %v137, %v137
  %v166 = vmul.f32 %v138, %v138
  %v167 = vmul.f32 %v139, %v139
  %v168 = vmul.f32 %v140, %v140
  %v169 = vadd.f32 %v141, %v145
  %v170 = vadd.f32 %v169, %v149
  %v171 = vadd.f32 %v170, %v153
  %v172 = vadd.f32 %v171, %v157
  %v173 = vadd.f32 %v172, %v161
  %v174 = vsel %vm53, %v165, 0.0
  %v175 = vadd.f32 %v173, %v174
  %v176 = vrot.slane %v175, 4
  %v177 = vadd.f32 %v175, %v176
  %v178 = vrot.slane %v177, 2
  %v179 = vadd.f32 %v177, %v178
  %v180 = vrot.slane %v179, 1
  %v181 = vadd.f32 %v179, %v180
  %v182 = vadd.f32 %v142, %v146
  %v183 = vadd.f32 %v182, %v150
  %v184 = vadd.f32 %v183, %v154
  %v185 = vadd.f32 %v184, %v158
  %v186 = vadd.f32 %v185, %v162
  %v187 = vsel %vm53, %v166, 0.0
  %v188 = vadd.f32 %v186, %v187
  %v189 = vrot.slane %v188, 4
  %v190 = vadd.f32 %v188, %v189
  %v191 = vrot.slane %v190, 2
  %v192 = vadd.f32 %v190, %v191
  %v193 = vrot.slane %v192, 1
  %v194 = vadd.f32 %v192, %v193
  %v195 = vadd.f32 %v143, %v147
  %v196 = vadd.f32 %v195, %v151
  %v197 = vadd.f32 %v196, %v155
  %v198 = vadd.f32 %v197, %v159
  %v199 = vadd.f32 %v198, %v163
  %v200 = vsel %vm53, %v167, 0.0
  %v201 = vadd.f32 %v199, %v200
  %v202 = vrot.slane %v201, 4
  %v203 = vadd.f32 %v201, %v202
  %v204 = vrot.slane %v203, 2
  %v205 = vadd.f32 %v203, %v204
  %v206 = vrot.slane %v205, 1
  %v207 = vadd.f32 %v205, %v206
  %v208 = vsel %vm88, %v144, 0.0
  %v209 = vsel %vm88, %v148, 0.0
  %v210 = vadd.f32 %v208, %v209
  %v211 = vsel %vm88, %v152, 0.0
  %v212 = vadd.f32 %v210, %v211
  %v213 = vsel %vm88, %v156, 0.0
  %v214 = vadd.f32 %v212, %v213
  %v215 = vsel %vm88, %v160, 0.0
  %v216 = vadd.f32 %v214, %v215
  %v217 = vsel %vm88, %v164, 0.0
  %v218 = vadd.f32 %v216, %v217
  %v219 = vsel %vm100, %v168, 0.0
  %v220 = vadd.f32 %v218, %v219
  %v221 = vrot.slane %v220, 4
  %v222 = vadd.f32 %v220, %v221
  %v223 = vrot.slane %v222, 2
  %v224 = vadd.f32 %v222, %v223
  %v225 = vrot.slane %v224, 1
  %v226 = vadd.f32 %v224, %v225
  %v227 = vmul.f32 %v181, 0.020408163
  %v228 = vmul.f32 %v194, 0.020408163
  %v229 = vmul.f32 %v207, 0.020408163
  %v230 = vmul.f32 %v226, 0.020408163
  %v231 = vld [vmem:[%s2] sm:$0xf]
  %v232 = vadd.f32 %v227, 1e-05
  %v233 = vadd.f32 %v228, 1e-05
  %v234 = vadd.f32 %v229, 1e-05
  %v235 = vadd.f32 %v230, 1e-05
  %v236 = vrsqrt.pop %v232
  %v237 = vrsqrt.pop %v233
  %v238 = vrsqrt.pop %v234
  %v239 = vrsqrt.pop %v235
  %v244 = vcombine.low %v236, %v237
  %v245 = vcombine.low %v238, %v239
  %v247 = vunpack.c.l.s4 1966171168
  %v248 = vunpack.c.0.s8 %v247
  %v249 = vlaneseq
  %v250 = vshrl.u32 %v249, 7
  %v251 = vsub.s32 %v248, %v250
  %v252 = vrot.slane %v244, %v251
  %v254 = vunpack.c.l.s4 1966171168
  %v255 = vunpack.c.0.s8 %v254
  %v256 = vlaneseq
  %v257 = vshrl.u32 %v256, 7
  %v258 = vsub.s32 %v255, %v257
  %v259 = vrot.slane %v245, %v258
  %v260 = vcombine.low %v252, %v259
  %v262 = vunpack.c.l.s4 1966171168
  %v263 = vunpack.c.0.s8 %v262
  %v264 = vlaneseq
  %v265 = vshrl.u32 %v264, 7
  %v266 = vsub.s32 %v263, %v265
  %v267 = vrot.slane %v260, %v266
  %v269 = vmul.f32 %v231, %v267
  %v270 = vld [vmem:[%s3] sm:$0xf]
  %v272 = vlaneseq
  %v273 = vshrl.u32 %v272, 7
  %v274 = vsub.s32 0, %v273
  %v275 = vrot.slane %v269, %v274
  %v276 = vlaneseq
  %v277 = vshrl.u32 %v276, 7
  %v278 = vsub.s32 1, %v277
  %v279 = vrot.slane %v269, %v278
  %v280 = vlaneseq
  %v281 = vshrl.u32 %v280, 7
  %v282 = vsub.s32 2, %v281
  %v283 = vrot.slane %v269, %v282
  %v284 = vlaneseq
  %v285 = vshrl.u32 %v284, 7
  %v286 = vsub.s32 3, %v285
  %v287 = vrot.slane %v269, %v286
  %v292 = vmul.f32 %v109, %v275
  %v293 = vmul.f32 %v110, %v279
  %v294 = vmul.f32 %v111, %v283
  %v295 = vmul.f32 %v112, %v287
  %v300 = vcombine.low %v292, %v293
  %v301 = vcombine.low %v294, %v295
  %v303 = vunpack.c.l.s4 1966171168
  %v304 = vunpack.c.0.s8 %v303
  %v305 = vlaneseq
  %v306 = vshrl.u32 %v305, 7
  %v307 = vsub.s32 %v304, %v306
  %v308 = vrot.slane %v300, %v307
  %v310 = vunpack.c.l.s4 1966171168
  %v311 = vunpack.c.0.s8 %v310
  %v312 = vlaneseq
  %v313 = vshrl.u32 %v312, 7
  %v314 = vsub.s32 %v311, %v313
  %v315 = vrot.slane %v301, %v314
  %v316 = vcombine.low %v308, %v315
  %v318 = vunpack.c.l.s4 1966171168
  %v319 = vunpack.c.0.s8 %v318
  %v320 = vlaneseq
  %v321 = vshrl.u32 %v320, 7
  %v322 = vsub.s32 %v319, %v321
  %v323 = vrot.slane %v316, %v322
  %v325 = vsub.f32 %v270, %v323
  %v326 = vmul.f32 %v20, %v275
  %v327 = vmul.f32 %v21, %v279
  %v328 = vmul.f32 %v22, %v283
  %v329 = vmul.f32 %v23, %v287
  %v330 = vmul.f32 %v24, %v275
  %v331 = vmul.f32 %v25, %v279
  %v332 = vmul.f32 %v26, %v283
  %v333 = vmul.f32 %v27, %v287
  %v334 = vmul.f32 %v28, %v275
  %v335 = vmul.f32 %v29, %v279
  %v336 = vmul.f32 %v30, %v283
  %v337 = vmul.f32 %v31, %v287
  %v338 = vmul.f32 %v32, %v275
  %v339 = vmul.f32 %v33, %v279
  %v340 = vmul.f32 %v34, %v283
  %v341 = vmul.f32 %v35, %v287
  %v342 = vmul.f32 %v36, %v275
  %v343 = vmul.f32 %v37, %v279
  %v344 = vmul.f32 %v38, %v283
  %v345 = vmul.f32 %v39, %v287
  %v346 = vmul.f32 %v40, %v275
  %v347 = vmul.f32 %v41, %v279
  %v348 = vmul.f32 %v42, %v283
  %v349 = vmul.f32 %v43, %v287
  %v350 = vmul.f32 %v44, %v275
  %v351 = vmul.f32 %v45, %v279
  %v352 = vmul.f32 %v46, %v283
  %v353 = vmul.f32 %v47, %v287
  %v355 = vlaneseq
  %v356 = vshrl.u32 %v355, 7
  %v357 = vsub.s32 0, %v356
  %v358 = vrot.slane %v325, %v357
  %v359 = vlaneseq
  %v360 = vshrl.u32 %v359, 7
  %v361 = vsub.s32 1, %v360
  %v362 = vrot.slane %v325, %v361
  %v363 = vlaneseq
  %v364 = vshrl.u32 %v363, 7
  %v365 = vsub.s32 2, %v364
  %v366 = vrot.slane %v325, %v365
  %v367 = vlaneseq
  %v368 = vshrl.u32 %v367, 7
  %v369 = vsub.s32 3, %v368
  %v370 = vrot.slane %v325, %v369
  %v375 = vadd.f32 %v326, %v358
  %v376 = vadd.f32 %v327, %v362
  %v377 = vadd.f32 %v328, %v366
  %v378 = vadd.f32 %v329, %v370
  %v379 = vadd.f32 %v330, %v358
  %v380 = vadd.f32 %v331, %v362
  %v381 = vadd.f32 %v332, %v366
  %v382 = vadd.f32 %v333, %v370
  %v383 = vadd.f32 %v334, %v358
  %v384 = vadd.f32 %v335, %v362
  %v385 = vadd.f32 %v336, %v366
  %v386 = vadd.f32 %v337, %v370
  %v387 = vadd.f32 %v338, %v358
  %v388 = vadd.f32 %v339, %v362
  %v389 = vadd.f32 %v340, %v366
  %v390 = vadd.f32 %v341, %v370
  %v391 = vadd.f32 %v342, %v358
  %v392 = vadd.f32 %v343, %v362
  %v393 = vadd.f32 %v344, %v366
  %v394 = vadd.f32 %v345, %v370
  %v395 = vadd.f32 %v346, %v358
  %v396 = vadd.f32 %v347, %v362
  %v397 = vadd.f32 %v348, %v366
  %v398 = vadd.f32 %v349, %v370
  %v399 = vadd.f32 %v350, %v358
  %v400 = vadd.f32 %v351, %v362
  %v401 = vadd.f32 %v352, %v366
  %v402 = vadd.f32 %v353, %v370
  %v403 = vld [vmem:[%s1] sm:$0xff]
  %v404 = vld [vmem:[%s1 + $0x8] sm:$0xff]
  %v405 = vld [vmem:[%s1 + $0x10] sm:$0xff]
  %v406 = vld [vmem:[%s1 + $0x18] sm:$0xff]
  %v407 = vld [vmem:[%s1 + $0x20] sm:$0xff]
  %v408 = vld [vmem:[%s1 + $0x28] sm:$0xff]
  %v409 = vld [vmem:[%s1 + $0x30] sm:$0xff]
  %v410 = vld [vmem:[%s1 + $0x38] sm:$0xff]
  %v411 = vld [vmem:[%s1 + $0x40] sm:$0xff]
  %v412 = vld [vmem:[%s1 + $0x48] sm:$0xff]
  %v413 = vld [vmem:[%s1 + $0x50] sm:$0xff]
  %v414 = vld [vmem:[%s1 + $0x58] sm:$0xff]
  %v415 = vld [vmem:[%s1 + $0x60] sm:$0xff]
  %v416 = vld [vmem:[%s1 + $0x68] sm:$0xff]
  %v417 = vld [vmem:[%s1 + $0x70] sm:$0xff]
  %v418 = vld [vmem:[%s1 + $0x78] sm:$0xff]
  %v419 = vld [vmem:[%s1 + $0x80] sm:$0xff]
  %v420 = vld [vmem:[%s1 + $0x88] sm:$0xff]
  %v421 = vld [vmem:[%s1 + $0x90] sm:$0xff]
  %v422 = vld [vmem:[%s1 + $0x98] sm:$0xff]
  %v423 = vld [vmem:[%s1 + $0xa0] sm:$0xff]
  %v424 = vld [vmem:[%s1 + $0xa8] sm:$0xff]
  %v425 = vld [vmem:[%s1 + $0xb0] sm:$0xff]
  %v426 = vld [vmem:[%s1 + $0xb8] sm:$0xff]
  %v427 = vld [vmem:[%s1 + $0xc0] sm:$0x1]
  %v428 = vld [vmem:[%s1 + $0xc8] sm:$0x1]
  %v429 = vld [vmem:[%s1 + $0xd0] sm:$0x1]
  %v430 = vld [vmem:[%s1 + $0xd8] sm:$0x1]
  %v431 = vadd.f32 %v375, %v403
  %v432 = vadd.f32 %v376, %v404
  %v433 = vadd.f32 %v377, %v405
  %v434 = vadd.f32 %v378, %v406
  %v435 = vadd.f32 %v379, %v407
  %v436 = vadd.f32 %v380, %v408
  %v437 = vadd.f32 %v381, %v409
  %v438 = vadd.f32 %v382, %v410
  %v439 = vadd.f32 %v383, %v411
  %v440 = vadd.f32 %v384, %v412
  %v441 = vadd.f32 %v385, %v413
  %v442 = vadd.f32 %v386, %v414
  %v443 = vadd.f32 %v387, %v415
  %v444 = vadd.f32 %v388, %v416
  %v445 = vadd.f32 %v389, %v417
  %v446 = vadd.f32 %v390, %v418
  %v447 = vadd.f32 %v391, %v419
  %v448 = vadd.f32 %v392, %v420
  %v449 = vadd.f32 %v393, %v421
  %v450 = vadd.f32 %v394, %v422
  %v451 = vadd.f32 %v395, %v423
  %v452 = vadd.f32 %v396, %v424
  %v453 = vadd.f32 %v397, %v425
  %v454 = vadd.f32 %v398, %v426
  %v455 = vadd.f32 %v399, %v427
  %v456 = vadd.f32 %v400, %v428
  %v457 = vadd.f32 %v401, %v429
  %v458 = vadd.f32 %v402, %v430
  %v459 = vmax.f32 %v431, 0.0
  %v460 = vmax.f32 %v432, 0.0
  %v461 = vmax.f32 %v433, 0.0
  %v462 = vmax.f32 %v434, 0.0
  %v463 = vmax.f32 %v435, 0.0
  %v464 = vmax.f32 %v436, 0.0
  %v465 = vmax.f32 %v437, 0.0
  %v466 = vmax.f32 %v438, 0.0
  %v467 = vmax.f32 %v439, 0.0
  %v468 = vmax.f32 %v440, 0.0
  %v469 = vmax.f32 %v441, 0.0
  %v470 = vmax.f32 %v442, 0.0
  %v471 = vmax.f32 %v443, 0.0
  %v472 = vmax.f32 %v444, 0.0
  %v473 = vmax.f32 %v445, 0.0
  %v474 = vmax.f32 %v446, 0.0
  %v475 = vmax.f32 %v447, 0.0
  %v476 = vmax.f32 %v448, 0.0
  %v477 = vmax.f32 %v449, 0.0
  %v478 = vmax.f32 %v450, 0.0
  %v479 = vmax.f32 %v451, 0.0
  %v480 = vmax.f32 %v452, 0.0
  %v481 = vmax.f32 %v453, 0.0
  %v482 = vmax.f32 %v454, 0.0
  %v483 = vmax.f32 %v455, 0.0
  %v484 = vmax.f32 %v456, 0.0
  %v485 = vmax.f32 %v457, 0.0
  %v486 = vmax.f32 %v458, 0.0
  %v487 = vld [vmem:[%s4] sm:$0xff]
  %v488 = vld [vmem:[%s4 + $0x8] sm:$0xff]
  %v489 = vld [vmem:[%s4 + $0x10] sm:$0xff]
  %v490 = vld [vmem:[%s4 + $0x18] sm:$0xff]
  %v491 = vld [vmem:[%s4 + $0x20] sm:$0xff]
  %v492 = vld [vmem:[%s4 + $0x28] sm:$0xff]
  %v493 = vld [vmem:[%s4 + $0x30] sm:$0xff]
  %v494 = vld [vmem:[%s4 + $0x38] sm:$0xff]
  %v495 = vld [vmem:[%s4 + $0x40] sm:$0xff]
  %v496 = vld [vmem:[%s4 + $0x48] sm:$0xff]
  %v497 = vld [vmem:[%s4 + $0x50] sm:$0xff]
  %v498 = vld [vmem:[%s4 + $0x58] sm:$0xff]
  %v499 = vld [vmem:[%s4 + $0x60] sm:$0xff]
  %v500 = vld [vmem:[%s4 + $0x68] sm:$0xff]
  %v501 = vld [vmem:[%s4 + $0x70] sm:$0xff]
  %v502 = vld [vmem:[%s4 + $0x78] sm:$0xff]
  %v503 = vld [vmem:[%s4 + $0x80] sm:$0xff]
  %v504 = vld [vmem:[%s4 + $0x88] sm:$0xff]
  %v505 = vld [vmem:[%s4 + $0x90] sm:$0xff]
  %v506 = vld [vmem:[%s4 + $0x98] sm:$0xff]
  %v507 = vld [vmem:[%s4 + $0xa0] sm:$0xff]
  %v508 = vld [vmem:[%s4 + $0xa8] sm:$0xff]
  %v509 = vld [vmem:[%s4 + $0xb0] sm:$0xff]
  %v510 = vld [vmem:[%s4 + $0xb8] sm:$0xff]
  %v511 = vld [vmem:[%s4 + $0xc0] sm:$0xff]
  %v512 = vld [vmem:[%s4 + $0xc8] sm:$0xff]
  %v513 = vld [vmem:[%s4 + $0xd0] sm:$0xff]
  %v514 = vld [vmem:[%s4 + $0xd8] sm:$0xff]
  %v515 = vld [vmem:[%s4 + $0xe0] sm:$0xff]
  %v516 = vld [vmem:[%s4 + $0xe8] sm:$0xff]
  %v517 = vld [vmem:[%s4 + $0xf0] sm:$0xff]
  %v518 = vld [vmem:[%s4 + $0xf8] sm:$0xff]
  %v519 = vld [vmem:[%s4 + $0x100] sm:$0xff]
  %v520 = vld [vmem:[%s4 + $0x108] sm:$0xff]
  %v521 = vld [vmem:[%s4 + $0x110] sm:$0xff]
  %v522 = vld [vmem:[%s4 + $0x118] sm:$0xff]
  %v523 = vld [vmem:[%s4 + $0x120] sm:$0xff]
  %v524 = vld [vmem:[%s4 + $0x128] sm:$0xff]
  %v525 = vld [vmem:[%s4 + $0x130] sm:$0xff]
  %v526 = vld [vmem:[%s4 + $0x138] sm:$0xff]
  %v527 = vld [vmem:[%s4 + $0x140] sm:$0xff]
  %v528 = vld [vmem:[%s4 + $0x148] sm:$0xff]
  %v529 = vld [vmem:[%s4 + $0x150] sm:$0xff]
  %v530 = vld [vmem:[%s4 + $0x158] sm:$0xff]
  %v531 = vld [vmem:[%s4 + $0x160] sm:$0xff]
  %v532 = vld [vmem:[%s4 + $0x168] sm:$0xff]
  %v533 = vld [vmem:[%s4 + $0x170] sm:$0xff]
  %v534 = vld [vmem:[%s4 + $0x178] sm:$0xff]
  %v535 = vld [vmem:[%s4 + $0x180] sm:$0xff]
  %v536 = vld [vmem:[%s4 + $0x188] sm:$0xff]
  %v537 = vld [vmem:[%s4 + $0x190] sm:$0xff]
  %v538 = vld [vmem:[%s4 + $0x198] sm:$0xff]
  %v539 = vld [vmem:[%s4 + $0x1a0] sm:$0xff]
  %v540 = vld [vmem:[%s4 + $0x1a8] sm:$0xff]
  %v541 = vld [vmem:[%s4 + $0x1b0] sm:$0xff]
  %v542 = vld [vmem:[%s4 + $0x1b8] sm:$0xff]
  %v543 = vld [vmem:[%s4 + $0x1c0] sm:$0xff]
  %v544 = vld [vmem:[%s4 + $0x1c8] sm:$0xff]
  %v545 = vld [vmem:[%s4 + $0x1d0] sm:$0xff]
  %v546 = vld [vmem:[%s4 + $0x1d8] sm:$0xff]
  %v547 = vld [vmem:[%s4 + $0x1e0] sm:$0xff]
  %v548 = vld [vmem:[%s4 + $0x1e8] sm:$0xff]
  %v549 = vld [vmem:[%s4 + $0x1f0] sm:$0xff]
  %v550 = vld [vmem:[%s4 + $0x1f8] sm:$0xff]
  %v551 = vld [vmem:[%s4 + $0x200] sm:$0xff]
  %v552 = vld [vmem:[%s4 + $0x208] sm:$0xff]
  %v553 = vld [vmem:[%s4 + $0x210] sm:$0xff]
  %v554 = vld [vmem:[%s4 + $0x218] sm:$0xff]
  %v555 = vld [vmem:[%s4 + $0x220] sm:$0xff]
  %v556 = vld [vmem:[%s4 + $0x228] sm:$0xff]
  %v557 = vld [vmem:[%s4 + $0x230] sm:$0xff]
  %v558 = vld [vmem:[%s4 + $0x238] sm:$0xff]
  %v559 = vld [vmem:[%s4 + $0x240] sm:$0xff]
  %v560 = vld [vmem:[%s4 + $0x248] sm:$0xff]
  %v561 = vld [vmem:[%s4 + $0x250] sm:$0xff]
  %v562 = vld [vmem:[%s4 + $0x258] sm:$0xff]
  %v563 = vld [vmem:[%s4 + $0x260] sm:$0xff]
  %v564 = vld [vmem:[%s4 + $0x268] sm:$0xff]
  %v565 = vld [vmem:[%s4 + $0x270] sm:$0xff]
  %v566 = vld [vmem:[%s4 + $0x278] sm:$0xff]
  %v567 = vld [vmem:[%s4 + $0x280] sm:$0xff]
  %v568 = vld [vmem:[%s4 + $0x288] sm:$0xff]
  %v569 = vld [vmem:[%s4 + $0x290] sm:$0xff]
  %v570 = vld [vmem:[%s4 + $0x298] sm:$0xff]
  %v571 = vld [vmem:[%s4 + $0x2a0] sm:$0xff]
  %v572 = vld [vmem:[%s4 + $0x2a8] sm:$0xff]
  %v573 = vld [vmem:[%s4 + $0x2b0] sm:$0xff]
  %v574 = vld [vmem:[%s4 + $0x2b8] sm:$0xff]
  %v575 = vld [vmem:[%s4 + $0x2c0] sm:$0xff]
  %v576 = vld [vmem:[%s4 + $0x2c8] sm:$0xff]
  %v577 = vld [vmem:[%s4 + $0x2d0] sm:$0xff]
  %v578 = vld [vmem:[%s4 + $0x2d8] sm:$0xff]
  %v579 = vld [vmem:[%s4 + $0x2e0] sm:$0xff]
  %v580 = vld [vmem:[%s4 + $0x2e8] sm:$0xff]
  %v581 = vld [vmem:[%s4 + $0x2f0] sm:$0xff]
  %v582 = vld [vmem:[%s4 + $0x2f8] sm:$0xff]
  %v583 = vld [vmem:[%s4 + $0x300] sm:$0xff]
  %v584 = vld [vmem:[%s4 + $0x308] sm:$0xff]
  %v585 = vld [vmem:[%s4 + $0x310] sm:$0xff]
  %v586 = vld [vmem:[%s4 + $0x318] sm:$0xff]
  %v587 = vld [vmem:[%s4 + $0x320] sm:$0xff]
  %v588 = vld [vmem:[%s4 + $0x328] sm:$0xff]
  %v589 = vld [vmem:[%s4 + $0x330] sm:$0xff]
  %v590 = vld [vmem:[%s4 + $0x338] sm:$0xff]
  %v591 = vld [vmem:[%s4 + $0x340] sm:$0xff]
  %v592 = vld [vmem:[%s4 + $0x348] sm:$0xff]
  %v593 = vld [vmem:[%s4 + $0x350] sm:$0xff]
  %v594 = vld [vmem:[%s4 + $0x358] sm:$0xff]
  %v595 = vld [vmem:[%s4 + $0x360] sm:$0xff]
  %v596 = vld [vmem:[%s4 + $0x368] sm:$0xff]
  %v597 = vld [vmem:[%s4 + $0x370] sm:$0xff]
  %v598 = vld [vmem:[%s4 + $0x378] sm:$0xff]
  %v599 = vld [vmem:[%s4 + $0x380] sm:$0xff]
  %v600 = vld [vmem:[%s4 + $0x388] sm:$0xff]
  %v601 = vld [vmem:[%s4 + $0x390] sm:$0xff]
  %v602 = vld [vmem:[%s4 + $0x398] sm:$0xff]
  %v603 = vld [vmem:[%s4 + $0x3a0] sm:$0xff]
  %v604 = vld [vmem:[%s4 + $0x3a8] sm:$0xff]
  %v605 = vld [vmem:[%s4 + $0x3b0] sm:$0xff]
  %v606 = vld [vmem:[%s4 + $0x3b8] sm:$0xff]
  %v607 = vld [vmem:[%s4 + $0x3c0] sm:$0xff]
  %v608 = vld [vmem:[%s4 + $0x3c8] sm:$0xff]
  %v609 = vld [vmem:[%s4 + $0x3d0] sm:$0xff]
  %v610 = vld [vmem:[%s4 + $0x3d8] sm:$0xff]
  %v611 = vld [vmem:[%s4 + $0x3e0] sm:$0xff]
  %v612 = vld [vmem:[%s4 + $0x3e8] sm:$0xff]
  %v613 = vld [vmem:[%s4 + $0x3f0] sm:$0xff]
  %v614 = vld [vmem:[%s4 + $0x3f8] sm:$0xff]
  %v615 = vld [vmem:[%s4 + $0x400] sm:$0xff]
  %v616 = vld [vmem:[%s4 + $0x408] sm:$0xff]
  %v617 = vld [vmem:[%s4 + $0x410] sm:$0xff]
  %v618 = vld [vmem:[%s4 + $0x418] sm:$0xff]
  %v619 = vld [vmem:[%s4 + $0x420] sm:$0xff]
  %v620 = vld [vmem:[%s4 + $0x428] sm:$0xff]
  %v621 = vld [vmem:[%s4 + $0x430] sm:$0xff]
  %v622 = vld [vmem:[%s4 + $0x438] sm:$0xff]
  %v623 = vld [vmem:[%s4 + $0x440] sm:$0xff]
  %v624 = vld [vmem:[%s4 + $0x448] sm:$0xff]
  %v625 = vld [vmem:[%s4 + $0x450] sm:$0xff]
  %v626 = vld [vmem:[%s4 + $0x458] sm:$0xff]
  %v627 = vld [vmem:[%s4 + $0x460] sm:$0xff]
  %v628 = vld [vmem:[%s4 + $0x468] sm:$0xff]
  %v629 = vld [vmem:[%s4 + $0x470] sm:$0xff]
  %v630 = vld [vmem:[%s4 + $0x478] sm:$0xff]
  %v631 = vld [vmem:[%s4 + $0x480] sm:$0xff]
  %v632 = vld [vmem:[%s4 + $0x488] sm:$0xff]
  %v633 = vld [vmem:[%s4 + $0x490] sm:$0xff]
  %v634 = vld [vmem:[%s4 + $0x498] sm:$0xff]
  %v635 = vld [vmem:[%s4 + $0x4a0] sm:$0xff]
  %v636 = vld [vmem:[%s4 + $0x4a8] sm:$0xff]
  %v637 = vld [vmem:[%s4 + $0x4b0] sm:$0xff]
  %v638 = vld [vmem:[%s4 + $0x4b8] sm:$0xff]
  %v639 = vld [vmem:[%s4 + $0x4c0] sm:$0xff]
  %v640 = vld [vmem:[%s4 + $0x4c8] sm:$0xff]
  %v641 = vld [vmem:[%s4 + $0x4d0] sm:$0xff]
  %v642 = vld [vmem:[%s4 + $0x4d8] sm:$0xff]
  %v643 = vld [vmem:[%s4 + $0x4e0] sm:$0xff]
  %v644 = vld [vmem:[%s4 + $0x4e8] sm:$0xff]
  %v645 = vld [vmem:[%s4 + $0x4f0] sm:$0xff]
  %v646 = vld [vmem:[%s4 + $0x4f8] sm:$0xff]
  %v647 = vld [vmem:[%s4 + $0x500] sm:$0xff]
  %v648 = vld [vmem:[%s4 + $0x508] sm:$0xff]
  %v649 = vld [vmem:[%s4 + $0x510] sm:$0xff]
  %v650 = vld [vmem:[%s4 + $0x518] sm:$0xff]
  %v651 = vld [vmem:[%s4 + $0x520] sm:$0xff]
  %v652 = vld [vmem:[%s4 + $0x528] sm:$0xff]
  %v653 = vld [vmem:[%s4 + $0x530] sm:$0xff]
  %v654 = vld [vmem:[%s4 + $0x538] sm:$0xff]
  %v655 = vld [vmem:[%s4 + $0x540] sm:$0xff]
  %v656 = vld [vmem:[%s4 + $0x548] sm:$0xff]
  %v657 = vld [vmem:[%s4 + $0x550] sm:$0xff]
  %v658 = vld [vmem:[%s4 + $0x558] sm:$0xff]
  %v659 = vld [vmem:[%s4 + $0x560] sm:$0xff]
  %v660 = vld [vmem:[%s4 + $0x568] sm:$0xff]
  %v661 = vld [vmem:[%s4 + $0x570] sm:$0xff]
  %v662 = vld [vmem:[%s4 + $0x578] sm:$0xff]
  %v663 = vld [vmem:[%s4 + $0x580] sm:$0xff]
  %v664 = vld [vmem:[%s4 + $0x588] sm:$0xff]
  %v665 = vld [vmem:[%s4 + $0x590] sm:$0xff]
  %v666 = vld [vmem:[%s4 + $0x598] sm:$0xff]
  %v667 = vld [vmem:[%s4 + $0x5a0] sm:$0xff]
  %v668 = vld [vmem:[%s4 + $0x5a8] sm:$0xff]
  %v669 = vld [vmem:[%s4 + $0x5b0] sm:$0xff]
  %v670 = vld [vmem:[%s4 + $0x5b8] sm:$0xff]
  %v671 = vld [vmem:[%s4 + $0x5c0] sm:$0xff]
  %v672 = vld [vmem:[%s4 + $0x5c8] sm:$0xff]
  %v673 = vld [vmem:[%s4 + $0x5d0] sm:$0xff]
  %v674 = vld [vmem:[%s4 + $0x5d8] sm:$0xff]
  %v675 = vld [vmem:[%s4 + $0x5e0] sm:$0xff]
  %v676 = vld [vmem:[%s4 + $0x5e8] sm:$0xff]
  %v677 = vld [vmem:[%s4 + $0x5f0] sm:$0xff]
  %v678 = vld [vmem:[%s4 + $0x5f8] sm:$0xff]
  %v679 = vld [vmem:[%s4 + $0x600] sm:$0xff]
  %v680 = vld [vmem:[%s4 + $0x608] sm:$0xff]
  %v681 = vld [vmem:[%s4 + $0x610] sm:$0xff]
  %v682 = vld [vmem:[%s4 + $0x618] sm:$0xff]
  %v683 = vld [vmem:[%s4 + $0x620] sm:$0xff]
  %v684 = vld [vmem:[%s4 + $0x628] sm:$0xff]
  %v685 = vld [vmem:[%s4 + $0x630] sm:$0xff]
  %v686 = vld [vmem:[%s4 + $0x638] sm:$0xff]
  %v688 = vsel %vm88, %v462, 0
  %v691 = vsel %vm88, %v466, 0
  %v694 = vsel %vm88, %v470, 0
  %v697 = vsel %vm88, %v474, 0
  %v700 = vsel %vm88, %v478, 0
  %v703 = vsel %vm88, %v482, 0
  %v706 = vsel %vm88, %v486, 0
  %v708 = vand.u32 %v488, 4294901760
  %709 = vmatprep.subr.mxu0 %v708
  %v710 = vand.u32 %v487, 4294901760
  %711 = vmatpush1.msra.mxu0 %v710
  %v712 = vand.u32 %v492, 4294901760
  %713 = vmatprep.subr.mxu0 %v712
  %v714 = vand.u32 %v491, 4294901760
  %715 = vmatpush1.msra.mxu0 %v714
  %v716 = vand.u32 %v496, 4294901760
  %717 = vmatprep.subr.mxu0 %v716
  %v718 = vand.u32 %v495, 4294901760
  %719 = vmatpush1.msra.mxu0 %v718
  %v720 = vand.u32 %v500, 4294901760
  %721 = vmatprep.subr.mxu0 %v720
  %v722 = vand.u32 %v499, 4294901760
  %723 = vmatpush1.msra.mxu0 %v722
  %v724 = vand.u32 %v504, 4294901760
  %725 = vmatprep.subr.mxu0 %v724
  %v726 = vand.u32 %v503, 4294901760
  %727 = vmatpush1.msra.mxu0 %v726
  %v728 = vand.u32 %v508, 4294901760
  %729 = vmatprep.subr.mxu0 %v728
  %v730 = vand.u32 %v507, 4294901760
  %731 = vmatpush1.msra.mxu0 %v730
  %v732 = vand.u32 %v512, 4294901760
  %733 = vmatprep.subr.mxu0 %v732
  %v734 = vand.u32 %v511, 4294901760
  %735 = vmatpush1.msra.mxu0 %v734
  %v736 = vand.u32 %v516, 4294901760
  %737 = vmatprep.subr.mxu0 %v736
  %v738 = vand.u32 %v515, 4294901760
  %739 = vmatpush1.msra.mxu0 %v738
  %v740 = vand.u32 %v520, 4294901760
  %741 = vmatprep.subr.mxu0 %v740
  %v742 = vand.u32 %v519, 4294901760
  %743 = vmatpush1.msra.mxu0 %v742
  %v744 = vand.u32 %v524, 4294901760
  %745 = vmatprep.subr.mxu0 %v744
  %v746 = vand.u32 %v523, 4294901760
  %747 = vmatpush1.msra.mxu0 %v746
  %v748 = vand.u32 %v528, 4294901760
  %749 = vmatprep.subr.mxu0 %v748
  %v750 = vand.u32 %v527, 4294901760
  %751 = vmatpush1.msra.mxu0 %v750
  %v752 = vand.u32 %v532, 4294901760
  %753 = vmatprep.subr.mxu0 %v752
  %v754 = vand.u32 %v531, 4294901760
  %755 = vmatpush1.msra.mxu0 %v754
  %v756 = vand.u32 %v536, 4294901760
  %757 = vmatprep.subr.mxu0 %v756
  %v758 = vand.u32 %v535, 4294901760
  %759 = vmatpush1.msra.mxu0 %v758
  %v760 = vand.u32 %v540, 4294901760
  %761 = vmatprep.subr.mxu0 %v760
  %v762 = vand.u32 %v539, 4294901760
  %763 = vmatpush1.msra.mxu0 %v762
  %v764 = vand.u32 %v544, 4294901760
  %765 = vmatprep.subr.mxu0 %v764
  %v766 = vand.u32 %v543, 4294901760
  %767 = vmatpush1.msra.mxu0 %v766
  %v768 = vand.u32 %v548, 4294901760
  %769 = vmatprep.subr.mxu0 %v768
  %v770 = vand.u32 %v547, 4294901760
  %771 = vmatpush1.msra.mxu0 %v770
  %v772 = vand.u32 %v552, 4294901760
  %773 = vmatprep.subr.mxu0 %v772
  %v774 = vand.u32 %v551, 4294901760
  %775 = vmatpush1.msra.mxu0 %v774
  %v776 = vand.u32 %v556, 4294901760
  %777 = vmatprep.subr.mxu0 %v776
  %v778 = vand.u32 %v555, 4294901760
  %779 = vmatpush1.msra.mxu0 %v778
  %v780 = vand.u32 %v560, 4294901760
  %781 = vmatprep.subr.mxu0 %v780
  %v782 = vand.u32 %v559, 4294901760
  %783 = vmatpush1.msra.mxu0 %v782
  %v784 = vand.u32 %v564, 4294901760
  %785 = vmatprep.subr.mxu0 %v784
  %v786 = vand.u32 %v563, 4294901760
  %787 = vmatpush1.msra.mxu0 %v786
  %v788 = vand.u32 %v568, 4294901760
  %789 = vmatprep.subr.mxu0 %v788
  %v790 = vand.u32 %v567, 4294901760
  %791 = vmatpush1.msra.mxu0 %v790
  %v792 = vand.u32 %v572, 4294901760
  %793 = vmatprep.subr.mxu0 %v792
  %v794 = vand.u32 %v571, 4294901760
  %795 = vmatpush1.msra.mxu0 %v794
  %v796 = vand.u32 %v576, 4294901760
  %797 = vmatprep.subr.mxu0 %v796
  %v798 = vand.u32 %v575, 4294901760
  %799 = vmatpush1.msra.mxu0 %v798
  %v800 = vand.u32 %v580, 4294901760
  %801 = vmatprep.subr.mxu0 %v800
  %v802 = vand.u32 %v579, 4294901760
  %803 = vmatpush1.msra.mxu0 %v802
  %v804 = vand.u32 %v584, 4294901760
  %805 = vmatprep.subr.mxu0 %v804
  %v806 = vand.u32 %v583, 4294901760
  %807 = vmatpush1.msra.mxu0 %v806
  %v808 = vand.u32 %v588, 4294901760
  %809 = vmatprep.subr.mxu0 %v808
  %v810 = vand.u32 %v587, 4294901760
  %811 = vmatpush1.msra.mxu0 %v810
  %v812 = vand.u32 %v592, 4294901760
  %813 = vmatprep.subr.mxu0 %v812
  %v814 = vand.u32 %v591, 4294901760
  %815 = vmatpush1.msra.mxu0 %v814
  %v816 = vand.u32 %v596, 4294901760
  %817 = vmatprep.subr.mxu0 %v816
  %v818 = vand.u32 %v595, 4294901760
  %819 = vmatpush1.msra.mxu0 %v818
  %v820 = vand.u32 %v600, 4294901760
  %821 = vmatprep.subr.mxu0 %v820
  %v822 = vand.u32 %v599, 4294901760
  %823 = vmatpush1.msra.mxu0 %v822
  %v824 = vand.u32 %v604, 4294901760
  %825 = vmatprep.subr.mxu0 %v824
  %v826 = vand.u32 %v603, 4294901760
  %827 = vmatpush1.msra.mxu0 %v826
  %v828 = vand.u32 %v608, 4294901760
  %829 = vmatprep.subr.mxu0 %v828
  %v830 = vand.u32 %v607, 4294901760
  %831 = vmatpush1.msra.mxu0 %v830
  %v832 = vand.u32 %v612, 4294901760
  %833 = vmatprep.subr.mxu0 %v832
  %v834 = vand.u32 %v611, 4294901760
  %835 = vmatpush1.msra.mxu0 %v834
  %v836 = vand.u32 %v460, 4294901760
  %v837 = vsub.f32 %v460, %v836
  %v838 = vand.u32 %v837, 4294901760
  %v839 = vsub.f32 %v837, %v838
  %v840 = vand.u32 %v839, 4294901760
  %841 = vmatprep.mubr.f32.mxu0 %v840
  %v842 = vand.u32 %v459, 4294901760
  %v843 = vsub.f32 %v459, %v842
  %v844 = vand.u32 %v843, 4294901760
  %v845 = vsub.f32 %v843, %v844
  %v846 = vand.u32 %v845, 4294901760
  %847 = vmatmul.mubr.f32.gmra.mrb[0].mxu0 %v846
  %v848 = vpop.f32.mrb[0].mxu0
  %v849 = vadd.f32 0.0, %v848
  %v850 = vpop.f32.mrb[0].mxu0
  %v851 = vadd.f32 0.0, %v850
  %v852 = vand.u32 %v464, 4294901760
  %v853 = vsub.f32 %v464, %v852
  %v854 = vand.u32 %v853, 4294901760
  %v855 = vsub.f32 %v853, %v854
  %v856 = vand.u32 %v855, 4294901760
  %857 = vmatprep.mubr.f32.mxu0 %v856
  %v858 = vand.u32 %v463, 4294901760
  %v859 = vsub.f32 %v463, %v858
  %v860 = vand.u32 %v859, 4294901760
  %v861 = vsub.f32 %v859, %v860
  %v862 = vand.u32 %v861, 4294901760
  %863 = vmatmul.mubr.f32.gmra.mrb[0].mxu0 %v862
  %v864 = vpop.f32.mrb[0].mxu0
  %v865 = vadd.f32 0.0, %v864
  %v866 = vpop.f32.mrb[0].mxu0
  %v867 = vadd.f32 0.0, %v866
  %v868 = vand.u32 %v468, 4294901760
  %v869 = vsub.f32 %v468, %v868
  %v870 = vand.u32 %v869, 4294901760
  %v871 = vsub.f32 %v869, %v870
  %v872 = vand.u32 %v871, 4294901760
  %873 = vmatprep.mubr.f32.mxu0 %v872
  %v874 = vand.u32 %v467, 4294901760
  %v875 = vsub.f32 %v467, %v874
  %v876 = vand.u32 %v875, 4294901760
  %v877 = vsub.f32 %v875, %v876
  %v878 = vand.u32 %v877, 4294901760
  %879 = vmatmul.mubr.f32.gmra.mrb[0].mxu0 %v878
  %v880 = vpop.f32.mrb[0].mxu0
  %v881 = vadd.f32 0.0, %v880
  %v882 = vpop.f32.mrb[0].mxu0
  %v883 = vadd.f32 0.0, %v882
  %v884 = vand.u32 %v472, 4294901760
  %v885 = vsub.f32 %v472, %v884
  %v886 = vand.u32 %v885, 4294901760
  %v887 = vsub.f32 %v885, %v886
  %v888 = vand.u32 %v887, 4294901760
  %889 = vmatprep.mubr.f32.mxu0 %v888
  %v890 = vand.u32 %v471, 4294901760
  %v891 = vsub.f32 %v471, %v890
  %v892 = vand.u32 %v891, 4294901760
  %v893 = vsub.f32 %v891, %v892
  %v894 = vand.u32 %v893, 4294901760
  %895 = vmatmul.mubr.f32.gmra.mrb[0].mxu0 %v894
  %v896 = vpop.f32.mrb[0].mxu0
  %v897 = vadd.f32 0.0, %v896
  %v898 = vpop.f32.mrb[0].mxu0
  %v899 = vadd.f32 0.0, %v898
  %v900 = vand.u32 %v476, 4294901760
  %v901 = vsub.f32 %v476, %v900
  %v902 = vand.u32 %v901, 4294901760
  %v903 = vsub.f32 %v901, %v902
  %v904 = vand.u32 %v903, 4294901760
  %905 = vmatprep.mubr.f32.mxu0 %v904
  %v906 = vand.u32 %v475, 4294901760
  %v907 = vsub.f32 %v475, %v906
  %v908 = vand.u32 %v907, 4294901760
  %v909 = vsub.f32 %v907, %v908
  %v910 = vand.u32 %v909, 4294901760
  %911 = vmatmul.mubr.f32.gmra.mrb[0].mxu0 %v910
  %v912 = vpop.f32.mrb[0].mxu0
  %v913 = vadd.f32 0.0, %v912
  %v914 = vpop.f32.mrb[0].mxu0
  %v915 = vadd.f32 0.0, %v914
  %v916 = vand.u32 %v480, 4294901760
  %v917 = vsub.f32 %v480, %v916
  %v918 = vand.u32 %v917, 4294901760
  %v919 = vsub.f32 %v917, %v918
  %v920 = vand.u32 %v919, 4294901760
  %921 = vmatprep.mubr.f32.mxu0 %v920
  %v922 = vand.u32 %v479, 4294901760
  %v923 = vsub.f32 %v479, %v922
  %v924 = vand.u32 %v923, 4294901760
  %v925 = vsub.f32 %v923, %v924
  %v926 = vand.u32 %v925, 4294901760
  %927 = vmatmul.mubr.f32.gmra.mrb[0].mxu0 %v926
  %v928 = vpop.f32.mrb[0].mxu0
  %v929 = vadd.f32 0.0, %v928
  %v930 = vpop.f32.mrb[0].mxu0
  %v931 = vadd.f32 0.0, %v930
  %v932 = vand.u32 %v484, 4294901760
  %v933 = vsub.f32 %v484, %v932
  %v934 = vand.u32 %v933, 4294901760
  %v935 = vsub.f32 %v933, %v934
  %v936 = vand.u32 %v935, 4294901760
  %937 = vmatprep.mubr.f32.mxu0 %v936
  %v938 = vand.u32 %v483, 4294901760
  %v939 = vsub.f32 %v483, %v938
  %v940 = vand.u32 %v939, 4294901760
  %v941 = vsub.f32 %v939, %v940
  %v942 = vand.u32 %v941, 4294901760
  %943 = vmatmul.mubr.f32.gmra.mrb[0].mxu0 %v942
  %v944 = vpop.f32.mrb[0].mxu0
  %v945 = vadd.f32 0.0, %v944
  %v946 = vpop.f32.mrb[0].mxu0
  %v947 = vadd.f32 0.0, %v946
  %948 = vdwg.mxu0
  %v949 = vand.u32 %v488, 4294901760
  %v950 = vsub.f32 %v488, %v949
  %v951 = vand.u32 %v950, 4294901760
  %v952 = vsub.f32 %v950, %v951
  %v953 = vand.u32 %v952, 4294901760
  %954 = vmatprep.subr.mxu0 %v953
  %v955 = vand.u32 %v487, 4294901760
  %v956 = vsub.f32 %v487, %v955
  %v957 = vand.u32 %v956, 4294901760
  %v958 = vsub.f32 %v956, %v957
  %v959 = vand.u32 %v958, 4294901760
  %960 = vmatpush1.msra.mxu0 %v959
  %v961 = vand.u32 %v492, 4294901760
  %v962 = vsub.f32 %v492, %v961
  %v963 = vand.u32 %v962, 4294901760
  %v964 = vsub.f32 %v962, %v963
  %v965 = vand.u32 %v964, 4294901760
  %966 = vmatprep.subr.mxu0 %v965
  %v967 = vand.u32 %v491, 4294901760
  %v968 = vsub.f32 %v491, %v967
  %v969 = vand.u32 %v968, 4294901760
  %v970 = vsub.f32 %v968, %v969
  %v971 = vand.u32 %v970, 4294901760
  %972 = vmatpush1.msra.mxu0 %v971
  %v973 = vand.u32 %v496, 4294901760
  %v974 = vsub.f32 %v496, %v973
  %v975 = vand.u32 %v974, 4294901760
  %v976 = vsub.f32 %v974, %v975
  %v977 = vand.u32 %v976, 4294901760
  %978 = vmatprep.subr.mxu0 %v977
  %v979 = vand.u32 %v495, 4294901760
  %v980 = vsub.f32 %v495, %v979
  %v981 = vand.u32 %v980, 4294901760
  %v982 = vsub.f32 %v980, %v981
  %v983 = vand.u32 %v982, 4294901760
  %984 = vmatpush1.msra.mxu0 %v983
  %v985 = vand.u32 %v500, 4294901760
  %v986 = vsub.f32 %v500, %v985
  %v987 = vand.u32 %v986, 4294901760
  %v988 = vsub.f32 %v986, %v987
  %v989 = vand.u32 %v988, 4294901760
  %990 = vmatprep.subr.mxu0 %v989
  %v991 = vand.u32 %v499, 4294901760
  %v992 = vsub.f32 %v499, %v991
  %v993 = vand.u32 %v992, 4294901760
  %v994 = vsub.f32 %v992, %v993
  %v995 = vand.u32 %v994, 4294901760
  %996 = vmatpush1.msra.mxu0 %v995
  %v997 = vand.u32 %v504, 4294901760
  %v998 = vsub.f32 %v504, %v997
  %v999 = vand.u32 %v998, 4294901760
  %v1000 = vsub.f32 %v998, %v999
  %v1001 = vand.u32 %v1000, 4294901760
  %1002 = vmatprep.subr.mxu0 %v1001
  %v1003 = vand.u32 %v503, 4294901760
  %v1004 = vsub.f32 %v503, %v1003
  %v1005 = vand.u32 %v1004, 4294901760
  %v1006 = vsub.f32 %v1004, %v1005
  %v1007 = vand.u32 %v1006, 4294901760
  %1008 = vmatpush1.msra.mxu0 %v1007
  %v1009 = vand.u32 %v508, 4294901760
  %v1010 = vsub.f32 %v508, %v1009
  %v1011 = vand.u32 %v1010, 4294901760
  %v1012 = vsub.f32 %v1010, %v1011
  %v1013 = vand.u32 %v1012, 4294901760
  %1014 = vmatprep.subr.mxu0 %v1013
  %v1015 = vand.u32 %v507, 4294901760
  %v1016 = vsub.f32 %v507, %v1015
  %v1017 = vand.u32 %v1016, 4294901760
  %v1018 = vsub.f32 %v1016, %v1017
  %v1019 = vand.u32 %v1018, 4294901760
  %1020 = vmatpush1.msra.mxu0 %v1019
  %v1021 = vand.u32 %v512, 4294901760
  %v1022 = vsub.f32 %v512, %v1021
  %v1023 = vand.u32 %v1022, 4294901760
  %v1024 = vsub.f32 %v1022, %v1023
  %v1025 = vand.u32 %v1024, 4294901760
  %1026 = vmatprep.subr.mxu0 %v1025
  %v1027 = vand.u32 %v511, 4294901760
  %v1028 = vsub.f32 %v511, %v1027
  %v1029 = vand.u32 %v1028, 4294901760
  %v1030 = vsub.f32 %v1028, %v1029
  %v1031 = vand.u32 %v1030, 4294901760
  %1032 = vmatpush1.msra.mxu0 %v1031
  %v1033 = vand.u32 %v516, 4294901760
  %v1034 = vsub.f32 %v516, %v1033
  %v1035 = vand.u32 %v1034, 4294901760
  %v1036 = vsub.f32 %v1034, %v1035
  %v1037 = vand.u32 %v1036, 4294901760
  %1038 = vmatprep.subr.mxu0 %v1037
  %v1039 = vand.u32 %v515, 4294901760
  %v1040 = vsub.f32 %v515, %v1039
  %v1041 = vand.u32 %v1040, 4294901760
  %v1042 = vsub.f32 %v1040, %v1041
  %v1043 = vand.u32 %v1042, 4294901760
  %1044 = vmatpush1.msra.mxu0 %v1043
  %v1045 = vand.u32 %v520, 4294901760
  %v1046 = vsub.f32 %v520, %v1045
  %v1047 = vand.u32 %v1046, 4294901760
  %v1048 = vsub.f32 %v1046, %v1047
  %v1049 = vand.u32 %v1048, 4294901760
  %1050 = vmatprep.subr.mxu0 %v1049
  %v1051 = vand.u32 %v519, 4294901760
  %v1052 = vsub.f32 %v519, %v1051
  %v1053 = vand.u32 %v1052, 4294901760
  %v1054 = vsub.f32 %v1052, %v1053
  %v1055 = vand.u32 %v1054, 4294901760
  %1056 = vmatpush1.msra.mxu0 %v1055
  %v1057 = vand.u32 %v524, 4294901760
  %v1058 = vsub.f32 %v524, %v1057
  %v1059 = vand.u32 %v1058, 4294901760
  %v1060 = vsub.f32 %v1058, %v1059
  %v1061 = vand.u32 %v1060, 4294901760
  %1062 = vmatprep.subr.mxu0 %v1061
  %v1063 = vand.u32 %v523, 4294901760
  %v1064 = vsub.f32 %v523, %v1063
  %v1065 = vand.u32 %v1064, 4294901760
  %v1066 = vsub.f32 %v1064, %v1065
  %v1067 = vand.u32 %v1066, 4294901760
  %1068 = vmatpush1.msra.mxu0 %v1067
  %v1069 = vand.u32 %v528, 4294901760
  %v1070 = vsub.f32 %v528, %v1069
  %v1071 = vand.u32 %v1070, 4294901760
  %v1072 = vsub.f32 %v1070, %v1071
  %v1073 = vand.u32 %v1072, 4294901760
  %1074 = vmatprep.subr.mxu0 %v1073
  %v1075 = vand.u32 %v527, 4294901760
  %v1076 = vsub.f32 %v527, %v1075
  %v1077 = vand.u32 %v1076, 4294901760
  %v1078 = vsub.f32 %v1076, %v1077
  %v1079 = vand.u32 %v1078, 4294901760
  %1080 = vmatpush1.msra.mxu0 %v1079
  %v1081 = vand.u32 %v532, 4294901760
  %v1082 = vsub.f32 %v532, %v1081
  %v1083 = vand.u32 %v1082, 4294901760
  %v1084 = vsub.f32 %v1082, %v1083
  %v1085 = vand.u32 %v1084, 4294901760
  %1086 = vmatprep.subr.mxu0 %v1085
  %v1087 = vand.u32 %v531, 4294901760
  %v1088 = vsub.f32 %v531, %v1087
  %v1089 = vand.u32 %v1088, 4294901760
  %v1090 = vsub.f32 %v1088, %v1089
  %v1091 = vand.u32 %v1090, 4294901760
  %1092 = vmatpush1.msra.mxu0 %v1091
  %v1093 = vand.u32 %v536, 4294901760
  %v1094 = vsub.f32 %v536, %v1093
  %v1095 = vand.u32 %v1094, 4294901760
  %v1096 = vsub.f32 %v1094, %v1095
  %v1097 = vand.u32 %v1096, 4294901760
  %1098 = vmatprep.subr.mxu0 %v1097
  %v1099 = vand.u32 %v535, 4294901760
  %v1100 = vsub.f32 %v535, %v1099
  %v1101 = vand.u32 %v1100, 4294901760
  %v1102 = vsub.f32 %v1100, %v1101
  %v1103 = vand.u32 %v1102, 4294901760
  %1104 = vmatpush1.msra.mxu0 %v1103
  %v1105 = vand.u32 %v540, 4294901760
  %v1106 = vsub.f32 %v540, %v1105
  %v1107 = vand.u32 %v1106, 4294901760
  %v1108 = vsub.f32 %v1106, %v1107
  %v1109 = vand.u32 %v1108, 4294901760
  %1110 = vmatprep.subr.mxu0 %v1109
  %v1111 = vand.u32 %v539, 4294901760
  %v1112 = vsub.f32 %v539, %v1111
  %v1113 = vand.u32 %v1112, 4294901760
  %v1114 = vsub.f32 %v1112, %v1113
  %v1115 = vand.u32 %v1114, 4294901760
  %1116 = vmatpush1.msra.mxu0 %v1115
  %v1117 = vand.u32 %v544, 4294901760
  %v1118 = vsub.f32 %v544, %v1117
  %v1119 = vand.u32 %v1118, 4294901760
  %v1120 = vsub.f32 %v1118, %v1119
  %v1121 = vand.u32 %v1120, 4294901760
  %1122 = vmatprep.subr.mxu0 %v1121
  %v1123 = vand.u32 %v543, 4294901760
  %v1124 = vsub.f32 %v543, %v1123
  %v1125 = vand.u32 %v1124, 4294901760
  %v1126 = vsub.f32 %v1124, %v1125
  %v1127 = vand.u32 %v1126, 4294901760
  %1128 = vmatpush1.msra.mxu0 %v1127
  %v1129 = vand.u32 %v548, 4294901760
  %v1130 = vsub.f32 %v548, %v1129
  %v1131 = vand.u32 %v1130, 4294901760
  %v1132 = vsub.f32 %v1130, %v1131
  %v1133 = vand.u32 %v1132, 4294901760
  %1134 = vmatprep.subr.mxu0 %v1133
  %v1135 = vand.u32 %v547, 4294901760
  %v1136 = vsub.f32 %v547, %v1135
  %v1137 = vand.u32 %v1136, 4294901760
  %v1138 = vsub.f32 %v1136, %v1137
  %v1139 = vand.u32 %v1138, 4294901760
  %1140 = vmatpush1.msra.mxu0 %v1139
  %v1141 = vand.u32 %v552, 4294901760
  %v1142 = vsub.f32 %v552, %v1141
  %v1143 = vand.u32 %v1142, 4294901760
  %v1144 = vsub.f32 %v1142, %v1143
  %v1145 = vand.u32 %v1144, 4294901760
  %1146 = vmatprep.subr.mxu0 %v1145
  %v1147 = vand.u32 %v551, 4294901760
  %v1148 = vsub.f32 %v551, %v1147
  %v1149 = vand.u32 %v1148, 4294901760
  %v1150 = vsub.f32 %v1148, %v1149
  %v1151 = vand.u32 %v1150, 4294901760
  %1152 = vmatpush1.msra.mxu0 %v1151
  %v1153 = vand.u32 %v556, 4294901760
  %v1154 = vsub.f32 %v556, %v1153
  %v1155 = vand.u32 %v1154, 4294901760
  %v1156 = vsub.f32 %v1154, %v1155
  %v1157 = vand.u32 %v1156, 4294901760
  %1158 = vmatprep.subr.mxu0 %v1157
  %v1159 = vand.u32 %v555, 4294901760
  %v1160 = vsub.f32 %v555, %v1159
  %v1161 = vand.u32 %v1160, 4294901760
  %v1162 = vsub.f32 %v1160, %v1161
  %v1163 = vand.u32 %v1162, 4294901760
  %1164 = vmatpush1.msra.mxu0 %v1163
  %v1165 = vand.u32 %v560, 4294901760
  %v1166 = vsub.f32 %v560, %v1165
  %v1167 = vand.u32 %v1166, 4294901760
  %v1168 = vsub.f32 %v1166, %v1167
  %v1169 = vand.u32 %v1168, 4294901760
  %1170 = vmatprep.subr.mxu0 %v1169
  %v1171 = vand.u32 %v559, 4294901760
  %v1172 = vsub.f32 %v559, %v1171
  %v1173 = vand.u32 %v1172, 4294901760
  %v1174 = vsub.f32 %v1172, %v1173
  %v1175 = vand.u32 %v1174, 4294901760
  %1176 = vmatpush1.msra.mxu0 %v1175
  %v1177 = vand.u32 %v564, 4294901760
  %v1178 = vsub.f32 %v564, %v1177
  %v1179 = vand.u32 %v1178, 4294901760
  %v1180 = vsub.f32 %v1178, %v1179
  %v1181 = vand.u32 %v1180, 4294901760
  %1182 = vmatprep.subr.mxu0 %v1181
  %v1183 = vand.u32 %v563, 4294901760
  %v1184 = vsub.f32 %v563, %v1183
  %v1185 = vand.u32 %v1184, 4294901760
  %v1186 = vsub.f32 %v1184, %v1185
  %v1187 = vand.u32 %v1186, 4294901760
  %1188 = vmatpush1.msra.mxu0 %v1187
  %v1189 = vand.u32 %v568, 4294901760
  %v1190 = vsub.f32 %v568, %v1189
  %v1191 = vand.u32 %v1190, 4294901760
  %v1192 = vsub.f32 %v1190, %v1191
  %v1193 = vand.u32 %v1192, 4294901760
  %1194 = vmatprep.subr.mxu0 %v1193
  %v1195 = vand.u32 %v567, 4294901760
  %v1196 = vsub.f32 %v567, %v1195
  %v1197 = vand.u32 %v1196, 4294901760
  %v1198 = vsub.f32 %v1196, %v1197
  %v1199 = vand.u32 %v1198, 4294901760
  %1200 = vmatpush1.msra.mxu0 %v1199
  %v1201 = vand.u32 %v572, 4294901760
  %v1202 = vsub.f32 %v572, %v1201
  %v1203 = vand.u32 %v1202, 4294901760
  %v1204 = vsub.f32 %v1202, %v1203
  %v1205 = vand.u32 %v1204, 4294901760
  %1206 = vmatprep.subr.mxu0 %v1205
  %v1207 = vand.u32 %v571, 4294901760
  %v1208 = vsub.f32 %v571, %v1207
  %v1209 = vand.u32 %v1208, 4294901760
  %v1210 = vsub.f32 %v1208, %v1209
  %v1211 = vand.u32 %v1210, 4294901760
  %1212 = vmatpush1.msra.mxu0 %v1211
  %v1213 = vand.u32 %v576, 4294901760
  %v1214 = vsub.f32 %v576, %v1213
  %v1215 = vand.u32 %v1214, 4294901760
  %v1216 = vsub.f32 %v1214, %v1215
  %v1217 = vand.u32 %v1216, 4294901760
  %1218 = vmatprep.subr.mxu0 %v1217
  %v1219 = vand.u32 %v575, 4294901760
  %v1220 = vsub.f32 %v575, %v1219
  %v1221 = vand.u32 %v1220, 4294901760
  %v1222 = vsub.f32 %v1220, %v1221
  %v1223 = vand.u32 %v1222, 4294901760
  %1224 = vmatpush1.msra.mxu0 %v1223
  %v1225 = vand.u32 %v580, 4294901760
  %v1226 = vsub.f32 %v580, %v1225
  %v1227 = vand.u32 %v1226, 4294901760
  %v1228 = vsub.f32 %v1226, %v1227
  %v1229 = vand.u32 %v1228, 4294901760
  %1230 = vmatprep.subr.mxu0 %v1229
  %v1231 = vand.u32 %v579, 4294901760
  %v1232 = vsub.f32 %v579, %v1231
  %v1233 = vand.u32 %v1232, 4294901760
  %v1234 = vsub.f32 %v1232, %v1233
  %v1235 = vand.u32 %v1234, 4294901760
  %1236 = vmatpush1.msra.mxu0 %v1235
  %v1237 = vand.u32 %v584, 4294901760
  %v1238 = vsub.f32 %v584, %v1237
  %v1239 = vand.u32 %v1238, 4294901760
  %v1240 = vsub.f32 %v1238, %v1239
  %v1241 = vand.u32 %v1240, 4294901760
  %1242 = vmatprep.subr.mxu0 %v1241
  %v1243 = vand.u32 %v583, 4294901760
  %v1244 = vsub.f32 %v583, %v1243
  %v1245 = vand.u32 %v1244, 4294901760
  %v1246 = vsub.f32 %v1244, %v1245
  %v1247 = vand.u32 %v1246, 4294901760
  %1248 = vmatpush1.msra.mxu0 %v1247
  %v1249 = vand.u32 %v588, 4294901760
  %v1250 = vsub.f32 %v588, %v1249
  %v1251 = vand.u32 %v1250, 4294901760
  %v1252 = vsub.f32 %v1250, %v1251
  %v1253 = vand.u32 %v1252, 4294901760
  %1254 = vmatprep.subr.mxu0 %v1253
  %v1255 = vand.u32 %v587, 4294901760
  %v1256 = vsub.f32 %v587, %v1255
  %v1257 = vand.u32 %v1256, 4294901760
  %v1258 = vsub.f32 %v1256, %v1257
  %v1259 = vand.u32 %v1258, 4294901760
  %1260 = vmatpush1.msra.mxu0 %v1259
  %v1261 = vand.u32 %v592, 4294901760
  %v1262 = vsub.f32 %v592, %v1261
  %v1263 = vand.u32 %v1262, 4294901760
  %v1264 = vsub.f32 %v1262, %v1263
  %v1265 = vand.u32 %v1264, 4294901760
  %1266 = vmatprep.subr.mxu0 %v1265
  %v1267 = vand.u32 %v591, 4294901760
  %v1268 = vsub.f32 %v591, %v1267
  %v1269 = vand.u32 %v1268, 4294901760
  %v1270 = vsub.f32 %v1268, %v1269
  %v1271 = vand.u32 %v1270, 4294901760
  %1272 = vmatpush1.msra.mxu0 %v1271
  %v1273 = vand.u32 %v596, 4294901760
  %v1274 = vsub.f32 %v596, %v1273
  %v1275 = vand.u32 %v1274, 4294901760
  %v1276 = vsub.f32 %v1274, %v1275
  %v1277 = vand.u32 %v1276, 4294901760
  %1278 = vmatprep.subr.mxu0 %v1277
  %v1279 = vand.u32 %v595, 4294901760
  %v1280 = vsub.f32 %v595, %v1279
  %v1281 = vand.u32 %v1280, 4294901760
  %v1282 = vsub.f32 %v1280, %v1281
  %v1283 = vand.u32 %v1282, 4294901760
  %1284 = vmatpush1.msra.mxu0 %v1283
  %v1285 = vand.u32 %v600, 4294901760
  %v1286 = vsub.f32 %v600, %v1285
  %v1287 = vand.u32 %v1286, 4294901760
  %v1288 = vsub.f32 %v1286, %v1287
  %v1289 = vand.u32 %v1288, 4294901760
  %1290 = vmatprep.subr.mxu0 %v1289
  %v1291 = vand.u32 %v599, 4294901760
  %v1292 = vsub.f32 %v599, %v1291
  %v1293 = vand.u32 %v1292, 4294901760
  %v1294 = vsub.f32 %v1292, %v1293
  %v1295 = vand.u32 %v1294, 4294901760
  %1296 = vmatpush1.msra.mxu0 %v1295
  %v1297 = vand.u32 %v604, 4294901760
  %v1298 = vsub.f32 %v604, %v1297
  %v1299 = vand.u32 %v1298, 4294901760
  %v1300 = vsub.f32 %v1298, %v1299
  %v1301 = vand.u32 %v1300, 4294901760
  %1302 = vmatprep.subr.mxu0 %v1301
  %v1303 = vand.u32 %v603, 4294901760
  %v1304 = vsub.f32 %v603, %v1303
  %v1305 = vand.u32 %v1304, 4294901760
  %v1306 = vsub.f32 %v1304, %v1305
  %v1307 = vand.u32 %v1306, 4294901760
  %1308 = vmatpush1.msra.mxu0 %v1307
  %v1309 = vand.u32 %v608, 4294901760
  %v1310 = vsub.f32 %v608, %v1309
  %v1311 = vand.u32 %v1310, 4294901760
  %v1312 = vsub.f32 %v1310, %v1311
  %v1313 = vand.u32 %v1312, 4294901760
  %1314 = vmatprep.subr.mxu0 %v1313
  %v1315 = vand.u32 %v607, 4294901760
  %v1316 = vsub.f32 %v607, %v1315
  %v1317 = vand.u32 %v1316, 4294901760
  %v1318 = vsub.f32 %v1316, %v1317
  %v1319 = vand.u32 %v1318, 4294901760
  %1320 = vmatpush1.msra.mxu0 %v1319
  %v1321 = vand.u32 %v612, 4294901760
  %v1322 = vsub.f32 %v612, %v1321
  %v1323 = vand.u32 %v1322, 4294901760
  %v1324 = vsub.f32 %v1322, %v1323
  %v1325 = vand.u32 %v1324, 4294901760
  %1326 = vmatprep.subr.mxu0 %v1325
  %v1327 = vand.u32 %v611, 4294901760
  %v1328 = vsub.f32 %v611, %v1327
  %v1329 = vand.u32 %v1328, 4294901760
  %v1330 = vsub.f32 %v1328, %v1329
  %v1331 = vand.u32 %v1330, 4294901760
  %1332 = vmatpush1.msra.mxu0 %v1331
  %v1333 = vand.u32 %v460, 4294901760
  %1334 = vmatprep.mubr.f32.mxu0 %v1333
  %v1335 = vand.u32 %v459, 4294901760
  %1336 = vmatmul.mubr.f32.gmra.mrb[0].mxu0 %v1335
  %v1337 = vpop.f32.mrb[0].mxu0
  %v1338 = vadd.f32 %v849, %v1337
  %v1339 = vpop.f32.mrb[0].mxu0
  %v1340 = vadd.f32 %v851, %v1339
  %v1341 = vand.u32 %v464, 4294901760
  %1342 = vmatprep.mubr.f32.mxu0 %v1341
  %v1343 = vand.u32 %v463, 4294901760
  %1344 = vmatmul.mubr.f32.gmra.mrb[0].mxu0 %v1343
  %v1345 = vpop.f32.mrb[0].mxu0
  %v1346 = vadd.f32 %v865, %v1345
  %v1347 = vpop.f32.mrb[0].mxu0
  %v1348 = vadd.f32 %v867, %v1347
  %v1349 = vand.u32 %v468, 4294901760
  %1350 = vmatprep.mubr.f32.mxu0 %v1349
  %v1351 = vand.u32 %v467, 4294901760
  %1352 = vmatmul.mubr.f32.gmra.mrb[0].mxu0 %v1351
  %v1353 = vpop.f32.mrb[0].mxu0
  %v1354 = vadd.f32 %v881, %v1353
  %v1355 = vpop.f32.mrb[0].mxu0
  %v1356 = vadd.f32 %v883, %v1355
  %v1357 = vand.u32 %v472, 4294901760
  %1358 = vmatprep.mubr.f32.mxu0 %v1357
  %v1359 = vand.u32 %v471, 4294901760
  %1360 = vmatmul.mubr.f32.gmra.mrb[0].mxu0 %v1359
  %v1361 = vpop.f32.mrb[0].mxu0
  %v1362 = vadd.f32 %v897, %v1361
  %v1363 = vpop.f32.mrb[0].mxu0
  %v1364 = vadd.f32 %v899, %v1363
  %v1365 = vand.u32 %v476, 4294901760
  %1366 = vmatprep.mubr.f32.mxu0 %v1365
  %v1367 = vand.u32 %v475, 4294901760
  %1368 = vmatmul.mubr.f32.gmra.mrb[0].mxu0 %v1367
  %v1369 = vpop.f32.mrb[0].mxu0
  %v1370 = vadd.f32 %v913, %v1369
  %v1371 = vpop.f32.mrb[0].mxu0
  %v1372 = vadd.f32 %v915, %v1371
  %v1373 = vand.u32 %v480, 4294901760
  %1374 = vmatprep.mubr.f32.mxu0 %v1373
  %v1375 = vand.u32 %v479, 4294901760
  %1376 = vmatmul.mubr.f32.gmra.mrb[0].mxu0 %v1375
  %v1377 = vpop.f32.mrb[0].mxu0
  %v1378 = vadd.f32 %v929, %v1377
  %v1379 = vpop.f32.mrb[0].mxu0
  %v1380 = vadd.f32 %v931, %v1379
  %v1381 = vand.u32 %v484, 4294901760
  %1382 = vmatprep.mubr.f32.mxu0 %v1381
  %v1383 = vand.u32 %v483, 4294901760
  %1384 = vmatmul.mubr.f32.gmra.mrb[0].mxu0 %v1383
  %v1385 = vpop.f32.mrb[0].mxu0
  %v1386 = vadd.f32 %v945, %v1385
  %v1387 = vpop.f32.mrb[0].mxu0
  %v1388 = vadd.f32 %v947, %v1387
  %1389 = vdwg.mxu0
  %v1390 = vand.u32 %v488, 4294901760
  %v1391 = vsub.f32 %v488, %v1390
  %1392 = vmatprep.subr.mxu0 %v1391
  %v1393 = vand.u32 %v487, 4294901760
  %v1394 = vsub.f32 %v487, %v1393
  %1395 = vmatpush1.msra.mxu0 %v1394
  %v1396 = vand.u32 %v492, 4294901760
  %v1397 = vsub.f32 %v492, %v1396
  %1398 = vmatprep.subr.mxu0 %v1397
  %v1399 = vand.u32 %v491, 4294901760
  %v1400 = vsub.f32 %v491, %v1399
  %1401 = vmatpush1.msra.mxu0 %v1400
  %v1402 = vand.u32 %v496, 4294901760
  %v1403 = vsub.f32 %v496, %v1402
  %1404 = vmatprep.subr.mxu0 %v1403
  %v1405 = vand.u32 %v495, 4294901760
  %v1406 = vsub.f32 %v495, %v1405
  %1407 = vmatpush1.msra.mxu0 %v1406
  %v1408 = vand.u32 %v500, 4294901760
  %v1409 = vsub.f32 %v500, %v1408
  %1410 = vmatprep.subr.mxu0 %v1409
  %v1411 = vand.u32 %v499, 4294901760
  %v1412 = vsub.f32 %v499, %v1411
  %1413 = vmatpush1.msra.mxu0 %v1412
  %v1414 = vand.u32 %v504, 4294901760
  %v1415 = vsub.f32 %v504, %v1414
  %1416 = vmatprep.subr.mxu0 %v1415
  %v1417 = vand.u32 %v503, 4294901760
  %v1418 = vsub.f32 %v503, %v1417
  %1419 = vmatpush1.msra.mxu0 %v1418
  %v1420 = vand.u32 %v508, 4294901760
  %v1421 = vsub.f32 %v508, %v1420
  %1422 = vmatprep.subr.mxu0 %v1421
  %v1423 = vand.u32 %v507, 4294901760
  %v1424 = vsub.f32 %v507, %v1423
  %1425 = vmatpush1.msra.mxu0 %v1424
  %v1426 = vand.u32 %v512, 4294901760
  %v1427 = vsub.f32 %v512, %v1426
  %1428 = vmatprep.subr.mxu0 %v1427
  %v1429 = vand.u32 %v511, 4294901760
  %v1430 = vsub.f32 %v511, %v1429
  %1431 = vmatpush1.msra.mxu0 %v1430
  %v1432 = vand.u32 %v516, 4294901760
  %v1433 = vsub.f32 %v516, %v1432
  %1434 = vmatprep.subr.mxu0 %v1433
  %v1435 = vand.u32 %v515, 4294901760
  %v1436 = vsub.f32 %v515, %v1435
  %1437 = vmatpush1.msra.mxu0 %v1436
  %v1438 = vand.u32 %v520, 4294901760
  %v1439 = vsub.f32 %v520, %v1438
  %1440 = vmatprep.subr.mxu0 %v1439
  %v1441 = vand.u32 %v519, 4294901760
  %v1442 = vsub.f32 %v519, %v1441
  %1443 = vmatpush1.msra.mxu0 %v1442
  %v1444 = vand.u32 %v524, 4294901760
  %v1445 = vsub.f32 %v524, %v1444
  %1446 = vmatprep.subr.mxu0 %v1445
  %v1447 = vand.u32 %v523, 4294901760
  %v1448 = vsub.f32 %v523, %v1447
  %1449 = vmatpush1.msra.mxu0 %v1448
  %v1450 = vand.u32 %v528, 4294901760
  %v1451 = vsub.f32 %v528, %v1450
  %1452 = vmatprep.subr.mxu0 %v1451
  %v1453 = vand.u32 %v527, 4294901760
  %v1454 = vsub.f32 %v527, %v1453
  %1455 = vmatpush1.msra.mxu0 %v1454
  %v1456 = vand.u32 %v532, 4294901760
  %v1457 = vsub.f32 %v532, %v1456
  %1458 = vmatprep.subr.mxu0 %v1457
  %v1459 = vand.u32 %v531, 4294901760
  %v1460 = vsub.f32 %v531, %v1459
  %1461 = vmatpush1.msra.mxu0 %v1460
  %v1462 = vand.u32 %v536, 4294901760
  %v1463 = vsub.f32 %v536, %v1462
  %1464 = vmatprep.subr.mxu0 %v1463
  %v1465 = vand.u32 %v535, 4294901760
  %v1466 = vsub.f32 %v535, %v1465
  %1467 = vmatpush1.msra.mxu0 %v1466
  %v1468 = vand.u32 %v540, 4294901760
  %v1469 = vsub.f32 %v540, %v1468
  %1470 = vmatprep.subr.mxu0 %v1469
  %v1471 = vand.u32 %v539, 4294901760
  %v1472 = vsub.f32 %v539, %v1471
  %1473 = vmatpush1.msra.mxu0 %v1472
  %v1474 = vand.u32 %v544, 4294901760
  %v1475 = vsub.f32 %v544, %v1474
  %1476 = vmatprep.subr.mxu0 %v1475
  %v1477 = vand.u32 %v543, 4294901760
  %v1478 = vsub.f32 %v543, %v1477
  %1479 = vmatpush1.msra.mxu0 %v1478
  %v1480 = vand.u32 %v548, 4294901760
  %v1481 = vsub.f32 %v548, %v1480
  %1482 = vmatprep.subr.mxu0 %v1481
  %v1483 = vand.u32 %v547, 4294901760
  %v1484 = vsub.f32 %v547, %v1483
  %1485 = vmatpush1.msra.mxu0 %v1484
  %v1486 = vand.u32 %v552, 4294901760
  %v1487 = vsub.f32 %v552, %v1486
  %1488 = vmatprep.subr.mxu0 %v1487
  %v1489 = vand.u32 %v551, 4294901760
  %v1490 = vsub.f32 %v551, %v1489
  %1491 = vmatpush1.msra.mxu0 %v1490
  %v1492 = vand.u32 %v556, 4294901760
  %v1493 = vsub.f32 %v556, %v1492
  %1494 = vmatprep.subr.mxu0 %v1493
  %v1495 = vand.u32 %v555, 4294901760
  %v1496 = vsub.f32 %v555, %v1495
  %1497 = vmatpush1.msra.mxu0 %v1496
  %v1498 = vand.u32 %v560, 4294901760
  %v1499 = vsub.f32 %v560, %v1498
  %1500 = vmatprep.subr.mxu0 %v1499
  %v1501 = vand.u32 %v559, 4294901760
  %v1502 = vsub.f32 %v559, %v1501
  %1503 = vmatpush1.msra.mxu0 %v1502
  %v1504 = vand.u32 %v564, 4294901760
  %v1505 = vsub.f32 %v564, %v1504
  %1506 = vmatprep.subr.mxu0 %v1505
  %v1507 = vand.u32 %v563, 4294901760
  %v1508 = vsub.f32 %v563, %v1507
  %1509 = vmatpush1.msra.mxu0 %v1508
  %v1510 = vand.u32 %v568, 4294901760
  %v1511 = vsub.f32 %v568, %v1510
  %1512 = vmatprep.subr.mxu0 %v1511
  %v1513 = vand.u32 %v567, 4294901760
  %v1514 = vsub.f32 %v567, %v1513
  %1515 = vmatpush1.msra.mxu0 %v1514
  %v1516 = vand.u32 %v572, 4294901760
  %v1517 = vsub.f32 %v572, %v1516
  %1518 = vmatprep.subr.mxu0 %v1517
  %v1519 = vand.u32 %v571, 4294901760
  %v1520 = vsub.f32 %v571, %v1519
  %1521 = vmatpush1.msra.mxu0 %v1520
  %v1522 = vand.u32 %v576, 4294901760
  %v1523 = vsub.f32 %v576, %v1522
  %1524 = vmatprep.subr.mxu0 %v1523
  %v1525 = vand.u32 %v575, 4294901760
  %v1526 = vsub.f32 %v575, %v1525
  %1527 = vmatpush1.msra.mxu0 %v1526
  %v1528 = vand.u32 %v580, 4294901760
  %v1529 = vsub.f32 %v580, %v1528
  %1530 = vmatprep.subr.mxu0 %v1529
  %v1531 = vand.u32 %v579, 4294901760
  %v1532 = vsub.f32 %v579, %v1531
  %1533 = vmatpush1.msra.mxu0 %v1532
  %v1534 = vand.u32 %v584, 4294901760
  %v1535 = vsub.f32 %v584, %v1534
  %1536 = vmatprep.subr.mxu0 %v1535
  %v1537 = vand.u32 %v583, 4294901760
  %v1538 = vsub.f32 %v583, %v1537
  %1539 = vmatpush1.msra.mxu0 %v1538
  %v1540 = vand.u32 %v588, 4294901760
  %v1541 = vsub.f32 %v588, %v1540
  %1542 = vmatprep.subr.mxu0 %v1541
  %v1543 = vand.u32 %v587, 4294901760
  %v1544 = vsub.f32 %v587, %v1543
  %1545 = vmatpush1.msra.mxu0 %v1544
  %v1546 = vand.u32 %v592, 4294901760
  %v1547 = vsub.f32 %v592, %v1546
  %1548 = vmatprep.subr.mxu0 %v1547
  %v1549 = vand.u32 %v591, 4294901760
  %v1550 = vsub.f32 %v591, %v1549
  %1551 = vmatpush1.msra.mxu0 %v1550
  %v1552 = vand.u32 %v596, 4294901760
  %v1553 = vsub.f32 %v596, %v1552
  %1554 = vmatprep.subr.mxu0 %v1553
  %v1555 = vand.u32 %v595, 4294901760
  %v1556 = vsub.f32 %v595, %v1555
  %1557 = vmatpush1.msra.mxu0 %v1556
  %v1558 = vand.u32 %v600, 4294901760
  %v1559 = vsub.f32 %v600, %v1558
  %1560 = vmatprep.subr.mxu0 %v1559
  %v1561 = vand.u32 %v599, 4294901760
  %v1562 = vsub.f32 %v599, %v1561
  %1563 = vmatpush1.msra.mxu0 %v1562
  %v1564 = vand.u32 %v604, 4294901760
  %v1565 = vsub.f32 %v604, %v1564
  %1566 = vmatprep.subr.mxu0 %v1565
  %v1567 = vand.u32 %v603, 4294901760
  %v1568 = vsub.f32 %v603, %v1567
  %1569 = vmatpush1.msra.mxu0 %v1568
  %v1570 = vand.u32 %v608, 4294901760
  %v1571 = vsub.f32 %v608, %v1570
  %1572 = vmatprep.subr.mxu0 %v1571
  %v1573 = vand.u32 %v607, 4294901760
  %v1574 = vsub.f32 %v607, %v1573
  %1575 = vmatpush1.msra.mxu0 %v1574
  %v1576 = vand.u32 %v612, 4294901760
  %v1577 = vsub.f32 %v612, %v1576
  %1578 = vmatprep.subr.mxu0 %v1577
  %v1579 = vand.u32 %v611, 4294901760
  %v1580 = vsub.f32 %v611, %v1579
  %1581 = vmatpush1.msra.mxu0 %v1580
  %v1582 = vand.u32 %v460, 4294901760
  %v1583 = vsub.f32 %v460, %v1582
  %1584 = vmatprep.mubr.f32.mxu0 %v1583
  %v1585 = vand.u32 %v459, 4294901760
  %v1586 = vsub.f32 %v459, %v1585
  %1587 = vmatmul.mubr.f32.gmra.mrb[0].mxu0 %v1586
  %v1588 = vpop.f32.mrb[0].mxu0
  %v1589 = vadd.f32 %v1338, %v1588
  %v1590 = vpop.f32.mrb[0].mxu0
  %v1591 = vadd.f32 %v1340, %v1590
  %v1592 = vand.u32 %v464, 4294901760
  %v1593 = vsub.f32 %v464, %v1592
  %1594 = vmatprep.mubr.f32.mxu0 %v1593
  %v1595 = vand.u32 %v463, 4294901760
  %v1596 = vsub.f32 %v463, %v1595
  %1597 = vmatmul.mubr.f32.gmra.mrb[0].mxu0 %v1596
  %v1598 = vpop.f32.mrb[0].mxu0
  %v1599 = vadd.f32 %v1346, %v1598
  %v1600 = vpop.f32.mrb[0].mxu0
  %v1601 = vadd.f32 %v1348, %v1600
  %v1602 = vand.u32 %v468, 4294901760
  %v1603 = vsub.f32 %v468, %v1602
  %1604 = vmatprep.mubr.f32.mxu0 %v1603
  %v1605 = vand.u32 %v467, 4294901760
  %v1606 = vsub.f32 %v467, %v1605
  %1607 = vmatmul.mubr.f32.gmra.mrb[0].mxu0 %v1606
  %v1608 = vpop.f32.mrb[0].mxu0
  %v1609 = vadd.f32 %v1354, %v1608
  %v1610 = vpop.f32.mrb[0].mxu0
  %v1611 = vadd.f32 %v1356, %v1610
  %v1612 = vand.u32 %v472, 4294901760
  %v1613 = vsub.f32 %v472, %v1612
  %1614 = vmatprep.mubr.f32.mxu0 %v1613
  %v1615 = vand.u32 %v471, 4294901760
  %v1616 = vsub.f32 %v471, %v1615
  %1617 = vmatmul.mubr.f32.gmra.mrb[0].mxu0 %v1616
  %v1618 = vpop.f32.mrb[0].mxu0
  %v1619 = vadd.f32 %v1362, %v1618
  %v1620 = vpop.f32.mrb[0].mxu0
  %v1621 = vadd.f32 %v1364, %v1620
  %v1622 = vand.u32 %v476, 4294901760
  %v1623 = vsub.f32 %v476, %v1622
  %1624 = vmatprep.mubr.f32.mxu0 %v1623
  %v1625 = vand.u32 %v475, 4294901760
  %v1626 = vsub.f32 %v475, %v1625
  %1627 = vmatmul.mubr.f32.gmra.mrb[0].mxu0 %v1626
  %v1628 = vpop.f32.mrb[0].mxu0
  %v1629 = vadd.f32 %v1370, %v1628
  %v1630 = vpop.f32.mrb[0].mxu0
  %v1631 = vadd.f32 %v1372, %v1630
  %v1632 = vand.u32 %v480, 4294901760
  %v1633 = vsub.f32 %v480, %v1632
  %1634 = vmatprep.mubr.f32.mxu0 %v1633
  %v1635 = vand.u32 %v479, 4294901760
  %v1636 = vsub.f32 %v479, %v1635
  %1637 = vmatmul.mubr.f32.gmra.mrb[0].mxu0 %v1636
  %v1638 = vpop.f32.mrb[0].mxu0
  %v1639 = vadd.f32 %v1378, %v1638
  %v1640 = vpop.f32.mrb[0].mxu0
  %v1641 = vadd.f32 %v1380, %v1640
  %v1642 = vand.u32 %v484, 4294901760
  %v1643 = vsub.f32 %v484, %v1642
  %1644 = vmatprep.mubr.f32.mxu0 %v1643
  %v1645 = vand.u32 %v483, 4294901760
  %v1646 = vsub.f32 %v483, %v1645
  %1647 = vmatmul.mubr.f32.gmra.mrb[0].mxu0 %v1646
  %v1648 = vpop.f32.mrb[0].mxu0
  %v1649 = vadd.f32 %v1386, %v1648
  %v1650 = vpop.f32.mrb[0].mxu0
  %v1651 = vadd.f32 %v1388, %v1650
  %1652 = vdwg.mxu0
  %v1653 = vand.u32 %v488, 4294901760
  %1654 = vmatprep.subr.mxu0 %v1653
  %v1655 = vand.u32 %v487, 4294901760
  %1656 = vmatpush1.msra.mxu0 %v1655
  %v1657 = vand.u32 %v492, 4294901760
  %1658 = vmatprep.subr.mxu0 %v1657
  %v1659 = vand.u32 %v491, 4294901760
  %1660 = vmatpush1.msra.mxu0 %v1659
  %v1661 = vand.u32 %v496, 4294901760
  %1662 = vmatprep.subr.mxu0 %v1661
  %v1663 = vand.u32 %v495, 4294901760
  %1664 = vmatpush1.msra.mxu0 %v1663
  %v1665 = vand.u32 %v500, 4294901760
  %1666 = vmatprep.subr.mxu0 %v1665
  %v1667 = vand.u32 %v499, 4294901760
  %1668 = vmatpush1.msra.mxu0 %v1667
  %v1669 = vand.u32 %v504, 4294901760
  %1670 = vmatprep.subr.mxu0 %v1669
  %v1671 = vand.u32 %v503, 4294901760
  %1672 = vmatpush1.msra.mxu0 %v1671
  %v1673 = vand.u32 %v508, 4294901760
  %1674 = vmatprep.subr.mxu0 %v1673
  %v1675 = vand.u32 %v507, 4294901760
  %1676 = vmatpush1.msra.mxu0 %v1675
  %v1677 = vand.u32 %v512, 4294901760
  %1678 = vmatprep.subr.mxu0 %v1677
  %v1679 = vand.u32 %v511, 4294901760
  %1680 = vmatpush1.msra.mxu0 %v1679
  %v1681 = vand.u32 %v516, 4294901760
  %1682 = vmatprep.subr.mxu0 %v1681
  %v1683 = vand.u32 %v515, 4294901760
  %1684 = vmatpush1.msra.mxu0 %v1683
  %v1685 = vand.u32 %v520, 4294901760
  %1686 = vmatprep.subr.mxu0 %v1685
  %v1687 = vand.u32 %v519, 4294901760
  %1688 = vmatpush1.msra.mxu0 %v1687
  %v1689 = vand.u32 %v524, 4294901760
  %1690 = vmatprep.subr.mxu0 %v1689
  %v1691 = vand.u32 %v523, 4294901760
  %1692 = vmatpush1.msra.mxu0 %v1691
  %v1693 = vand.u32 %v528, 4294901760
  %1694 = vmatprep.subr.mxu0 %v1693
  %v1695 = vand.u32 %v527, 4294901760
  %1696 = vmatpush1.msra.mxu0 %v1695
  %v1697 = vand.u32 %v532, 4294901760
  %1698 = vmatprep.subr.mxu0 %v1697
  %v1699 = vand.u32 %v531, 4294901760
  %1700 = vmatpush1.msra.mxu0 %v1699
  %v1701 = vand.u32 %v536, 4294901760
  %1702 = vmatprep.subr.mxu0 %v1701
  %v1703 = vand.u32 %v535, 4294901760
  %1704 = vmatpush1.msra.mxu0 %v1703
  %v1705 = vand.u32 %v540, 4294901760
  %1706 = vmatprep.subr.mxu0 %v1705
  %v1707 = vand.u32 %v539, 4294901760
  %1708 = vmatpush1.msra.mxu0 %v1707
  %v1709 = vand.u32 %v544, 4294901760
  %1710 = vmatprep.subr.mxu0 %v1709
  %v1711 = vand.u32 %v543, 4294901760
  %1712 = vmatpush1.msra.mxu0 %v1711
  %v1713 = vand.u32 %v548, 4294901760
  %1714 = vmatprep.subr.mxu0 %v1713
  %v1715 = vand.u32 %v547, 4294901760
  %1716 = vmatpush1.msra.mxu0 %v1715
  %v1717 = vand.u32 %v552, 4294901760
  %1718 = vmatprep.subr.mxu0 %v1717
  %v1719 = vand.u32 %v551, 4294901760
  %1720 = vmatpush1.msra.mxu0 %v1719
  %v1721 = vand.u32 %v556, 4294901760
  %1722 = vmatprep.subr.mxu0 %v1721
  %v1723 = vand.u32 %v555, 4294901760
  %1724 = vmatpush1.msra.mxu0 %v1723
  %v1725 = vand.u32 %v560, 4294901760
  %1726 = vmatprep.subr.mxu0 %v1725
  %v1727 = vand.u32 %v559, 4294901760
  %1728 = vmatpush1.msra.mxu0 %v1727
  %v1729 = vand.u32 %v564, 4294901760
  %1730 = vmatprep.subr.mxu0 %v1729
  %v1731 = vand.u32 %v563, 4294901760
  %1732 = vmatpush1.msra.mxu0 %v1731
  %v1733 = vand.u32 %v568, 4294901760
  %1734 = vmatprep.subr.mxu0 %v1733
  %v1735 = vand.u32 %v567, 4294901760
  %1736 = vmatpush1.msra.mxu0 %v1735
  %v1737 = vand.u32 %v572, 4294901760
  %1738 = vmatprep.subr.mxu0 %v1737
  %v1739 = vand.u32 %v571, 4294901760
  %1740 = vmatpush1.msra.mxu0 %v1739
  %v1741 = vand.u32 %v576, 4294901760
  %1742 = vmatprep.subr.mxu0 %v1741
  %v1743 = vand.u32 %v575, 4294901760
  %1744 = vmatpush1.msra.mxu0 %v1743
  %v1745 = vand.u32 %v580, 4294901760
  %1746 = vmatprep.subr.mxu0 %v1745
  %v1747 = vand.u32 %v579, 4294901760
  %1748 = vmatpush1.msra.mxu0 %v1747
  %v1749 = vand.u32 %v584, 4294901760
  %1750 = vmatprep.subr.mxu0 %v1749
  %v1751 = vand.u32 %v583, 4294901760
  %1752 = vmatpush1.msra.mxu0 %v1751
  %v1753 = vand.u32 %v588, 4294901760
  %1754 = vmatprep.subr.mxu0 %v1753
  %v1755 = vand.u32 %v587, 4294901760
  %1756 = vmatpush1.msra.mxu0 %v1755
  %v1757 = vand.u32 %v592, 4294901760
  %1758 = vmatprep.subr.mxu0 %v1757
  %v1759 = vand.u32 %v591, 4294901760
  %1760 = vmatpush1.msra.mxu0 %v1759
  %v1761 = vand.u32 %v596, 4294901760
  %1762 = vmatprep.subr.mxu0 %v1761
  %v1763 = vand.u32 %v595, 4294901760
  %1764 = vmatpush1.msra.mxu0 %v1763
  %v1765 = vand.u32 %v600, 4294901760
  %1766 = vmatprep.subr.mxu0 %v1765
  %v1767 = vand.u32 %v599, 4294901760
  %1768 = vmatpush1.msra.mxu0 %v1767
  %v1769 = vand.u32 %v604, 4294901760
  %1770 = vmatprep.subr.mxu0 %v1769
  %v1771 = vand.u32 %v603, 4294901760
  %1772 = vmatpush1.msra.mxu0 %v1771
  %v1773 = vand.u32 %v608, 4294901760
  %1774 = vmatprep.subr.mxu0 %v1773
  %v1775 = vand.u32 %v607, 4294901760
  %1776 = vmatpush1.msra.mxu0 %v1775
  %v1777 = vand.u32 %v612, 4294901760
  %1778 = vmatprep.subr.mxu0 %v1777
  %v1779 = vand.u32 %v611, 4294901760
  %1780 = vmatpush1.msra.mxu0 %v1779
  %v1781 = vand.u32 %v460, 4294901760
  %v1782 = vsub.f32 %v460, %v1781
  %v1783 = vand.u32 %v1782, 4294901760
  %1784 = vmatprep.mubr.f32.mxu0 %v1783
  %v1785 = vand.u32 %v459, 4294901760
  %v1786 = vsub.f32 %v459, %v1785
  %v1787 = vand.u32 %v1786, 4294901760
  %1788 = vmatmul.mubr.f32.gmra.mrb[0].mxu0 %v1787
  %v1789 = vpop.f32.mrb[0].mxu0
  %v1790 = vadd.f32 %v1589, %v1789
  %v1791 = vpop.f32.mrb[0].mxu0
  %v1792 = vadd.f32 %v1591, %v1791
  %v1793 = vand.u32 %v464, 4294901760
  %v1794 = vsub.f32 %v464, %v1793
  %v1795 = vand.u32 %v1794, 4294901760
  %1796 = vmatprep.mubr.f32.mxu0 %v1795
  %v1797 = vand.u32 %v463, 4294901760
  %v1798 = vsub.f32 %v463, %v1797
  %v1799 = vand.u32 %v1798, 4294901760
  %1800 = vmatmul.mubr.f32.gmra.mrb[0].mxu0 %v1799
  %v1801 = vpop.f32.mrb[0].mxu0
  %v1802 = vadd.f32 %v1599, %v1801
  %v1803 = vpop.f32.mrb[0].mxu0
  %v1804 = vadd.f32 %v1601, %v1803
  %v1805 = vand.u32 %v468, 4294901760
  %v1806 = vsub.f32 %v468, %v1805
  %v1807 = vand.u32 %v1806, 4294901760
  %1808 = vmatprep.mubr.f32.mxu0 %v1807
  %v1809 = vand.u32 %v467, 4294901760
  %v1810 = vsub.f32 %v467, %v1809
  %v1811 = vand.u32 %v1810, 4294901760
  %1812 = vmatmul.mubr.f32.gmra.mrb[0].mxu0 %v1811
  %v1813 = vpop.f32.mrb[0].mxu0
  %v1814 = vadd.f32 %v1609, %v1813
  %v1815 = vpop.f32.mrb[0].mxu0
  %v1816 = vadd.f32 %v1611, %v1815
  %v1817 = vand.u32 %v472, 4294901760
  %v1818 = vsub.f32 %v472, %v1817
  %v1819 = vand.u32 %v1818, 4294901760
  %1820 = vmatprep.mubr.f32.mxu0 %v1819
  %v1821 = vand.u32 %v471, 4294901760
  %v1822 = vsub.f32 %v471, %v1821
  %v1823 = vand.u32 %v1822, 4294901760
  %1824 = vmatmul.mubr.f32.gmra.mrb[0].mxu0 %v1823
  %v1825 = vpop.f32.mrb[0].mxu0
  %v1826 = vadd.f32 %v1619, %v1825
  %v1827 = vpop.f32.mrb[0].mxu0
  %v1828 = vadd.f32 %v1621, %v1827
  %v1829 = vand.u32 %v476, 4294901760
  %v1830 = vsub.f32 %v476, %v1829
  %v1831 = vand.u32 %v1830, 4294901760
  %1832 = vmatprep.mubr.f32.mxu0 %v1831
  %v1833 = vand.u32 %v475, 4294901760
  %v1834 = vsub.f32 %v475, %v1833
  %v1835 = vand.u32 %v1834, 4294901760
  %1836 = vmatmul.mubr.f32.gmra.mrb[0].mxu0 %v1835
  %v1837 = vpop.f32.mrb[0].mxu0
  %v1838 = vadd.f32 %v1629, %v1837
  %v1839 = vpop.f32.mrb[0].mxu0
  %v1840 = vadd.f32 %v1631, %v1839
  %v1841 = vand.u32 %v480, 4294901760
  %v1842 = vsub.f32 %v480, %v1841
  %v1843 = vand.u32 %v1842, 4294901760
  %1844 = vmatprep.mubr.f32.mxu0 %v1843
  %v1845 = vand.u32 %v479, 4294901760
  %v1846 = vsub.f32 %v479, %v1845
  %v1847 = vand.u32 %v1846, 4294901760
  %1848 = vmatmul.mubr.f32.gmra.mrb[0].mxu0 %v1847
  %v1849 = vpop.f32.mrb[0].mxu0
  %v1850 = vadd.f32 %v1639, %v1849
  %v1851 = vpop.f32.mrb[0].mxu0
  %v1852 = vadd.f32 %v1641, %v1851
  %v1853 = vand.u32 %v484, 4294901760
  %v1854 = vsub.f32 %v484, %v1853
  %v1855 = vand.u32 %v1854, 4294901760
  %1856 = vmatprep.mubr.f32.mxu0 %v1855
  %v1857 = vand.u32 %v483, 4294901760
  %v1858 = vsub.f32 %v483, %v1857
  %v1859 = vand.u32 %v1858, 4294901760
  %1860 = vmatmul.mubr.f32.gmra.mrb[0].mxu0 %v1859
  %v1861 = vpop.f32.mrb[0].mxu0
  %v1862 = vadd.f32 %v1649, %v1861
  %v1863 = vpop.f32.mrb[0].mxu0
  %v1864 = vadd.f32 %v1651, %v1863
  %1865 = vdwg.mxu0
  %v1866 = vand.u32 %v488, 4294901760
  %v1867 = vsub.f32 %v488, %v1866
  %v1868 = vand.u32 %v1867, 4294901760
  %1869 = vmatprep.subr.mxu0 %v1868
  %v1870 = vand.u32 %v487, 4294901760
  %v1871 = vsub.f32 %v487, %v1870
  %v1872 = vand.u32 %v1871, 4294901760
  %1873 = vmatpush1.msra.mxu0 %v1872
  %v1874 = vand.u32 %v492, 4294901760
  %v1875 = vsub.f32 %v492, %v1874
  %v1876 = vand.u32 %v1875, 4294901760
  %1877 = vmatprep.subr.mxu0 %v1876
  %v1878 = vand.u32 %v491, 4294901760
  %v1879 = vsub.f32 %v491, %v1878
  %v1880 = vand.u32 %v1879, 4294901760
  %1881 = vmatpush1.msra.mxu0 %v1880
  %v1882 = vand.u32 %v496, 4294901760
  %v1883 = vsub.f32 %v496, %v1882
  %v1884 = vand.u32 %v1883, 4294901760
  %1885 = vmatprep.subr.mxu0 %v1884
  %v1886 = vand.u32 %v495, 4294901760
  %v1887 = vsub.f32 %v495, %v1886
  %v1888 = vand.u32 %v1887, 4294901760
  %1889 = vmatpush1.msra.mxu0 %v1888
  %v1890 = vand.u32 %v500, 4294901760
  %v1891 = vsub.f32 %v500, %v1890
  %v1892 = vand.u32 %v1891, 4294901760
  %1893 = vmatprep.subr.mxu0 %v1892
  %v1894 = vand.u32 %v499, 4294901760
  %v1895 = vsub.f32 %v499, %v1894
  %v1896 = vand.u32 %v1895, 4294901760
  %1897 = vmatpush1.msra.mxu0 %v1896
  %v1898 = vand.u32 %v504, 4294901760
  %v1899 = vsub.f32 %v504, %v1898
  %v1900 = vand.u32 %v1899, 4294901760
  %1901 = vmatprep.subr.mxu0 %v1900
  %v1902 = vand.u32 %v503, 4294901760
  %v1903 = vsub.f32 %v503, %v1902
  %v1904 = vand.u32 %v1903, 4294901760
  %1905 = vmatpush1.msra.mxu0 %v1904
  %v1906 = vand.u32 %v508, 4294901760
  %v1907 = vsub.f32 %v508, %v1906
  %v1908 = vand.u32 %v1907, 4294901760
  %1909 = vmatprep.subr.mxu0 %v1908
  %v1910 = vand.u32 %v507, 4294901760
  %v1911 = vsub.f32 %v507, %v1910
  %v1912 = vand.u32 %v1911, 4294901760
  %1913 = vmatpush1.msra.mxu0 %v1912
  %v1914 = vand.u32 %v512, 4294901760
  %v1915 = vsub.f32 %v512, %v1914
  %v1916 = vand.u32 %v1915, 4294901760
  %1917 = vmatprep.subr.mxu0 %v1916
  %v1918 = vand.u32 %v511, 4294901760
  %v1919 = vsub.f32 %v511, %v1918
  %v1920 = vand.u32 %v1919, 4294901760
  %1921 = vmatpush1.msra.mxu0 %v1920
  %v1922 = vand.u32 %v516, 4294901760
  %v1923 = vsub.f32 %v516, %v1922
  %v1924 = vand.u32 %v1923, 4294901760
  %1925 = vmatprep.subr.mxu0 %v1924
  %v1926 = vand.u32 %v515, 4294901760
  %v1927 = vsub.f32 %v515, %v1926
  %v1928 = vand.u32 %v1927, 4294901760
  %1929 = vmatpush1.msra.mxu0 %v1928
  %v1930 = vand.u32 %v520, 4294901760
  %v1931 = vsub.f32 %v520, %v1930
  %v1932 = vand.u32 %v1931, 4294901760
  %1933 = vmatprep.subr.mxu0 %v1932
  %v1934 = vand.u32 %v519, 4294901760
  %v1935 = vsub.f32 %v519, %v1934
  %v1936 = vand.u32 %v1935, 4294901760
  %1937 = vmatpush1.msra.mxu0 %v1936
  %v1938 = vand.u32 %v524, 4294901760
  %v1939 = vsub.f32 %v524, %v1938
  %v1940 = vand.u32 %v1939, 4294901760
  %1941 = vmatprep.subr.mxu0 %v1940
  %v1942 = vand.u32 %v523, 4294901760
  %v1943 = vsub.f32 %v523, %v1942
  %v1944 = vand.u32 %v1943, 4294901760
  %1945 = vmatpush1.msra.mxu0 %v1944
  %v1946 = vand.u32 %v528, 4294901760
  %v1947 = vsub.f32 %v528, %v1946
  %v1948 = vand.u32 %v1947, 4294901760
  %1949 = vmatprep.subr.mxu0 %v1948
  %v1950 = vand.u32 %v527, 4294901760
  %v1951 = vsub.f32 %v527, %v1950
  %v1952 = vand.u32 %v1951, 4294901760
  %1953 = vmatpush1.msra.mxu0 %v1952
  %v1954 = vand.u32 %v532, 4294901760
  %v1955 = vsub.f32 %v532, %v1954
  %v1956 = vand.u32 %v1955, 4294901760
  %1957 = vmatprep.subr.mxu0 %v1956
  %v1958 = vand.u32 %v531, 4294901760
  %v1959 = vsub.f32 %v531, %v1958
  %v1960 = vand.u32 %v1959, 4294901760
  %1961 = vmatpush1.msra.mxu0 %v1960
  %v1962 = vand.u32 %v536, 4294901760
  %v1963 = vsub.f32 %v536, %v1962
  %v1964 = vand.u32 %v1963, 4294901760
  %1965 = vmatprep.subr.mxu0 %v1964
  %v1966 = vand.u32 %v535, 4294901760
  %v1967 = vsub.f32 %v535, %v1966
  %v1968 = vand.u32 %v1967, 4294901760
  %1969 = vmatpush1.msra.mxu0 %v1968
  %v1970 = vand.u32 %v540, 4294901760
  %v1971 = vsub.f32 %v540, %v1970
  %v1972 = vand.u32 %v1971, 4294901760
  %1973 = vmatprep.subr.mxu0 %v1972
  %v1974 = vand.u32 %v539, 4294901760
  %v1975 = vsub.f32 %v539, %v1974
  %v1976 = vand.u32 %v1975, 4294901760
  %1977 = vmatpush1.msra.mxu0 %v1976
  %v1978 = vand.u32 %v544, 4294901760
  %v1979 = vsub.f32 %v544, %v1978
  %v1980 = vand.u32 %v1979, 4294901760
  %1981 = vmatprep.subr.mxu0 %v1980
  %v1982 = vand.u32 %v543, 4294901760
  %v1983 = vsub.f32 %v543, %v1982
  %v1984 = vand.u32 %v1983, 4294901760
  %1985 = vmatpush1.msra.mxu0 %v1984
  %v1986 = vand.u32 %v548, 4294901760
  %v1987 = vsub.f32 %v548, %v1986
  %v1988 = vand.u32 %v1987, 4294901760
  %1989 = vmatprep.subr.mxu0 %v1988
  %v1990 = vand.u32 %v547, 4294901760
  %v1991 = vsub.f32 %v547, %v1990
  %v1992 = vand.u32 %v1991, 4294901760
  %1993 = vmatpush1.msra.mxu0 %v1992
  %v1994 = vand.u32 %v552, 4294901760
  %v1995 = vsub.f32 %v552, %v1994
  %v1996 = vand.u32 %v1995, 4294901760
  %1997 = vmatprep.subr.mxu0 %v1996
  %v1998 = vand.u32 %v551, 4294901760
  %v1999 = vsub.f32 %v551, %v1998
  %v2000 = vand.u32 %v1999, 4294901760
  %2001 = vmatpush1.msra.mxu0 %v2000
  %v2002 = vand.u32 %v556, 4294901760
  %v2003 = vsub.f32 %v556, %v2002
  %v2004 = vand.u32 %v2003, 4294901760
  %2005 = vmatprep.subr.mxu0 %v2004
  %v2006 = vand.u32 %v555, 4294901760
  %v2007 = vsub.f32 %v555, %v2006
  %v2008 = vand.u32 %v2007, 4294901760
  %2009 = vmatpush1.msra.mxu0 %v2008
  %v2010 = vand.u32 %v560, 4294901760
  %v2011 = vsub.f32 %v560, %v2010
  %v2012 = vand.u32 %v2011, 4294901760
  %2013 = vmatprep.subr.mxu0 %v2012
  %v2014 = vand.u32 %v559, 4294901760
  %v2015 = vsub.f32 %v559, %v2014
  %v2016 = vand.u32 %v2015, 4294901760
  %2017 = vmatpush1.msra.mxu0 %v2016
  %v2018 = vand.u32 %v564, 4294901760
  %v2019 = vsub.f32 %v564, %v2018
  %v2020 = vand.u32 %v2019, 4294901760
  %2021 = vmatprep.subr.mxu0 %v2020
  %v2022 = vand.u32 %v563, 4294901760
  %v2023 = vsub.f32 %v563, %v2022
  %v2024 = vand.u32 %v2023, 4294901760
  %2025 = vmatpush1.msra.mxu0 %v2024
  %v2026 = vand.u32 %v568, 4294901760
  %v2027 = vsub.f32 %v568, %v2026
  %v2028 = vand.u32 %v2027, 4294901760
  %2029 = vmatprep.subr.mxu0 %v2028
  %v2030 = vand.u32 %v567, 4294901760
  %v2031 = vsub.f32 %v567, %v2030
  %v2032 = vand.u32 %v2031, 4294901760
  %2033 = vmatpush1.msra.mxu0 %v2032
  %v2034 = vand.u32 %v572, 4294901760
  %v2035 = vsub.f32 %v572, %v2034
  %v2036 = vand.u32 %v2035, 4294901760
  %2037 = vmatprep.subr.mxu0 %v2036
  %v2038 = vand.u32 %v571, 4294901760
  %v2039 = vsub.f32 %v571, %v2038
  %v2040 = vand.u32 %v2039, 4294901760
  %2041 = vmatpush1.msra.mxu0 %v2040
  %v2042 = vand.u32 %v576, 4294901760
  %v2043 = vsub.f32 %v576, %v2042
  %v2044 = vand.u32 %v2043, 4294901760
  %2045 = vmatprep.subr.mxu0 %v2044
  %v2046 = vand.u32 %v575, 4294901760
  %v2047 = vsub.f32 %v575, %v2046
  %v2048 = vand.u32 %v2047, 4294901760
  %2049 = vmatpush1.msra.mxu0 %v2048
  %v2050 = vand.u32 %v580, 4294901760
  %v2051 = vsub.f32 %v580, %v2050
  %v2052 = vand.u32 %v2051, 4294901760
  %2053 = vmatprep.subr.mxu0 %v2052
  %v2054 = vand.u32 %v579, 4294901760
  %v2055 = vsub.f32 %v579, %v2054
  %v2056 = vand.u32 %v2055, 4294901760
  %2057 = vmatpush1.msra.mxu0 %v2056
  %v2058 = vand.u32 %v584, 4294901760
  %v2059 = vsub.f32 %v584, %v2058
  %v2060 = vand.u32 %v2059, 4294901760
  %2061 = vmatprep.subr.mxu0 %v2060
  %v2062 = vand.u32 %v583, 4294901760
  %v2063 = vsub.f32 %v583, %v2062
  %v2064 = vand.u32 %v2063, 4294901760
  %2065 = vmatpush1.msra.mxu0 %v2064
  %v2066 = vand.u32 %v588, 4294901760
  %v2067 = vsub.f32 %v588, %v2066
  %v2068 = vand.u32 %v2067, 4294901760
  %2069 = vmatprep.subr.mxu0 %v2068
  %v2070 = vand.u32 %v587, 4294901760
  %v2071 = vsub.f32 %v587, %v2070
  %v2072 = vand.u32 %v2071, 4294901760
  %2073 = vmatpush1.msra.mxu0 %v2072
  %v2074 = vand.u32 %v592, 4294901760
  %v2075 = vsub.f32 %v592, %v2074
  %v2076 = vand.u32 %v2075, 4294901760
  %2077 = vmatprep.subr.mxu0 %v2076
  %v2078 = vand.u32 %v591, 4294901760
  %v2079 = vsub.f32 %v591, %v2078
  %v2080 = vand.u32 %v2079, 4294901760
  %2081 = vmatpush1.msra.mxu0 %v2080
  %v2082 = vand.u32 %v596, 4294901760
  %v2083 = vsub.f32 %v596, %v2082
  %v2084 = vand.u32 %v2083, 4294901760
  %2085 = vmatprep.subr.mxu0 %v2084
  %v2086 = vand.u32 %v595, 4294901760
  %v2087 = vsub.f32 %v595, %v2086
  %v2088 = vand.u32 %v2087, 4294901760
  %2089 = vmatpush1.msra.mxu0 %v2088
  %v2090 = vand.u32 %v600, 4294901760
  %v2091 = vsub.f32 %v600, %v2090
  %v2092 = vand.u32 %v2091, 4294901760
  %2093 = vmatprep.subr.mxu0 %v2092
  %v2094 = vand.u32 %v599, 4294901760
  %v2095 = vsub.f32 %v599, %v2094
  %v2096 = vand.u32 %v2095, 4294901760
  %2097 = vmatpush1.msra.mxu0 %v2096
  %v2098 = vand.u32 %v604, 4294901760
  %v2099 = vsub.f32 %v604, %v2098
  %v2100 = vand.u32 %v2099, 4294901760
  %2101 = vmatprep.subr.mxu0 %v2100
  %v2102 = vand.u32 %v603, 4294901760
  %v2103 = vsub.f32 %v603, %v2102
  %v2104 = vand.u32 %v2103, 4294901760
  %2105 = vmatpush1.msra.mxu0 %v2104
  %v2106 = vand.u32 %v608, 4294901760
  %v2107 = vsub.f32 %v608, %v2106
  %v2108 = vand.u32 %v2107, 4294901760
  %2109 = vmatprep.subr.mxu0 %v2108
  %v2110 = vand.u32 %v607, 4294901760
  %v2111 = vsub.f32 %v607, %v2110
  %v2112 = vand.u32 %v2111, 4294901760
  %2113 = vmatpush1.msra.mxu0 %v2112
  %v2114 = vand.u32 %v612, 4294901760
  %v2115 = vsub.f32 %v612, %v2114
  %v2116 = vand.u32 %v2115, 4294901760
  %2117 = vmatprep.subr.mxu0 %v2116
  %v2118 = vand.u32 %v611, 4294901760
  %v2119 = vsub.f32 %v611, %v2118
  %v2120 = vand.u32 %v2119, 4294901760
  %2121 = vmatpush1.msra.mxu0 %v2120
  %v2122 = vand.u32 %v460, 4294901760
  %2123 = vmatprep.mubr.f32.mxu0 %v2122
  %v2124 = vand.u32 %v459, 4294901760
  %2125 = vmatmul.mubr.f32.gmra.mrb[0].mxu0 %v2124
  %v2126 = vpop.f32.mrb[0].mxu0
  %v2127 = vadd.f32 %v1790, %v2126
  %v2128 = vpop.f32.mrb[0].mxu0
  %v2129 = vadd.f32 %v1792, %v2128
  %v2130 = vand.u32 %v464, 4294901760
  %2131 = vmatprep.mubr.f32.mxu0 %v2130
  %v2132 = vand.u32 %v463, 4294901760
  %2133 = vmatmul.mubr.f32.gmra.mrb[0].mxu0 %v2132
  %v2134 = vpop.f32.mrb[0].mxu0
  %v2135 = vadd.f32 %v1802, %v2134
  %v2136 = vpop.f32.mrb[0].mxu0
  %v2137 = vadd.f32 %v1804, %v2136
  %v2138 = vand.u32 %v468, 4294901760
  %2139 = vmatprep.mubr.f32.mxu0 %v2138
  %v2140 = vand.u32 %v467, 4294901760
  %2141 = vmatmul.mubr.f32.gmra.mrb[0].mxu0 %v2140
  %v2142 = vpop.f32.mrb[0].mxu0
  %v2143 = vadd.f32 %v1814, %v2142
  %v2144 = vpop.f32.mrb[0].mxu0
  %v2145 = vadd.f32 %v1816, %v2144
  %v2146 = vand.u32 %v472, 4294901760
  %2147 = vmatprep.mubr.f32.mxu0 %v2146
  %v2148 = vand.u32 %v471, 4294901760
  %2149 = vmatmul.mubr.f32.gmra.mrb[0].mxu0 %v2148
  %v2150 = vpop.f32.mrb[0].mxu0
  %v2151 = vadd.f32 %v1826, %v2150
  %v2152 = vpop.f32.mrb[0].mxu0
  %v2153 = vadd.f32 %v1828, %v2152
  %v2154 = vand.u32 %v476, 4294901760
  %2155 = vmatprep.mubr.f32.mxu0 %v2154
  %v2156 = vand.u32 %v475, 4294901760
  %2157 = vmatmul.mubr.f32.gmra.mrb[0].mxu0 %v2156
  %v2158 = vpop.f32.mrb[0].mxu0
  %v2159 = vadd.f32 %v1838, %v2158
  %v2160 = vpop.f32.mrb[0].mxu0
  %v2161 = vadd.f32 %v1840, %v2160
  %v2162 = vand.u32 %v480, 4294901760
  %2163 = vmatprep.mubr.f32.mxu0 %v2162
  %v2164 = vand.u32 %v479, 4294901760
  %2165 = vmatmul.mubr.f32.gmra.mrb[0].mxu0 %v2164
  %v2166 = vpop.f32.mrb[0].mxu0
  %v2167 = vadd.f32 %v1850, %v2166
  %v2168 = vpop.f32.mrb[0].mxu0
  %v2169 = vadd.f32 %v1852, %v2168
  %v2170 = vand.u32 %v484, 4294901760
  %2171 = vmatprep.mubr.f32.mxu0 %v2170
  %v2172 = vand.u32 %v483, 4294901760
  %2173 = vmatmul.mubr.f32.gmra.mrb[0].mxu0 %v2172
  %v2174 = vpop.f32.mrb[0].mxu0
  %v2175 = vadd.f32 %v1862, %v2174
  %v2176 = vpop.f32.mrb[0].mxu0
  %v2177 = vadd.f32 %v1864, %v2176
  %2178 = vdwg.mxu0
  %v2179 = vand.u32 %v488, 4294901760
  %2180 = vmatprep.subr.mxu0 %v2179
  %v2181 = vand.u32 %v487, 4294901760
  %2182 = vmatpush1.msra.mxu0 %v2181
  %v2183 = vand.u32 %v492, 4294901760
  %2184 = vmatprep.subr.mxu0 %v2183
  %v2185 = vand.u32 %v491, 4294901760
  %2186 = vmatpush1.msra.mxu0 %v2185
  %v2187 = vand.u32 %v496, 4294901760
  %2188 = vmatprep.subr.mxu0 %v2187
  %v2189 = vand.u32 %v495, 4294901760
  %2190 = vmatpush1.msra.mxu0 %v2189
  %v2191 = vand.u32 %v500, 4294901760
  %2192 = vmatprep.subr.mxu0 %v2191
  %v2193 = vand.u32 %v499, 4294901760
  %2194 = vmatpush1.msra.mxu0 %v2193
  %v2195 = vand.u32 %v504, 4294901760
  %2196 = vmatprep.subr.mxu0 %v2195
  %v2197 = vand.u32 %v503, 4294901760
  %2198 = vmatpush1.msra.mxu0 %v2197
  %v2199 = vand.u32 %v508, 4294901760
  %2200 = vmatprep.subr.mxu0 %v2199
  %v2201 = vand.u32 %v507, 4294901760
  %2202 = vmatpush1.msra.mxu0 %v2201
  %v2203 = vand.u32 %v512, 4294901760
  %2204 = vmatprep.subr.mxu0 %v2203
  %v2205 = vand.u32 %v511, 4294901760
  %2206 = vmatpush1.msra.mxu0 %v2205
  %v2207 = vand.u32 %v516, 4294901760
  %2208 = vmatprep.subr.mxu0 %v2207
  %v2209 = vand.u32 %v515, 4294901760
  %2210 = vmatpush1.msra.mxu0 %v2209
  %v2211 = vand.u32 %v520, 4294901760
  %2212 = vmatprep.subr.mxu0 %v2211
  %v2213 = vand.u32 %v519, 4294901760
  %2214 = vmatpush1.msra.mxu0 %v2213
  %v2215 = vand.u32 %v524, 4294901760
  %2216 = vmatprep.subr.mxu0 %v2215
  %v2217 = vand.u32 %v523, 4294901760
  %2218 = vmatpush1.msra.mxu0 %v2217
  %v2219 = vand.u32 %v528, 4294901760
  %2220 = vmatprep.subr.mxu0 %v2219
  %v2221 = vand.u32 %v527, 4294901760
  %2222 = vmatpush1.msra.mxu0 %v2221
  %v2223 = vand.u32 %v532, 4294901760
  %2224 = vmatprep.subr.mxu0 %v2223
  %v2225 = vand.u32 %v531, 4294901760
  %2226 = vmatpush1.msra.mxu0 %v2225
  %v2227 = vand.u32 %v536, 4294901760
  %2228 = vmatprep.subr.mxu0 %v2227
  %v2229 = vand.u32 %v535, 4294901760
  %2230 = vmatpush1.msra.mxu0 %v2229
  %v2231 = vand.u32 %v540, 4294901760
  %2232 = vmatprep.subr.mxu0 %v2231
  %v2233 = vand.u32 %v539, 4294901760
  %2234 = vmatpush1.msra.mxu0 %v2233
  %v2235 = vand.u32 %v544, 4294901760
  %2236 = vmatprep.subr.mxu0 %v2235
  %v2237 = vand.u32 %v543, 4294901760
  %2238 = vmatpush1.msra.mxu0 %v2237
  %v2239 = vand.u32 %v548, 4294901760
  %2240 = vmatprep.subr.mxu0 %v2239
  %v2241 = vand.u32 %v547, 4294901760
  %2242 = vmatpush1.msra.mxu0 %v2241
  %v2243 = vand.u32 %v552, 4294901760
  %2244 = vmatprep.subr.mxu0 %v2243
  %v2245 = vand.u32 %v551, 4294901760
  %2246 = vmatpush1.msra.mxu0 %v2245
  %v2247 = vand.u32 %v556, 4294901760
  %2248 = vmatprep.subr.mxu0 %v2247
  %v2249 = vand.u32 %v555, 4294901760
  %2250 = vmatpush1.msra.mxu0 %v2249
  %v2251 = vand.u32 %v560, 4294901760
  %2252 = vmatprep.subr.mxu0 %v2251
  %v2253 = vand.u32 %v559, 4294901760
  %2254 = vmatpush1.msra.mxu0 %v2253
  %v2255 = vand.u32 %v564, 4294901760
  %2256 = vmatprep.subr.mxu0 %v2255
  %v2257 = vand.u32 %v563, 4294901760
  %2258 = vmatpush1.msra.mxu0 %v2257
  %v2259 = vand.u32 %v568, 4294901760
  %2260 = vmatprep.subr.mxu0 %v2259
  %v2261 = vand.u32 %v567, 4294901760
  %2262 = vmatpush1.msra.mxu0 %v2261
  %v2263 = vand.u32 %v572, 4294901760
  %2264 = vmatprep.subr.mxu0 %v2263
  %v2265 = vand.u32 %v571, 4294901760
  %2266 = vmatpush1.msra.mxu0 %v2265
  %v2267 = vand.u32 %v576, 4294901760
  %2268 = vmatprep.subr.mxu0 %v2267
  %v2269 = vand.u32 %v575, 4294901760
  %2270 = vmatpush1.msra.mxu0 %v2269
  %v2271 = vand.u32 %v580, 4294901760
  %2272 = vmatprep.subr.mxu0 %v2271
  %v2273 = vand.u32 %v579, 4294901760
  %2274 = vmatpush1.msra.mxu0 %v2273
  %v2275 = vand.u32 %v584, 4294901760
  %2276 = vmatprep.subr.mxu0 %v2275
  %v2277 = vand.u32 %v583, 4294901760
  %2278 = vmatpush1.msra.mxu0 %v2277
  %v2279 = vand.u32 %v588, 4294901760
  %2280 = vmatprep.subr.mxu0 %v2279
  %v2281 = vand.u32 %v587, 4294901760
  %2282 = vmatpush1.msra.mxu0 %v2281
  %v2283 = vand.u32 %v592, 4294901760
  %2284 = vmatprep.subr.mxu0 %v2283
  %v2285 = vand.u32 %v591, 4294901760
  %2286 = vmatpush1.msra.mxu0 %v2285
  %v2287 = vand.u32 %v596, 4294901760
  %2288 = vmatprep.subr.mxu0 %v2287
  %v2289 = vand.u32 %v595, 4294901760
  %2290 = vmatpush1.msra.mxu0 %v2289
  %v2291 = vand.u32 %v600, 4294901760
  %2292 = vmatprep.subr.mxu0 %v2291
  %v2293 = vand.u32 %v599, 4294901760
  %2294 = vmatpush1.msra.mxu0 %v2293
  %v2295 = vand.u32 %v604, 4294901760
  %2296 = vmatprep.subr.mxu0 %v2295
  %v2297 = vand.u32 %v603, 4294901760
  %2298 = vmatpush1.msra.mxu0 %v2297
  %v2299 = vand.u32 %v608, 4294901760
  %2300 = vmatprep.subr.mxu0 %v2299
  %v2301 = vand.u32 %v607, 4294901760
  %2302 = vmatpush1.msra.mxu0 %v2301
  %v2303 = vand.u32 %v612, 4294901760
  %2304 = vmatprep.subr.mxu0 %v2303
  %v2305 = vand.u32 %v611, 4294901760
  %2306 = vmatpush1.msra.mxu0 %v2305
  %v2307 = vand.u32 %v460, 4294901760
  %2308 = vmatprep.mubr.f32.mxu0 %v2307
  %v2309 = vand.u32 %v459, 4294901760
  %2310 = vmatmul.mubr.f32.gmra.mrb[0].mxu0 %v2309
  %v2311 = vpop.f32.mrb[0].mxu0
  %v2312 = vadd.f32 %v2127, %v2311
  %v2313 = vpop.f32.mrb[0].mxu0
  %v2314 = vadd.f32 %v2129, %v2313
  %v2315 = vand.u32 %v464, 4294901760
  %2316 = vmatprep.mubr.f32.mxu0 %v2315
  %v2317 = vand.u32 %v463, 4294901760
  %2318 = vmatmul.mubr.f32.gmra.mrb[0].mxu0 %v2317
  %v2319 = vpop.f32.mrb[0].mxu0
  %v2320 = vadd.f32 %v2135, %v2319
  %v2321 = vpop.f32.mrb[0].mxu0
  %v2322 = vadd.f32 %v2137, %v2321
  %v2323 = vand.u32 %v468, 4294901760
  %2324 = vmatprep.mubr.f32.mxu0 %v2323
  %v2325 = vand.u32 %v467, 4294901760
  %2326 = vmatmul.mubr.f32.gmra.mrb[0].mxu0 %v2325
  %v2327 = vpop.f32.mrb[0].mxu0
  %v2328 = vadd.f32 %v2143, %v2327
  %v2329 = vpop.f32.mrb[0].mxu0
  %v2330 = vadd.f32 %v2145, %v2329
  %v2331 = vand.u32 %v472, 4294901760
  %2332 = vmatprep.mubr.f32.mxu0 %v2331
  %v2333 = vand.u32 %v471, 4294901760
  %2334 = vmatmul.mubr.f32.gmra.mrb[0].mxu0 %v2333
  %v2335 = vpop.f32.mrb[0].mxu0
  %v2336 = vadd.f32 %v2151, %v2335
  %v2337 = vpop.f32.mrb[0].mxu0
  %v2338 = vadd.f32 %v2153, %v2337
  %v2339 = vand.u32 %v476, 4294901760
  %2340 = vmatprep.mubr.f32.mxu0 %v2339
  %v2341 = vand.u32 %v475, 4294901760
  %2342 = vmatmul.mubr.f32.gmra.mrb[0].mxu0 %v2341
  %v2343 = vpop.f32.mrb[0].mxu0
  %v2344 = vadd.f32 %v2159, %v2343
  %v2345 = vpop.f32.mrb[0].mxu0
  %v2346 = vadd.f32 %v2161, %v2345
  %v2347 = vand.u32 %v480, 4294901760
  %2348 = vmatprep.mubr.f32.mxu0 %v2347
  %v2349 = vand.u32 %v479, 4294901760
  %2350 = vmatmul.mubr.f32.gmra.mrb[0].mxu0 %v2349
  %v2351 = vpop.f32.mrb[0].mxu0
  %v2352 = vadd.f32 %v2167, %v2351
  %v2353 = vpop.f32.mrb[0].mxu0
  %v2354 = vadd.f32 %v2169, %v2353
  %v2355 = vand.u32 %v484, 4294901760
  %2356 = vmatprep.mubr.f32.mxu0 %v2355
  %v2357 = vand.u32 %v483, 4294901760
  %2358 = vmatmul.mubr.f32.gmra.mrb[0].mxu0 %v2357
  %v2359 = vpop.f32.mrb[0].mxu0
  %v2360 = vadd.f32 %v2175, %v2359
  %v2361 = vpop.f32.mrb[0].mxu0
  %v2362 = vadd.f32 %v2177, %v2361
  %2363 = vdwg.mxu0
  %v2364 = vand.u32 %v616, 4294901760
  %2365 = vmatprep.subr.mxu0 %v2364
  %v2366 = vand.u32 %v615, 4294901760
  %2367 = vmatpush1.msra.mxu0 %v2366
  %v2368 = vand.u32 %v620, 4294901760
  %2369 = vmatprep.subr.mxu0 %v2368
  %v2370 = vand.u32 %v619, 4294901760
  %2371 = vmatpush1.msra.mxu0 %v2370
  %v2372 = vand.u32 %v624, 4294901760
  %2373 = vmatprep.subr.mxu0 %v2372
  %v2374 = vand.u32 %v623, 4294901760
  %2375 = vmatpush1.msra.mxu0 %v2374
  %v2376 = vand.u32 %v628, 4294901760
  %2377 = vmatprep.subr.mxu0 %v2376
  %v2378 = vand.u32 %v627, 4294901760
  %2379 = vmatpush1.msra.mxu0 %v2378
  %v2380 = vand.u32 %v632, 4294901760
  %2381 = vmatprep.subr.mxu0 %v2380
  %v2382 = vand.u32 %v631, 4294901760
  %2383 = vmatpush1.msra.mxu0 %v2382
  %v2384 = vand.u32 %v636, 4294901760
  %2385 = vmatprep.subr.mxu0 %v2384
  %v2386 = vand.u32 %v635, 4294901760
  %2387 = vmatpush1.msra.mxu0 %v2386
  %v2388 = vand.u32 %v640, 4294901760
  %2389 = vmatprep.subr.mxu0 %v2388
  %v2390 = vand.u32 %v639, 4294901760
  %2391 = vmatpush1.msra.mxu0 %v2390
  %v2392 = vand.u32 %v644, 4294901760
  %2393 = vmatprep.subr.mxu0 %v2392
  %v2394 = vand.u32 %v643, 4294901760
  %2395 = vmatpush1.msra.mxu0 %v2394
  %v2396 = vand.u32 %v648, 4294901760
  %2397 = vmatprep.subr.mxu0 %v2396
  %v2398 = vand.u32 %v647, 4294901760
  %2399 = vmatpush1.msra.mxu0 %v2398
  %v2400 = vand.u32 %v652, 4294901760
  %2401 = vmatprep.subr.mxu0 %v2400
  %v2402 = vand.u32 %v651, 4294901760
  %2403 = vmatpush1.msra.mxu0 %v2402
  %v2404 = vand.u32 %v656, 4294901760
  %2405 = vmatprep.subr.mxu0 %v2404
  %v2406 = vand.u32 %v655, 4294901760
  %2407 = vmatpush1.msra.mxu0 %v2406
  %v2408 = vand.u32 %v660, 4294901760
  %2409 = vmatprep.subr.mxu0 %v2408
  %v2410 = vand.u32 %v659, 4294901760
  %2411 = vmatpush1.msra.mxu0 %v2410
  %v2412 = vand.u32 %v664, 4294901760
  %2413 = vmatprep.subr.mxu0 %v2412
  %v2414 = vand.u32 %v663, 4294901760
  %2415 = vmatpush1.msra.mxu0 %v2414
  %v2416 = vand.u32 %v668, 4294901760
  %2417 = vmatprep.subr.mxu0 %v2416
  %v2418 = vand.u32 %v667, 4294901760
  %2419 = vmatpush1.msra.mxu0 %v2418
  %v2420 = vand.u32 %v672, 4294901760
  %2421 = vmatprep.subr.mxu0 %v2420
  %v2422 = vand.u32 %v671, 4294901760
  %2423 = vmatpush1.msra.mxu0 %v2422
  %v2424 = vand.u32 %v676, 4294901760
  %2425 = vmatprep.subr.mxu0 %v2424
  %v2426 = vand.u32 %v675, 4294901760
  %2427 = vmatpush1.msra.mxu0 %v2426
  %v2428 = vand.u32 %v680, 4294901760
  %2429 = vmatprep.subr.mxu0 %v2428
  %v2430 = vand.u32 %v679, 4294901760
  %2431 = vmatpush1.msra.mxu0 %v2430
  %v2432 = vand.u32 %v684, 4294901760
  %2433 = vmatprep.subr.mxu0 %v2432
  %v2434 = vand.u32 %v683, 4294901760
  %2435 = vmatpush1.msra.mxu0 %v2434
  %2436 = vmatprep.subr.mxu0 0.0
  %2437 = vmatpush1.msra.mxu0 0.0
  %2438 = vmatprep.subr.mxu0 0.0
  %2439 = vmatpush1.msra.mxu0 0.0
  %2440 = vmatprep.subr.mxu0 0.0
  %2441 = vmatpush1.msra.mxu0 0.0
  %2442 = vmatprep.subr.mxu0 0.0
  %2443 = vmatpush1.msra.mxu0 0.0
  %2444 = vmatprep.subr.mxu0 0.0
  %2445 = vmatpush1.msra.mxu0 0.0
  %2446 = vmatprep.subr.mxu0 0.0
  %2447 = vmatpush1.msra.mxu0 0.0
  %2448 = vmatprep.subr.mxu0 0.0
  %2449 = vmatpush1.msra.mxu0 0.0
  %2450 = vmatprep.subr.mxu0 0.0
  %2451 = vmatpush1.msra.mxu0 0.0
  %2452 = vmatprep.subr.mxu0 0.0
  %2453 = vmatpush1.msra.mxu0 0.0
  %2454 = vmatprep.subr.mxu0 0.0
  %2455 = vmatpush1.msra.mxu0 0.0
  %2456 = vmatprep.subr.mxu0 0.0
  %2457 = vmatpush1.msra.mxu0 0.0
  %2458 = vmatprep.subr.mxu0 0.0
  %2459 = vmatpush1.msra.mxu0 0.0
  %2460 = vmatprep.subr.mxu0 0.0
  %2461 = vmatpush1.msra.mxu0 0.0
  %2462 = vmatprep.subr.mxu0 0.0
  %2463 = vmatpush1.msra.mxu0 0.0
  %v2464 = vand.u32 %v688, 4294901760
  %v2465 = vsub.f32 %v688, %v2464
  %v2466 = vand.u32 %v2465, 4294901760
  %v2467 = vsub.f32 %v2465, %v2466
  %v2468 = vand.u32 %v2467, 4294901760
  %2469 = vmatprep.mubr.f32.mxu0 %v2468
  %v2470 = vand.u32 %v461, 4294901760
  %v2471 = vsub.f32 %v461, %v2470
  %v2472 = vand.u32 %v2471, 4294901760
  %v2473 = vsub.f32 %v2471, %v2472
  %v2474 = vand.u32 %v2473, 4294901760
  %2475 = vmatmul.mubr.f32.gmra.mrb[0].mxu0 %v2474
  %v2476 = vpop.f32.mrb[0].mxu0
  %v2477 = vadd.f32 %v2312, %v2476
  %v2478 = vpop.f32.mrb[0].mxu0
  %v2479 = vadd.f32 %v2314, %v2478
  %v2480 = vand.u32 %v691, 4294901760
  %v2481 = vsub.f32 %v691, %v2480
  %v2482 = vand.u32 %v2481, 4294901760
  %v2483 = vsub.f32 %v2481, %v2482
  %v2484 = vand.u32 %v2483, 4294901760
  %2485 = vmatprep.mubr.f32.mxu0 %v2484
  %v2486 = vand.u32 %v465, 4294901760
  %v2487 = vsub.f32 %v465, %v2486
  %v2488 = vand.u32 %v2487, 4294901760
  %v2489 = vsub.f32 %v2487, %v2488
  %v2490 = vand.u32 %v2489, 4294901760
  %2491 = vmatmul.mubr.f32.gmra.mrb[0].mxu0 %v2490
  %v2492 = vpop.f32.mrb[0].mxu0
  %v2493 = vadd.f32 %v2320, %v2492
  %v2494 = vpop.f32.mrb[0].mxu0
  %v2495 = vadd.f32 %v2322, %v2494
  %v2496 = vand.u32 %v694, 4294901760
  %v2497 = vsub.f32 %v694, %v2496
  %v2498 = vand.u32 %v2497, 4294901760
  %v2499 = vsub.f32 %v2497, %v2498
  %v2500 = vand.u32 %v2499, 4294901760
  %2501 = vmatprep.mubr.f32.mxu0 %v2500
  %v2502 = vand.u32 %v469, 4294901760
  %v2503 = vsub.f32 %v469, %v2502
  %v2504 = vand.u32 %v2503, 4294901760
  %v2505 = vsub.f32 %v2503, %v2504
  %v2506 = vand.u32 %v2505, 4294901760
  %2507 = vmatmul.mubr.f32.gmra.mrb[0].mxu0 %v2506
  %v2508 = vpop.f32.mrb[0].mxu0
  %v2509 = vadd.f32 %v2328, %v2508
  %v2510 = vpop.f32.mrb[0].mxu0
  %v2511 = vadd.f32 %v2330, %v2510
  %v2512 = vand.u32 %v697, 4294901760
  %v2513 = vsub.f32 %v697, %v2512
  %v2514 = vand.u32 %v2513, 4294901760
  %v2515 = vsub.f32 %v2513, %v2514
  %v2516 = vand.u32 %v2515, 4294901760
  %2517 = vmatprep.mubr.f32.mxu0 %v2516
  %v2518 = vand.u32 %v473, 4294901760
  %v2519 = vsub.f32 %v473, %v2518
  %v2520 = vand.u32 %v2519, 4294901760
  %v2521 = vsub.f32 %v2519, %v2520
  %v2522 = vand.u32 %v2521, 4294901760
  %2523 = vmatmul.mubr.f32.gmra.mrb[0].mxu0 %v2522
  %v2524 = vpop.f32.mrb[0].mxu0
  %v2525 = vadd.f32 %v2336, %v2524
  %v2526 = vpop.f32.mrb[0].mxu0
  %v2527 = vadd.f32 %v2338, %v2526
  %v2528 = vand.u32 %v700, 4294901760
  %v2529 = vsub.f32 %v700, %v2528
  %v2530 = vand.u32 %v2529, 4294901760
  %v2531 = vsub.f32 %v2529, %v2530
  %v2532 = vand.u32 %v2531, 4294901760
  %2533 = vmatprep.mubr.f32.mxu0 %v2532
  %v2534 = vand.u32 %v477, 4294901760
  %v2535 = vsub.f32 %v477, %v2534
  %v2536 = vand.u32 %v2535, 4294901760
  %v2537 = vsub.f32 %v2535, %v2536
  %v2538 = vand.u32 %v2537, 4294901760
  %2539 = vmatmul.mubr.f32.gmra.mrb[0].mxu0 %v2538
  %v2540 = vpop.f32.mrb[0].mxu0
  %v2541 = vadd.f32 %v2344, %v2540
  %v2542 = vpop.f32.mrb[0].mxu0
  %v2543 = vadd.f32 %v2346, %v2542
  %v2544 = vand.u32 %v703, 4294901760
  %v2545 = vsub.f32 %v703, %v2544
  %v2546 = vand.u32 %v2545, 4294901760
  %v2547 = vsub.f32 %v2545, %v2546
  %v2548 = vand.u32 %v2547, 4294901760
  %2549 = vmatprep.mubr.f32.mxu0 %v2548
  %v2550 = vand.u32 %v481, 4294901760
  %v2551 = vsub.f32 %v481, %v2550
  %v2552 = vand.u32 %v2551, 4294901760
  %v2553 = vsub.f32 %v2551, %v2552
  %v2554 = vand.u32 %v2553, 4294901760
  %2555 = vmatmul.mubr.f32.gmra.mrb[0].mxu0 %v2554
  %v2556 = vpop.f32.mrb[0].mxu0
  %v2557 = vadd.f32 %v2352, %v2556
  %v2558 = vpop.f32.mrb[0].mxu0
  %v2559 = vadd.f32 %v2354, %v2558
  %v2560 = vand.u32 %v706, 4294901760
  %v2561 = vsub.f32 %v706, %v2560
  %v2562 = vand.u32 %v2561, 4294901760
  %v2563 = vsub.f32 %v2561, %v2562
  %v2564 = vand.u32 %v2563, 4294901760
  %2565 = vmatprep.mubr.f32.mxu0 %v2564
  %v2566 = vand.u32 %v485, 4294901760
  %v2567 = vsub.f32 %v485, %v2566
  %v2568 = vand.u32 %v2567, 4294901760
  %v2569 = vsub.f32 %v2567, %v2568
  %v2570 = vand.u32 %v2569, 4294901760
  %2571 = vmatmul.mubr.f32.gmra.mrb[0].mxu0 %v2570
  %v2572 = vpop.f32.mrb[0].mxu0
  %v2573 = vadd.f32 %v2360, %v2572
  %v2574 = vpop.f32.mrb[0].mxu0
  %v2575 = vadd.f32 %v2362, %v2574
  %2576 = vdwg.mxu0
  %v2577 = vand.u32 %v616, 4294901760
  %v2578 = vsub.f32 %v616, %v2577
  %v2579 = vand.u32 %v2578, 4294901760
  %v2580 = vsub.f32 %v2578, %v2579
  %v2581 = vand.u32 %v2580, 4294901760
  %2582 = vmatprep.subr.mxu0 %v2581
  %v2583 = vand.u32 %v615, 4294901760
  %v2584 = vsub.f32 %v615, %v2583
  %v2585 = vand.u32 %v2584, 4294901760
  %v2586 = vsub.f32 %v2584, %v2585
  %v2587 = vand.u32 %v2586, 4294901760
  %2588 = vmatpush1.msra.mxu0 %v2587
  %v2589 = vand.u32 %v620, 4294901760
  %v2590 = vsub.f32 %v620, %v2589
  %v2591 = vand.u32 %v2590, 4294901760
  %v2592 = vsub.f32 %v2590, %v2591
  %v2593 = vand.u32 %v2592, 4294901760
  %2594 = vmatprep.subr.mxu0 %v2593
  %v2595 = vand.u32 %v619, 4294901760
  %v2596 = vsub.f32 %v619, %v2595
  %v2597 = vand.u32 %v2596, 4294901760
  %v2598 = vsub.f32 %v2596, %v2597
  %v2599 = vand.u32 %v2598, 4294901760
  %2600 = vmatpush1.msra.mxu0 %v2599
  %v2601 = vand.u32 %v624, 4294901760
  %v2602 = vsub.f32 %v624, %v2601
  %v2603 = vand.u32 %v2602, 4294901760
  %v2604 = vsub.f32 %v2602, %v2603
  %v2605 = vand.u32 %v2604, 4294901760
  %2606 = vmatprep.subr.mxu0 %v2605
  %v2607 = vand.u32 %v623, 4294901760
  %v2608 = vsub.f32 %v623, %v2607
  %v2609 = vand.u32 %v2608, 4294901760
  %v2610 = vsub.f32 %v2608, %v2609
  %v2611 = vand.u32 %v2610, 4294901760
  %2612 = vmatpush1.msra.mxu0 %v2611
  %v2613 = vand.u32 %v628, 4294901760
  %v2614 = vsub.f32 %v628, %v2613
  %v2615 = vand.u32 %v2614, 4294901760
  %v2616 = vsub.f32 %v2614, %v2615
  %v2617 = vand.u32 %v2616, 4294901760
  %2618 = vmatprep.subr.mxu0 %v2617
  %v2619 = vand.u32 %v627, 4294901760
  %v2620 = vsub.f32 %v627, %v2619
  %v2621 = vand.u32 %v2620, 4294901760
  %v2622 = vsub.f32 %v2620, %v2621
  %v2623 = vand.u32 %v2622, 4294901760
  %2624 = vmatpush1.msra.mxu0 %v2623
  %v2625 = vand.u32 %v632, 4294901760
  %v2626 = vsub.f32 %v632, %v2625
  %v2627 = vand.u32 %v2626, 4294901760
  %v2628 = vsub.f32 %v2626, %v2627
  %v2629 = vand.u32 %v2628, 4294901760
  %2630 = vmatprep.subr.mxu0 %v2629
  %v2631 = vand.u32 %v631, 4294901760
  %v2632 = vsub.f32 %v631, %v2631
  %v2633 = vand.u32 %v2632, 4294901760
  %v2634 = vsub.f32 %v2632, %v2633
  %v2635 = vand.u32 %v2634, 4294901760
  %2636 = vmatpush1.msra.mxu0 %v2635
  %v2637 = vand.u32 %v636, 4294901760
  %v2638 = vsub.f32 %v636, %v2637
  %v2639 = vand.u32 %v2638, 4294901760
  %v2640 = vsub.f32 %v2638, %v2639
  %v2641 = vand.u32 %v2640, 4294901760
  %2642 = vmatprep.subr.mxu0 %v2641
  %v2643 = vand.u32 %v635, 4294901760
  %v2644 = vsub.f32 %v635, %v2643
  %v2645 = vand.u32 %v2644, 4294901760
  %v2646 = vsub.f32 %v2644, %v2645
  %v2647 = vand.u32 %v2646, 4294901760
  %2648 = vmatpush1.msra.mxu0 %v2647
  %v2649 = vand.u32 %v640, 4294901760
  %v2650 = vsub.f32 %v640, %v2649
  %v2651 = vand.u32 %v2650, 4294901760
  %v2652 = vsub.f32 %v2650, %v2651
  %v2653 = vand.u32 %v2652, 4294901760
  %2654 = vmatprep.subr.mxu0 %v2653
  %v2655 = vand.u32 %v639, 4294901760
  %v2656 = vsub.f32 %v639, %v2655
  %v2657 = vand.u32 %v2656, 4294901760
  %v2658 = vsub.f32 %v2656, %v2657
  %v2659 = vand.u32 %v2658, 4294901760
  %2660 = vmatpush1.msra.mxu0 %v2659
  %v2661 = vand.u32 %v644, 4294901760
  %v2662 = vsub.f32 %v644, %v2661
  %v2663 = vand.u32 %v2662, 4294901760
  %v2664 = vsub.f32 %v2662, %v2663
  %v2665 = vand.u32 %v2664, 4294901760
  %2666 = vmatprep.subr.mxu0 %v2665
  %v2667 = vand.u32 %v643, 4294901760
  %v2668 = vsub.f32 %v643, %v2667
  %v2669 = vand.u32 %v2668, 4294901760
  %v2670 = vsub.f32 %v2668, %v2669
  %v2671 = vand.u32 %v2670, 4294901760
  %2672 = vmatpush1.msra.mxu0 %v2671
  %v2673 = vand.u32 %v648, 4294901760
  %v2674 = vsub.f32 %v648, %v2673
  %v2675 = vand.u32 %v2674, 4294901760
  %v2676 = vsub.f32 %v2674, %v2675
  %v2677 = vand.u32 %v2676, 4294901760
  %2678 = vmatprep.subr.mxu0 %v2677
  %v2679 = vand.u32 %v647, 4294901760
  %v2680 = vsub.f32 %v647, %v2679
  %v2681 = vand.u32 %v2680, 4294901760
  %v2682 = vsub.f32 %v2680, %v2681
  %v2683 = vand.u32 %v2682, 4294901760
  %2684 = vmatpush1.msra.mxu0 %v2683
  %v2685 = vand.u32 %v652, 4294901760
  %v2686 = vsub.f32 %v652, %v2685
  %v2687 = vand.u32 %v2686, 4294901760
  %v2688 = vsub.f32 %v2686, %v2687
  %v2689 = vand.u32 %v2688, 4294901760
  %2690 = vmatprep.subr.mxu0 %v2689
  %v2691 = vand.u32 %v651, 4294901760
  %v2692 = vsub.f32 %v651, %v2691
  %v2693 = vand.u32 %v2692, 4294901760
  %v2694 = vsub.f32 %v2692, %v2693
  %v2695 = vand.u32 %v2694, 4294901760
  %2696 = vmatpush1.msra.mxu0 %v2695
  %v2697 = vand.u32 %v656, 4294901760
  %v2698 = vsub.f32 %v656, %v2697
  %v2699 = vand.u32 %v2698, 4294901760
  %v2700 = vsub.f32 %v2698, %v2699
  %v2701 = vand.u32 %v2700, 4294901760
  %2702 = vmatprep.subr.mxu0 %v2701
  %v2703 = vand.u32 %v655, 4294901760
  %v2704 = vsub.f32 %v655, %v2703
  %v2705 = vand.u32 %v2704, 4294901760
  %v2706 = vsub.f32 %v2704, %v2705
  %v2707 = vand.u32 %v2706, 4294901760
  %2708 = vmatpush1.msra.mxu0 %v2707
  %v2709 = vand.u32 %v660, 4294901760
  %v2710 = vsub.f32 %v660, %v2709
  %v2711 = vand.u32 %v2710, 4294901760
  %v2712 = vsub.f32 %v2710, %v2711
  %v2713 = vand.u32 %v2712, 4294901760
  %2714 = vmatprep.subr.mxu0 %v2713
  %v2715 = vand.u32 %v659, 4294901760
  %v2716 = vsub.f32 %v659, %v2715
  %v2717 = vand.u32 %v2716, 4294901760
  %v2718 = vsub.f32 %v2716, %v2717
  %v2719 = vand.u32 %v2718, 4294901760
  %2720 = vmatpush1.msra.mxu0 %v2719
  %v2721 = vand.u32 %v664, 4294901760
  %v2722 = vsub.f32 %v664, %v2721
  %v2723 = vand.u32 %v2722, 4294901760
  %v2724 = vsub.f32 %v2722, %v2723
  %v2725 = vand.u32 %v2724, 4294901760
  %2726 = vmatprep.subr.mxu0 %v2725
  %v2727 = vand.u32 %v663, 4294901760
  %v2728 = vsub.f32 %v663, %v2727
  %v2729 = vand.u32 %v2728, 4294901760
  %v2730 = vsub.f32 %v2728, %v2729
  %v2731 = vand.u32 %v2730, 4294901760
  %2732 = vmatpush1.msra.mxu0 %v2731
  %v2733 = vand.u32 %v668, 4294901760
  %v2734 = vsub.f32 %v668, %v2733
  %v2735 = vand.u32 %v2734, 4294901760
  %v2736 = vsub.f32 %v2734, %v2735
  %v2737 = vand.u32 %v2736, 4294901760
  %2738 = vmatprep.subr.mxu0 %v2737
  %v2739 = vand.u32 %v667, 4294901760
  %v2740 = vsub.f32 %v667, %v2739
  %v2741 = vand.u32 %v2740, 4294901760
  %v2742 = vsub.f32 %v2740, %v2741
  %v2743 = vand.u32 %v2742, 4294901760
  %2744 = vmatpush1.msra.mxu0 %v2743
  %v2745 = vand.u32 %v672, 4294901760
  %v2746 = vsub.f32 %v672, %v2745
  %v2747 = vand.u32 %v2746, 4294901760
  %v2748 = vsub.f32 %v2746, %v2747
  %v2749 = vand.u32 %v2748, 4294901760
  %2750 = vmatprep.subr.mxu0 %v2749
  %v2751 = vand.u32 %v671, 4294901760
  %v2752 = vsub.f32 %v671, %v2751
  %v2753 = vand.u32 %v2752, 4294901760
  %v2754 = vsub.f32 %v2752, %v2753
  %v2755 = vand.u32 %v2754, 4294901760
  %2756 = vmatpush1.msra.mxu0 %v2755
  %v2757 = vand.u32 %v676, 4294901760
  %v2758 = vsub.f32 %v676, %v2757
  %v2759 = vand.u32 %v2758, 4294901760
  %v2760 = vsub.f32 %v2758, %v2759
  %v2761 = vand.u32 %v2760, 4294901760
  %2762 = vmatprep.subr.mxu0 %v2761
  %v2763 = vand.u32 %v675, 4294901760
  %v2764 = vsub.f32 %v675, %v2763
  %v2765 = vand.u32 %v2764, 4294901760
  %v2766 = vsub.f32 %v2764, %v2765
  %v2767 = vand.u32 %v2766, 4294901760
  %2768 = vmatpush1.msra.mxu0 %v2767
  %v2769 = vand.u32 %v680, 4294901760
  %v2770 = vsub.f32 %v680, %v2769
  %v2771 = vand.u32 %v2770, 4294901760
  %v2772 = vsub.f32 %v2770, %v2771
  %v2773 = vand.u32 %v2772, 4294901760
  %2774 = vmatprep.subr.mxu0 %v2773
  %v2775 = vand.u32 %v679, 4294901760
  %v2776 = vsub.f32 %v679, %v2775
  %v2777 = vand.u32 %v2776, 4294901760
  %v2778 = vsub.f32 %v2776, %v2777
  %v2779 = vand.u32 %v2778, 4294901760
  %2780 = vmatpush1.msra.mxu0 %v2779
  %v2781 = vand.u32 %v684, 4294901760
  %v2782 = vsub.f32 %v684, %v2781
  %v2783 = vand.u32 %v2782, 4294901760
  %v2784 = vsub.f32 %v2782, %v2783
  %v2785 = vand.u32 %v2784, 4294901760
  %2786 = vmatprep.subr.mxu0 %v2785
  %v2787 = vand.u32 %v683, 4294901760
  %v2788 = vsub.f32 %v683, %v2787
  %v2789 = vand.u32 %v2788, 4294901760
  %v2790 = vsub.f32 %v2788, %v2789
  %v2791 = vand.u32 %v2790, 4294901760
  %2792 = vmatpush1.msra.mxu0 %v2791
  %2793 = vmatprep.subr.mxu0 0.0
  %2794 = vmatpush1.msra.mxu0 0.0
  %2795 = vmatprep.subr.mxu0 0.0
  %2796 = vmatpush1.msra.mxu0 0.0
  %2797 = vmatprep.subr.mxu0 0.0
  %2798 = vmatpush1.msra.mxu0 0.0
  %2799 = vmatprep.subr.mxu0 0.0
  %2800 = vmatpush1.msra.mxu0 0.0
  %2801 = vmatprep.subr.mxu0 0.0
  %2802 = vmatpush1.msra.mxu0 0.0
  %2803 = vmatprep.subr.mxu0 0.0
  %2804 = vmatpush1.msra.mxu0 0.0
  %2805 = vmatprep.subr.mxu0 0.0
  %2806 = vmatpush1.msra.mxu0 0.0
  %2807 = vmatprep.subr.mxu0 0.0
  %2808 = vmatpush1.msra.mxu0 0.0
  %2809 = vmatprep.subr.mxu0 0.0
  %2810 = vmatpush1.msra.mxu0 0.0
  %2811 = vmatprep.subr.mxu0 0.0
  %2812 = vmatpush1.msra.mxu0 0.0
  %2813 = vmatprep.subr.mxu0 0.0
  %2814 = vmatpush1.msra.mxu0 0.0
  %2815 = vmatprep.subr.mxu0 0.0
  %2816 = vmatpush1.msra.mxu0 0.0
  %2817 = vmatprep.subr.mxu0 0.0
  %2818 = vmatpush1.msra.mxu0 0.0
  %2819 = vmatprep.subr.mxu0 0.0
  %2820 = vmatpush1.msra.mxu0 0.0
  %v2821 = vand.u32 %v688, 4294901760
  %2822 = vmatprep.mubr.f32.mxu0 %v2821
  %v2823 = vand.u32 %v461, 4294901760
  %2824 = vmatmul.mubr.f32.gmra.mrb[0].mxu0 %v2823
  %v2825 = vpop.f32.mrb[0].mxu0
  %v2826 = vadd.f32 %v2477, %v2825
  %v2827 = vpop.f32.mrb[0].mxu0
  %v2828 = vadd.f32 %v2479, %v2827
  %v2829 = vand.u32 %v691, 4294901760
  %2830 = vmatprep.mubr.f32.mxu0 %v2829
  %v2831 = vand.u32 %v465, 4294901760
  %2832 = vmatmul.mubr.f32.gmra.mrb[0].mxu0 %v2831
  %v2833 = vpop.f32.mrb[0].mxu0
  %v2834 = vadd.f32 %v2493, %v2833
  %v2835 = vpop.f32.mrb[0].mxu0
  %v2836 = vadd.f32 %v2495, %v2835
  %v2837 = vand.u32 %v694, 4294901760
  %2838 = vmatprep.mubr.f32.mxu0 %v2837
  %v2839 = vand.u32 %v469, 4294901760
  %2840 = vmatmul.mubr.f32.gmra.mrb[0].mxu0 %v2839
  %v2841 = vpop.f32.mrb[0].mxu0
  %v2842 = vadd.f32 %v2509, %v2841
  %v2843 = vpop.f32.mrb[0].mxu0
  %v2844 = vadd.f32 %v2511, %v2843
  %v2845 = vand.u32 %v697, 4294901760
  %2846 = vmatprep.mubr.f32.mxu0 %v2845
  %v2847 = vand.u32 %v473, 4294901760
  %2848 = vmatmul.mubr.f32.gmra.mrb[0].mxu0 %v2847
  %v2849 = vpop.f32.mrb[0].mxu0
  %v2850 = vadd.f32 %v2525, %v2849
  %v2851 = vpop.f32.mrb[0].mxu0
  %v2852 = vadd.f32 %v2527, %v2851
  %v2853 = vand.u32 %v700, 4294901760
  %2854 = vmatprep.mubr.f32.mxu0 %v2853
  %v2855 = vand.u32 %v477, 4294901760
  %2856 = vmatmul.mubr.f32.gmra.mrb[0].mxu0 %v2855
  %v2857 = vpop.f32.mrb[0].mxu0
  %v2858 = vadd.f32 %v2541, %v2857
  %v2859 = vpop.f32.mrb[0].mxu0
  %v2860 = vadd.f32 %v2543, %v2859
  %v2861 = vand.u32 %v703, 4294901760
  %2862 = vmatprep.mubr.f32.mxu0 %v2861
  %v2863 = vand.u32 %v481, 4294901760
  %2864 = vmatmul.mubr.f32.gmra.mrb[0].mxu0 %v2863
  %v2865 = vpop.f32.mrb[0].mxu0
  %v2866 = vadd.f32 %v2557, %v2865
  %v2867 = vpop.f32.mrb[0].mxu0
  %v2868 = vadd.f32 %v2559, %v2867
  %v2869 = vand.u32 %v706, 4294901760
  %2870 = vmatprep.mubr.f32.mxu0 %v2869
  %v2871 = vand.u32 %v485, 4294901760
  %2872 = vmatmul.mubr.f32.gmra.mrb[0].mxu0 %v2871
  %v2873 = vpop.f32.mrb[0].mxu0
  %v2874 = vadd.f32 %v2573, %v2873
  %v2875 = vpop.f32.mrb[0].mxu0
  %v2876 = vadd.f32 %v2575, %v2875
  %2877 = vdwg.mxu0
  %v2878 = vand.u32 %v616, 4294901760
  %v2879 = vsub.f32 %v616, %v2878
  %2880 = vmatprep.subr.mxu0 %v2879
  %v2881 = vand.u32 %v615, 4294901760
  %v2882 = vsub.f32 %v615, %v2881
  %2883 = vmatpush1.msra.mxu0 %v2882
  %v2884 = vand.u32 %v620, 4294901760
  %v2885 = vsub.f32 %v620, %v2884
  %2886 = vmatprep.subr.mxu0 %v2885
  %v2887 = vand.u32 %v619, 4294901760
  %v2888 = vsub.f32 %v619, %v2887
  %2889 = vmatpush1.msra.mxu0 %v2888
  %v2890 = vand.u32 %v624, 4294901760
  %v2891 = vsub.f32 %v624, %v2890
  %2892 = vmatprep.subr.mxu0 %v2891
  %v2893 = vand.u32 %v623, 4294901760
  %v2894 = vsub.f32 %v623, %v2893
  %2895 = vmatpush1.msra.mxu0 %v2894
  %v2896 = vand.u32 %v628, 4294901760
  %v2897 = vsub.f32 %v628, %v2896
  %2898 = vmatprep.subr.mxu0 %v2897
  %v2899 = vand.u32 %v627, 4294901760
  %v2900 = vsub.f32 %v627, %v2899
  %2901 = vmatpush1.msra.mxu0 %v2900
  %v2902 = vand.u32 %v632, 4294901760
  %v2903 = vsub.f32 %v632, %v2902
  %2904 = vmatprep.subr.mxu0 %v2903
  %v2905 = vand.u32 %v631, 4294901760
  %v2906 = vsub.f32 %v631, %v2905
  %2907 = vmatpush1.msra.mxu0 %v2906
  %v2908 = vand.u32 %v636, 4294901760
  %v2909 = vsub.f32 %v636, %v2908
  %2910 = vmatprep.subr.mxu0 %v2909
  %v2911 = vand.u32 %v635, 4294901760
  %v2912 = vsub.f32 %v635, %v2911
  %2913 = vmatpush1.msra.mxu0 %v2912
  %v2914 = vand.u32 %v640, 4294901760
  %v2915 = vsub.f32 %v640, %v2914
  %2916 = vmatprep.subr.mxu0 %v2915
  %v2917 = vand.u32 %v639, 4294901760
  %v2918 = vsub.f32 %v639, %v2917
  %2919 = vmatpush1.msra.mxu0 %v2918
  %v2920 = vand.u32 %v644, 4294901760
  %v2921 = vsub.f32 %v644, %v2920
  %2922 = vmatprep.subr.mxu0 %v2921
  %v2923 = vand.u32 %v643, 4294901760
  %v2924 = vsub.f32 %v643, %v2923
  %2925 = vmatpush1.msra.mxu0 %v2924
  %v2926 = vand.u32 %v648, 4294901760
  %v2927 = vsub.f32 %v648, %v2926
  %2928 = vmatprep.subr.mxu0 %v2927
  %v2929 = vand.u32 %v647, 4294901760
  %v2930 = vsub.f32 %v647, %v2929
  %2931 = vmatpush1.msra.mxu0 %v2930
  %v2932 = vand.u32 %v652, 4294901760
  %v2933 = vsub.f32 %v652, %v2932
  %2934 = vmatprep.subr.mxu0 %v2933
  %v2935 = vand.u32 %v651, 4294901760
  %v2936 = vsub.f32 %v651, %v2935
  %2937 = vmatpush1.msra.mxu0 %v2936
  %v2938 = vand.u32 %v656, 4294901760
  %v2939 = vsub.f32 %v656, %v2938
  %2940 = vmatprep.subr.mxu0 %v2939
  %v2941 = vand.u32 %v655, 4294901760
  %v2942 = vsub.f32 %v655, %v2941
  %2943 = vmatpush1.msra.mxu0 %v2942
  %v2944 = vand.u32 %v660, 4294901760
  %v2945 = vsub.f32 %v660, %v2944
  %2946 = vmatprep.subr.mxu0 %v2945
  %v2947 = vand.u32 %v659, 4294901760
  %v2948 = vsub.f32 %v659, %v2947
  %2949 = vmatpush1.msra.mxu0 %v2948
  %v2950 = vand.u32 %v664, 4294901760
  %v2951 = vsub.f32 %v664, %v2950
  %2952 = vmatprep.subr.mxu0 %v2951
  %v2953 = vand.u32 %v663, 4294901760
  %v2954 = vsub.f32 %v663, %v2953
  %2955 = vmatpush1.msra.mxu0 %v2954
  %v2956 = vand.u32 %v668, 4294901760
  %v2957 = vsub.f32 %v668, %v2956
  %2958 = vmatprep.subr.mxu0 %v2957
  %v2959 = vand.u32 %v667, 4294901760
  %v2960 = vsub.f32 %v667, %v2959
  %2961 = vmatpush1.msra.mxu0 %v2960
  %v2962 = vand.u32 %v672, 4294901760
  %v2963 = vsub.f32 %v672, %v2962
  %2964 = vmatprep.subr.mxu0 %v2963
  %v2965 = vand.u32 %v671, 4294901760
  %v2966 = vsub.f32 %v671, %v2965
  %2967 = vmatpush1.msra.mxu0 %v2966
  %v2968 = vand.u32 %v676, 4294901760
  %v2969 = vsub.f32 %v676, %v2968
  %2970 = vmatprep.subr.mxu0 %v2969
  %v2971 = vand.u32 %v675, 4294901760
  %v2972 = vsub.f32 %v675, %v2971
  %2973 = vmatpush1.msra.mxu0 %v2972
  %v2974 = vand.u32 %v680, 4294901760
  %v2975 = vsub.f32 %v680, %v2974
  %2976 = vmatprep.subr.mxu0 %v2975
  %v2977 = vand.u32 %v679, 4294901760
  %v2978 = vsub.f32 %v679, %v2977
  %2979 = vmatpush1.msra.mxu0 %v2978
  %v2980 = vand.u32 %v684, 4294901760
  %v2981 = vsub.f32 %v684, %v2980
  %2982 = vmatprep.subr.mxu0 %v2981
  %v2983 = vand.u32 %v683, 4294901760
  %v2984 = vsub.f32 %v683, %v2983
  %2985 = vmatpush1.msra.mxu0 %v2984
  %2986 = vmatprep.subr.mxu0 0.0
  %2987 = vmatpush1.msra.mxu0 0.0
  %2988 = vmatprep.subr.mxu0 0.0
  %2989 = vmatpush1.msra.mxu0 0.0
  %2990 = vmatprep.subr.mxu0 0.0
  %2991 = vmatpush1.msra.mxu0 0.0
  %2992 = vmatprep.subr.mxu0 0.0
  %2993 = vmatpush1.msra.mxu0 0.0
  %2994 = vmatprep.subr.mxu0 0.0
  %2995 = vmatpush1.msra.mxu0 0.0
  %2996 = vmatprep.subr.mxu0 0.0
  %2997 = vmatpush1.msra.mxu0 0.0
  %2998 = vmatprep.subr.mxu0 0.0
  %2999 = vmatpush1.msra.mxu0 0.0
  %3000 = vmatprep.subr.mxu0 0.0
  %3001 = vmatpush1.msra.mxu0 0.0
  %3002 = vmatprep.subr.mxu0 0.0
  %3003 = vmatpush1.msra.mxu0 0.0
  %3004 = vmatprep.subr.mxu0 0.0
  %3005 = vmatpush1.msra.mxu0 0.0
  %3006 = vmatprep.subr.mxu0 0.0
  %3007 = vmatpush1.msra.mxu0 0.0
  %3008 = vmatprep.subr.mxu0 0.0
  %3009 = vmatpush1.msra.mxu0 0.0
  %3010 = vmatprep.subr.mxu0 0.0
  %3011 = vmatpush1.msra.mxu0 0.0
  %3012 = vmatprep.subr.mxu0 0.0
  %3013 = vmatpush1.msra.mxu0 0.0
  %v3014 = vand.u32 %v688, 4294901760
  %v3015 = vsub.f32 %v688, %v3014
  %3016 = vmatprep.mubr.f32.mxu0 %v3015
  %v3017 = vand.u32 %v461, 4294901760
  %v3018 = vsub.f32 %v461, %v3017
  %3019 = vmatmul.mubr.f32.gmra.mrb[0].mxu0 %v3018
  %v3020 = vpop.f32.mrb[0].mxu0
  %v3021 = vadd.f32 %v2826, %v3020
  %v3022 = vpop.f32.mrb[0].mxu0
  %v3023 = vadd.f32 %v2828, %v3022
  %v3024 = vand.u32 %v691, 4294901760
  %v3025 = vsub.f32 %v691, %v3024
  %3026 = vmatprep.mubr.f32.mxu0 %v3025
  %v3027 = vand.u32 %v465, 4294901760
  %v3028 = vsub.f32 %v465, %v3027
  %3029 = vmatmul.mubr.f32.gmra.mrb[0].mxu0 %v3028
  %v3030 = vpop.f32.mrb[0].mxu0
  %v3031 = vadd.f32 %v2834, %v3030
  %v3032 = vpop.f32.mrb[0].mxu0
  %v3033 = vadd.f32 %v2836, %v3032
  %v3034 = vand.u32 %v694, 4294901760
  %v3035 = vsub.f32 %v694, %v3034
  %3036 = vmatprep.mubr.f32.mxu0 %v3035
  %v3037 = vand.u32 %v469, 4294901760
  %v3038 = vsub.f32 %v469, %v3037
  %3039 = vmatmul.mubr.f32.gmra.mrb[0].mxu0 %v3038
  %v3040 = vpop.f32.mrb[0].mxu0
  %v3041 = vadd.f32 %v2842, %v3040
  %v3042 = vpop.f32.mrb[0].mxu0
  %v3043 = vadd.f32 %v2844, %v3042
  %v3044 = vand.u32 %v697, 4294901760
  %v3045 = vsub.f32 %v697, %v3044
  %3046 = vmatprep.mubr.f32.mxu0 %v3045
  %v3047 = vand.u32 %v473, 4294901760
  %v3048 = vsub.f32 %v473, %v3047
  %3049 = vmatmul.mubr.f32.gmra.mrb[0].mxu0 %v3048
  %v3050 = vpop.f32.mrb[0].mxu0
  %v3051 = vadd.f32 %v2850, %v3050
  %v3052 = vpop.f32.mrb[0].mxu0
  %v3053 = vadd.f32 %v2852, %v3052
  %v3054 = vand.u32 %v700, 4294901760
  %v3055 = vsub.f32 %v700, %v3054
  %3056 = vmatprep.mubr.f32.mxu0 %v3055
  %v3057 = vand.u32 %v477, 4294901760
  %v3058 = vsub.f32 %v477, %v3057
  %3059 = vmatmul.mubr.f32.gmra.mrb[0].mxu0 %v3058
  %v3060 = vpop.f32.mrb[0].mxu0
  %v3061 = vadd.f32 %v2858, %v3060
  %v3062 = vpop.f32.mrb[0].mxu0
  %v3063 = vadd.f32 %v2860, %v3062
  %v3064 = vand.u32 %v703, 4294901760
  %v3065 = vsub.f32 %v703, %v3064
  %3066 = vmatprep.mubr.f32.mxu0 %v3065
  %v3067 = vand.u32 %v481, 4294901760
  %v3068 = vsub.f32 %v481, %v3067
  %3069 = vmatmul.mubr.f32.gmra.mrb[0].mxu0 %v3068
  %v3070 = vpop.f32.mrb[0].mxu0
  %v3071 = vadd.f32 %v2866, %v3070
  %v3072 = vpop.f32.mrb[0].mxu0
  %v3073 = vadd.f32 %v2868, %v3072
  %v3074 = vand.u32 %v706, 4294901760
  %v3075 = vsub.f32 %v706, %v3074
  %3076 = vmatprep.mubr.f32.mxu0 %v3075
  %v3077 = vand.u32 %v485, 4294901760
  %v3078 = vsub.f32 %v485, %v3077
  %3079 = vmatmul.mubr.f32.gmra.mrb[0].mxu0 %v3078
  %v3080 = vpop.f32.mrb[0].mxu0
  %v3081 = vadd.f32 %v2874, %v3080
  %v3082 = vpop.f32.mrb[0].mxu0
  %v3083 = vadd.f32 %v2876, %v3082
  %3084 = vdwg.mxu0
  %v3085 = vand.u32 %v616, 4294901760
  %3086 = vmatprep.subr.mxu0 %v3085
  %v3087 = vand.u32 %v615, 4294901760
  %3088 = vmatpush1.msra.mxu0 %v3087
  %v3089 = vand.u32 %v620, 4294901760
  %3090 = vmatprep.subr.mxu0 %v3089
  %v3091 = vand.u32 %v619, 4294901760
  %3092 = vmatpush1.msra.mxu0 %v3091
  %v3093 = vand.u32 %v624, 4294901760
  %3094 = vmatprep.subr.mxu0 %v3093
  %v3095 = vand.u32 %v623, 4294901760
  %3096 = vmatpush1.msra.mxu0 %v3095
  %v3097 = vand.u32 %v628, 4294901760
  %3098 = vmatprep.subr.mxu0 %v3097
  %v3099 = vand.u32 %v627, 4294901760
  %3100 = vmatpush1.msra.mxu0 %v3099
  %v3101 = vand.u32 %v632, 4294901760
  %3102 = vmatprep.subr.mxu0 %v3101
  %v3103 = vand.u32 %v631, 4294901760
  %3104 = vmatpush1.msra.mxu0 %v3103
  %v3105 = vand.u32 %v636, 4294901760
  %3106 = vmatprep.subr.mxu0 %v3105
  %v3107 = vand.u32 %v635, 4294901760
  %3108 = vmatpush1.msra.mxu0 %v3107
  %v3109 = vand.u32 %v640, 4294901760
  %3110 = vmatprep.subr.mxu0 %v3109
  %v3111 = vand.u32 %v639, 4294901760
  %3112 = vmatpush1.msra.mxu0 %v3111
  %v3113 = vand.u32 %v644, 4294901760
  %3114 = vmatprep.subr.mxu0 %v3113
  %v3115 = vand.u32 %v643, 4294901760
  %3116 = vmatpush1.msra.mxu0 %v3115
  %v3117 = vand.u32 %v648, 4294901760
  %3118 = vmatprep.subr.mxu0 %v3117
  %v3119 = vand.u32 %v647, 4294901760
  %3120 = vmatpush1.msra.mxu0 %v3119
  %v3121 = vand.u32 %v652, 4294901760
  %3122 = vmatprep.subr.mxu0 %v3121
  %v3123 = vand.u32 %v651, 4294901760
  %3124 = vmatpush1.msra.mxu0 %v3123
  %v3125 = vand.u32 %v656, 4294901760
  %3126 = vmatprep.subr.mxu0 %v3125
  %v3127 = vand.u32 %v655, 4294901760
  %3128 = vmatpush1.msra.mxu0 %v3127
  %v3129 = vand.u32 %v660, 4294901760
  %3130 = vmatprep.subr.mxu0 %v3129
  %v3131 = vand.u32 %v659, 4294901760
  %3132 = vmatpush1.msra.mxu0 %v3131
  %v3133 = vand.u32 %v664, 4294901760
  %3134 = vmatprep.subr.mxu0 %v3133
  %v3135 = vand.u32 %v663, 4294901760
  %3136 = vmatpush1.msra.mxu0 %v3135
  %v3137 = vand.u32 %v668, 4294901760
  %3138 = vmatprep.subr.mxu0 %v3137
  %v3139 = vand.u32 %v667, 4294901760
  %3140 = vmatpush1.msra.mxu0 %v3139
  %v3141 = vand.u32 %v672, 4294901760
  %3142 = vmatprep.subr.mxu0 %v3141
  %v3143 = vand.u32 %v671, 4294901760
  %3144 = vmatpush1.msra.mxu0 %v3143
  %v3145 = vand.u32 %v676, 4294901760
  %3146 = vmatprep.subr.mxu0 %v3145
  %v3147 = vand.u32 %v675, 4294901760
  %3148 = vmatpush1.msra.mxu0 %v3147
  %v3149 = vand.u32 %v680, 4294901760
  %3150 = vmatprep.subr.mxu0 %v3149
  %v3151 = vand.u32 %v679, 4294901760
  %3152 = vmatpush1.msra.mxu0 %v3151
  %v3153 = vand.u32 %v684, 4294901760
  %3154 = vmatprep.subr.mxu0 %v3153
  %v3155 = vand.u32 %v683, 4294901760
  %3156 = vmatpush1.msra.mxu0 %v3155
  %3157 = vmatprep.subr.mxu0 0.0
  %3158 = vmatpush1.msra.mxu0 0.0
  %3159 = vmatprep.subr.mxu0 0.0
  %3160 = vmatpush1.msra.mxu0 0.0
  %3161 = vmatprep.subr.mxu0 0.0
  %3162 = vmatpush1.msra.mxu0 0.0
  %3163 = vmatprep.subr.mxu0 0.0
  %3164 = vmatpush1.msra.mxu0 0.0
  %3165 = vmatprep.subr.mxu0 0.0
  %3166 = vmatpush1.msra.mxu0 0.0
  %3167 = vmatprep.subr.mxu0 0.0
  %3168 = vmatpush1.msra.mxu0 0.0
  %3169 = vmatprep.subr.mxu0 0.0
  %3170 = vmatpush1.msra.mxu0 0.0
  %3171 = vmatprep.subr.mxu0 0.0
  %3172 = vmatpush1.msra.mxu0 0.0
  %3173 = vmatprep.subr.mxu0 0.0
  %3174 = vmatpush1.msra.mxu0 0.0
  %3175 = vmatprep.subr.mxu0 0.0
  %3176 = vmatpush1.msra.mxu0 0.0
  %3177 = vmatprep.subr.mxu0 0.0
  %3178 = vmatpush1.msra.mxu0 0.0
  %3179 = vmatprep.subr.mxu0 0.0
  %3180 = vmatpush1.msra.mxu0 0.0
  %3181 = vmatprep.subr.mxu0 0.0
  %3182 = vmatpush1.msra.mxu0 0.0
  %3183 = vmatprep.subr.mxu0 0.0
  %3184 = vmatpush1.msra.mxu0 0.0
  %v3185 = vand.u32 %v688, 4294901760
  %v3186 = vsub.f32 %v688, %v3185
  %v3187 = vand.u32 %v3186, 4294901760
  %3188 = vmatprep.mubr.f32.mxu0 %v3187
  %v3189 = vand.u32 %v461, 4294901760
  %v3190 = vsub.f32 %v461, %v3189
  %v3191 = vand.u32 %v3190, 4294901760
  %3192 = vmatmul.mubr.f32.gmra.mrb[0].mxu0 %v3191
  %v3193 = vpop.f32.mrb[0].mxu0
  %v3194 = vadd.f32 %v3021, %v3193
  %v3195 = vpop.f32.mrb[0].mxu0
  %v3196 = vadd.f32 %v3023, %v3195
  %v3197 = vand.u32 %v691, 4294901760
  %v3198 = vsub.f32 %v691, %v3197
  %v3199 = vand.u32 %v3198, 4294901760
  %3200 = vmatprep.mubr.f32.mxu0 %v3199
  %v3201 = vand.u32 %v465, 4294901760
  %v3202 = vsub.f32 %v465, %v3201
  %v3203 = vand.u32 %v3202, 4294901760
  %3204 = vmatmul.mubr.f32.gmra.mrb[0].mxu0 %v3203
  %v3205 = vpop.f32.mrb[0].mxu0
  %v3206 = vadd.f32 %v3031, %v3205
  %v3207 = vpop.f32.mrb[0].mxu0
  %v3208 = vadd.f32 %v3033, %v3207
  %v3209 = vand.u32 %v694, 4294901760
  %v3210 = vsub.f32 %v694, %v3209
  %v3211 = vand.u32 %v3210, 4294901760
  %3212 = vmatprep.mubr.f32.mxu0 %v3211
  %v3213 = vand.u32 %v469, 4294901760
  %v3214 = vsub.f32 %v469, %v3213
  %v3215 = vand.u32 %v3214, 4294901760
  %3216 = vmatmul.mubr.f32.gmra.mrb[0].mxu0 %v3215
  %v3217 = vpop.f32.mrb[0].mxu0
  %v3218 = vadd.f32 %v3041, %v3217
  %v3219 = vpop.f32.mrb[0].mxu0
  %v3220 = vadd.f32 %v3043, %v3219
  %v3221 = vand.u32 %v697, 4294901760
  %v3222 = vsub.f32 %v697, %v3221
  %v3223 = vand.u32 %v3222, 4294901760
  %3224 = vmatprep.mubr.f32.mxu0 %v3223
  %v3225 = vand.u32 %v473, 4294901760
  %v3226 = vsub.f32 %v473, %v3225
  %v3227 = vand.u32 %v3226, 4294901760
  %3228 = vmatmul.mubr.f32.gmra.mrb[0].mxu0 %v3227
  %v3229 = vpop.f32.mrb[0].mxu0
  %v3230 = vadd.f32 %v3051, %v3229
  %v3231 = vpop.f32.mrb[0].mxu0
  %v3232 = vadd.f32 %v3053, %v3231
  %v3233 = vand.u32 %v700, 4294901760
  %v3234 = vsub.f32 %v700, %v3233
  %v3235 = vand.u32 %v3234, 4294901760
  %3236 = vmatprep.mubr.f32.mxu0 %v3235
  %v3237 = vand.u32 %v477, 4294901760
  %v3238 = vsub.f32 %v477, %v3237
  %v3239 = vand.u32 %v3238, 4294901760
  %3240 = vmatmul.mubr.f32.gmra.mrb[0].mxu0 %v3239
  %v3241 = vpop.f32.mrb[0].mxu0
  %v3242 = vadd.f32 %v3061, %v3241
  %v3243 = vpop.f32.mrb[0].mxu0
  %v3244 = vadd.f32 %v3063, %v3243
  %v3245 = vand.u32 %v703, 4294901760
  %v3246 = vsub.f32 %v703, %v3245
  %v3247 = vand.u32 %v3246, 4294901760
  %3248 = vmatprep.mubr.f32.mxu0 %v3247
  %v3249 = vand.u32 %v481, 4294901760
  %v3250 = vsub.f32 %v481, %v3249
  %v3251 = vand.u32 %v3250, 4294901760
  %3252 = vmatmul.mubr.f32.gmra.mrb[0].mxu0 %v3251
  %v3253 = vpop.f32.mrb[0].mxu0
  %v3254 = vadd.f32 %v3071, %v3253
  %v3255 = vpop.f32.mrb[0].mxu0
  %v3256 = vadd.f32 %v3073, %v3255
  %v3257 = vand.u32 %v706, 4294901760
  %v3258 = vsub.f32 %v706, %v3257
  %v3259 = vand.u32 %v3258, 4294901760
  %3260 = vmatprep.mubr.f32.mxu0 %v3259
  %v3261 = vand.u32 %v485, 4294901760
  %v3262 = vsub.f32 %v485, %v3261
  %v3263 = vand.u32 %v3262, 4294901760
  %3264 = vmatmul.mubr.f32.gmra.mrb[0].mxu0 %v3263
  %v3265 = vpop.f32.mrb[0].mxu0
  %v3266 = vadd.f32 %v3081, %v3265
  %v3267 = vpop.f32.mrb[0].mxu0
  %v3268 = vadd.f32 %v3083, %v3267
  %3269 = vdwg.mxu0
  %v3270 = vand.u32 %v616, 4294901760
  %v3271 = vsub.f32 %v616, %v3270
  %v3272 = vand.u32 %v3271, 4294901760
  %3273 = vmatprep.subr.mxu0 %v3272
  %v3274 = vand.u32 %v615, 4294901760
  %v3275 = vsub.f32 %v615, %v3274
  %v3276 = vand.u32 %v3275, 4294901760
  %3277 = vmatpush1.msra.mxu0 %v3276
  %v3278 = vand.u32 %v620, 4294901760
  %v3279 = vsub.f32 %v620, %v3278
  %v3280 = vand.u32 %v3279, 4294901760
  %3281 = vmatprep.subr.mxu0 %v3280
  %v3282 = vand.u32 %v619, 4294901760
  %v3283 = vsub.f32 %v619, %v3282
  %v3284 = vand.u32 %v3283, 4294901760
  %3285 = vmatpush1.msra.mxu0 %v3284
  %v3286 = vand.u32 %v624, 4294901760
  %v3287 = vsub.f32 %v624, %v3286
  %v3288 = vand.u32 %v3287, 4294901760
  %3289 = vmatprep.subr.mxu0 %v3288
  %v3290 = vand.u32 %v623, 4294901760
  %v3291 = vsub.f32 %v623, %v3290
  %v3292 = vand.u32 %v3291, 4294901760
  %3293 = vmatpush1.msra.mxu0 %v3292
  %v3294 = vand.u32 %v628, 4294901760
  %v3295 = vsub.f32 %v628, %v3294
  %v3296 = vand.u32 %v3295, 4294901760
  %3297 = vmatprep.subr.mxu0 %v3296
  %v3298 = vand.u32 %v627, 4294901760
  %v3299 = vsub.f32 %v627, %v3298
  %v3300 = vand.u32 %v3299, 4294901760
  %3301 = vmatpush1.msra.mxu0 %v3300
  %v3302 = vand.u32 %v632, 4294901760
  %v3303 = vsub.f32 %v632, %v3302
  %v3304 = vand.u32 %v3303, 4294901760
  %3305 = vmatprep.subr.mxu0 %v3304
  %v3306 = vand.u32 %v631, 4294901760
  %v3307 = vsub.f32 %v631, %v3306
  %v3308 = vand.u32 %v3307, 4294901760
  %3309 = vmatpush1.msra.mxu0 %v3308
  %v3310 = vand.u32 %v636, 4294901760
  %v3311 = vsub.f32 %v636, %v3310
  %v3312 = vand.u32 %v3311, 4294901760
  %3313 = vmatprep.subr.mxu0 %v3312
  %v3314 = vand.u32 %v635, 4294901760
  %v3315 = vsub.f32 %v635, %v3314
  %v3316 = vand.u32 %v3315, 4294901760
  %3317 = vmatpush1.msra.mxu0 %v3316
  %v3318 = vand.u32 %v640, 4294901760
  %v3319 = vsub.f32 %v640, %v3318
  %v3320 = vand.u32 %v3319, 4294901760
  %3321 = vmatprep.subr.mxu0 %v3320
  %v3322 = vand.u32 %v639, 4294901760
  %v3323 = vsub.f32 %v639, %v3322
  %v3324 = vand.u32 %v3323, 4294901760
  %3325 = vmatpush1.msra.mxu0 %v3324
  %v3326 = vand.u32 %v644, 4294901760
  %v3327 = vsub.f32 %v644, %v3326
  %v3328 = vand.u32 %v3327, 4294901760
  %3329 = vmatprep.subr.mxu0 %v3328
  %v3330 = vand.u32 %v643, 4294901760
  %v3331 = vsub.f32 %v643, %v3330
  %v3332 = vand.u32 %v3331, 4294901760
  %3333 = vmatpush1.msra.mxu0 %v3332
  %v3334 = vand.u32 %v648, 4294901760
  %v3335 = vsub.f32 %v648, %v3334
  %v3336 = vand.u32 %v3335, 4294901760
  %3337 = vmatprep.subr.mxu0 %v3336
  %v3338 = vand.u32 %v647, 4294901760
  %v3339 = vsub.f32 %v647, %v3338
  %v3340 = vand.u32 %v3339, 4294901760
  %3341 = vmatpush1.msra.mxu0 %v3340
  %v3342 = vand.u32 %v652, 4294901760
  %v3343 = vsub.f32 %v652, %v3342
  %v3344 = vand.u32 %v3343, 4294901760
  %3345 = vmatprep.subr.mxu0 %v3344
  %v3346 = vand.u32 %v651, 4294901760
  %v3347 = vsub.f32 %v651, %v3346
  %v3348 = vand.u32 %v3347, 4294901760
  %3349 = vmatpush1.msra.mxu0 %v3348
  %v3350 = vand.u32 %v656, 4294901760
  %v3351 = vsub.f32 %v656, %v3350
  %v3352 = vand.u32 %v3351, 4294901760
  %3353 = vmatprep.subr.mxu0 %v3352
  %v3354 = vand.u32 %v655, 4294901760
  %v3355 = vsub.f32 %v655, %v3354
  %v3356 = vand.u32 %v3355, 4294901760
  %3357 = vmatpush1.msra.mxu0 %v3356
  %v3358 = vand.u32 %v660, 4294901760
  %v3359 = vsub.f32 %v660, %v3358
  %v3360 = vand.u32 %v3359, 4294901760
  %3361 = vmatprep.subr.mxu0 %v3360
  %v3362 = vand.u32 %v659, 4294901760
  %v3363 = vsub.f32 %v659, %v3362
  %v3364 = vand.u32 %v3363, 4294901760
  %3365 = vmatpush1.msra.mxu0 %v3364
  %v3366 = vand.u32 %v664, 4294901760
  %v3367 = vsub.f32 %v664, %v3366
  %v3368 = vand.u32 %v3367, 4294901760
  %3369 = vmatprep.subr.mxu0 %v3368
  %v3370 = vand.u32 %v663, 4294901760
  %v3371 = vsub.f32 %v663, %v3370
  %v3372 = vand.u32 %v3371, 4294901760
  %3373 = vmatpush1.msra.mxu0 %v3372
  %v3374 = vand.u32 %v668, 4294901760
  %v3375 = vsub.f32 %v668, %v3374
  %v3376 = vand.u32 %v3375, 4294901760
  %3377 = vmatprep.subr.mxu0 %v3376
  %v3378 = vand.u32 %v667, 4294901760
  %v3379 = vsub.f32 %v667, %v3378
  %v3380 = vand.u32 %v3379, 4294901760
  %3381 = vmatpush1.msra.mxu0 %v3380
  %v3382 = vand.u32 %v672, 4294901760
  %v3383 = vsub.f32 %v672, %v3382
  %v3384 = vand.u32 %v3383, 4294901760
  %3385 = vmatprep.subr.mxu0 %v3384
  %v3386 = vand.u32 %v671, 4294901760
  %v3387 = vsub.f32 %v671, %v3386
  %v3388 = vand.u32 %v3387, 4294901760
  %3389 = vmatpush1.msra.mxu0 %v3388
  %v3390 = vand.u32 %v676, 4294901760
  %v3391 = vsub.f32 %v676, %v3390
  %v3392 = vand.u32 %v3391, 4294901760
  %3393 = vmatprep.subr.mxu0 %v3392
  %v3394 = vand.u32 %v675, 4294901760
  %v3395 = vsub.f32 %v675, %v3394
  %v3396 = vand.u32 %v3395, 4294901760
  %3397 = vmatpush1.msra.mxu0 %v3396
  %v3398 = vand.u32 %v680, 4294901760
  %v3399 = vsub.f32 %v680, %v3398
  %v3400 = vand.u32 %v3399, 4294901760
  %3401 = vmatprep.subr.mxu0 %v3400
  %v3402 = vand.u32 %v679, 4294901760
  %v3403 = vsub.f32 %v679, %v3402
  %v3404 = vand.u32 %v3403, 4294901760
  %3405 = vmatpush1.msra.mxu0 %v3404
  %v3406 = vand.u32 %v684, 4294901760
  %v3407 = vsub.f32 %v684, %v3406
  %v3408 = vand.u32 %v3407, 4294901760
  %3409 = vmatprep.subr.mxu0 %v3408
  %v3410 = vand.u32 %v683, 4294901760
  %v3411 = vsub.f32 %v683, %v3410
  %v3412 = vand.u32 %v3411, 4294901760
  %3413 = vmatpush1.msra.mxu0 %v3412
  %3414 = vmatprep.subr.mxu0 0.0
  %3415 = vmatpush1.msra.mxu0 0.0
  %3416 = vmatprep.subr.mxu0 0.0
  %3417 = vmatpush1.msra.mxu0 0.0
  %3418 = vmatprep.subr.mxu0 0.0
  %3419 = vmatpush1.msra.mxu0 0.0
  %3420 = vmatprep.subr.mxu0 0.0
  %3421 = vmatpush1.msra.mxu0 0.0
  %3422 = vmatprep.subr.mxu0 0.0
  %3423 = vmatpush1.msra.mxu0 0.0
  %3424 = vmatprep.subr.mxu0 0.0
  %3425 = vmatpush1.msra.mxu0 0.0
  %3426 = vmatprep.subr.mxu0 0.0
  %3427 = vmatpush1.msra.mxu0 0.0
  %3428 = vmatprep.subr.mxu0 0.0
  %3429 = vmatpush1.msra.mxu0 0.0
  %3430 = vmatprep.subr.mxu0 0.0
  %3431 = vmatpush1.msra.mxu0 0.0
  %3432 = vmatprep.subr.mxu0 0.0
  %3433 = vmatpush1.msra.mxu0 0.0
  %3434 = vmatprep.subr.mxu0 0.0
  %3435 = vmatpush1.msra.mxu0 0.0
  %3436 = vmatprep.subr.mxu0 0.0
  %3437 = vmatpush1.msra.mxu0 0.0
  %3438 = vmatprep.subr.mxu0 0.0
  %3439 = vmatpush1.msra.mxu0 0.0
  %3440 = vmatprep.subr.mxu0 0.0
  %3441 = vmatpush1.msra.mxu0 0.0
  %v3442 = vand.u32 %v688, 4294901760
  %3443 = vmatprep.mubr.f32.mxu0 %v3442
  %v3444 = vand.u32 %v461, 4294901760
  %3445 = vmatmul.mubr.f32.gmra.mrb[0].mxu0 %v3444
  %v3446 = vpop.f32.mrb[0].mxu0
  %v3447 = vadd.f32 %v3194, %v3446
  %v3448 = vpop.f32.mrb[0].mxu0
  %v3449 = vadd.f32 %v3196, %v3448
  %v3450 = vand.u32 %v691, 4294901760
  %3451 = vmatprep.mubr.f32.mxu0 %v3450
  %v3452 = vand.u32 %v465, 4294901760
  %3453 = vmatmul.mubr.f32.gmra.mrb[0].mxu0 %v3452
  %v3454 = vpop.f32.mrb[0].mxu0
  %v3455 = vadd.f32 %v3206, %v3454
  %v3456 = vpop.f32.mrb[0].mxu0
  %v3457 = vadd.f32 %v3208, %v3456
  %v3458 = vand.u32 %v694, 4294901760
  %3459 = vmatprep.mubr.f32.mxu0 %v3458
  %v3460 = vand.u32 %v469, 4294901760
  %3461 = vmatmul.mubr.f32.gmra.mrb[0].mxu0 %v3460
  %v3462 = vpop.f32.mrb[0].mxu0
  %v3463 = vadd.f32 %v3218, %v3462
  %v3464 = vpop.f32.mrb[0].mxu0
  %v3465 = vadd.f32 %v3220, %v3464
  %v3466 = vand.u32 %v697, 4294901760
  %3467 = vmatprep.mubr.f32.mxu0 %v3466
  %v3468 = vand.u32 %v473, 4294901760
  %3469 = vmatmul.mubr.f32.gmra.mrb[0].mxu0 %v3468
  %v3470 = vpop.f32.mrb[0].mxu0
  %v3471 = vadd.f32 %v3230, %v3470
  %v3472 = vpop.f32.mrb[0].mxu0
  %v3473 = vadd.f32 %v3232, %v3472
  %v3474 = vand.u32 %v700, 4294901760
  %3475 = vmatprep.mubr.f32.mxu0 %v3474
  %v3476 = vand.u32 %v477, 4294901760
  %3477 = vmatmul.mubr.f32.gmra.mrb[0].mxu0 %v3476
  %v3478 = vpop.f32.mrb[0].mxu0
  %v3479 = vadd.f32 %v3242, %v3478
  %v3480 = vpop.f32.mrb[0].mxu0
  %v3481 = vadd.f32 %v3244, %v3480
  %v3482 = vand.u32 %v703, 4294901760
  %3483 = vmatprep.mubr.f32.mxu0 %v3482
  %v3484 = vand.u32 %v481, 4294901760
  %3485 = vmatmul.mubr.f32.gmra.mrb[0].mxu0 %v3484
  %v3486 = vpop.f32.mrb[0].mxu0
  %v3487 = vadd.f32 %v3254, %v3486
  %v3488 = vpop.f32.mrb[0].mxu0
  %v3489 = vadd.f32 %v3256, %v3488
  %v3490 = vand.u32 %v706, 4294901760
  %3491 = vmatprep.mubr.f32.mxu0 %v3490
  %v3492 = vand.u32 %v485, 4294901760
  %3493 = vmatmul.mubr.f32.gmra.mrb[0].mxu0 %v3492
  %v3494 = vpop.f32.mrb[0].mxu0
  %v3495 = vadd.f32 %v3266, %v3494
  %v3496 = vpop.f32.mrb[0].mxu0
  %v3497 = vadd.f32 %v3268, %v3496
  %3498 = vdwg.mxu0
  %v3499 = vand.u32 %v616, 4294901760
  %3500 = vmatprep.subr.mxu0 %v3499
  %v3501 = vand.u32 %v615, 4294901760
  %3502 = vmatpush1.msra.mxu0 %v3501
  %v3503 = vand.u32 %v620, 4294901760
  %3504 = vmatprep.subr.mxu0 %v3503
  %v3505 = vand.u32 %v619, 4294901760
  %3506 = vmatpush1.msra.mxu0 %v3505
  %v3507 = vand.u32 %v624, 4294901760
  %3508 = vmatprep.subr.mxu0 %v3507
  %v3509 = vand.u32 %v623, 4294901760
  %3510 = vmatpush1.msra.mxu0 %v3509
  %v3511 = vand.u32 %v628, 4294901760
  %3512 = vmatprep.subr.mxu0 %v3511
  %v3513 = vand.u32 %v627, 4294901760
  %3514 = vmatpush1.msra.mxu0 %v3513
  %v3515 = vand.u32 %v632, 4294901760
  %3516 = vmatprep.subr.mxu0 %v3515
  %v3517 = vand.u32 %v631, 4294901760
  %3518 = vmatpush1.msra.mxu0 %v3517
  %v3519 = vand.u32 %v636, 4294901760
  %3520 = vmatprep.subr.mxu0 %v3519
  %v3521 = vand.u32 %v635, 4294901760
  %3522 = vmatpush1.msra.mxu0 %v3521
  %v3523 = vand.u32 %v640, 4294901760
  %3524 = vmatprep.subr.mxu0 %v3523
  %v3525 = vand.u32 %v639, 4294901760
  %3526 = vmatpush1.msra.mxu0 %v3525
  %v3527 = vand.u32 %v644, 4294901760
  %3528 = vmatprep.subr.mxu0 %v3527
  %v3529 = vand.u32 %v643, 4294901760
  %3530 = vmatpush1.msra.mxu0 %v3529
  %v3531 = vand.u32 %v648, 4294901760
  %3532 = vmatprep.subr.mxu0 %v3531
  %v3533 = vand.u32 %v647, 4294901760
  %3534 = vmatpush1.msra.mxu0 %v3533
  %v3535 = vand.u32 %v652, 4294901760
  %3536 = vmatprep.subr.mxu0 %v3535
  %v3537 = vand.u32 %v651, 4294901760
  %3538 = vmatpush1.msra.mxu0 %v3537
  %v3539 = vand.u32 %v656, 4294901760
  %3540 = vmatprep.subr.mxu0 %v3539
  %v3541 = vand.u32 %v655, 4294901760
  %3542 = vmatpush1.msra.mxu0 %v3541
  %v3543 = vand.u32 %v660, 4294901760
  %3544 = vmatprep.subr.mxu0 %v3543
  %v3545 = vand.u32 %v659, 4294901760
  %3546 = vmatpush1.msra.mxu0 %v3545
  %v3547 = vand.u32 %v664, 4294901760
  %3548 = vmatprep.subr.mxu0 %v3547
  %v3549 = vand.u32 %v663, 4294901760
  %3550 = vmatpush1.msra.mxu0 %v3549
  %v3551 = vand.u32 %v668, 4294901760
  %3552 = vmatprep.subr.mxu0 %v3551
  %v3553 = vand.u32 %v667, 4294901760
  %3554 = vmatpush1.msra.mxu0 %v3553
  %v3555 = vand.u32 %v672, 4294901760
  %3556 = vmatprep.subr.mxu0 %v3555
  %v3557 = vand.u32 %v671, 4294901760
  %3558 = vmatpush1.msra.mxu0 %v3557
  %v3559 = vand.u32 %v676, 4294901760
  %3560 = vmatprep.subr.mxu0 %v3559
  %v3561 = vand.u32 %v675, 4294901760
  %3562 = vmatpush1.msra.mxu0 %v3561
  %v3563 = vand.u32 %v680, 4294901760
  %3564 = vmatprep.subr.mxu0 %v3563
  %v3565 = vand.u32 %v679, 4294901760
  %3566 = vmatpush1.msra.mxu0 %v3565
  %v3567 = vand.u32 %v684, 4294901760
  %3568 = vmatprep.subr.mxu0 %v3567
  %v3569 = vand.u32 %v683, 4294901760
  %3570 = vmatpush1.msra.mxu0 %v3569
  %3571 = vmatprep.subr.mxu0 0.0
  %3572 = vmatpush1.msra.mxu0 0.0
  %3573 = vmatprep.subr.mxu0 0.0
  %3574 = vmatpush1.msra.mxu0 0.0
  %3575 = vmatprep.subr.mxu0 0.0
  %3576 = vmatpush1.msra.mxu0 0.0
  %3577 = vmatprep.subr.mxu0 0.0
  %3578 = vmatpush1.msra.mxu0 0.0
  %3579 = vmatprep.subr.mxu0 0.0
  %3580 = vmatpush1.msra.mxu0 0.0
  %3581 = vmatprep.subr.mxu0 0.0
  %3582 = vmatpush1.msra.mxu0 0.0
  %3583 = vmatprep.subr.mxu0 0.0
  %3584 = vmatpush1.msra.mxu0 0.0
  %3585 = vmatprep.subr.mxu0 0.0
  %3586 = vmatpush1.msra.mxu0 0.0
  %3587 = vmatprep.subr.mxu0 0.0
  %3588 = vmatpush1.msra.mxu0 0.0
  %3589 = vmatprep.subr.mxu0 0.0
  %3590 = vmatpush1.msra.mxu0 0.0
  %3591 = vmatprep.subr.mxu0 0.0
  %3592 = vmatpush1.msra.mxu0 0.0
  %3593 = vmatprep.subr.mxu0 0.0
  %3594 = vmatpush1.msra.mxu0 0.0
  %3595 = vmatprep.subr.mxu0 0.0
  %3596 = vmatpush1.msra.mxu0 0.0
  %3597 = vmatprep.subr.mxu0 0.0
  %3598 = vmatpush1.msra.mxu0 0.0
  %v3599 = vand.u32 %v688, 4294901760
  %3600 = vmatprep.mubr.f32.mxu0 %v3599
  %v3601 = vand.u32 %v461, 4294901760
  %3602 = vmatmul.mubr.f32.gmra.mrb[0].mxu0 %v3601
  %v3603 = vpop.f32.mrb[0].mxu0
  %v3604 = vadd.f32 %v3447, %v3603
  %v3605 = vpop.f32.mrb[0].mxu0
  %v3606 = vadd.f32 %v3449, %v3605
  %v3607 = vand.u32 %v691, 4294901760
  %3608 = vmatprep.mubr.f32.mxu0 %v3607
  %v3609 = vand.u32 %v465, 4294901760
  %3610 = vmatmul.mubr.f32.gmra.mrb[0].mxu0 %v3609
  %v3611 = vpop.f32.mrb[0].mxu0
  %v3612 = vadd.f32 %v3455, %v3611
  %v3613 = vpop.f32.mrb[0].mxu0
  %v3614 = vadd.f32 %v3457, %v3613
  %v3615 = vand.u32 %v694, 4294901760
  %3616 = vmatprep.mubr.f32.mxu0 %v3615
  %v3617 = vand.u32 %v469, 4294901760
  %3618 = vmatmul.mubr.f32.gmra.mrb[0].mxu0 %v3617
  %v3619 = vpop.f32.mrb[0].mxu0
  %v3620 = vadd.f32 %v3463, %v3619
  %v3621 = vpop.f32.mrb[0].mxu0
  %v3622 = vadd.f32 %v3465, %v3621
  %v3623 = vand.u32 %v697, 4294901760
  %3624 = vmatprep.mubr.f32.mxu0 %v3623
  %v3625 = vand.u32 %v473, 4294901760
  %3626 = vmatmul.mubr.f32.gmra.mrb[0].mxu0 %v3625
  %v3627 = vpop.f32.mrb[0].mxu0
  %v3628 = vadd.f32 %v3471, %v3627
  %v3629 = vpop.f32.mrb[0].mxu0
  %v3630 = vadd.f32 %v3473, %v3629
  %v3631 = vand.u32 %v700, 4294901760
  %3632 = vmatprep.mubr.f32.mxu0 %v3631
  %v3633 = vand.u32 %v477, 4294901760
  %3634 = vmatmul.mubr.f32.gmra.mrb[0].mxu0 %v3633
  %v3635 = vpop.f32.mrb[0].mxu0
  %v3636 = vadd.f32 %v3479, %v3635
  %v3637 = vpop.f32.mrb[0].mxu0
  %v3638 = vadd.f32 %v3481, %v3637
  %v3639 = vand.u32 %v703, 4294901760
  %3640 = vmatprep.mubr.f32.mxu0 %v3639
  %v3641 = vand.u32 %v481, 4294901760
  %3642 = vmatmul.mubr.f32.gmra.mrb[0].mxu0 %v3641
  %v3643 = vpop.f32.mrb[0].mxu0
  %v3644 = vadd.f32 %v3487, %v3643
  %v3645 = vpop.f32.mrb[0].mxu0
  %v3646 = vadd.f32 %v3489, %v3645
  %v3647 = vand.u32 %v706, 4294901760
  %3648 = vmatprep.mubr.f32.mxu0 %v3647
  %v3649 = vand.u32 %v485, 4294901760
  %3650 = vmatmul.mubr.f32.gmra.mrb[0].mxu0 %v3649
  %v3651 = vpop.f32.mrb[0].mxu0
  %v3652 = vadd.f32 %v3495, %v3651
  %v3653 = vpop.f32.mrb[0].mxu0
  %v3654 = vadd.f32 %v3497, %v3653
  %3655 = vdwg.mxu0
  %v3656 = vand.u32 %v490, 4294901760
  %3657 = vmatprep.subr.mxu0 %v3656
  %v3658 = vand.u32 %v489, 4294901760
  %3659 = vmatpush1.msra.mxu0 %v3658
  %v3660 = vand.u32 %v494, 4294901760
  %3661 = vmatprep.subr.mxu0 %v3660
  %v3662 = vand.u32 %v493, 4294901760
  %3663 = vmatpush1.msra.mxu0 %v3662
  %v3664 = vand.u32 %v498, 4294901760
  %3665 = vmatprep.subr.mxu0 %v3664
  %v3666 = vand.u32 %v497, 4294901760
  %3667 = vmatpush1.msra.mxu0 %v3666
  %v3668 = vand.u32 %v502, 4294901760
  %3669 = vmatprep.subr.mxu0 %v3668
  %v3670 = vand.u32 %v501, 4294901760
  %3671 = vmatpush1.msra.mxu0 %v3670
  %v3672 = vand.u32 %v506, 4294901760
  %3673 = vmatprep.subr.mxu0 %v3672
  %v3674 = vand.u32 %v505, 4294901760
  %3675 = vmatpush1.msra.mxu0 %v3674
  %v3676 = vand.u32 %v510, 4294901760
  %3677 = vmatprep.subr.mxu0 %v3676
  %v3678 = vand.u32 %v509, 4294901760
  %3679 = vmatpush1.msra.mxu0 %v3678
  %v3680 = vand.u32 %v514, 4294901760
  %3681 = vmatprep.subr.mxu0 %v3680
  %v3682 = vand.u32 %v513, 4294901760
  %3683 = vmatpush1.msra.mxu0 %v3682
  %v3684 = vand.u32 %v518, 4294901760
  %3685 = vmatprep.subr.mxu0 %v3684
  %v3686 = vand.u32 %v517, 4294901760
  %3687 = vmatpush1.msra.mxu0 %v3686
  %v3688 = vand.u32 %v522, 4294901760
  %3689 = vmatprep.subr.mxu0 %v3688
  %v3690 = vand.u32 %v521, 4294901760
  %3691 = vmatpush1.msra.mxu0 %v3690
  %v3692 = vand.u32 %v526, 4294901760
  %3693 = vmatprep.subr.mxu0 %v3692
  %v3694 = vand.u32 %v525, 4294901760
  %3695 = vmatpush1.msra.mxu0 %v3694
  %v3696 = vand.u32 %v530, 4294901760
  %3697 = vmatprep.subr.mxu0 %v3696
  %v3698 = vand.u32 %v529, 4294901760
  %3699 = vmatpush1.msra.mxu0 %v3698
  %v3700 = vand.u32 %v534, 4294901760
  %3701 = vmatprep.subr.mxu0 %v3700
  %v3702 = vand.u32 %v533, 4294901760
  %3703 = vmatpush1.msra.mxu0 %v3702
  %v3704 = vand.u32 %v538, 4294901760
  %3705 = vmatprep.subr.mxu0 %v3704
  %v3706 = vand.u32 %v537, 4294901760
  %3707 = vmatpush1.msra.mxu0 %v3706
  %v3708 = vand.u32 %v542, 4294901760
  %3709 = vmatprep.subr.mxu0 %v3708
  %v3710 = vand.u32 %v541, 4294901760
  %3711 = vmatpush1.msra.mxu0 %v3710
  %v3712 = vand.u32 %v546, 4294901760
  %3713 = vmatprep.subr.mxu0 %v3712
  %v3714 = vand.u32 %v545, 4294901760
  %3715 = vmatpush1.msra.mxu0 %v3714
  %v3716 = vand.u32 %v550, 4294901760
  %3717 = vmatprep.subr.mxu0 %v3716
  %v3718 = vand.u32 %v549, 4294901760
  %3719 = vmatpush1.msra.mxu0 %v3718
  %v3720 = vand.u32 %v554, 4294901760
  %3721 = vmatprep.subr.mxu0 %v3720
  %v3722 = vand.u32 %v553, 4294901760
  %3723 = vmatpush1.msra.mxu0 %v3722
  %v3724 = vand.u32 %v558, 4294901760
  %3725 = vmatprep.subr.mxu0 %v3724
  %v3726 = vand.u32 %v557, 4294901760
  %3727 = vmatpush1.msra.mxu0 %v3726
  %v3728 = vand.u32 %v562, 4294901760
  %3729 = vmatprep.subr.mxu0 %v3728
  %v3730 = vand.u32 %v561, 4294901760
  %3731 = vmatpush1.msra.mxu0 %v3730
  %v3732 = vand.u32 %v566, 4294901760
  %3733 = vmatprep.subr.mxu0 %v3732
  %v3734 = vand.u32 %v565, 4294901760
  %3735 = vmatpush1.msra.mxu0 %v3734
  %v3736 = vand.u32 %v570, 4294901760
  %3737 = vmatprep.subr.mxu0 %v3736
  %v3738 = vand.u32 %v569, 4294901760
  %3739 = vmatpush1.msra.mxu0 %v3738
  %v3740 = vand.u32 %v574, 4294901760
  %3741 = vmatprep.subr.mxu0 %v3740
  %v3742 = vand.u32 %v573, 4294901760
  %3743 = vmatpush1.msra.mxu0 %v3742
  %v3744 = vand.u32 %v578, 4294901760
  %3745 = vmatprep.subr.mxu0 %v3744
  %v3746 = vand.u32 %v577, 4294901760
  %3747 = vmatpush1.msra.mxu0 %v3746
  %v3748 = vand.u32 %v582, 4294901760
  %3749 = vmatprep.subr.mxu0 %v3748
  %v3750 = vand.u32 %v581, 4294901760
  %3751 = vmatpush1.msra.mxu0 %v3750
  %v3752 = vand.u32 %v586, 4294901760
  %3753 = vmatprep.subr.mxu0 %v3752
  %v3754 = vand.u32 %v585, 4294901760
  %3755 = vmatpush1.msra.mxu0 %v3754
  %v3756 = vand.u32 %v590, 4294901760
  %3757 = vmatprep.subr.mxu0 %v3756
  %v3758 = vand.u32 %v589, 4294901760
  %3759 = vmatpush1.msra.mxu0 %v3758
  %v3760 = vand.u32 %v594, 4294901760
  %3761 = vmatprep.subr.mxu0 %v3760
  %v3762 = vand.u32 %v593, 4294901760
  %3763 = vmatpush1.msra.mxu0 %v3762
  %v3764 = vand.u32 %v598, 4294901760
  %3765 = vmatprep.subr.mxu0 %v3764
  %v3766 = vand.u32 %v597, 4294901760
  %3767 = vmatpush1.msra.mxu0 %v3766
  %v3768 = vand.u32 %v602, 4294901760
  %3769 = vmatprep.subr.mxu0 %v3768
  %v3770 = vand.u32 %v601, 4294901760
  %3771 = vmatpush1.msra.mxu0 %v3770
  %v3772 = vand.u32 %v606, 4294901760
  %3773 = vmatprep.subr.mxu0 %v3772
  %v3774 = vand.u32 %v605, 4294901760
  %3775 = vmatpush1.msra.mxu0 %v3774
  %v3776 = vand.u32 %v610, 4294901760
  %3777 = vmatprep.subr.mxu0 %v3776
  %v3778 = vand.u32 %v609, 4294901760
  %3779 = vmatpush1.msra.mxu0 %v3778
  %v3780 = vand.u32 %v614, 4294901760
  %3781 = vmatprep.subr.mxu0 %v3780
  %v3782 = vand.u32 %v613, 4294901760
  %3783 = vmatpush1.msra.mxu0 %v3782
  %v3784 = vand.u32 %v460, 4294901760
  %v3785 = vsub.f32 %v460, %v3784
  %v3786 = vand.u32 %v3785, 4294901760
  %v3787 = vsub.f32 %v3785, %v3786
  %v3788 = vand.u32 %v3787, 4294901760
  %3789 = vmatprep.mubr.f32.mxu0 %v3788
  %v3790 = vand.u32 %v459, 4294901760
  %v3791 = vsub.f32 %v459, %v3790
  %v3792 = vand.u32 %v3791, 4294901760
  %v3793 = vsub.f32 %v3791, %v3792
  %v3794 = vand.u32 %v3793, 4294901760
  %3795 = vmatmul.mubr.f32.gmra.mrb[0].mxu0 %v3794
  %v3796 = vpop.f32.mrb[0].mxu0
  %v3797 = vadd.f32 0.0, %v3796
  %v3798 = vpop.f32.mrb[0].mxu0
  %v3799 = vadd.f32 0.0, %v3798
  %v3800 = vand.u32 %v464, 4294901760
  %v3801 = vsub.f32 %v464, %v3800
  %v3802 = vand.u32 %v3801, 4294901760
  %v3803 = vsub.f32 %v3801, %v3802
  %v3804 = vand.u32 %v3803, 4294901760
  %3805 = vmatprep.mubr.f32.mxu0 %v3804
  %v3806 = vand.u32 %v463, 4294901760
  %v3807 = vsub.f32 %v463, %v3806
  %v3808 = vand.u32 %v3807, 4294901760
  %v3809 = vsub.f32 %v3807, %v3808
  %v3810 = vand.u32 %v3809, 4294901760
  %3811 = vmatmul.mubr.f32.gmra.mrb[0].mxu0 %v3810
  %v3812 = vpop.f32.mrb[0].mxu0
  %v3813 = vadd.f32 0.0, %v3812
  %v3814 = vpop.f32.mrb[0].mxu0
  %v3815 = vadd.f32 0.0, %v3814
  %v3816 = vand.u32 %v468, 4294901760
  %v3817 = vsub.f32 %v468, %v3816
  %v3818 = vand.u32 %v3817, 4294901760
  %v3819 = vsub.f32 %v3817, %v3818
  %v3820 = vand.u32 %v3819, 4294901760
  %3821 = vmatprep.mubr.f32.mxu0 %v3820
  %v3822 = vand.u32 %v467, 4294901760
  %v3823 = vsub.f32 %v467, %v3822
  %v3824 = vand.u32 %v3823, 4294901760
  %v3825 = vsub.f32 %v3823, %v3824
  %v3826 = vand.u32 %v3825, 4294901760
  %3827 = vmatmul.mubr.f32.gmra.mrb[0].mxu0 %v3826
  %v3828 = vpop.f32.mrb[0].mxu0
  %v3829 = vadd.f32 0.0, %v3828
  %v3830 = vpop.f32.mrb[0].mxu0
  %v3831 = vadd.f32 0.0, %v3830
  %v3832 = vand.u32 %v472, 4294901760
  %v3833 = vsub.f32 %v472, %v3832
  %v3834 = vand.u32 %v3833, 4294901760
  %v3835 = vsub.f32 %v3833, %v3834
  %v3836 = vand.u32 %v3835, 4294901760
  %3837 = vmatprep.mubr.f32.mxu0 %v3836
  %v3838 = vand.u32 %v471, 4294901760
  %v3839 = vsub.f32 %v471, %v3838
  %v3840 = vand.u32 %v3839, 4294901760
  %v3841 = vsub.f32 %v3839, %v3840
  %v3842 = vand.u32 %v3841, 4294901760
  %3843 = vmatmul.mubr.f32.gmra.mrb[0].mxu0 %v3842
  %v3844 = vpop.f32.mrb[0].mxu0
  %v3845 = vadd.f32 0.0, %v3844
  %v3846 = vpop.f32.mrb[0].mxu0
  %v3847 = vadd.f32 0.0, %v3846
  %v3848 = vand.u32 %v476, 4294901760
  %v3849 = vsub.f32 %v476, %v3848
  %v3850 = vand.u32 %v3849, 4294901760
  %v3851 = vsub.f32 %v3849, %v3850
  %v3852 = vand.u32 %v3851, 4294901760
  %3853 = vmatprep.mubr.f32.mxu0 %v3852
  %v3854 = vand.u32 %v475, 4294901760
  %v3855 = vsub.f32 %v475, %v3854
  %v3856 = vand.u32 %v3855, 4294901760
  %v3857 = vsub.f32 %v3855, %v3856
  %v3858 = vand.u32 %v3857, 4294901760
  %3859 = vmatmul.mubr.f32.gmra.mrb[0].mxu0 %v3858
  %v3860 = vpop.f32.mrb[0].mxu0
  %v3861 = vadd.f32 0.0, %v3860
  %v3862 = vpop.f32.mrb[0].mxu0
  %v3863 = vadd.f32 0.0, %v3862
  %v3864 = vand.u32 %v480, 4294901760
  %v3865 = vsub.f32 %v480, %v3864
  %v3866 = vand.u32 %v3865, 4294901760
  %v3867 = vsub.f32 %v3865, %v3866
  %v3868 = vand.u32 %v3867, 4294901760
  %3869 = vmatprep.mubr.f32.mxu0 %v3868
  %v3870 = vand.u32 %v479, 4294901760
  %v3871 = vsub.f32 %v479, %v3870
  %v3872 = vand.u32 %v3871, 4294901760
  %v3873 = vsub.f32 %v3871, %v3872
  %v3874 = vand.u32 %v3873, 4294901760
  %3875 = vmatmul.mubr.f32.gmra.mrb[0].mxu0 %v3874
  %v3876 = vpop.f32.mrb[0].mxu0
  %v3877 = vadd.f32 0.0, %v3876
  %v3878 = vpop.f32.mrb[0].mxu0
  %v3879 = vadd.f32 0.0, %v3878
  %v3880 = vand.u32 %v484, 4294901760
  %v3881 = vsub.f32 %v484, %v3880
  %v3882 = vand.u32 %v3881, 4294901760
  %v3883 = vsub.f32 %v3881, %v3882
  %v3884 = vand.u32 %v3883, 4294901760
  %3885 = vmatprep.mubr.f32.mxu0 %v3884
  %v3886 = vand.u32 %v483, 4294901760
  %v3887 = vsub.f32 %v483, %v3886
  %v3888 = vand.u32 %v3887, 4294901760
  %v3889 = vsub.f32 %v3887, %v3888
  %v3890 = vand.u32 %v3889, 4294901760
  %3891 = vmatmul.mubr.f32.gmra.mrb[0].mxu0 %v3890
  %v3892 = vpop.f32.mrb[0].mxu0
  %v3893 = vadd.f32 0.0, %v3892
  %v3894 = vpop.f32.mrb[0].mxu0
  %v3895 = vadd.f32 0.0, %v3894
  %3896 = vdwg.mxu0
  %v3897 = vand.u32 %v490, 4294901760
  %v3898 = vsub.f32 %v490, %v3897
  %v3899 = vand.u32 %v3898, 4294901760
  %v3900 = vsub.f32 %v3898, %v3899
  %v3901 = vand.u32 %v3900, 4294901760
  %3902 = vmatprep.subr.mxu0 %v3901
  %v3903 = vand.u32 %v489, 4294901760
  %v3904 = vsub.f32 %v489, %v3903
  %v3905 = vand.u32 %v3904, 4294901760
  %v3906 = vsub.f32 %v3904, %v3905
  %v3907 = vand.u32 %v3906, 4294901760
  %3908 = vmatpush1.msra.mxu0 %v3907
  %v3909 = vand.u32 %v494, 4294901760
  %v3910 = vsub.f32 %v494, %v3909
  %v3911 = vand.u32 %v3910, 4294901760
  %v3912 = vsub.f32 %v3910, %v3911
  %v3913 = vand.u32 %v3912, 4294901760
  %3914 = vmatprep.subr.mxu0 %v3913
  %v3915 = vand.u32 %v493, 4294901760
  %v3916 = vsub.f32 %v493, %v3915
  %v3917 = vand.u32 %v3916, 4294901760
  %v3918 = vsub.f32 %v3916, %v3917
  %v3919 = vand.u32 %v3918, 4294901760
  %3920 = vmatpush1.msra.mxu0 %v3919
  %v3921 = vand.u32 %v498, 4294901760
  %v3922 = vsub.f32 %v498, %v3921
  %v3923 = vand.u32 %v3922, 4294901760
  %v3924 = vsub.f32 %v3922, %v3923
  %v3925 = vand.u32 %v3924, 4294901760
  %3926 = vmatprep.subr.mxu0 %v3925
  %v3927 = vand.u32 %v497, 4294901760
  %v3928 = vsub.f32 %v497, %v3927
  %v3929 = vand.u32 %v3928, 4294901760
  %v3930 = vsub.f32 %v3928, %v3929
  %v3931 = vand.u32 %v3930, 4294901760
  %3932 = vmatpush1.msra.mxu0 %v3931
  %v3933 = vand.u32 %v502, 4294901760
  %v3934 = vsub.f32 %v502, %v3933
  %v3935 = vand.u32 %v3934, 4294901760
  %v3936 = vsub.f32 %v3934, %v3935
  %v3937 = vand.u32 %v3936, 4294901760
  %3938 = vmatprep.subr.mxu0 %v3937
  %v3939 = vand.u32 %v501, 4294901760
  %v3940 = vsub.f32 %v501, %v3939
  %v3941 = vand.u32 %v3940, 4294901760
  %v3942 = vsub.f32 %v3940, %v3941
  %v3943 = vand.u32 %v3942, 4294901760
  %3944 = vmatpush1.msra.mxu0 %v3943
  %v3945 = vand.u32 %v506, 4294901760
  %v3946 = vsub.f32 %v506, %v3945
  %v3947 = vand.u32 %v3946, 4294901760
  %v3948 = vsub.f32 %v3946, %v3947
  %v3949 = vand.u32 %v3948, 4294901760
  %3950 = vmatprep.subr.mxu0 %v3949
  %v3951 = vand.u32 %v505, 4294901760
  %v3952 = vsub.f32 %v505, %v3951
  %v3953 = vand.u32 %v3952, 4294901760
  %v3954 = vsub.f32 %v3952, %v3953
  %v3955 = vand.u32 %v3954, 4294901760
  %3956 = vmatpush1.msra.mxu0 %v3955
  %v3957 = vand.u32 %v510, 4294901760
  %v3958 = vsub.f32 %v510, %v3957
  %v3959 = vand.u32 %v3958, 4294901760
  %v3960 = vsub.f32 %v3958, %v3959
  %v3961 = vand.u32 %v3960, 4294901760
  %3962 = vmatprep.subr.mxu0 %v3961
  %v3963 = vand.u32 %v509, 4294901760
  %v3964 = vsub.f32 %v509, %v3963
  %v3965 = vand.u32 %v3964, 4294901760
  %v3966 = vsub.f32 %v3964, %v3965
  %v3967 = vand.u32 %v3966, 4294901760
  %3968 = vmatpush1.msra.mxu0 %v3967
  %v3969 = vand.u32 %v514, 4294901760
  %v3970 = vsub.f32 %v514, %v3969
  %v3971 = vand.u32 %v3970, 4294901760
  %v3972 = vsub.f32 %v3970, %v3971
  %v3973 = vand.u32 %v3972, 4294901760
  %3974 = vmatprep.subr.mxu0 %v3973
  %v3975 = vand.u32 %v513, 4294901760
  %v3976 = vsub.f32 %v513, %v3975
  %v3977 = vand.u32 %v3976, 4294901760
  %v3978 = vsub.f32 %v3976, %v3977
  %v3979 = vand.u32 %v3978, 4294901760
  %3980 = vmatpush1.msra.mxu0 %v3979
  %v3981 = vand.u32 %v518, 4294901760
  %v3982 = vsub.f32 %v518, %v3981
  %v3983 = vand.u32 %v3982, 4294901760
  %v3984 = vsub.f32 %v3982, %v3983
  %v3985 = vand.u32 %v3984, 4294901760
  %3986 = vmatprep.subr.mxu0 %v3985
  %v3987 = vand.u32 %v517, 4294901760
  %v3988 = vsub.f32 %v517, %v3987
  %v3989 = vand.u32 %v3988, 4294901760
  %v3990 = vsub.f32 %v3988, %v3989
  %v3991 = vand.u32 %v3990, 4294901760
  %3992 = vmatpush1.msra.mxu0 %v3991
  %v3993 = vand.u32 %v522, 4294901760
  %v3994 = vsub.f32 %v522, %v3993
  %v3995 = vand.u32 %v3994, 4294901760
  %v3996 = vsub.f32 %v3994, %v3995
  %v3997 = vand.u32 %v3996, 4294901760
  %3998 = vmatprep.subr.mxu0 %v3997
  %v3999 = vand.u32 %v521, 4294901760
  %v4000 = vsub.f32 %v521, %v3999
  %v4001 = vand.u32 %v4000, 4294901760
  %v4002 = vsub.f32 %v4000, %v4001
  %v4003 = vand.u32 %v4002, 4294901760
  %4004 = vmatpush1.msra.mxu0 %v4003
  %v4005 = vand.u32 %v526, 4294901760
  %v4006 = vsub.f32 %v526, %v4005
  %v4007 = vand.u32 %v4006, 4294901760
  %v4008 = vsub.f32 %v4006, %v4007
  %v4009 = vand.u32 %v4008, 4294901760
  %4010 = vmatprep.subr.mxu0 %v4009
  %v4011 = vand.u32 %v525, 4294901760
  %v4012 = vsub.f32 %v525, %v4011
  %v4013 = vand.u32 %v4012, 4294901760
  %v4014 = vsub.f32 %v4012, %v4013
  %v4015 = vand.u32 %v4014, 4294901760
  %4016 = vmatpush1.msra.mxu0 %v4015
  %v4017 = vand.u32 %v530, 4294901760
  %v4018 = vsub.f32 %v530, %v4017
  %v4019 = vand.u32 %v4018, 4294901760
  %v4020 = vsub.f32 %v4018, %v4019
  %v4021 = vand.u32 %v4020, 4294901760
  %4022 = vmatprep.subr.mxu0 %v4021
  %v4023 = vand.u32 %v529, 4294901760
  %v4024 = vsub.f32 %v529, %v4023
  %v4025 = vand.u32 %v4024, 4294901760
  %v4026 = vsub.f32 %v4024, %v4025
  %v4027 = vand.u32 %v4026, 4294901760
  %4028 = vmatpush1.msra.mxu0 %v4027
  %v4029 = vand.u32 %v534, 4294901760
  %v4030 = vsub.f32 %v534, %v4029
  %v4031 = vand.u32 %v4030, 4294901760
  %v4032 = vsub.f32 %v4030, %v4031
  %v4033 = vand.u32 %v4032, 4294901760
  %4034 = vmatprep.subr.mxu0 %v4033
  %v4035 = vand.u32 %v533, 4294901760
  %v4036 = vsub.f32 %v533, %v4035
  %v4037 = vand.u32 %v4036, 4294901760
  %v4038 = vsub.f32 %v4036, %v4037
  %v4039 = vand.u32 %v4038, 4294901760
  %4040 = vmatpush1.msra.mxu0 %v4039
  %v4041 = vand.u32 %v538, 4294901760
  %v4042 = vsub.f32 %v538, %v4041
  %v4043 = vand.u32 %v4042, 4294901760
  %v4044 = vsub.f32 %v4042, %v4043
  %v4045 = vand.u32 %v4044, 4294901760
  %4046 = vmatprep.subr.mxu0 %v4045
  %v4047 = vand.u32 %v537, 4294901760
  %v4048 = vsub.f32 %v537, %v4047
  %v4049 = vand.u32 %v4048, 4294901760
  %v4050 = vsub.f32 %v4048, %v4049
  %v4051 = vand.u32 %v4050, 4294901760
  %4052 = vmatpush1.msra.mxu0 %v4051
  %v4053 = vand.u32 %v542, 4294901760
  %v4054 = vsub.f32 %v542, %v4053
  %v4055 = vand.u32 %v4054, 4294901760
  %v4056 = vsub.f32 %v4054, %v4055
  %v4057 = vand.u32 %v4056, 4294901760
  %4058 = vmatprep.subr.mxu0 %v4057
  %v4059 = vand.u32 %v541, 4294901760
  %v4060 = vsub.f32 %v541, %v4059
  %v4061 = vand.u32 %v4060, 4294901760
  %v4062 = vsub.f32 %v4060, %v4061
  %v4063 = vand.u32 %v4062, 4294901760
  %4064 = vmatpush1.msra.mxu0 %v4063
  %v4065 = vand.u32 %v546, 4294901760
  %v4066 = vsub.f32 %v546, %v4065
  %v4067 = vand.u32 %v4066, 4294901760
  %v4068 = vsub.f32 %v4066, %v4067
  %v4069 = vand.u32 %v4068, 4294901760
  %4070 = vmatprep.subr.mxu0 %v4069
  %v4071 = vand.u32 %v545, 4294901760
  %v4072 = vsub.f32 %v545, %v4071
  %v4073 = vand.u32 %v4072, 4294901760
  %v4074 = vsub.f32 %v4072, %v4073
  %v4075 = vand.u32 %v4074, 4294901760
  %4076 = vmatpush1.msra.mxu0 %v4075
  %v4077 = vand.u32 %v550, 4294901760
  %v4078 = vsub.f32 %v550, %v4077
  %v4079 = vand.u32 %v4078, 4294901760
  %v4080 = vsub.f32 %v4078, %v4079
  %v4081 = vand.u32 %v4080, 4294901760
  %4082 = vmatprep.subr.mxu0 %v4081
  %v4083 = vand.u32 %v549, 4294901760
  %v4084 = vsub.f32 %v549, %v4083
  %v4085 = vand.u32 %v4084, 4294901760
  %v4086 = vsub.f32 %v4084, %v4085
  %v4087 = vand.u32 %v4086, 4294901760
  %4088 = vmatpush1.msra.mxu0 %v4087
  %v4089 = vand.u32 %v554, 4294901760
  %v4090 = vsub.f32 %v554, %v4089
  %v4091 = vand.u32 %v4090, 4294901760
  %v4092 = vsub.f32 %v4090, %v4091
  %v4093 = vand.u32 %v4092, 4294901760
  %4094 = vmatprep.subr.mxu0 %v4093
  %v4095 = vand.u32 %v553, 4294901760
  %v4096 = vsub.f32 %v553, %v4095
  %v4097 = vand.u32 %v4096, 4294901760
  %v4098 = vsub.f32 %v4096, %v4097
  %v4099 = vand.u32 %v4098, 4294901760
  %4100 = vmatpush1.msra.mxu0 %v4099
  %v4101 = vand.u32 %v558, 4294901760
  %v4102 = vsub.f32 %v558, %v4101
  %v4103 = vand.u32 %v4102, 4294901760
  %v4104 = vsub.f32 %v4102, %v4103
  %v4105 = vand.u32 %v4104, 4294901760
  %4106 = vmatprep.subr.mxu0 %v4105
  %v4107 = vand.u32 %v557, 4294901760
  %v4108 = vsub.f32 %v557, %v4107
  %v4109 = vand.u32 %v4108, 4294901760
  %v4110 = vsub.f32 %v4108, %v4109
  %v4111 = vand.u32 %v4110, 4294901760
  %4112 = vmatpush1.msra.mxu0 %v4111
  %v4113 = vand.u32 %v562, 4294901760
  %v4114 = vsub.f32 %v562, %v4113
  %v4115 = vand.u32 %v4114, 4294901760
  %v4116 = vsub.f32 %v4114, %v4115
  %v4117 = vand.u32 %v4116, 4294901760
  %4118 = vmatprep.subr.mxu0 %v4117
  %v4119 = vand.u32 %v561, 4294901760
  %v4120 = vsub.f32 %v561, %v4119
  %v4121 = vand.u32 %v4120, 4294901760
  %v4122 = vsub.f32 %v4120, %v4121
  %v4123 = vand.u32 %v4122, 4294901760
  %4124 = vmatpush1.msra.mxu0 %v4123
  %v4125 = vand.u32 %v566, 4294901760
  %v4126 = vsub.f32 %v566, %v4125
  %v4127 = vand.u32 %v4126, 4294901760
  %v4128 = vsub.f32 %v4126, %v4127
  %v4129 = vand.u32 %v4128, 4294901760
  %4130 = vmatprep.subr.mxu0 %v4129
  %v4131 = vand.u32 %v565, 4294901760
  %v4132 = vsub.f32 %v565, %v4131
  %v4133 = vand.u32 %v4132, 4294901760
  %v4134 = vsub.f32 %v4132, %v4133
  %v4135 = vand.u32 %v4134, 4294901760
  %4136 = vmatpush1.msra.mxu0 %v4135
  %v4137 = vand.u32 %v570, 4294901760
  %v4138 = vsub.f32 %v570, %v4137
  %v4139 = vand.u32 %v4138, 4294901760
  %v4140 = vsub.f32 %v4138, %v4139
  %v4141 = vand.u32 %v4140, 4294901760
  %4142 = vmatprep.subr.mxu0 %v4141
  %v4143 = vand.u32 %v569, 4294901760
  %v4144 = vsub.f32 %v569, %v4143
  %v4145 = vand.u32 %v4144, 4294901760
  %v4146 = vsub.f32 %v4144, %v4145
  %v4147 = vand.u32 %v4146, 4294901760
  %4148 = vmatpush1.msra.mxu0 %v4147
  %v4149 = vand.u32 %v574, 4294901760
  %v4150 = vsub.f32 %v574, %v4149
  %v4151 = vand.u32 %v4150, 4294901760
  %v4152 = vsub.f32 %v4150, %v4151
  %v4153 = vand.u32 %v4152, 4294901760
  %4154 = vmatprep.subr.mxu0 %v4153
  %v4155 = vand.u32 %v573, 4294901760
  %v4156 = vsub.f32 %v573, %v4155
  %v4157 = vand.u32 %v4156, 4294901760
  %v4158 = vsub.f32 %v4156, %v4157
  %v4159 = vand.u32 %v4158, 4294901760
  %4160 = vmatpush1.msra.mxu0 %v4159
  %v4161 = vand.u32 %v578, 4294901760
  %v4162 = vsub.f32 %v578, %v4161
  %v4163 = vand.u32 %v4162, 4294901760
  %v4164 = vsub.f32 %v4162, %v4163
  %v4165 = vand.u32 %v4164, 4294901760
  %4166 = vmatprep.subr.mxu0 %v4165
  %v4167 = vand.u32 %v577, 4294901760
  %v4168 = vsub.f32 %v577, %v4167
  %v4169 = vand.u32 %v4168, 4294901760
  %v4170 = vsub.f32 %v4168, %v4169
  %v4171 = vand.u32 %v4170, 4294901760
  %4172 = vmatpush1.msra.mxu0 %v4171
  %v4173 = vand.u32 %v582, 4294901760
  %v4174 = vsub.f32 %v582, %v4173
  %v4175 = vand.u32 %v4174, 4294901760
  %v4176 = vsub.f32 %v4174, %v4175
  %v4177 = vand.u32 %v4176, 4294901760
  %4178 = vmatprep.subr.mxu0 %v4177
  %v4179 = vand.u32 %v581, 4294901760
  %v4180 = vsub.f32 %v581, %v4179
  %v4181 = vand.u32 %v4180, 4294901760
  %v4182 = vsub.f32 %v4180, %v4181
  %v4183 = vand.u32 %v4182, 4294901760
  %4184 = vmatpush1.msra.mxu0 %v4183
  %v4185 = vand.u32 %v586, 4294901760
  %v4186 = vsub.f32 %v586, %v4185
  %v4187 = vand.u32 %v4186, 4294901760
  %v4188 = vsub.f32 %v4186, %v4187
  %v4189 = vand.u32 %v4188, 4294901760
  %4190 = vmatprep.subr.mxu0 %v4189
  %v4191 = vand.u32 %v585, 4294901760
  %v4192 = vsub.f32 %v585, %v4191
  %v4193 = vand.u32 %v4192, 4294901760
  %v4194 = vsub.f32 %v4192, %v4193
  %v4195 = vand.u32 %v4194, 4294901760
  %4196 = vmatpush1.msra.mxu0 %v4195
  %v4197 = vand.u32 %v590, 4294901760
  %v4198 = vsub.f32 %v590, %v4197
  %v4199 = vand.u32 %v4198, 4294901760
  %v4200 = vsub.f32 %v4198, %v4199
  %v4201 = vand.u32 %v4200, 4294901760
  %4202 = vmatprep.subr.mxu0 %v4201
  %v4203 = vand.u32 %v589, 4294901760
  %v4204 = vsub.f32 %v589, %v4203
  %v4205 = vand.u32 %v4204, 4294901760
  %v4206 = vsub.f32 %v4204, %v4205
  %v4207 = vand.u32 %v4206, 4294901760
  %4208 = vmatpush1.msra.mxu0 %v4207
  %v4209 = vand.u32 %v594, 4294901760
  %v4210 = vsub.f32 %v594, %v4209
  %v4211 = vand.u32 %v4210, 4294901760
  %v4212 = vsub.f32 %v4210, %v4211
  %v4213 = vand.u32 %v4212, 4294901760
  %4214 = vmatprep.subr.mxu0 %v4213
  %v4215 = vand.u32 %v593, 4294901760
  %v4216 = vsub.f32 %v593, %v4215
  %v4217 = vand.u32 %v4216, 4294901760
  %v4218 = vsub.f32 %v4216, %v4217
  %v4219 = vand.u32 %v4218, 4294901760
  %4220 = vmatpush1.msra.mxu0 %v4219
  %v4221 = vand.u32 %v598, 4294901760
  %v4222 = vsub.f32 %v598, %v4221
  %v4223 = vand.u32 %v4222, 4294901760
  %v4224 = vsub.f32 %v4222, %v4223
  %v4225 = vand.u32 %v4224, 4294901760
  %4226 = vmatprep.subr.mxu0 %v4225
  %v4227 = vand.u32 %v597, 4294901760
  %v4228 = vsub.f32 %v597, %v4227
  %v4229 = vand.u32 %v4228, 4294901760
  %v4230 = vsub.f32 %v4228, %v4229
  %v4231 = vand.u32 %v4230, 4294901760
  %4232 = vmatpush1.msra.mxu0 %v4231
  %v4233 = vand.u32 %v602, 4294901760
  %v4234 = vsub.f32 %v602, %v4233
  %v4235 = vand.u32 %v4234, 4294901760
  %v4236 = vsub.f32 %v4234, %v4235
  %v4237 = vand.u32 %v4236, 4294901760
  %4238 = vmatprep.subr.mxu0 %v4237
  %v4239 = vand.u32 %v601, 4294901760
  %v4240 = vsub.f32 %v601, %v4239
  %v4241 = vand.u32 %v4240, 4294901760
  %v4242 = vsub.f32 %v4240, %v4241
  %v4243 = vand.u32 %v4242, 4294901760
  %4244 = vmatpush1.msra.mxu0 %v4243
  %v4245 = vand.u32 %v606, 4294901760
  %v4246 = vsub.f32 %v606, %v4245
  %v4247 = vand.u32 %v4246, 4294901760
  %v4248 = vsub.f32 %v4246, %v4247
  %v4249 = vand.u32 %v4248, 4294901760
  %4250 = vmatprep.subr.mxu0 %v4249
  %v4251 = vand.u32 %v605, 4294901760
  %v4252 = vsub.f32 %v605, %v4251
  %v4253 = vand.u32 %v4252, 4294901760
  %v4254 = vsub.f32 %v4252, %v4253
  %v4255 = vand.u32 %v4254, 4294901760
  %4256 = vmatpush1.msra.mxu0 %v4255
  %v4257 = vand.u32 %v610, 4294901760
  %v4258 = vsub.f32 %v610, %v4257
  %v4259 = vand.u32 %v4258, 4294901760
  %v4260 = vsub.f32 %v4258, %v4259
  %v4261 = vand.u32 %v4260, 4294901760
  %4262 = vmatprep.subr.mxu0 %v4261
  %v4263 = vand.u32 %v609, 4294901760
  %v4264 = vsub.f32 %v609, %v4263
  %v4265 = vand.u32 %v4264, 4294901760
  %v4266 = vsub.f32 %v4264, %v4265
  %v4267 = vand.u32 %v4266, 4294901760
  %4268 = vmatpush1.msra.mxu0 %v4267
  %v4269 = vand.u32 %v614, 4294901760
  %v4270 = vsub.f32 %v614, %v4269
  %v4271 = vand.u32 %v4270, 4294901760
  %v4272 = vsub.f32 %v4270, %v4271
  %v4273 = vand.u32 %v4272, 4294901760
  %4274 = vmatprep.subr.mxu0 %v4273
  %v4275 = vand.u32 %v613, 4294901760
  %v4276 = vsub.f32 %v613, %v4275
  %v4277 = vand.u32 %v4276, 4294901760
  %v4278 = vsub.f32 %v4276, %v4277
  %v4279 = vand.u32 %v4278, 4294901760
  %4280 = vmatpush1.msra.mxu0 %v4279
  %v4281 = vand.u32 %v460, 4294901760
  %4282 = vmatprep.mubr.f32.mxu0 %v4281
  %v4283 = vand.u32 %v459, 4294901760
  %4284 = vmatmul.mubr.f32.gmra.mrb[0].mxu0 %v4283
  %v4285 = vpop.f32.mrb[0].mxu0
  %v4286 = vadd.f32 %v3797, %v4285
  %v4287 = vpop.f32.mrb[0].mxu0
  %v4288 = vadd.f32 %v3799, %v4287
  %v4289 = vand.u32 %v464, 4294901760
  %4290 = vmatprep.mubr.f32.mxu0 %v4289
  %v4291 = vand.u32 %v463, 4294901760
  %4292 = vmatmul.mubr.f32.gmra.mrb[0].mxu0 %v4291
  %v4293 = vpop.f32.mrb[0].mxu0
  %v4294 = vadd.f32 %v3813, %v4293
  %v4295 = vpop.f32.mrb[0].mxu0
  %v4296 = vadd.f32 %v3815, %v4295
  %v4297 = vand.u32 %v468, 4294901760
  %4298 = vmatprep.mubr.f32.mxu0 %v4297
  %v4299 = vand.u32 %v467, 4294901760
  %4300 = vmatmul.mubr.f32.gmra.mrb[0].mxu0 %v4299
  %v4301 = vpop.f32.mrb[0].mxu0
  %v4302 = vadd.f32 %v3829, %v4301
  %v4303 = vpop.f32.mrb[0].mxu0
  %v4304 = vadd.f32 %v3831, %v4303
  %v4305 = vand.u32 %v472, 4294901760
  %4306 = vmatprep.mubr.f32.mxu0 %v4305
  %v4307 = vand.u32 %v471, 4294901760
  %4308 = vmatmul.mubr.f32.gmra.mrb[0].mxu0 %v4307
  %v4309 = vpop.f32.mrb[0].mxu0
  %v4310 = vadd.f32 %v3845, %v4309
  %v4311 = vpop.f32.mrb[0].mxu0
  %v4312 = vadd.f32 %v3847, %v4311
  %v4313 = vand.u32 %v476, 4294901760
  %4314 = vmatprep.mubr.f32.mxu0 %v4313
  %v4315 = vand.u32 %v475, 4294901760
  %4316 = vmatmul.mubr.f32.gmra.mrb[0].mxu0 %v4315
  %v4317 = vpop.f32.mrb[0].mxu0
  %v4318 = vadd.f32 %v3861, %v4317
  %v4319 = vpop.f32.mrb[0].mxu0
  %v4320 = vadd.f32 %v3863, %v4319
  %v4321 = vand.u32 %v480, 4294901760
  %4322 = vmatprep.mubr.f32.mxu0 %v4321
  %v4323 = vand.u32 %v479, 4294901760
  %4324 = vmatmul.mubr.f32.gmra.mrb[0].mxu0 %v4323
  %v4325 = vpop.f32.mrb[0].mxu0
  %v4326 = vadd.f32 %v3877, %v4325
  %v4327 = vpop.f32.mrb[0].mxu0
  %v4328 = vadd.f32 %v3879, %v4327
  %v4329 = vand.u32 %v484, 4294901760
  %4330 = vmatprep.mubr.f32.mxu0 %v4329
  %v4331 = vand.u32 %v483, 4294901760
  %4332 = vmatmul.mubr.f32.gmra.mrb[0].mxu0 %v4331
  %v4333 = vpop.f32.mrb[0].mxu0
  %v4334 = vadd.f32 %v3893, %v4333
  %v4335 = vpop.f32.mrb[0].mxu0
  %v4336 = vadd.f32 %v3895, %v4335
  %4337 = vdwg.mxu0
  %v4338 = vand.u32 %v490, 4294901760
  %v4339 = vsub.f32 %v490, %v4338
  %4340 = vmatprep.subr.mxu0 %v4339
  %v4341 = vand.u32 %v489, 4294901760
  %v4342 = vsub.f32 %v489, %v4341
  %4343 = vmatpush1.msra.mxu0 %v4342
  %v4344 = vand.u32 %v494, 4294901760
  %v4345 = vsub.f32 %v494, %v4344
  %4346 = vmatprep.subr.mxu0 %v4345
  %v4347 = vand.u32 %v493, 4294901760
  %v4348 = vsub.f32 %v493, %v4347
  %4349 = vmatpush1.msra.mxu0 %v4348
  %v4350 = vand.u32 %v498, 4294901760
  %v4351 = vsub.f32 %v498, %v4350
  %4352 = vmatprep.subr.mxu0 %v4351
  %v4353 = vand.u32 %v497, 4294901760
  %v4354 = vsub.f32 %v497, %v4353
  %4355 = vmatpush1.msra.mxu0 %v4354
  %v4356 = vand.u32 %v502, 4294901760
  %v4357 = vsub.f32 %v502, %v4356
  %4358 = vmatprep.subr.mxu0 %v4357
  %v4359 = vand.u32 %v501, 4294901760
  %v4360 = vsub.f32 %v501, %v4359
  %4361 = vmatpush1.msra.mxu0 %v4360
  %v4362 = vand.u32 %v506, 4294901760
  %v4363 = vsub.f32 %v506, %v4362
  %4364 = vmatprep.subr.mxu0 %v4363
  %v4365 = vand.u32 %v505, 4294901760
  %v4366 = vsub.f32 %v505, %v4365
  %4367 = vmatpush1.msra.mxu0 %v4366
  %v4368 = vand.u32 %v510, 4294901760
  %v4369 = vsub.f32 %v510, %v4368
  %4370 = vmatprep.subr.mxu0 %v4369
  %v4371 = vand.u32 %v509, 4294901760
  %v4372 = vsub.f32 %v509, %v4371
  %4373 = vmatpush1.msra.mxu0 %v4372
  %v4374 = vand.u32 %v514, 4294901760
  %v4375 = vsub.f32 %v514, %v4374
  %4376 = vmatprep.subr.mxu0 %v4375
  %v4377 = vand.u32 %v513, 4294901760
  %v4378 = vsub.f32 %v513, %v4377
  %4379 = vmatpush1.msra.mxu0 %v4378
  %v4380 = vand.u32 %v518, 4294901760
  %v4381 = vsub.f32 %v518, %v4380
  %4382 = vmatprep.subr.mxu0 %v4381
  %v4383 = vand.u32 %v517, 4294901760
  %v4384 = vsub.f32 %v517, %v4383
  %4385 = vmatpush1.msra.mxu0 %v4384
  %v4386 = vand.u32 %v522, 4294901760
  %v4387 = vsub.f32 %v522, %v4386
  %4388 = vmatprep.subr.mxu0 %v4387
  %v4389 = vand.u32 %v521, 4294901760
  %v4390 = vsub.f32 %v521, %v4389
  %4391 = vmatpush1.msra.mxu0 %v4390
  %v4392 = vand.u32 %v526, 4294901760
  %v4393 = vsub.f32 %v526, %v4392
  %4394 = vmatprep.subr.mxu0 %v4393
  %v4395 = vand.u32 %v525, 4294901760
  %v4396 = vsub.f32 %v525, %v4395
  %4397 = vmatpush1.msra.mxu0 %v4396
  %v4398 = vand.u32 %v530, 4294901760
  %v4399 = vsub.f32 %v530, %v4398
  %4400 = vmatprep.subr.mxu0 %v4399
  %v4401 = vand.u32 %v529, 4294901760
  %v4402 = vsub.f32 %v529, %v4401
  %4403 = vmatpush1.msra.mxu0 %v4402
  %v4404 = vand.u32 %v534, 4294901760
  %v4405 = vsub.f32 %v534, %v4404
  %4406 = vmatprep.subr.mxu0 %v4405
  %v4407 = vand.u32 %v533, 4294901760
  %v4408 = vsub.f32 %v533, %v4407
  %4409 = vmatpush1.msra.mxu0 %v4408
  %v4410 = vand.u32 %v538, 4294901760
  %v4411 = vsub.f32 %v538, %v4410
  %4412 = vmatprep.subr.mxu0 %v4411
  %v4413 = vand.u32 %v537, 4294901760
  %v4414 = vsub.f32 %v537, %v4413
  %4415 = vmatpush1.msra.mxu0 %v4414
  %v4416 = vand.u32 %v542, 4294901760
  %v4417 = vsub.f32 %v542, %v4416
  %4418 = vmatprep.subr.mxu0 %v4417
  %v4419 = vand.u32 %v541, 4294901760
  %v4420 = vsub.f32 %v541, %v4419
  %4421 = vmatpush1.msra.mxu0 %v4420
  %v4422 = vand.u32 %v546, 4294901760
  %v4423 = vsub.f32 %v546, %v4422
  %4424 = vmatprep.subr.mxu0 %v4423
  %v4425 = vand.u32 %v545, 4294901760
  %v4426 = vsub.f32 %v545, %v4425
  %4427 = vmatpush1.msra.mxu0 %v4426
  %v4428 = vand.u32 %v550, 4294901760
  %v4429 = vsub.f32 %v550, %v4428
  %4430 = vmatprep.subr.mxu0 %v4429
  %v4431 = vand.u32 %v549, 4294901760
  %v4432 = vsub.f32 %v549, %v4431
  %4433 = vmatpush1.msra.mxu0 %v4432
  %v4434 = vand.u32 %v554, 4294901760
  %v4435 = vsub.f32 %v554, %v4434
  %4436 = vmatprep.subr.mxu0 %v4435
  %v4437 = vand.u32 %v553, 4294901760
  %v4438 = vsub.f32 %v553, %v4437
  %4439 = vmatpush1.msra.mxu0 %v4438
  %v4440 = vand.u32 %v558, 4294901760
  %v4441 = vsub.f32 %v558, %v4440
  %4442 = vmatprep.subr.mxu0 %v4441
  %v4443 = vand.u32 %v557, 4294901760
  %v4444 = vsub.f32 %v557, %v4443
  %4445 = vmatpush1.msra.mxu0 %v4444
  %v4446 = vand.u32 %v562, 4294901760
  %v4447 = vsub.f32 %v562, %v4446
  %4448 = vmatprep.subr.mxu0 %v4447
  %v4449 = vand.u32 %v561, 4294901760
  %v4450 = vsub.f32 %v561, %v4449
  %4451 = vmatpush1.msra.mxu0 %v4450
  %v4452 = vand.u32 %v566, 4294901760
  %v4453 = vsub.f32 %v566, %v4452
  %4454 = vmatprep.subr.mxu0 %v4453
  %v4455 = vand.u32 %v565, 4294901760
  %v4456 = vsub.f32 %v565, %v4455
  %4457 = vmatpush1.msra.mxu0 %v4456
  %v4458 = vand.u32 %v570, 4294901760
  %v4459 = vsub.f32 %v570, %v4458
  %4460 = vmatprep.subr.mxu0 %v4459
  %v4461 = vand.u32 %v569, 4294901760
  %v4462 = vsub.f32 %v569, %v4461
  %4463 = vmatpush1.msra.mxu0 %v4462
  %v4464 = vand.u32 %v574, 4294901760
  %v4465 = vsub.f32 %v574, %v4464
  %4466 = vmatprep.subr.mxu0 %v4465
  %v4467 = vand.u32 %v573, 4294901760
  %v4468 = vsub.f32 %v573, %v4467
  %4469 = vmatpush1.msra.mxu0 %v4468
  %v4470 = vand.u32 %v578, 4294901760
  %v4471 = vsub.f32 %v578, %v4470
  %4472 = vmatprep.subr.mxu0 %v4471
  %v4473 = vand.u32 %v577, 4294901760
  %v4474 = vsub.f32 %v577, %v4473
  %4475 = vmatpush1.msra.mxu0 %v4474
  %v4476 = vand.u32 %v582, 4294901760
  %v4477 = vsub.f32 %v582, %v4476
  %4478 = vmatprep.subr.mxu0 %v4477
  %v4479 = vand.u32 %v581, 4294901760
  %v4480 = vsub.f32 %v581, %v4479
  %4481 = vmatpush1.msra.mxu0 %v4480
  %v4482 = vand.u32 %v586, 4294901760
  %v4483 = vsub.f32 %v586, %v4482
  %4484 = vmatprep.subr.mxu0 %v4483
  %v4485 = vand.u32 %v585, 4294901760
  %v4486 = vsub.f32 %v585, %v4485
  %4487 = vmatpush1.msra.mxu0 %v4486
  %v4488 = vand.u32 %v590, 4294901760
  %v4489 = vsub.f32 %v590, %v4488
  %4490 = vmatprep.subr.mxu0 %v4489
  %v4491 = vand.u32 %v589, 4294901760
  %v4492 = vsub.f32 %v589, %v4491
  %4493 = vmatpush1.msra.mxu0 %v4492
  %v4494 = vand.u32 %v594, 4294901760
  %v4495 = vsub.f32 %v594, %v4494
  %4496 = vmatprep.subr.mxu0 %v4495
  %v4497 = vand.u32 %v593, 4294901760
  %v4498 = vsub.f32 %v593, %v4497
  %4499 = vmatpush1.msra.mxu0 %v4498
  %v4500 = vand.u32 %v598, 4294901760
  %v4501 = vsub.f32 %v598, %v4500
  %4502 = vmatprep.subr.mxu0 %v4501
  %v4503 = vand.u32 %v597, 4294901760
  %v4504 = vsub.f32 %v597, %v4503
  %4505 = vmatpush1.msra.mxu0 %v4504
  %v4506 = vand.u32 %v602, 4294901760
  %v4507 = vsub.f32 %v602, %v4506
  %4508 = vmatprep.subr.mxu0 %v4507
  %v4509 = vand.u32 %v601, 4294901760
  %v4510 = vsub.f32 %v601, %v4509
  %4511 = vmatpush1.msra.mxu0 %v4510
  %v4512 = vand.u32 %v606, 4294901760
  %v4513 = vsub.f32 %v606, %v4512
  %4514 = vmatprep.subr.mxu0 %v4513
  %v4515 = vand.u32 %v605, 4294901760
  %v4516 = vsub.f32 %v605, %v4515
  %4517 = vmatpush1.msra.mxu0 %v4516
  %v4518 = vand.u32 %v610, 4294901760
  %v4519 = vsub.f32 %v610, %v4518
  %4520 = vmatprep.subr.mxu0 %v4519
  %v4521 = vand.u32 %v609, 4294901760
  %v4522 = vsub.f32 %v609, %v4521
  %4523 = vmatpush1.msra.mxu0 %v4522
  %v4524 = vand.u32 %v614, 4294901760
  %v4525 = vsub.f32 %v614, %v4524
  %4526 = vmatprep.subr.mxu0 %v4525
  %v4527 = vand.u32 %v613, 4294901760
  %v4528 = vsub.f32 %v613, %v4527
  %4529 = vmatpush1.msra.mxu0 %v4528
  %v4530 = vand.u32 %v460, 4294901760
  %v4531 = vsub.f32 %v460, %v4530
  %4532 = vmatprep.mubr.f32.mxu0 %v4531
  %v4533 = vand.u32 %v459, 4294901760
  %v4534 = vsub.f32 %v459, %v4533
  %4535 = vmatmul.mubr.f32.gmra.mrb[0].mxu0 %v4534
  %v4536 = vpop.f32.mrb[0].mxu0
  %v4537 = vadd.f32 %v4286, %v4536
  %v4538 = vpop.f32.mrb[0].mxu0
  %v4539 = vadd.f32 %v4288, %v4538
  %v4540 = vand.u32 %v464, 4294901760
  %v4541 = vsub.f32 %v464, %v4540
  %4542 = vmatprep.mubr.f32.mxu0 %v4541
  %v4543 = vand.u32 %v463, 4294901760
  %v4544 = vsub.f32 %v463, %v4543
  %4545 = vmatmul.mubr.f32.gmra.mrb[0].mxu0 %v4544
  %v4546 = vpop.f32.mrb[0].mxu0
  %v4547 = vadd.f32 %v4294, %v4546
  %v4548 = vpop.f32.mrb[0].mxu0
  %v4549 = vadd.f32 %v4296, %v4548
  %v4550 = vand.u32 %v468, 4294901760
  %v4551 = vsub.f32 %v468, %v4550
  %4552 = vmatprep.mubr.f32.mxu0 %v4551
  %v4553 = vand.u32 %v467, 4294901760
  %v4554 = vsub.f32 %v467, %v4553
  %4555 = vmatmul.mubr.f32.gmra.mrb[0].mxu0 %v4554
  %v4556 = vpop.f32.mrb[0].mxu0
  %v4557 = vadd.f32 %v4302, %v4556
  %v4558 = vpop.f32.mrb[0].mxu0
  %v4559 = vadd.f32 %v4304, %v4558
  %v4560 = vand.u32 %v472, 4294901760
  %v4561 = vsub.f32 %v472, %v4560
  %4562 = vmatprep.mubr.f32.mxu0 %v4561
  %v4563 = vand.u32 %v471, 4294901760
  %v4564 = vsub.f32 %v471, %v4563
  %4565 = vmatmul.mubr.f32.gmra.mrb[0].mxu0 %v4564
  %v4566 = vpop.f32.mrb[0].mxu0
  %v4567 = vadd.f32 %v4310, %v4566
  %v4568 = vpop.f32.mrb[0].mxu0
  %v4569 = vadd.f32 %v4312, %v4568
  %v4570 = vand.u32 %v476, 4294901760
  %v4571 = vsub.f32 %v476, %v4570
  %4572 = vmatprep.mubr.f32.mxu0 %v4571
  %v4573 = vand.u32 %v475, 4294901760
  %v4574 = vsub.f32 %v475, %v4573
  %4575 = vmatmul.mubr.f32.gmra.mrb[0].mxu0 %v4574
  %v4576 = vpop.f32.mrb[0].mxu0
  %v4577 = vadd.f32 %v4318, %v4576
  %v4578 = vpop.f32.mrb[0].mxu0
  %v4579 = vadd.f32 %v4320, %v4578
  %v4580 = vand.u32 %v480, 4294901760
  %v4581 = vsub.f32 %v480, %v4580
  %4582 = vmatprep.mubr.f32.mxu0 %v4581
  %v4583 = vand.u32 %v479, 4294901760
  %v4584 = vsub.f32 %v479, %v4583
  %4585 = vmatmul.mubr.f32.gmra.mrb[0].mxu0 %v4584
  %v4586 = vpop.f32.mrb[0].mxu0
  %v4587 = vadd.f32 %v4326, %v4586
  %v4588 = vpop.f32.mrb[0].mxu0
  %v4589 = vadd.f32 %v4328, %v4588
  %v4590 = vand.u32 %v484, 4294901760
  %v4591 = vsub.f32 %v484, %v4590
  %4592 = vmatprep.mubr.f32.mxu0 %v4591
  %v4593 = vand.u32 %v483, 4294901760
  %v4594 = vsub.f32 %v483, %v4593
  %4595 = vmatmul.mubr.f32.gmra.mrb[0].mxu0 %v4594
  %v4596 = vpop.f32.mrb[0].mxu0
  %v4597 = vadd.f32 %v4334, %v4596
  %v4598 = vpop.f32.mrb[0].mxu0
  %v4599 = vadd.f32 %v4336, %v4598
  %4600 = vdwg.mxu0
  %v4601 = vand.u32 %v490, 4294901760
  %4602 = vmatprep.subr.mxu0 %v4601
  %v4603 = vand.u32 %v489, 4294901760
  %4604 = vmatpush1.msra.mxu0 %v4603
  %v4605 = vand.u32 %v494, 4294901760
  %4606 = vmatprep.subr.mxu0 %v4605
  %v4607 = vand.u32 %v493, 4294901760
  %4608 = vmatpush1.msra.mxu0 %v4607
  %v4609 = vand.u32 %v498, 4294901760
  %4610 = vmatprep.subr.mxu0 %v4609
  %v4611 = vand.u32 %v497, 4294901760
  %4612 = vmatpush1.msra.mxu0 %v4611
  %v4613 = vand.u32 %v502, 4294901760
  %4614 = vmatprep.subr.mxu0 %v4613
  %v4615 = vand.u32 %v501, 4294901760
  %4616 = vmatpush1.msra.mxu0 %v4615
  %v4617 = vand.u32 %v506, 4294901760
  %4618 = vmatprep.subr.mxu0 %v4617
  %v4619 = vand.u32 %v505, 4294901760
  %4620 = vmatpush1.msra.mxu0 %v4619
  %v4621 = vand.u32 %v510, 4294901760
  %4622 = vmatprep.subr.mxu0 %v4621
  %v4623 = vand.u32 %v509, 4294901760
  %4624 = vmatpush1.msra.mxu0 %v4623
  %v4625 = vand.u32 %v514, 4294901760
  %4626 = vmatprep.subr.mxu0 %v4625
  %v4627 = vand.u32 %v513, 4294901760
  %4628 = vmatpush1.msra.mxu0 %v4627
  %v4629 = vand.u32 %v518, 4294901760
  %4630 = vmatprep.subr.mxu0 %v4629
  %v4631 = vand.u32 %v517, 4294901760
  %4632 = vmatpush1.msra.mxu0 %v4631
  %v4633 = vand.u32 %v522, 4294901760
  %4634 = vmatprep.subr.mxu0 %v4633
  %v4635 = vand.u32 %v521, 4294901760
  %4636 = vmatpush1.msra.mxu0 %v4635
  %v4637 = vand.u32 %v526, 4294901760
  %4638 = vmatprep.subr.mxu0 %v4637
  %v4639 = vand.u32 %v525, 4294901760
  %4640 = vmatpush1.msra.mxu0 %v4639
  %v4641 = vand.u32 %v530, 4294901760
  %4642 = vmatprep.subr.mxu0 %v4641
  %v4643 = vand.u32 %v529, 4294901760
  %4644 = vmatpush1.msra.mxu0 %v4643
  %v4645 = vand.u32 %v534, 4294901760
  %4646 = vmatprep.subr.mxu0 %v4645
  %v4647 = vand.u32 %v533, 4294901760
  %4648 = vmatpush1.msra.mxu0 %v4647
  %v4649 = vand.u32 %v538, 4294901760
  %4650 = vmatprep.subr.mxu0 %v4649
  %v4651 = vand.u32 %v537, 4294901760
  %4652 = vmatpush1.msra.mxu0 %v4651
  %v4653 = vand.u32 %v542, 4294901760
  %4654 = vmatprep.subr.mxu0 %v4653
  %v4655 = vand.u32 %v541, 4294901760
  %4656 = vmatpush1.msra.mxu0 %v4655
  %v4657 = vand.u32 %v546, 4294901760
  %4658 = vmatprep.subr.mxu0 %v4657
  %v4659 = vand.u32 %v545, 4294901760
  %4660 = vmatpush1.msra.mxu0 %v4659
  %v4661 = vand.u32 %v550, 4294901760
  %4662 = vmatprep.subr.mxu0 %v4661
  %v4663 = vand.u32 %v549, 4294901760
  %4664 = vmatpush1.msra.mxu0 %v4663
  %v4665 = vand.u32 %v554, 4294901760
  %4666 = vmatprep.subr.mxu0 %v4665
  %v4667 = vand.u32 %v553, 4294901760
  %4668 = vmatpush1.msra.mxu0 %v4667
  %v4669 = vand.u32 %v558, 4294901760
  %4670 = vmatprep.subr.mxu0 %v4669
  %v4671 = vand.u32 %v557, 4294901760
  %4672 = vmatpush1.msra.mxu0 %v4671
  %v4673 = vand.u32 %v562, 4294901760
  %4674 = vmatprep.subr.mxu0 %v4673
  %v4675 = vand.u32 %v561, 4294901760
  %4676 = vmatpush1.msra.mxu0 %v4675
  %v4677 = vand.u32 %v566, 4294901760
  %4678 = vmatprep.subr.mxu0 %v4677
  %v4679 = vand.u32 %v565, 4294901760
  %4680 = vmatpush1.msra.mxu0 %v4679
  %v4681 = vand.u32 %v570, 4294901760
  %4682 = vmatprep.subr.mxu0 %v4681
  %v4683 = vand.u32 %v569, 4294901760
  %4684 = vmatpush1.msra.mxu0 %v4683
  %v4685 = vand.u32 %v574, 4294901760
  %4686 = vmatprep.subr.mxu0 %v4685
  %v4687 = vand.u32 %v573, 4294901760
  %4688 = vmatpush1.msra.mxu0 %v4687
  %v4689 = vand.u32 %v578, 4294901760
  %4690 = vmatprep.subr.mxu0 %v4689
  %v4691 = vand.u32 %v577, 4294901760
  %4692 = vmatpush1.msra.mxu0 %v4691
  %v4693 = vand.u32 %v582, 4294901760
  %4694 = vmatprep.subr.mxu0 %v4693
  %v4695 = vand.u32 %v581, 4294901760
  %4696 = vmatpush1.msra.mxu0 %v4695
  %v4697 = vand.u32 %v586, 4294901760
  %4698 = vmatprep.subr.mxu0 %v4697
  %v4699 = vand.u32 %v585, 4294901760
  %4700 = vmatpush1.msra.mxu0 %v4699
  %v4701 = vand.u32 %v590, 4294901760
  %4702 = vmatprep.subr.mxu0 %v4701
  %v4703 = vand.u32 %v589, 4294901760
  %4704 = vmatpush1.msra.mxu0 %v4703
  %v4705 = vand.u32 %v594, 4294901760
  %4706 = vmatprep.subr.mxu0 %v4705
  %v4707 = vand.u32 %v593, 4294901760
  %4708 = vmatpush1.msra.mxu0 %v4707
  %v4709 = vand.u32 %v598, 4294901760
  %4710 = vmatprep.subr.mxu0 %v4709
  %v4711 = vand.u32 %v597, 4294901760
  %4712 = vmatpush1.msra.mxu0 %v4711
  %v4713 = vand.u32 %v602, 4294901760
  %4714 = vmatprep.subr.mxu0 %v4713
  %v4715 = vand.u32 %v601, 4294901760
  %4716 = vmatpush1.msra.mxu0 %v4715
  %v4717 = vand.u32 %v606, 4294901760
  %4718 = vmatprep.subr.mxu0 %v4717
  %v4719 = vand.u32 %v605, 4294901760
  %4720 = vmatpush1.msra.mxu0 %v4719
  %v4721 = vand.u32 %v610, 4294901760
  %4722 = vmatprep.subr.mxu0 %v4721
  %v4723 = vand.u32 %v609, 4294901760
  %4724 = vmatpush1.msra.mxu0 %v4723
  %v4725 = vand.u32 %v614, 4294901760
  %4726 = vmatprep.subr.mxu0 %v4725
  %v4727 = vand.u32 %v613, 4294901760
  %4728 = vmatpush1.msra.mxu0 %v4727
  %v4729 = vand.u32 %v460, 4294901760
  %v4730 = vsub.f32 %v460, %v4729
  %v4731 = vand.u32 %v4730, 4294901760
  %4732 = vmatprep.mubr.f32.mxu0 %v4731
  %v4733 = vand.u32 %v459, 4294901760
  %v4734 = vsub.f32 %v459, %v4733
  %v4735 = vand.u32 %v4734, 4294901760
  %4736 = vmatmul.mubr.f32.gmra.mrb[0].mxu0 %v4735
  %v4737 = vpop.f32.mrb[0].mxu0
  %v4738 = vadd.f32 %v4537, %v4737
  %v4739 = vpop.f32.mrb[0].mxu0
  %v4740 = vadd.f32 %v4539, %v4739
  %v4741 = vand.u32 %v464, 4294901760
  %v4742 = vsub.f32 %v464, %v4741
  %v4743 = vand.u32 %v4742, 4294901760
  %4744 = vmatprep.mubr.f32.mxu0 %v4743
  %v4745 = vand.u32 %v463, 4294901760
  %v4746 = vsub.f32 %v463, %v4745
  %v4747 = vand.u32 %v4746, 4294901760
  %4748 = vmatmul.mubr.f32.gmra.mrb[0].mxu0 %v4747
  %v4749 = vpop.f32.mrb[0].mxu0
  %v4750 = vadd.f32 %v4547, %v4749
  %v4751 = vpop.f32.mrb[0].mxu0
  %v4752 = vadd.f32 %v4549, %v4751
  %v4753 = vand.u32 %v468, 4294901760
  %v4754 = vsub.f32 %v468, %v4753
  %v4755 = vand.u32 %v4754, 4294901760
  %4756 = vmatprep.mubr.f32.mxu0 %v4755
  %v4757 = vand.u32 %v467, 4294901760
  %v4758 = vsub.f32 %v467, %v4757
  %v4759 = vand.u32 %v4758, 4294901760
  %4760 = vmatmul.mubr.f32.gmra.mrb[0].mxu0 %v4759
  %v4761 = vpop.f32.mrb[0].mxu0
  %v4762 = vadd.f32 %v4557, %v4761
  %v4763 = vpop.f32.mrb[0].mxu0
  %v4764 = vadd.f32 %v4559, %v4763
  %v4765 = vand.u32 %v472, 4294901760
  %v4766 = vsub.f32 %v472, %v4765
  %v4767 = vand.u32 %v4766, 4294901760
  %4768 = vmatprep.mubr.f32.mxu0 %v4767
  %v4769 = vand.u32 %v471, 4294901760
  %v4770 = vsub.f32 %v471, %v4769
  %v4771 = vand.u32 %v4770, 4294901760
  %4772 = vmatmul.mubr.f32.gmra.mrb[0].mxu0 %v4771
  %v4773 = vpop.f32.mrb[0].mxu0
  %v4774 = vadd.f32 %v4567, %v4773
  %v4775 = vpop.f32.mrb[0].mxu0
  %v4776 = vadd.f32 %v4569, %v4775
  %v4777 = vand.u32 %v476, 4294901760
  %v4778 = vsub.f32 %v476, %v4777
  %v4779 = vand.u32 %v4778, 4294901760
  %4780 = vmatprep.mubr.f32.mxu0 %v4779
  %v4781 = vand.u32 %v475, 4294901760
  %v4782 = vsub.f32 %v475, %v4781
  %v4783 = vand.u32 %v4782, 4294901760
  %4784 = vmatmul.mubr.f32.gmra.mrb[0].mxu0 %v4783
  %v4785 = vpop.f32.mrb[0].mxu0
  %v4786 = vadd.f32 %v4577, %v4785
  %v4787 = vpop.f32.mrb[0].mxu0
  %v4788 = vadd.f32 %v4579, %v4787
  %v4789 = vand.u32 %v480, 4294901760
  %v4790 = vsub.f32 %v480, %v4789
  %v4791 = vand.u32 %v4790, 4294901760
  %4792 = vmatprep.mubr.f32.mxu0 %v4791
  %v4793 = vand.u32 %v479, 4294901760
  %v4794 = vsub.f32 %v479, %v4793
  %v4795 = vand.u32 %v4794, 4294901760
  %4796 = vmatmul.mubr.f32.gmra.mrb[0].mxu0 %v4795
  %v4797 = vpop.f32.mrb[0].mxu0
  %v4798 = vadd.f32 %v4587, %v4797
  %v4799 = vpop.f32.mrb[0].mxu0
  %v4800 = vadd.f32 %v4589, %v4799
  %v4801 = vand.u32 %v484, 4294901760
  %v4802 = vsub.f32 %v484, %v4801
  %v4803 = vand.u32 %v4802, 4294901760
  %4804 = vmatprep.mubr.f32.mxu0 %v4803
  %v4805 = vand.u32 %v483, 4294901760
  %v4806 = vsub.f32 %v483, %v4805
  %v4807 = vand.u32 %v4806, 4294901760
  %4808 = vmatmul.mubr.f32.gmra.mrb[0].mxu0 %v4807
  %v4809 = vpop.f32.mrb[0].mxu0
  %v4810 = vadd.f32 %v4597, %v4809
  %v4811 = vpop.f32.mrb[0].mxu0
  %v4812 = vadd.f32 %v4599, %v4811
  %4813 = vdwg.mxu0
  %v4814 = vand.u32 %v490, 4294901760
  %v4815 = vsub.f32 %v490, %v4814
  %v4816 = vand.u32 %v4815, 4294901760
  %4817 = vmatprep.subr.mxu0 %v4816
  %v4818 = vand.u32 %v489, 4294901760
  %v4819 = vsub.f32 %v489, %v4818
  %v4820 = vand.u32 %v4819, 4294901760
  %4821 = vmatpush1.msra.mxu0 %v4820
  %v4822 = vand.u32 %v494, 4294901760
  %v4823 = vsub.f32 %v494, %v4822
  %v4824 = vand.u32 %v4823, 4294901760
  %4825 = vmatprep.subr.mxu0 %v4824
  %v4826 = vand.u32 %v493, 4294901760
  %v4827 = vsub.f32 %v493, %v4826
  %v4828 = vand.u32 %v4827, 4294901760
  %4829 = vmatpush1.msra.mxu0 %v4828
  %v4830 = vand.u32 %v498, 4294901760
  %v4831 = vsub.f32 %v498, %v4830
  %v4832 = vand.u32 %v4831, 4294901760
  %4833 = vmatprep.subr.mxu0 %v4832
  %v4834 = vand.u32 %v497, 4294901760
  %v4835 = vsub.f32 %v497, %v4834
  %v4836 = vand.u32 %v4835, 4294901760
  %4837 = vmatpush1.msra.mxu0 %v4836
  %v4838 = vand.u32 %v502, 4294901760
  %v4839 = vsub.f32 %v502, %v4838
  %v4840 = vand.u32 %v4839, 4294901760
  %4841 = vmatprep.subr.mxu0 %v4840
  %v4842 = vand.u32 %v501, 4294901760
  %v4843 = vsub.f32 %v501, %v4842
  %v4844 = vand.u32 %v4843, 4294901760
  %4845 = vmatpush1.msra.mxu0 %v4844
  %v4846 = vand.u32 %v506, 4294901760
  %v4847 = vsub.f32 %v506, %v4846
  %v4848 = vand.u32 %v4847, 4294901760
  %4849 = vmatprep.subr.mxu0 %v4848
  %v4850 = vand.u32 %v505, 4294901760
  %v4851 = vsub.f32 %v505, %v4850
  %v4852 = vand.u32 %v4851, 4294901760
  %4853 = vmatpush1.msra.mxu0 %v4852
  %v4854 = vand.u32 %v510, 4294901760
  %v4855 = vsub.f32 %v510, %v4854
  %v4856 = vand.u32 %v4855, 4294901760
  %4857 = vmatprep.subr.mxu0 %v4856
  %v4858 = vand.u32 %v509, 4294901760
  %v4859 = vsub.f32 %v509, %v4858
  %v4860 = vand.u32 %v4859, 4294901760
  %4861 = vmatpush1.msra.mxu0 %v4860
  %v4862 = vand.u32 %v514, 4294901760
  %v4863 = vsub.f32 %v514, %v4862
  %v4864 = vand.u32 %v4863, 4294901760
  %4865 = vmatprep.subr.mxu0 %v4864
  %v4866 = vand.u32 %v513, 4294901760
  %v4867 = vsub.f32 %v513, %v4866
  %v4868 = vand.u32 %v4867, 4294901760
  %4869 = vmatpush1.msra.mxu0 %v4868
  %v4870 = vand.u32 %v518, 4294901760
  %v4871 = vsub.f32 %v518, %v4870
  %v4872 = vand.u32 %v4871, 4294901760
  %4873 = vmatprep.subr.mxu0 %v4872
  %v4874 = vand.u32 %v517, 4294901760
  %v4875 = vsub.f32 %v517, %v4874
  %v4876 = vand.u32 %v4875, 4294901760
  %4877 = vmatpush1.msra.mxu0 %v4876
  %v4878 = vand.u32 %v522, 4294901760
  %v4879 = vsub.f32 %v522, %v4878
  %v4880 = vand.u32 %v4879, 4294901760
  %4881 = vmatprep.subr.mxu0 %v4880
  %v4882 = vand.u32 %v521, 4294901760
  %v4883 = vsub.f32 %v521, %v4882
  %v4884 = vand.u32 %v4883, 4294901760
  %4885 = vmatpush1.msra.mxu0 %v4884
  %v4886 = vand.u32 %v526, 4294901760
  %v4887 = vsub.f32 %v526, %v4886
  %v4888 = vand.u32 %v4887, 4294901760
  %4889 = vmatprep.subr.mxu0 %v4888
  %v4890 = vand.u32 %v525, 4294901760
  %v4891 = vsub.f32 %v525, %v4890
  %v4892 = vand.u32 %v4891, 4294901760
  %4893 = vmatpush1.msra.mxu0 %v4892
  %v4894 = vand.u32 %v530, 4294901760
  %v4895 = vsub.f32 %v530, %v4894
  %v4896 = vand.u32 %v4895, 4294901760
  %4897 = vmatprep.subr.mxu0 %v4896
  %v4898 = vand.u32 %v529, 4294901760
  %v4899 = vsub.f32 %v529, %v4898
  %v4900 = vand.u32 %v4899, 4294901760
  %4901 = vmatpush1.msra.mxu0 %v4900
  %v4902 = vand.u32 %v534, 4294901760
  %v4903 = vsub.f32 %v534, %v4902
  %v4904 = vand.u32 %v4903, 4294901760
  %4905 = vmatprep.subr.mxu0 %v4904
  %v4906 = vand.u32 %v533, 4294901760
  %v4907 = vsub.f32 %v533, %v4906
  %v4908 = vand.u32 %v4907, 4294901760
  %4909 = vmatpush1.msra.mxu0 %v4908
  %v4910 = vand.u32 %v538, 4294901760
  %v4911 = vsub.f32 %v538, %v4910
  %v4912 = vand.u32 %v4911, 4294901760
  %4913 = vmatprep.subr.mxu0 %v4912
  %v4914 = vand.u32 %v537, 4294901760
  %v4915 = vsub.f32 %v537, %v4914
  %v4916 = vand.u32 %v4915, 4294901760
  %4917 = vmatpush1.msra.mxu0 %v4916
  %v4918 = vand.u32 %v542, 4294901760
  %v4919 = vsub.f32 %v542, %v4918
  %v4920 = vand.u32 %v4919, 4294901760
  %4921 = vmatprep.subr.mxu0 %v4920
  %v4922 = vand.u32 %v541, 4294901760
  %v4923 = vsub.f32 %v541, %v4922
  %v4924 = vand.u32 %v4923, 4294901760
  %4925 = vmatpush1.msra.mxu0 %v4924
  %v4926 = vand.u32 %v546, 4294901760
  %v4927 = vsub.f32 %v546, %v4926
  %v4928 = vand.u32 %v4927, 4294901760
  %4929 = vmatprep.subr.mxu0 %v4928
  %v4930 = vand.u32 %v545, 4294901760
  %v4931 = vsub.f32 %v545, %v4930
  %v4932 = vand.u32 %v4931, 4294901760
  %4933 = vmatpush1.msra.mxu0 %v4932
  %v4934 = vand.u32 %v550, 4294901760
  %v4935 = vsub.f32 %v550, %v4934
  %v4936 = vand.u32 %v4935, 4294901760
  %4937 = vmatprep.subr.mxu0 %v4936
  %v4938 = vand.u32 %v549, 4294901760
  %v4939 = vsub.f32 %v549, %v4938
  %v4940 = vand.u32 %v4939, 4294901760
  %4941 = vmatpush1.msra.mxu0 %v4940
  %v4942 = vand.u32 %v554, 4294901760
  %v4943 = vsub.f32 %v554, %v4942
  %v4944 = vand.u32 %v4943, 4294901760
  %4945 = vmatprep.subr.mxu0 %v4944
  %v4946 = vand.u32 %v553, 4294901760
  %v4947 = vsub.f32 %v553, %v4946
  %v4948 = vand.u32 %v4947, 4294901760
  %4949 = vmatpush1.msra.mxu0 %v4948
  %v4950 = vand.u32 %v558, 4294901760
  %v4951 = vsub.f32 %v558, %v4950
  %v4952 = vand.u32 %v4951, 4294901760
  %4953 = vmatprep.subr.mxu0 %v4952
  %v4954 = vand.u32 %v557, 4294901760
  %v4955 = vsub.f32 %v557, %v4954
  %v4956 = vand.u32 %v4955, 4294901760
  %4957 = vmatpush1.msra.mxu0 %v4956
  %v4958 = vand.u32 %v562, 4294901760
  %v4959 = vsub.f32 %v562, %v4958
  %v4960 = vand.u32 %v4959, 4294901760
  %4961 = vmatprep.subr.mxu0 %v4960
  %v4962 = vand.u32 %v561, 4294901760
  %v4963 = vsub.f32 %v561, %v4962
  %v4964 = vand.u32 %v4963, 4294901760
  %4965 = vmatpush1.msra.mxu0 %v4964
  %v4966 = vand.u32 %v566, 4294901760
  %v4967 = vsub.f32 %v566, %v4966
  %v4968 = vand.u32 %v4967, 4294901760
  %4969 = vmatprep.subr.mxu0 %v4968
  %v4970 = vand.u32 %v565, 4294901760
  %v4971 = vsub.f32 %v565, %v4970
  %v4972 = vand.u32 %v4971, 4294901760
  %4973 = vmatpush1.msra.mxu0 %v4972
  %v4974 = vand.u32 %v570, 4294901760
  %v4975 = vsub.f32 %v570, %v4974
  %v4976 = vand.u32 %v4975, 4294901760
  %4977 = vmatprep.subr.mxu0 %v4976
  %v4978 = vand.u32 %v569, 4294901760
  %v4979 = vsub.f32 %v569, %v4978
  %v4980 = vand.u32 %v4979, 4294901760
  %4981 = vmatpush1.msra.mxu0 %v4980
  %v4982 = vand.u32 %v574, 4294901760
  %v4983 = vsub.f32 %v574, %v4982
  %v4984 = vand.u32 %v4983, 4294901760
  %4985 = vmatprep.subr.mxu0 %v4984
  %v4986 = vand.u32 %v573, 4294901760
  %v4987 = vsub.f32 %v573, %v4986
  %v4988 = vand.u32 %v4987, 4294901760
  %4989 = vmatpush1.msra.mxu0 %v4988
  %v4990 = vand.u32 %v578, 4294901760
  %v4991 = vsub.f32 %v578, %v4990
  %v4992 = vand.u32 %v4991, 4294901760
  %4993 = vmatprep.subr.mxu0 %v4992
  %v4994 = vand.u32 %v577, 4294901760
  %v4995 = vsub.f32 %v577, %v4994
  %v4996 = vand.u32 %v4995, 4294901760
  %4997 = vmatpush1.msra.mxu0 %v4996
  %v4998 = vand.u32 %v582, 4294901760
  %v4999 = vsub.f32 %v582, %v4998
  %v5000 = vand.u32 %v4999, 4294901760
  %5001 = vmatprep.subr.mxu0 %v5000
  %v5002 = vand.u32 %v581, 4294901760
  %v5003 = vsub.f32 %v581, %v5002
  %v5004 = vand.u32 %v5003, 4294901760
  %5005 = vmatpush1.msra.mxu0 %v5004
  %v5006 = vand.u32 %v586, 4294901760
  %v5007 = vsub.f32 %v586, %v5006
  %v5008 = vand.u32 %v5007, 4294901760
  %5009 = vmatprep.subr.mxu0 %v5008
  %v5010 = vand.u32 %v585, 4294901760
  %v5011 = vsub.f32 %v585, %v5010
  %v5012 = vand.u32 %v5011, 4294901760
  %5013 = vmatpush1.msra.mxu0 %v5012
  %v5014 = vand.u32 %v590, 4294901760
  %v5015 = vsub.f32 %v590, %v5014
  %v5016 = vand.u32 %v5015, 4294901760
  %5017 = vmatprep.subr.mxu0 %v5016
  %v5018 = vand.u32 %v589, 4294901760
  %v5019 = vsub.f32 %v589, %v5018
  %v5020 = vand.u32 %v5019, 4294901760
  %5021 = vmatpush1.msra.mxu0 %v5020
  %v5022 = vand.u32 %v594, 4294901760
  %v5023 = vsub.f32 %v594, %v5022
  %v5024 = vand.u32 %v5023, 4294901760
  %5025 = vmatprep.subr.mxu0 %v5024
  %v5026 = vand.u32 %v593, 4294901760
  %v5027 = vsub.f32 %v593, %v5026
  %v5028 = vand.u32 %v5027, 4294901760
  %5029 = vmatpush1.msra.mxu0 %v5028
  %v5030 = vand.u32 %v598, 4294901760
  %v5031 = vsub.f32 %v598, %v5030
  %v5032 = vand.u32 %v5031, 4294901760
  %5033 = vmatprep.subr.mxu0 %v5032
  %v5034 = vand.u32 %v597, 4294901760
  %v5035 = vsub.f32 %v597, %v5034
  %v5036 = vand.u32 %v5035, 4294901760
  %5037 = vmatpush1.msra.mxu0 %v5036
  %v5038 = vand.u32 %v602, 4294901760
  %v5039 = vsub.f32 %v602, %v5038
  %v5040 = vand.u32 %v5039, 4294901760
  %5041 = vmatprep.subr.mxu0 %v5040
  %v5042 = vand.u32 %v601, 4294901760
  %v5043 = vsub.f32 %v601, %v5042
  %v5044 = vand.u32 %v5043, 4294901760
  %5045 = vmatpush1.msra.mxu0 %v5044
  %v5046 = vand.u32 %v606, 4294901760
  %v5047 = vsub.f32 %v606, %v5046
  %v5048 = vand.u32 %v5047, 4294901760
  %5049 = vmatprep.subr.mxu0 %v5048
  %v5050 = vand.u32 %v605, 4294901760
  %v5051 = vsub.f32 %v605, %v5050
  %v5052 = vand.u32 %v5051, 4294901760
  %5053 = vmatpush1.msra.mxu0 %v5052
  %v5054 = vand.u32 %v610, 4294901760
  %v5055 = vsub.f32 %v610, %v5054
  %v5056 = vand.u32 %v5055, 4294901760
  %5057 = vmatprep.subr.mxu0 %v5056
  %v5058 = vand.u32 %v609, 4294901760
  %v5059 = vsub.f32 %v609, %v5058
  %v5060 = vand.u32 %v5059, 4294901760
  %5061 = vmatpush1.msra.mxu0 %v5060
  %v5062 = vand.u32 %v614, 4294901760
  %v5063 = vsub.f32 %v614, %v5062
  %v5064 = vand.u32 %v5063, 4294901760
  %5065 = vmatprep.subr.mxu0 %v5064
  %v5066 = vand.u32 %v613, 4294901760
  %v5067 = vsub.f32 %v613, %v5066
  %v5068 = vand.u32 %v5067, 4294901760
  %5069 = vmatpush1.msra.mxu0 %v5068
  %v5070 = vand.u32 %v460, 4294901760
  %5071 = vmatprep.mubr.f32.mxu0 %v5070
  %v5072 = vand.u32 %v459, 4294901760
  %5073 = vmatmul.mubr.f32.gmra.mrb[0].mxu0 %v5072
  %v5074 = vpop.f32.mrb[0].mxu0
  %v5075 = vadd.f32 %v4738, %v5074
  %v5076 = vpop.f32.mrb[0].mxu0
  %v5077 = vadd.f32 %v4740, %v5076
  %v5078 = vand.u32 %v464, 4294901760
  %5079 = vmatprep.mubr.f32.mxu0 %v5078
  %v5080 = vand.u32 %v463, 4294901760
  %5081 = vmatmul.mubr.f32.gmra.mrb[0].mxu0 %v5080
  %v5082 = vpop.f32.mrb[0].mxu0
  %v5083 = vadd.f32 %v4750, %v5082
  %v5084 = vpop.f32.mrb[0].mxu0
  %v5085 = vadd.f32 %v4752, %v5084
  %v5086 = vand.u32 %v468, 4294901760
  %5087 = vmatprep.mubr.f32.mxu0 %v5086
  %v5088 = vand.u32 %v467, 4294901760
  %5089 = vmatmul.mubr.f32.gmra.mrb[0].mxu0 %v5088
  %v5090 = vpop.f32.mrb[0].mxu0
  %v5091 = vadd.f32 %v4762, %v5090
  %v5092 = vpop.f32.mrb[0].mxu0
  %v5093 = vadd.f32 %v4764, %v5092
  %v5094 = vand.u32 %v472, 4294901760
  %5095 = vmatprep.mubr.f32.mxu0 %v5094
  %v5096 = vand.u32 %v471, 4294901760
  %5097 = vmatmul.mubr.f32.gmra.mrb[0].mxu0 %v5096
  %v5098 = vpop.f32.mrb[0].mxu0
  %v5099 = vadd.f32 %v4774, %v5098
  %v5100 = vpop.f32.mrb[0].mxu0
  %v5101 = vadd.f32 %v4776, %v5100
  %v5102 = vand.u32 %v476, 4294901760
  %5103 = vmatprep.mubr.f32.mxu0 %v5102
  %v5104 = vand.u32 %v475, 4294901760
  %5105 = vmatmul.mubr.f32.gmra.mrb[0].mxu0 %v5104
  %v5106 = vpop.f32.mrb[0].mxu0
  %v5107 = vadd.f32 %v4786, %v5106
  %v5108 = vpop.f32.mrb[0].mxu0
  %v5109 = vadd.f32 %v4788, %v5108
  %v5110 = vand.u32 %v480, 4294901760
  %5111 = vmatprep.mubr.f32.mxu0 %v5110
  %v5112 = vand.u32 %v479, 4294901760
  %5113 = vmatmul.mubr.f32.gmra.mrb[0].mxu0 %v5112
  %v5114 = vpop.f32.mrb[0].mxu0
  %v5115 = vadd.f32 %v4798, %v5114
  %v5116 = vpop.f32.mrb[0].mxu0
  %v5117 = vadd.f32 %v4800, %v5116
  %v5118 = vand.u32 %v484, 4294901760
  %5119 = vmatprep.mubr.f32.mxu0 %v5118
  %v5120 = vand.u32 %v483, 4294901760
  %5121 = vmatmul.mubr.f32.gmra.mrb[0].mxu0 %v5120
  %v5122 = vpop.f32.mrb[0].mxu0
  %v5123 = vadd.f32 %v4810, %v5122
  %v5124 = vpop.f32.mrb[0].mxu0
  %v5125 = vadd.f32 %v4812, %v5124
  %5126 = vdwg.mxu0
  %v5127 = vand.u32 %v490, 4294901760
  %5128 = vmatprep.subr.mxu0 %v5127
  %v5129 = vand.u32 %v489, 4294901760
  %5130 = vmatpush1.msra.mxu0 %v5129
  %v5131 = vand.u32 %v494, 4294901760
  %5132 = vmatprep.subr.mxu0 %v5131
  %v5133 = vand.u32 %v493, 4294901760
  %5134 = vmatpush1.msra.mxu0 %v5133
  %v5135 = vand.u32 %v498, 4294901760
  %5136 = vmatprep.subr.mxu0 %v5135
  %v5137 = vand.u32 %v497, 4294901760
  %5138 = vmatpush1.msra.mxu0 %v5137
  %v5139 = vand.u32 %v502, 4294901760
  %5140 = vmatprep.subr.mxu0 %v5139
  %v5141 = vand.u32 %v501, 4294901760
  %5142 = vmatpush1.msra.mxu0 %v5141
  %v5143 = vand.u32 %v506, 4294901760
  %5144 = vmatprep.subr.mxu0 %v5143
  %v5145 = vand.u32 %v505, 4294901760
  %5146 = vmatpush1.msra.mxu0 %v5145
  %v5147 = vand.u32 %v510, 4294901760
  %5148 = vmatprep.subr.mxu0 %v5147
  %v5149 = vand.u32 %v509, 4294901760
  %5150 = vmatpush1.msra.mxu0 %v5149
  %v5151 = vand.u32 %v514, 4294901760
  %5152 = vmatprep.subr.mxu0 %v5151
  %v5153 = vand.u32 %v513, 4294901760
  %5154 = vmatpush1.msra.mxu0 %v5153
  %v5155 = vand.u32 %v518, 4294901760
  %5156 = vmatprep.subr.mxu0 %v5155
  %v5157 = vand.u32 %v517, 4294901760
  %5158 = vmatpush1.msra.mxu0 %v5157
  %v5159 = vand.u32 %v522, 4294901760
  %5160 = vmatprep.subr.mxu0 %v5159
  %v5161 = vand.u32 %v521, 4294901760
  %5162 = vmatpush1.msra.mxu0 %v5161
  %v5163 = vand.u32 %v526, 4294901760
  %5164 = vmatprep.subr.mxu0 %v5163
  %v5165 = vand.u32 %v525, 4294901760
  %5166 = vmatpush1.msra.mxu0 %v5165
  %v5167 = vand.u32 %v530, 4294901760
  %5168 = vmatprep.subr.mxu0 %v5167
  %v5169 = vand.u32 %v529, 4294901760
  %5170 = vmatpush1.msra.mxu0 %v5169
  %v5171 = vand.u32 %v534, 4294901760
  %5172 = vmatprep.subr.mxu0 %v5171
  %v5173 = vand.u32 %v533, 4294901760
  %5174 = vmatpush1.msra.mxu0 %v5173
  %v5175 = vand.u32 %v538, 4294901760
  %5176 = vmatprep.subr.mxu0 %v5175
  %v5177 = vand.u32 %v537, 4294901760
  %5178 = vmatpush1.msra.mxu0 %v5177
  %v5179 = vand.u32 %v542, 4294901760
  %5180 = vmatprep.subr.mxu0 %v5179
  %v5181 = vand.u32 %v541, 4294901760
  %5182 = vmatpush1.msra.mxu0 %v5181
  %v5183 = vand.u32 %v546, 4294901760
  %5184 = vmatprep.subr.mxu0 %v5183
  %v5185 = vand.u32 %v545, 4294901760
  %5186 = vmatpush1.msra.mxu0 %v5185
  %v5187 = vand.u32 %v550, 4294901760
  %5188 = vmatprep.subr.mxu0 %v5187
  %v5189 = vand.u32 %v549, 4294901760
  %5190 = vmatpush1.msra.mxu0 %v5189
  %v5191 = vand.u32 %v554, 4294901760
  %5192 = vmatprep.subr.mxu0 %v5191
  %v5193 = vand.u32 %v553, 4294901760
  %5194 = vmatpush1.msra.mxu0 %v5193
  %v5195 = vand.u32 %v558, 4294901760
  %5196 = vmatprep.subr.mxu0 %v5195
  %v5197 = vand.u32 %v557, 4294901760
  %5198 = vmatpush1.msra.mxu0 %v5197
  %v5199 = vand.u32 %v562, 4294901760
  %5200 = vmatprep.subr.mxu0 %v5199
  %v5201 = vand.u32 %v561, 4294901760
  %5202 = vmatpush1.msra.mxu0 %v5201
  %v5203 = vand.u32 %v566, 4294901760
  %5204 = vmatprep.subr.mxu0 %v5203
  %v5205 = vand.u32 %v565, 4294901760
  %5206 = vmatpush1.msra.mxu0 %v5205
  %v5207 = vand.u32 %v570, 4294901760
  %5208 = vmatprep.subr.mxu0 %v5207
  %v5209 = vand.u32 %v569, 4294901760
  %5210 = vmatpush1.msra.mxu0 %v5209
  %v5211 = vand.u32 %v574, 4294901760
  %5212 = vmatprep.subr.mxu0 %v5211
  %v5213 = vand.u32 %v573, 4294901760
  %5214 = vmatpush1.msra.mxu0 %v5213
  %v5215 = vand.u32 %v578, 4294901760
  %5216 = vmatprep.subr.mxu0 %v5215
  %v5217 = vand.u32 %v577, 4294901760
  %5218 = vmatpush1.msra.mxu0 %v5217
  %v5219 = vand.u32 %v582, 4294901760
  %5220 = vmatprep.subr.mxu0 %v5219
  %v5221 = vand.u32 %v581, 4294901760
  %5222 = vmatpush1.msra.mxu0 %v5221
  %v5223 = vand.u32 %v586, 4294901760
  %5224 = vmatprep.subr.mxu0 %v5223
  %v5225 = vand.u32 %v585, 4294901760
  %5226 = vmatpush1.msra.mxu0 %v5225
  %v5227 = vand.u32 %v590, 4294901760
  %5228 = vmatprep.subr.mxu0 %v5227
  %v5229 = vand.u32 %v589, 4294901760
  %5230 = vmatpush1.msra.mxu0 %v5229
  %v5231 = vand.u32 %v594, 4294901760
  %5232 = vmatprep.subr.mxu0 %v5231
  %v5233 = vand.u32 %v593, 4294901760
  %5234 = vmatpush1.msra.mxu0 %v5233
  %v5235 = vand.u32 %v598, 4294901760
  %5236 = vmatprep.subr.mxu0 %v5235
  %v5237 = vand.u32 %v597, 4294901760
  %5238 = vmatpush1.msra.mxu0 %v5237
  %v5239 = vand.u32 %v602, 4294901760
  %5240 = vmatprep.subr.mxu0 %v5239
  %v5241 = vand.u32 %v601, 4294901760
  %5242 = vmatpush1.msra.mxu0 %v5241
  %v5243 = vand.u32 %v606, 4294901760
  %5244 = vmatprep.subr.mxu0 %v5243
  %v5245 = vand.u32 %v605, 4294901760
  %5246 = vmatpush1.msra.mxu0 %v5245
  %v5247 = vand.u32 %v610, 4294901760
  %5248 = vmatprep.subr.mxu0 %v5247
  %v5249 = vand.u32 %v609, 4294901760
  %5250 = vmatpush1.msra.mxu0 %v5249
  %v5251 = vand.u32 %v614, 4294901760
  %5252 = vmatprep.subr.mxu0 %v5251
  %v5253 = vand.u32 %v613, 4294901760
  %5254 = vmatpush1.msra.mxu0 %v5253
  %v5255 = vand.u32 %v460, 4294901760
  %5256 = vmatprep.mubr.f32.mxu0 %v5255
  %v5257 = vand.u32 %v459, 4294901760
  %5258 = vmatmul.mubr.f32.gmra.mrb[0].mxu0 %v5257
  %v5259 = vpop.f32.mrb[0].mxu0
  %v5260 = vadd.f32 %v5075, %v5259
  %v5261 = vpop.f32.mrb[0].mxu0
  %v5262 = vadd.f32 %v5077, %v5261
  %v5263 = vand.u32 %v464, 4294901760
  %5264 = vmatprep.mubr.f32.mxu0 %v5263
  %v5265 = vand.u32 %v463, 4294901760
  %5266 = vmatmul.mubr.f32.gmra.mrb[0].mxu0 %v5265
  %v5267 = vpop.f32.mrb[0].mxu0
  %v5268 = vadd.f32 %v5083, %v5267
  %v5269 = vpop.f32.mrb[0].mxu0
  %v5270 = vadd.f32 %v5085, %v5269
  %v5271 = vand.u32 %v468, 4294901760
  %5272 = vmatprep.mubr.f32.mxu0 %v5271
  %v5273 = vand.u32 %v467, 4294901760
  %5274 = vmatmul.mubr.f32.gmra.mrb[0].mxu0 %v5273
  %v5275 = vpop.f32.mrb[0].mxu0
  %v5276 = vadd.f32 %v5091, %v5275
  %v5277 = vpop.f32.mrb[0].mxu0
  %v5278 = vadd.f32 %v5093, %v5277
  %v5279 = vand.u32 %v472, 4294901760
  %5280 = vmatprep.mubr.f32.mxu0 %v5279
  %v5281 = vand.u32 %v471, 4294901760
  %5282 = vmatmul.mubr.f32.gmra.mrb[0].mxu0 %v5281
  %v5283 = vpop.f32.mrb[0].mxu0
  %v5284 = vadd.f32 %v5099, %v5283
  %v5285 = vpop.f32.mrb[0].mxu0
  %v5286 = vadd.f32 %v5101, %v5285
  %v5287 = vand.u32 %v476, 4294901760
  %5288 = vmatprep.mubr.f32.mxu0 %v5287
  %v5289 = vand.u32 %v475, 4294901760
  %5290 = vmatmul.mubr.f32.gmra.mrb[0].mxu0 %v5289
  %v5291 = vpop.f32.mrb[0].mxu0
  %v5292 = vadd.f32 %v5107, %v5291
  %v5293 = vpop.f32.mrb[0].mxu0
  %v5294 = vadd.f32 %v5109, %v5293
  %v5295 = vand.u32 %v480, 4294901760
  %5296 = vmatprep.mubr.f32.mxu0 %v5295
  %v5297 = vand.u32 %v479, 4294901760
  %5298 = vmatmul.mubr.f32.gmra.mrb[0].mxu0 %v5297
  %v5299 = vpop.f32.mrb[0].mxu0
  %v5300 = vadd.f32 %v5115, %v5299
  %v5301 = vpop.f32.mrb[0].mxu0
  %v5302 = vadd.f32 %v5117, %v5301
  %v5303 = vand.u32 %v484, 4294901760
  %5304 = vmatprep.mubr.f32.mxu0 %v5303
  %v5305 = vand.u32 %v483, 4294901760
  %5306 = vmatmul.mubr.f32.gmra.mrb[0].mxu0 %v5305
  %v5307 = vpop.f32.mrb[0].mxu0
  %v5308 = vadd.f32 %v5123, %v5307
  %v5309 = vpop.f32.mrb[0].mxu0
  %v5310 = vadd.f32 %v5125, %v5309
  %5311 = vdwg.mxu0
  %v5312 = vand.u32 %v618, 4294901760
  %5313 = vmatprep.subr.mxu0 %v5312
  %v5314 = vand.u32 %v617, 4294901760
  %5315 = vmatpush1.msra.mxu0 %v5314
  %v5316 = vand.u32 %v622, 4294901760
  %5317 = vmatprep.subr.mxu0 %v5316
  %v5318 = vand.u32 %v621, 4294901760
  %5319 = vmatpush1.msra.mxu0 %v5318
  %v5320 = vand.u32 %v626, 4294901760
  %5321 = vmatprep.subr.mxu0 %v5320
  %v5322 = vand.u32 %v625, 4294901760
  %5323 = vmatpush1.msra.mxu0 %v5322
  %v5324 = vand.u32 %v630, 4294901760
  %5325 = vmatprep.subr.mxu0 %v5324
  %v5326 = vand.u32 %v629, 4294901760
  %5327 = vmatpush1.msra.mxu0 %v5326
  %v5328 = vand.u32 %v634, 4294901760
  %5329 = vmatprep.subr.mxu0 %v5328
  %v5330 = vand.u32 %v633, 4294901760
  %5331 = vmatpush1.msra.mxu0 %v5330
  %v5332 = vand.u32 %v638, 4294901760
  %5333 = vmatprep.subr.mxu0 %v5332
  %v5334 = vand.u32 %v637, 4294901760
  %5335 = vmatpush1.msra.mxu0 %v5334
  %v5336 = vand.u32 %v642, 4294901760
  %5337 = vmatprep.subr.mxu0 %v5336
  %v5338 = vand.u32 %v641, 4294901760
  %5339 = vmatpush1.msra.mxu0 %v5338
  %v5340 = vand.u32 %v646, 4294901760
  %5341 = vmatprep.subr.mxu0 %v5340
  %v5342 = vand.u32 %v645, 4294901760
  %5343 = vmatpush1.msra.mxu0 %v5342
  %v5344 = vand.u32 %v650, 4294901760
  %5345 = vmatprep.subr.mxu0 %v5344
  %v5346 = vand.u32 %v649, 4294901760
  %5347 = vmatpush1.msra.mxu0 %v5346
  %v5348 = vand.u32 %v654, 4294901760
  %5349 = vmatprep.subr.mxu0 %v5348
  %v5350 = vand.u32 %v653, 4294901760
  %5351 = vmatpush1.msra.mxu0 %v5350
  %v5352 = vand.u32 %v658, 4294901760
  %5353 = vmatprep.subr.mxu0 %v5352
  %v5354 = vand.u32 %v657, 4294901760
  %5355 = vmatpush1.msra.mxu0 %v5354
  %v5356 = vand.u32 %v662, 4294901760
  %5357 = vmatprep.subr.mxu0 %v5356
  %v5358 = vand.u32 %v661, 4294901760
  %5359 = vmatpush1.msra.mxu0 %v5358
  %v5360 = vand.u32 %v666, 4294901760
  %5361 = vmatprep.subr.mxu0 %v5360
  %v5362 = vand.u32 %v665, 4294901760
  %5363 = vmatpush1.msra.mxu0 %v5362
  %v5364 = vand.u32 %v670, 4294901760
  %5365 = vmatprep.subr.mxu0 %v5364
  %v5366 = vand.u32 %v669, 4294901760
  %5367 = vmatpush1.msra.mxu0 %v5366
  %v5368 = vand.u32 %v674, 4294901760
  %5369 = vmatprep.subr.mxu0 %v5368
  %v5370 = vand.u32 %v673, 4294901760
  %5371 = vmatpush1.msra.mxu0 %v5370
  %v5372 = vand.u32 %v678, 4294901760
  %5373 = vmatprep.subr.mxu0 %v5372
  %v5374 = vand.u32 %v677, 4294901760
  %5375 = vmatpush1.msra.mxu0 %v5374
  %v5376 = vand.u32 %v682, 4294901760
  %5377 = vmatprep.subr.mxu0 %v5376
  %v5378 = vand.u32 %v681, 4294901760
  %5379 = vmatpush1.msra.mxu0 %v5378
  %v5380 = vand.u32 %v686, 4294901760
  %5381 = vmatprep.subr.mxu0 %v5380
  %v5382 = vand.u32 %v685, 4294901760
  %5383 = vmatpush1.msra.mxu0 %v5382
  %5384 = vmatprep.subr.mxu0 0.0
  %5385 = vmatpush1.msra.mxu0 0.0
  %5386 = vmatprep.subr.mxu0 0.0
  %5387 = vmatpush1.msra.mxu0 0.0
  %5388 = vmatprep.subr.mxu0 0.0
  %5389 = vmatpush1.msra.mxu0 0.0
  %5390 = vmatprep.subr.mxu0 0.0
  %5391 = vmatpush1.msra.mxu0 0.0
  %5392 = vmatprep.subr.mxu0 0.0
  %5393 = vmatpush1.msra.mxu0 0.0
  %5394 = vmatprep.subr.mxu0 0.0
  %5395 = vmatpush1.msra.mxu0 0.0
  %5396 = vmatprep.subr.mxu0 0.0
  %5397 = vmatpush1.msra.mxu0 0.0
  %5398 = vmatprep.subr.mxu0 0.0
  %5399 = vmatpush1.msra.mxu0 0.0
  %5400 = vmatprep.subr.mxu0 0.0
  %5401 = vmatpush1.msra.mxu0 0.0
  %5402 = vmatprep.subr.mxu0 0.0
  %5403 = vmatpush1.msra.mxu0 0.0
  %5404 = vmatprep.subr.mxu0 0.0
  %5405 = vmatpush1.msra.mxu0 0.0
  %5406 = vmatprep.subr.mxu0 0.0
  %5407 = vmatpush1.msra.mxu0 0.0
  %5408 = vmatprep.subr.mxu0 0.0
  %5409 = vmatpush1.msra.mxu0 0.0
  %5410 = vmatprep.subr.mxu0 0.0
  %5411 = vmatpush1.msra.mxu0 0.0
  %v5412 = vand.u32 %v688, 4294901760
  %v5413 = vsub.f32 %v688, %v5412
  %v5414 = vand.u32 %v5413, 4294901760
  %v5415 = vsub.f32 %v5413, %v5414
  %v5416 = vand.u32 %v5415, 4294901760
  %5417 = vmatprep.mubr.f32.mxu0 %v5416
  %v5418 = vand.u32 %v461, 4294901760
  %v5419 = vsub.f32 %v461, %v5418
  %v5420 = vand.u32 %v5419, 4294901760
  %v5421 = vsub.f32 %v5419, %v5420
  %v5422 = vand.u32 %v5421, 4294901760
  %5423 = vmatmul.mubr.f32.gmra.mrb[0].mxu0 %v5422
  %v5424 = vpop.f32.mrb[0].mxu0
  %v5425 = vadd.f32 %v5260, %v5424
  %v5426 = vpop.f32.mrb[0].mxu0
  %v5427 = vadd.f32 %v5262, %v5426
  %v5428 = vand.u32 %v691, 4294901760
  %v5429 = vsub.f32 %v691, %v5428
  %v5430 = vand.u32 %v5429, 4294901760
  %v5431 = vsub.f32 %v5429, %v5430
  %v5432 = vand.u32 %v5431, 4294901760
  %5433 = vmatprep.mubr.f32.mxu0 %v5432
  %v5434 = vand.u32 %v465, 4294901760
  %v5435 = vsub.f32 %v465, %v5434
  %v5436 = vand.u32 %v5435, 4294901760
  %v5437 = vsub.f32 %v5435, %v5436
  %v5438 = vand.u32 %v5437, 4294901760
  %5439 = vmatmul.mubr.f32.gmra.mrb[0].mxu0 %v5438
  %v5440 = vpop.f32.mrb[0].mxu0
  %v5441 = vadd.f32 %v5268, %v5440
  %v5442 = vpop.f32.mrb[0].mxu0
  %v5443 = vadd.f32 %v5270, %v5442
  %v5444 = vand.u32 %v694, 4294901760
  %v5445 = vsub.f32 %v694, %v5444
  %v5446 = vand.u32 %v5445, 4294901760
  %v5447 = vsub.f32 %v5445, %v5446
  %v5448 = vand.u32 %v5447, 4294901760
  %5449 = vmatprep.mubr.f32.mxu0 %v5448
  %v5450 = vand.u32 %v469, 4294901760
  %v5451 = vsub.f32 %v469, %v5450
  %v5452 = vand.u32 %v5451, 4294901760
  %v5453 = vsub.f32 %v5451, %v5452
  %v5454 = vand.u32 %v5453, 4294901760
  %5455 = vmatmul.mubr.f32.gmra.mrb[0].mxu0 %v5454
  %v5456 = vpop.f32.mrb[0].mxu0
  %v5457 = vadd.f32 %v5276, %v5456
  %v5458 = vpop.f32.mrb[0].mxu0
  %v5459 = vadd.f32 %v5278, %v5458
  %v5460 = vand.u32 %v697, 4294901760
  %v5461 = vsub.f32 %v697, %v5460
  %v5462 = vand.u32 %v5461, 4294901760
  %v5463 = vsub.f32 %v5461, %v5462
  %v5464 = vand.u32 %v5463, 4294901760
  %5465 = vmatprep.mubr.f32.mxu0 %v5464
  %v5466 = vand.u32 %v473, 4294901760
  %v5467 = vsub.f32 %v473, %v5466
  %v5468 = vand.u32 %v5467, 4294901760
  %v5469 = vsub.f32 %v5467, %v5468
  %v5470 = vand.u32 %v5469, 4294901760
  %5471 = vmatmul.mubr.f32.gmra.mrb[0].mxu0 %v5470
  %v5472 = vpop.f32.mrb[0].mxu0
  %v5473 = vadd.f32 %v5284, %v5472
  %v5474 = vpop.f32.mrb[0].mxu0
  %v5475 = vadd.f32 %v5286, %v5474
  %v5476 = vand.u32 %v700, 4294901760
  %v5477 = vsub.f32 %v700, %v5476
  %v5478 = vand.u32 %v5477, 4294901760
  %v5479 = vsub.f32 %v5477, %v5478
  %v5480 = vand.u32 %v5479, 4294901760
  %5481 = vmatprep.mubr.f32.mxu0 %v5480
  %v5482 = vand.u32 %v477, 4294901760
  %v5483 = vsub.f32 %v477, %v5482
  %v5484 = vand.u32 %v5483, 4294901760
  %v5485 = vsub.f32 %v5483, %v5484
  %v5486 = vand.u32 %v5485, 4294901760
  %5487 = vmatmul.mubr.f32.gmra.mrb[0].mxu0 %v5486
  %v5488 = vpop.f32.mrb[0].mxu0
  %v5489 = vadd.f32 %v5292, %v5488
  %v5490 = vpop.f32.mrb[0].mxu0
  %v5491 = vadd.f32 %v5294, %v5490
  %v5492 = vand.u32 %v703, 4294901760
  %v5493 = vsub.f32 %v703, %v5492
  %v5494 = vand.u32 %v5493, 4294901760
  %v5495 = vsub.f32 %v5493, %v5494
  %v5496 = vand.u32 %v5495, 4294901760
  %5497 = vmatprep.mubr.f32.mxu0 %v5496
  %v5498 = vand.u32 %v481, 4294901760
  %v5499 = vsub.f32 %v481, %v5498
  %v5500 = vand.u32 %v5499, 4294901760
  %v5501 = vsub.f32 %v5499, %v5500
  %v5502 = vand.u32 %v5501, 4294901760
  %5503 = vmatmul.mubr.f32.gmra.mrb[0].mxu0 %v5502
  %v5504 = vpop.f32.mrb[0].mxu0
  %v5505 = vadd.f32 %v5300, %v5504
  %v5506 = vpop.f32.mrb[0].mxu0
  %v5507 = vadd.f32 %v5302, %v5506
  %v5508 = vand.u32 %v706, 4294901760
  %v5509 = vsub.f32 %v706, %v5508
  %v5510 = vand.u32 %v5509, 4294901760
  %v5511 = vsub.f32 %v5509, %v5510
  %v5512 = vand.u32 %v5511, 4294901760
  %5513 = vmatprep.mubr.f32.mxu0 %v5512
  %v5514 = vand.u32 %v485, 4294901760
  %v5515 = vsub.f32 %v485, %v5514
  %v5516 = vand.u32 %v5515, 4294901760
  %v5517 = vsub.f32 %v5515, %v5516
  %v5518 = vand.u32 %v5517, 4294901760
  %5519 = vmatmul.mubr.f32.gmra.mrb[0].mxu0 %v5518
  %v5520 = vpop.f32.mrb[0].mxu0
  %v5521 = vadd.f32 %v5308, %v5520
  %v5522 = vpop.f32.mrb[0].mxu0
  %v5523 = vadd.f32 %v5310, %v5522
  %5524 = vdwg.mxu0
  %v5525 = vand.u32 %v618, 4294901760
  %v5526 = vsub.f32 %v618, %v5525
  %v5527 = vand.u32 %v5526, 4294901760
  %v5528 = vsub.f32 %v5526, %v5527
  %v5529 = vand.u32 %v5528, 4294901760
  %5530 = vmatprep.subr.mxu0 %v5529
  %v5531 = vand.u32 %v617, 4294901760
  %v5532 = vsub.f32 %v617, %v5531
  %v5533 = vand.u32 %v5532, 4294901760
  %v5534 = vsub.f32 %v5532, %v5533
  %v5535 = vand.u32 %v5534, 4294901760
  %5536 = vmatpush1.msra.mxu0 %v5535
  %v5537 = vand.u32 %v622, 4294901760
  %v5538 = vsub.f32 %v622, %v5537
  %v5539 = vand.u32 %v5538, 4294901760
  %v5540 = vsub.f32 %v5538, %v5539
  %v5541 = vand.u32 %v5540, 4294901760
  %5542 = vmatprep.subr.mxu0 %v5541
  %v5543 = vand.u32 %v621, 4294901760
  %v5544 = vsub.f32 %v621, %v5543
  %v5545 = vand.u32 %v5544, 4294901760
  %v5546 = vsub.f32 %v5544, %v5545
  %v5547 = vand.u32 %v5546, 4294901760
  %5548 = vmatpush1.msra.mxu0 %v5547
  %v5549 = vand.u32 %v626, 4294901760
  %v5550 = vsub.f32 %v626, %v5549
  %v5551 = vand.u32 %v5550, 4294901760
  %v5552 = vsub.f32 %v5550, %v5551
  %v5553 = vand.u32 %v5552, 4294901760
  %5554 = vmatprep.subr.mxu0 %v5553
  %v5555 = vand.u32 %v625, 4294901760
  %v5556 = vsub.f32 %v625, %v5555
  %v5557 = vand.u32 %v5556, 4294901760
  %v5558 = vsub.f32 %v5556, %v5557
  %v5559 = vand.u32 %v5558, 4294901760
  %5560 = vmatpush1.msra.mxu0 %v5559
  %v5561 = vand.u32 %v630, 4294901760
  %v5562 = vsub.f32 %v630, %v5561
  %v5563 = vand.u32 %v5562, 4294901760
  %v5564 = vsub.f32 %v5562, %v5563
  %v5565 = vand.u32 %v5564, 4294901760
  %5566 = vmatprep.subr.mxu0 %v5565
  %v5567 = vand.u32 %v629, 4294901760
  %v5568 = vsub.f32 %v629, %v5567
  %v5569 = vand.u32 %v5568, 4294901760
  %v5570 = vsub.f32 %v5568, %v5569
  %v5571 = vand.u32 %v5570, 4294901760
  %5572 = vmatpush1.msra.mxu0 %v5571
  %v5573 = vand.u32 %v634, 4294901760
  %v5574 = vsub.f32 %v634, %v5573
  %v5575 = vand.u32 %v5574, 4294901760
  %v5576 = vsub.f32 %v5574, %v5575
  %v5577 = vand.u32 %v5576, 4294901760
  %5578 = vmatprep.subr.mxu0 %v5577
  %v5579 = vand.u32 %v633, 4294901760
  %v5580 = vsub.f32 %v633, %v5579
  %v5581 = vand.u32 %v5580, 4294901760
  %v5582 = vsub.f32 %v5580, %v5581
  %v5583 = vand.u32 %v5582, 4294901760
  %5584 = vmatpush1.msra.mxu0 %v5583
  %v5585 = vand.u32 %v638, 4294901760
  %v5586 = vsub.f32 %v638, %v5585
  %v5587 = vand.u32 %v5586, 4294901760
  %v5588 = vsub.f32 %v5586, %v5587
  %v5589 = vand.u32 %v5588, 4294901760
  %5590 = vmatprep.subr.mxu0 %v5589
  %v5591 = vand.u32 %v637, 4294901760
  %v5592 = vsub.f32 %v637, %v5591
  %v5593 = vand.u32 %v5592, 4294901760
  %v5594 = vsub.f32 %v5592, %v5593
  %v5595 = vand.u32 %v5594, 4294901760
  %5596 = vmatpush1.msra.mxu0 %v5595
  %v5597 = vand.u32 %v642, 4294901760
  %v5598 = vsub.f32 %v642, %v5597
  %v5599 = vand.u32 %v5598, 4294901760
  %v5600 = vsub.f32 %v5598, %v5599
  %v5601 = vand.u32 %v5600, 4294901760
  %5602 = vmatprep.subr.mxu0 %v5601
  %v5603 = vand.u32 %v641, 4294901760
  %v5604 = vsub.f32 %v641, %v5603
  %v5605 = vand.u32 %v5604, 4294901760
  %v5606 = vsub.f32 %v5604, %v5605
  %v5607 = vand.u32 %v5606, 4294901760
  %5608 = vmatpush1.msra.mxu0 %v5607
  %v5609 = vand.u32 %v646, 4294901760
  %v5610 = vsub.f32 %v646, %v5609
  %v5611 = vand.u32 %v5610, 4294901760
  %v5612 = vsub.f32 %v5610, %v5611
  %v5613 = vand.u32 %v5612, 4294901760
  %5614 = vmatprep.subr.mxu0 %v5613
  %v5615 = vand.u32 %v645, 4294901760
  %v5616 = vsub.f32 %v645, %v5615
  %v5617 = vand.u32 %v5616, 4294901760
  %v5618 = vsub.f32 %v5616, %v5617
  %v5619 = vand.u32 %v5618, 4294901760
  %5620 = vmatpush1.msra.mxu0 %v5619
  %v5621 = vand.u32 %v650, 4294901760
  %v5622 = vsub.f32 %v650, %v5621
  %v5623 = vand.u32 %v5622, 4294901760
  %v5624 = vsub.f32 %v5622, %v5623
  %v5625 = vand.u32 %v5624, 4294901760
  %5626 = vmatprep.subr.mxu0 %v5625
  %v5627 = vand.u32 %v649, 4294901760
  %v5628 = vsub.f32 %v649, %v5627
  %v5629 = vand.u32 %v5628, 4294901760
  %v5630 = vsub.f32 %v5628, %v5629
  %v5631 = vand.u32 %v5630, 4294901760
  %5632 = vmatpush1.msra.mxu0 %v5631
  %v5633 = vand.u32 %v654, 4294901760
  %v5634 = vsub.f32 %v654, %v5633
  %v5635 = vand.u32 %v5634, 4294901760
  %v5636 = vsub.f32 %v5634, %v5635
  %v5637 = vand.u32 %v5636, 4294901760
  %5638 = vmatprep.subr.mxu0 %v5637
  %v5639 = vand.u32 %v653, 4294901760
  %v5640 = vsub.f32 %v653, %v5639
  %v5641 = vand.u32 %v5640, 4294901760
  %v5642 = vsub.f32 %v5640, %v5641
  %v5643 = vand.u32 %v5642, 4294901760
  %5644 = vmatpush1.msra.mxu0 %v5643
  %v5645 = vand.u32 %v658, 4294901760
  %v5646 = vsub.f32 %v658, %v5645
  %v5647 = vand.u32 %v5646, 4294901760
  %v5648 = vsub.f32 %v5646, %v5647
  %v5649 = vand.u32 %v5648, 4294901760
  %5650 = vmatprep.subr.mxu0 %v5649
  %v5651 = vand.u32 %v657, 4294901760
  %v5652 = vsub.f32 %v657, %v5651
  %v5653 = vand.u32 %v5652, 4294901760
  %v5654 = vsub.f32 %v5652, %v5653
  %v5655 = vand.u32 %v5654, 4294901760
  %5656 = vmatpush1.msra.mxu0 %v5655
  %v5657 = vand.u32 %v662, 4294901760
  %v5658 = vsub.f32 %v662, %v5657
  %v5659 = vand.u32 %v5658, 4294901760
  %v5660 = vsub.f32 %v5658, %v5659
  %v5661 = vand.u32 %v5660, 4294901760
  %5662 = vmatprep.subr.mxu0 %v5661
  %v5663 = vand.u32 %v661, 4294901760
  %v5664 = vsub.f32 %v661, %v5663
  %v5665 = vand.u32 %v5664, 4294901760
  %v5666 = vsub.f32 %v5664, %v5665
  %v5667 = vand.u32 %v5666, 4294901760
  %5668 = vmatpush1.msra.mxu0 %v5667
  %v5669 = vand.u32 %v666, 4294901760
  %v5670 = vsub.f32 %v666, %v5669
  %v5671 = vand.u32 %v5670, 4294901760
  %v5672 = vsub.f32 %v5670, %v5671
  %v5673 = vand.u32 %v5672, 4294901760
  %5674 = vmatprep.subr.mxu0 %v5673
  %v5675 = vand.u32 %v665, 4294901760
  %v5676 = vsub.f32 %v665, %v5675
  %v5677 = vand.u32 %v5676, 4294901760
  %v5678 = vsub.f32 %v5676, %v5677
  %v5679 = vand.u32 %v5678, 4294901760
  %5680 = vmatpush1.msra.mxu0 %v5679
  %v5681 = vand.u32 %v670, 4294901760
  %v5682 = vsub.f32 %v670, %v5681
  %v5683 = vand.u32 %v5682, 4294901760
  %v5684 = vsub.f32 %v5682, %v5683
  %v5685 = vand.u32 %v5684, 4294901760
  %5686 = vmatprep.subr.mxu0 %v5685
  %v5687 = vand.u32 %v669, 4294901760
  %v5688 = vsub.f32 %v669, %v5687
  %v5689 = vand.u32 %v5688, 4294901760
  %v5690 = vsub.f32 %v5688, %v5689
  %v5691 = vand.u32 %v5690, 4294901760
  %5692 = vmatpush1.msra.mxu0 %v5691
  %v5693 = vand.u32 %v674, 4294901760
  %v5694 = vsub.f32 %v674, %v5693
  %v5695 = vand.u32 %v5694, 4294901760
  %v5696 = vsub.f32 %v5694, %v5695
  %v5697 = vand.u32 %v5696, 4294901760
  %5698 = vmatprep.subr.mxu0 %v5697
  %v5699 = vand.u32 %v673, 4294901760
  %v5700 = vsub.f32 %v673, %v5699
  %v5701 = vand.u32 %v5700, 4294901760
  %v5702 = vsub.f32 %v5700, %v5701
  %v5703 = vand.u32 %v5702, 4294901760
  %5704 = vmatpush1.msra.mxu0 %v5703
  %v5705 = vand.u32 %v678, 4294901760
  %v5706 = vsub.f32 %v678, %v5705
  %v5707 = vand.u32 %v5706, 4294901760
  %v5708 = vsub.f32 %v5706, %v5707
  %v5709 = vand.u32 %v5708, 4294901760
  %5710 = vmatprep.subr.mxu0 %v5709
  %v5711 = vand.u32 %v677, 4294901760
  %v5712 = vsub.f32 %v677, %v5711
  %v5713 = vand.u32 %v5712, 4294901760
  %v5714 = vsub.f32 %v5712, %v5713
  %v5715 = vand.u32 %v5714, 4294901760
  %5716 = vmatpush1.msra.mxu0 %v5715
  %v5717 = vand.u32 %v682, 4294901760
  %v5718 = vsub.f32 %v682, %v5717
  %v5719 = vand.u32 %v5718, 4294901760
  %v5720 = vsub.f32 %v5718, %v5719
  %v5721 = vand.u32 %v5720, 4294901760
  %5722 = vmatprep.subr.mxu0 %v5721
  %v5723 = vand.u32 %v681, 4294901760
  %v5724 = vsub.f32 %v681, %v5723
  %v5725 = vand.u32 %v5724, 4294901760
  %v5726 = vsub.f32 %v5724, %v5725
  %v5727 = vand.u32 %v5726, 4294901760
  %5728 = vmatpush1.msra.mxu0 %v5727
  %v5729 = vand.u32 %v686, 4294901760
  %v5730 = vsub.f32 %v686, %v5729
  %v5731 = vand.u32 %v5730, 4294901760
  %v5732 = vsub.f32 %v5730, %v5731
  %v5733 = vand.u32 %v5732, 4294901760
  %5734 = vmatprep.subr.mxu0 %v5733
  %v5735 = vand.u32 %v685, 4294901760
  %v5736 = vsub.f32 %v685, %v5735
  %v5737 = vand.u32 %v5736, 4294901760
  %v5738 = vsub.f32 %v5736, %v5737
  %v5739 = vand.u32 %v5738, 4294901760
  %5740 = vmatpush1.msra.mxu0 %v5739
  %5741 = vmatprep.subr.mxu0 0.0
  %5742 = vmatpush1.msra.mxu0 0.0
  %5743 = vmatprep.subr.mxu0 0.0
  %5744 = vmatpush1.msra.mxu0 0.0
  %5745 = vmatprep.subr.mxu0 0.0
  %5746 = vmatpush1.msra.mxu0 0.0
  %5747 = vmatprep.subr.mxu0 0.0
  %5748 = vmatpush1.msra.mxu0 0.0
  %5749 = vmatprep.subr.mxu0 0.0
  %5750 = vmatpush1.msra.mxu0 0.0
  %5751 = vmatprep.subr.mxu0 0.0
  %5752 = vmatpush1.msra.mxu0 0.0
  %5753 = vmatprep.subr.mxu0 0.0
  %5754 = vmatpush1.msra.mxu0 0.0
  %5755 = vmatprep.subr.mxu0 0.0
  %5756 = vmatpush1.msra.mxu0 0.0
  %5757 = vmatprep.subr.mxu0 0.0
  %5758 = vmatpush1.msra.mxu0 0.0
  %5759 = vmatprep.subr.mxu0 0.0
  %5760 = vmatpush1.msra.mxu0 0.0
  %5761 = vmatprep.subr.mxu0 0.0
  %5762 = vmatpush1.msra.mxu0 0.0
  %5763 = vmatprep.subr.mxu0 0.0
  %5764 = vmatpush1.msra.mxu0 0.0
  %5765 = vmatprep.subr.mxu0 0.0
  %5766 = vmatpush1.msra.mxu0 0.0
  %5767 = vmatprep.subr.mxu0 0.0
  %5768 = vmatpush1.msra.mxu0 0.0
  %v5769 = vand.u32 %v688, 4294901760
  %5770 = vmatprep.mubr.f32.mxu0 %v5769
  %v5771 = vand.u32 %v461, 4294901760
  %5772 = vmatmul.mubr.f32.gmra.mrb[0].mxu0 %v5771
  %v5773 = vpop.f32.mrb[0].mxu0
  %v5774 = vadd.f32 %v5425, %v5773
  %v5775 = vpop.f32.mrb[0].mxu0
  %v5776 = vadd.f32 %v5427, %v5775
  %v5777 = vand.u32 %v691, 4294901760
  %5778 = vmatprep.mubr.f32.mxu0 %v5777
  %v5779 = vand.u32 %v465, 4294901760
  %5780 = vmatmul.mubr.f32.gmra.mrb[0].mxu0 %v5779
  %v5781 = vpop.f32.mrb[0].mxu0
  %v5782 = vadd.f32 %v5441, %v5781
  %v5783 = vpop.f32.mrb[0].mxu0
  %v5784 = vadd.f32 %v5443, %v5783
  %v5785 = vand.u32 %v694, 4294901760
  %5786 = vmatprep.mubr.f32.mxu0 %v5785
  %v5787 = vand.u32 %v469, 4294901760
  %5788 = vmatmul.mubr.f32.gmra.mrb[0].mxu0 %v5787
  %v5789 = vpop.f32.mrb[0].mxu0
  %v5790 = vadd.f32 %v5457, %v5789
  %v5791 = vpop.f32.mrb[0].mxu0
  %v5792 = vadd.f32 %v5459, %v5791
  %v5793 = vand.u32 %v697, 4294901760
  %5794 = vmatprep.mubr.f32.mxu0 %v5793
  %v5795 = vand.u32 %v473, 4294901760
  %5796 = vmatmul.mubr.f32.gmra.mrb[0].mxu0 %v5795
  %v5797 = vpop.f32.mrb[0].mxu0
  %v5798 = vadd.f32 %v5473, %v5797
  %v5799 = vpop.f32.mrb[0].mxu0
  %v5800 = vadd.f32 %v5475, %v5799
  %v5801 = vand.u32 %v700, 4294901760
  %5802 = vmatprep.mubr.f32.mxu0 %v5801
  %v5803 = vand.u32 %v477, 4294901760
  %5804 = vmatmul.mubr.f32.gmra.mrb[0].mxu0 %v5803
  %v5805 = vpop.f32.mrb[0].mxu0
  %v5806 = vadd.f32 %v5489, %v5805
  %v5807 = vpop.f32.mrb[0].mxu0
  %v5808 = vadd.f32 %v5491, %v5807
  %v5809 = vand.u32 %v703, 4294901760
  %5810 = vmatprep.mubr.f32.mxu0 %v5809
  %v5811 = vand.u32 %v481, 4294901760
  %5812 = vmatmul.mubr.f32.gmra.mrb[0].mxu0 %v5811
  %v5813 = vpop.f32.mrb[0].mxu0
  %v5814 = vadd.f32 %v5505, %v5813
  %v5815 = vpop.f32.mrb[0].mxu0
  %v5816 = vadd.f32 %v5507, %v5815
  %v5817 = vand.u32 %v706, 4294901760
  %5818 = vmatprep.mubr.f32.mxu0 %v5817
  %v5819 = vand.u32 %v485, 4294901760
  %5820 = vmatmul.mubr.f32.gmra.mrb[0].mxu0 %v5819
  %v5821 = vpop.f32.mrb[0].mxu0
  %v5822 = vadd.f32 %v5521, %v5821
  %v5823 = vpop.f32.mrb[0].mxu0
  %v5824 = vadd.f32 %v5523, %v5823
  %5825 = vdwg.mxu0
  %v5826 = vand.u32 %v618, 4294901760
  %v5827 = vsub.f32 %v618, %v5826
  %5828 = vmatprep.subr.mxu0 %v5827
  %v5829 = vand.u32 %v617, 4294901760
  %v5830 = vsub.f32 %v617, %v5829
  %5831 = vmatpush1.msra.mxu0 %v5830
  %v5832 = vand.u32 %v622, 4294901760
  %v5833 = vsub.f32 %v622, %v5832
  %5834 = vmatprep.subr.mxu0 %v5833
  %v5835 = vand.u32 %v621, 4294901760
  %v5836 = vsub.f32 %v621, %v5835
  %5837 = vmatpush1.msra.mxu0 %v5836
  %v5838 = vand.u32 %v626, 4294901760
  %v5839 = vsub.f32 %v626, %v5838
  %5840 = vmatprep.subr.mxu0 %v5839
  %v5841 = vand.u32 %v625, 4294901760
  %v5842 = vsub.f32 %v625, %v5841
  %5843 = vmatpush1.msra.mxu0 %v5842
  %v5844 = vand.u32 %v630, 4294901760
  %v5845 = vsub.f32 %v630, %v5844
  %5846 = vmatprep.subr.mxu0 %v5845
  %v5847 = vand.u32 %v629, 4294901760
  %v5848 = vsub.f32 %v629, %v5847
  %5849 = vmatpush1.msra.mxu0 %v5848
  %v5850 = vand.u32 %v634, 4294901760
  %v5851 = vsub.f32 %v634, %v5850
  %5852 = vmatprep.subr.mxu0 %v5851
  %v5853 = vand.u32 %v633, 4294901760
  %v5854 = vsub.f32 %v633, %v5853
  %5855 = vmatpush1.msra.mxu0 %v5854
  %v5856 = vand.u32 %v638, 4294901760
  %v5857 = vsub.f32 %v638, %v5856
  %5858 = vmatprep.subr.mxu0 %v5857
  %v5859 = vand.u32 %v637, 4294901760
  %v5860 = vsub.f32 %v637, %v5859
  %5861 = vmatpush1.msra.mxu0 %v5860
  %v5862 = vand.u32 %v642, 4294901760
  %v5863 = vsub.f32 %v642, %v5862
  %5864 = vmatprep.subr.mxu0 %v5863
  %v5865 = vand.u32 %v641, 4294901760
  %v5866 = vsub.f32 %v641, %v5865
  %5867 = vmatpush1.msra.mxu0 %v5866
  %v5868 = vand.u32 %v646, 4294901760
  %v5869 = vsub.f32 %v646, %v5868
  %5870 = vmatprep.subr.mxu0 %v5869
  %v5871 = vand.u32 %v645, 4294901760
  %v5872 = vsub.f32 %v645, %v5871
  %5873 = vmatpush1.msra.mxu0 %v5872
  %v5874 = vand.u32 %v650, 4294901760
  %v5875 = vsub.f32 %v650, %v5874
  %5876 = vmatprep.subr.mxu0 %v5875
  %v5877 = vand.u32 %v649, 4294901760
  %v5878 = vsub.f32 %v649, %v5877
  %5879 = vmatpush1.msra.mxu0 %v5878
  %v5880 = vand.u32 %v654, 4294901760
  %v5881 = vsub.f32 %v654, %v5880
  %5882 = vmatprep.subr.mxu0 %v5881
  %v5883 = vand.u32 %v653, 4294901760
  %v5884 = vsub.f32 %v653, %v5883
  %5885 = vmatpush1.msra.mxu0 %v5884
  %v5886 = vand.u32 %v658, 4294901760
  %v5887 = vsub.f32 %v658, %v5886
  %5888 = vmatprep.subr.mxu0 %v5887
  %v5889 = vand.u32 %v657, 4294901760
  %v5890 = vsub.f32 %v657, %v5889
  %5891 = vmatpush1.msra.mxu0 %v5890
  %v5892 = vand.u32 %v662, 4294901760
  %v5893 = vsub.f32 %v662, %v5892
  %5894 = vmatprep.subr.mxu0 %v5893
  %v5895 = vand.u32 %v661, 4294901760
  %v5896 = vsub.f32 %v661, %v5895
  %5897 = vmatpush1.msra.mxu0 %v5896
  %v5898 = vand.u32 %v666, 4294901760
  %v5899 = vsub.f32 %v666, %v5898
  %5900 = vmatprep.subr.mxu0 %v5899
  %v5901 = vand.u32 %v665, 4294901760
  %v5902 = vsub.f32 %v665, %v5901
  %5903 = vmatpush1.msra.mxu0 %v5902
  %v5904 = vand.u32 %v670, 4294901760
  %v5905 = vsub.f32 %v670, %v5904
  %5906 = vmatprep.subr.mxu0 %v5905
  %v5907 = vand.u32 %v669, 4294901760
  %v5908 = vsub.f32 %v669, %v5907
  %5909 = vmatpush1.msra.mxu0 %v5908
  %v5910 = vand.u32 %v674, 4294901760
  %v5911 = vsub.f32 %v674, %v5910
  %5912 = vmatprep.subr.mxu0 %v5911
  %v5913 = vand.u32 %v673, 4294901760
  %v5914 = vsub.f32 %v673, %v5913
  %5915 = vmatpush1.msra.mxu0 %v5914
  %v5916 = vand.u32 %v678, 4294901760
  %v5917 = vsub.f32 %v678, %v5916
  %5918 = vmatprep.subr.mxu0 %v5917
  %v5919 = vand.u32 %v677, 4294901760
  %v5920 = vsub.f32 %v677, %v5919
  %5921 = vmatpush1.msra.mxu0 %v5920
  %v5922 = vand.u32 %v682, 4294901760
  %v5923 = vsub.f32 %v682, %v5922
  %5924 = vmatprep.subr.mxu0 %v5923
  %v5925 = vand.u32 %v681, 4294901760
  %v5926 = vsub.f32 %v681, %v5925
  %5927 = vmatpush1.msra.mxu0 %v5926
  %v5928 = vand.u32 %v686, 4294901760
  %v5929 = vsub.f32 %v686, %v5928
  %5930 = vmatprep.subr.mxu0 %v5929
  %v5931 = vand.u32 %v685, 4294901760
  %v5932 = vsub.f32 %v685, %v5931
  %5933 = vmatpush1.msra.mxu0 %v5932
  %5934 = vmatprep.subr.mxu0 0.0
  %5935 = vmatpush1.msra.mxu0 0.0
  %5936 = vmatprep.subr.mxu0 0.0
  %5937 = vmatpush1.msra.mxu0 0.0
  %5938 = vmatprep.subr.mxu0 0.0
  %5939 = vmatpush1.msra.mxu0 0.0
  %5940 = vmatprep.subr.mxu0 0.0
  %5941 = vmatpush1.msra.mxu0 0.0
  %5942 = vmatprep.subr.mxu0 0.0
  %5943 = vmatpush1.msra.mxu0 0.0
  %5944 = vmatprep.subr.mxu0 0.0
  %5945 = vmatpush1.msra.mxu0 0.0
  %5946 = vmatprep.subr.mxu0 0.0
  %5947 = vmatpush1.msra.mxu0 0.0
  %5948 = vmatprep.subr.mxu0 0.0
  %5949 = vmatpush1.msra.mxu0 0.0
  %5950 = vmatprep.subr.mxu0 0.0
  %5951 = vmatpush1.msra.mxu0 0.0
  %5952 = vmatprep.subr.mxu0 0.0
  %5953 = vmatpush1.msra.mxu0 0.0
  %5954 = vmatprep.subr.mxu0 0.0
  %5955 = vmatpush1.msra.mxu0 0.0
  %5956 = vmatprep.subr.mxu0 0.0
  %5957 = vmatpush1.msra.mxu0 0.0
  %5958 = vmatprep.subr.mxu0 0.0
  %5959 = vmatpush1.msra.mxu0 0.0
  %5960 = vmatprep.subr.mxu0 0.0
  %5961 = vmatpush1.msra.mxu0 0.0
  %v5962 = vand.u32 %v688, 4294901760
  %v5963 = vsub.f32 %v688, %v5962
  %5964 = vmatprep.mubr.f32.mxu0 %v5963
  %v5965 = vand.u32 %v461, 4294901760
  %v5966 = vsub.f32 %v461, %v5965
  %5967 = vmatmul.mubr.f32.gmra.mrb[0].mxu0 %v5966
  %v5968 = vpop.f32.mrb[0].mxu0
  %v5969 = vadd.f32 %v5774, %v5968
  %v5970 = vpop.f32.mrb[0].mxu0
  %v5971 = vadd.f32 %v5776, %v5970
  %v5972 = vand.u32 %v691, 4294901760
  %v5973 = vsub.f32 %v691, %v5972
  %5974 = vmatprep.mubr.f32.mxu0 %v5973
  %v5975 = vand.u32 %v465, 4294901760
  %v5976 = vsub.f32 %v465, %v5975
  %5977 = vmatmul.mubr.f32.gmra.mrb[0].mxu0 %v5976
  %v5978 = vpop.f32.mrb[0].mxu0
  %v5979 = vadd.f32 %v5782, %v5978
  %v5980 = vpop.f32.mrb[0].mxu0
  %v5981 = vadd.f32 %v5784, %v5980
  %v5982 = vand.u32 %v694, 4294901760
  %v5983 = vsub.f32 %v694, %v5982
  %5984 = vmatprep.mubr.f32.mxu0 %v5983
  %v5985 = vand.u32 %v469, 4294901760
  %v5986 = vsub.f32 %v469, %v5985
  %5987 = vmatmul.mubr.f32.gmra.mrb[0].mxu0 %v5986
  %v5988 = vpop.f32.mrb[0].mxu0
  %v5989 = vadd.f32 %v5790, %v5988
  %v5990 = vpop.f32.mrb[0].mxu0
  %v5991 = vadd.f32 %v5792, %v5990
  %v5992 = vand.u32 %v697, 4294901760
  %v5993 = vsub.f32 %v697, %v5992
  %5994 = vmatprep.mubr.f32.mxu0 %v5993
  %v5995 = vand.u32 %v473, 4294901760
  %v5996 = vsub.f32 %v473, %v5995
  %5997 = vmatmul.mubr.f32.gmra.mrb[0].mxu0 %v5996
  %v5998 = vpop.f32.mrb[0].mxu0
  %v5999 = vadd.f32 %v5798, %v5998
  %v6000 = vpop.f32.mrb[0].mxu0
  %v6001 = vadd.f32 %v5800, %v6000
  %v6002 = vand.u32 %v700, 4294901760
  %v6003 = vsub.f32 %v700, %v6002
  %6004 = vmatprep.mubr.f32.mxu0 %v6003
  %v6005 = vand.u32 %v477, 4294901760
  %v6006 = vsub.f32 %v477, %v6005
  %6007 = vmatmul.mubr.f32.gmra.mrb[0].mxu0 %v6006
  %v6008 = vpop.f32.mrb[0].mxu0
  %v6009 = vadd.f32 %v5806, %v6008
  %v6010 = vpop.f32.mrb[0].mxu0
  %v6011 = vadd.f32 %v5808, %v6010
  %v6012 = vand.u32 %v703, 4294901760
  %v6013 = vsub.f32 %v703, %v6012
  %6014 = vmatprep.mubr.f32.mxu0 %v6013
  %v6015 = vand.u32 %v481, 4294901760
  %v6016 = vsub.f32 %v481, %v6015
  %6017 = vmatmul.mubr.f32.gmra.mrb[0].mxu0 %v6016
  %v6018 = vpop.f32.mrb[0].mxu0
  %v6019 = vadd.f32 %v5814, %v6018
  %v6020 = vpop.f32.mrb[0].mxu0
  %v6021 = vadd.f32 %v5816, %v6020
  %v6022 = vand.u32 %v706, 4294901760
  %v6023 = vsub.f32 %v706, %v6022
  %6024 = vmatprep.mubr.f32.mxu0 %v6023
  %v6025 = vand.u32 %v485, 4294901760
  %v6026 = vsub.f32 %v485, %v6025
  %6027 = vmatmul.mubr.f32.gmra.mrb[0].mxu0 %v6026
  %v6028 = vpop.f32.mrb[0].mxu0
  %v6029 = vadd.f32 %v5822, %v6028
  %v6030 = vpop.f32.mrb[0].mxu0
  %v6031 = vadd.f32 %v5824, %v6030
  %6032 = vdwg.mxu0
  %v6033 = vand.u32 %v618, 4294901760
  %6034 = vmatprep.subr.mxu0 %v6033
  %v6035 = vand.u32 %v617, 4294901760
  %6036 = vmatpush1.msra.mxu0 %v6035
  %v6037 = vand.u32 %v622, 4294901760
  %6038 = vmatprep.subr.mxu0 %v6037
  %v6039 = vand.u32 %v621, 4294901760
  %6040 = vmatpush1.msra.mxu0 %v6039
  %v6041 = vand.u32 %v626, 4294901760
  %6042 = vmatprep.subr.mxu0 %v6041
  %v6043 = vand.u32 %v625, 4294901760
  %6044 = vmatpush1.msra.mxu0 %v6043
  %v6045 = vand.u32 %v630, 4294901760
  %6046 = vmatprep.subr.mxu0 %v6045
  %v6047 = vand.u32 %v629, 4294901760
  %6048 = vmatpush1.msra.mxu0 %v6047
  %v6049 = vand.u32 %v634, 4294901760
  %6050 = vmatprep.subr.mxu0 %v6049
  %v6051 = vand.u32 %v633, 4294901760
  %6052 = vmatpush1.msra.mxu0 %v6051
  %v6053 = vand.u32 %v638, 4294901760
  %6054 = vmatprep.subr.mxu0 %v6053
  %v6055 = vand.u32 %v637, 4294901760
  %6056 = vmatpush1.msra.mxu0 %v6055
  %v6057 = vand.u32 %v642, 4294901760
  %6058 = vmatprep.subr.mxu0 %v6057
  %v6059 = vand.u32 %v641, 4294901760
  %6060 = vmatpush1.msra.mxu0 %v6059
  %v6061 = vand.u32 %v646, 4294901760
  %6062 = vmatprep.subr.mxu0 %v6061
  %v6063 = vand.u32 %v645, 4294901760
  %6064 = vmatpush1.msra.mxu0 %v6063
  %v6065 = vand.u32 %v650, 4294901760
  %6066 = vmatprep.subr.mxu0 %v6065
  %v6067 = vand.u32 %v649, 4294901760
  %6068 = vmatpush1.msra.mxu0 %v6067
  %v6069 = vand.u32 %v654, 4294901760
  %6070 = vmatprep.subr.mxu0 %v6069
  %v6071 = vand.u32 %v653, 4294901760
  %6072 = vmatpush1.msra.mxu0 %v6071
  %v6073 = vand.u32 %v658, 4294901760
  %6074 = vmatprep.subr.mxu0 %v6073
  %v6075 = vand.u32 %v657, 4294901760
  %6076 = vmatpush1.msra.mxu0 %v6075
  %v6077 = vand.u32 %v662, 4294901760
  %6078 = vmatprep.subr.mxu0 %v6077
  %v6079 = vand.u32 %v661, 4294901760
  %6080 = vmatpush1.msra.mxu0 %v6079
  %v6081 = vand.u32 %v666, 4294901760
  %6082 = vmatprep.subr.mxu0 %v6081
  %v6083 = vand.u32 %v665, 4294901760
  %6084 = vmatpush1.msra.mxu0 %v6083
  %v6085 = vand.u32 %v670, 4294901760
  %6086 = vmatprep.subr.mxu0 %v6085
  %v6087 = vand.u32 %v669, 4294901760
  %6088 = vmatpush1.msra.mxu0 %v6087
  %v6089 = vand.u32 %v674, 4294901760
  %6090 = vmatprep.subr.mxu0 %v6089
  %v6091 = vand.u32 %v673, 4294901760
  %6092 = vmatpush1.msra.mxu0 %v6091
  %v6093 = vand.u32 %v678, 4294901760
  %6094 = vmatprep.subr.mxu0 %v6093
  %v6095 = vand.u32 %v677, 4294901760
  %6096 = vmatpush1.msra.mxu0 %v6095
  %v6097 = vand.u32 %v682, 4294901760
  %6098 = vmatprep.subr.mxu0 %v6097
  %v6099 = vand.u32 %v681, 4294901760
  %6100 = vmatpush1.msra.mxu0 %v6099
  %v6101 = vand.u32 %v686, 4294901760
  %6102 = vmatprep.subr.mxu0 %v6101
  %v6103 = vand.u32 %v685, 4294901760
  %6104 = vmatpush1.msra.mxu0 %v6103
  %6105 = vmatprep.subr.mxu0 0.0
  %6106 = vmatpush1.msra.mxu0 0.0
  %6107 = vmatprep.subr.mxu0 0.0
  %6108 = vmatpush1.msra.mxu0 0.0
  %6109 = vmatprep.subr.mxu0 0.0
  %6110 = vmatpush1.msra.mxu0 0.0
  %6111 = vmatprep.subr.mxu0 0.0
  %6112 = vmatpush1.msra.mxu0 0.0
  %6113 = vmatprep.subr.mxu0 0.0
  %6114 = vmatpush1.msra.mxu0 0.0
  %6115 = vmatprep.subr.mxu0 0.0
  %6116 = vmatpush1.msra.mxu0 0.0
  %6117 = vmatprep.subr.mxu0 0.0
  %6118 = vmatpush1.msra.mxu0 0.0
  %6119 = vmatprep.subr.mxu0 0.0
  %6120 = vmatpush1.msra.mxu0 0.0
  %6121 = vmatprep.subr.mxu0 0.0
  %6122 = vmatpush1.msra.mxu0 0.0
  %6123 = vmatprep.subr.mxu0 0.0
  %6124 = vmatpush1.msra.mxu0 0.0
  %6125 = vmatprep.subr.mxu0 0.0
  %6126 = vmatpush1.msra.mxu0 0.0
  %6127 = vmatprep.subr.mxu0 0.0
  %6128 = vmatpush1.msra.mxu0 0.0
  %6129 = vmatprep.subr.mxu0 0.0
  %6130 = vmatpush1.msra.mxu0 0.0
  %6131 = vmatprep.subr.mxu0 0.0
  %6132 = vmatpush1.msra.mxu0 0.0
  %v6133 = vand.u32 %v688, 4294901760
  %v6134 = vsub.f32 %v688, %v6133
  %v6135 = vand.u32 %v6134, 4294901760
  %6136 = vmatprep.mubr.f32.mxu0 %v6135
  %v6137 = vand.u32 %v461, 4294901760
  %v6138 = vsub.f32 %v461, %v6137
  %v6139 = vand.u32 %v6138, 4294901760
  %6140 = vmatmul.mubr.f32.gmra.mrb[0].mxu0 %v6139
  %v6141 = vpop.f32.mrb[0].mxu0
  %v6142 = vadd.f32 %v5969, %v6141
  %v6143 = vpop.f32.mrb[0].mxu0
  %v6144 = vadd.f32 %v5971, %v6143
  %v6145 = vand.u32 %v691, 4294901760
  %v6146 = vsub.f32 %v691, %v6145
  %v6147 = vand.u32 %v6146, 4294901760
  %6148 = vmatprep.mubr.f32.mxu0 %v6147
  %v6149 = vand.u32 %v465, 4294901760
  %v6150 = vsub.f32 %v465, %v6149
  %v6151 = vand.u32 %v6150, 4294901760
  %6152 = vmatmul.mubr.f32.gmra.mrb[0].mxu0 %v6151
  %v6153 = vpop.f32.mrb[0].mxu0
  %v6154 = vadd.f32 %v5979, %v6153
  %v6155 = vpop.f32.mrb[0].mxu0
  %v6156 = vadd.f32 %v5981, %v6155
  %v6157 = vand.u32 %v694, 4294901760
  %v6158 = vsub.f32 %v694, %v6157
  %v6159 = vand.u32 %v6158, 4294901760
  %6160 = vmatprep.mubr.f32.mxu0 %v6159
  %v6161 = vand.u32 %v469, 4294901760
  %v6162 = vsub.f32 %v469, %v6161
  %v6163 = vand.u32 %v6162, 4294901760
  %6164 = vmatmul.mubr.f32.gmra.mrb[0].mxu0 %v6163
  %v6165 = vpop.f32.mrb[0].mxu0
  %v6166 = vadd.f32 %v5989, %v6165
  %v6167 = vpop.f32.mrb[0].mxu0
  %v6168 = vadd.f32 %v5991, %v6167
  %v6169 = vand.u32 %v697, 4294901760
  %v6170 = vsub.f32 %v697, %v6169
  %v6171 = vand.u32 %v6170, 4294901760
  %6172 = vmatprep.mubr.f32.mxu0 %v6171
  %v6173 = vand.u32 %v473, 4294901760
  %v6174 = vsub.f32 %v473, %v6173
  %v6175 = vand.u32 %v6174, 4294901760
  %6176 = vmatmul.mubr.f32.gmra.mrb[0].mxu0 %v6175
  %v6177 = vpop.f32.mrb[0].mxu0
  %v6178 = vadd.f32 %v5999, %v6177
  %v6179 = vpop.f32.mrb[0].mxu0
  %v6180 = vadd.f32 %v6001, %v6179
  %v6181 = vand.u32 %v700, 4294901760
  %v6182 = vsub.f32 %v700, %v6181
  %v6183 = vand.u32 %v6182, 4294901760
  %6184 = vmatprep.mubr.f32.mxu0 %v6183
  %v6185 = vand.u32 %v477, 4294901760
  %v6186 = vsub.f32 %v477, %v6185
  %v6187 = vand.u32 %v6186, 4294901760
  %6188 = vmatmul.mubr.f32.gmra.mrb[0].mxu0 %v6187
  %v6189 = vpop.f32.mrb[0].mxu0
  %v6190 = vadd.f32 %v6009, %v6189
  %v6191 = vpop.f32.mrb[0].mxu0
  %v6192 = vadd.f32 %v6011, %v6191
  %v6193 = vand.u32 %v703, 4294901760
  %v6194 = vsub.f32 %v703, %v6193
  %v6195 = vand.u32 %v6194, 4294901760
  %6196 = vmatprep.mubr.f32.mxu0 %v6195
  %v6197 = vand.u32 %v481, 4294901760
  %v6198 = vsub.f32 %v481, %v6197
  %v6199 = vand.u32 %v6198, 4294901760
  %6200 = vmatmul.mubr.f32.gmra.mrb[0].mxu0 %v6199
  %v6201 = vpop.f32.mrb[0].mxu0
  %v6202 = vadd.f32 %v6019, %v6201
  %v6203 = vpop.f32.mrb[0].mxu0
  %v6204 = vadd.f32 %v6021, %v6203
  %v6205 = vand.u32 %v706, 4294901760
  %v6206 = vsub.f32 %v706, %v6205
  %v6207 = vand.u32 %v6206, 4294901760
  %6208 = vmatprep.mubr.f32.mxu0 %v6207
  %v6209 = vand.u32 %v485, 4294901760
  %v6210 = vsub.f32 %v485, %v6209
  %v6211 = vand.u32 %v6210, 4294901760
  %6212 = vmatmul.mubr.f32.gmra.mrb[0].mxu0 %v6211
  %v6213 = vpop.f32.mrb[0].mxu0
  %v6214 = vadd.f32 %v6029, %v6213
  %v6215 = vpop.f32.mrb[0].mxu0
  %v6216 = vadd.f32 %v6031, %v6215
  %6217 = vdwg.mxu0
  %v6218 = vand.u32 %v618, 4294901760
  %v6219 = vsub.f32 %v618, %v6218
  %v6220 = vand.u32 %v6219, 4294901760
  %6221 = vmatprep.subr.mxu0 %v6220
  %v6222 = vand.u32 %v617, 4294901760
  %v6223 = vsub.f32 %v617, %v6222
  %v6224 = vand.u32 %v6223, 4294901760
  %6225 = vmatpush1.msra.mxu0 %v6224
  %v6226 = vand.u32 %v622, 4294901760
  %v6227 = vsub.f32 %v622, %v6226
  %v6228 = vand.u32 %v6227, 4294901760
  %6229 = vmatprep.subr.mxu0 %v6228
  %v6230 = vand.u32 %v621, 4294901760
  %v6231 = vsub.f32 %v621, %v6230
  %v6232 = vand.u32 %v6231, 4294901760
  %6233 = vmatpush1.msra.mxu0 %v6232
  %v6234 = vand.u32 %v626, 4294901760
  %v6235 = vsub.f32 %v626, %v6234
  %v6236 = vand.u32 %v6235, 4294901760
  %6237 = vmatprep.subr.mxu0 %v6236
  %v6238 = vand.u32 %v625, 4294901760
  %v6239 = vsub.f32 %v625, %v6238
  %v6240 = vand.u32 %v6239, 4294901760
  %6241 = vmatpush1.msra.mxu0 %v6240
  %v6242 = vand.u32 %v630, 4294901760
  %v6243 = vsub.f32 %v630, %v6242
  %v6244 = vand.u32 %v6243, 4294901760
  %6245 = vmatprep.subr.mxu0 %v6244
  %v6246 = vand.u32 %v629, 4294901760
  %v6247 = vsub.f32 %v629, %v6246
  %v6248 = vand.u32 %v6247, 4294901760
  %6249 = vmatpush1.msra.mxu0 %v6248
  %v6250 = vand.u32 %v634, 4294901760
  %v6251 = vsub.f32 %v634, %v6250
  %v6252 = vand.u32 %v6251, 4294901760
  %6253 = vmatprep.subr.mxu0 %v6252
  %v6254 = vand.u32 %v633, 4294901760
  %v6255 = vsub.f32 %v633, %v6254
  %v6256 = vand.u32 %v6255, 4294901760
  %6257 = vmatpush1.msra.mxu0 %v6256
  %v6258 = vand.u32 %v638, 4294901760
  %v6259 = vsub.f32 %v638, %v6258
  %v6260 = vand.u32 %v6259, 4294901760
  %6261 = vmatprep.subr.mxu0 %v6260
  %v6262 = vand.u32 %v637, 4294901760
  %v6263 = vsub.f32 %v637, %v6262
  %v6264 = vand.u32 %v6263, 4294901760
  %6265 = vmatpush1.msra.mxu0 %v6264
  %v6266 = vand.u32 %v642, 4294901760
  %v6267 = vsub.f32 %v642, %v6266
  %v6268 = vand.u32 %v6267, 4294901760
  %6269 = vmatprep.subr.mxu0 %v6268
  %v6270 = vand.u32 %v641, 4294901760
  %v6271 = vsub.f32 %v641, %v6270
  %v6272 = vand.u32 %v6271, 4294901760
  %6273 = vmatpush1.msra.mxu0 %v6272
  %v6274 = vand.u32 %v646, 4294901760
  %v6275 = vsub.f32 %v646, %v6274
  %v6276 = vand.u32 %v6275, 4294901760
  %6277 = vmatprep.subr.mxu0 %v6276
  %v6278 = vand.u32 %v645, 4294901760
  %v6279 = vsub.f32 %v645, %v6278
  %v6280 = vand.u32 %v6279, 4294901760
  %6281 = vmatpush1.msra.mxu0 %v6280
  %v6282 = vand.u32 %v650, 4294901760
  %v6283 = vsub.f32 %v650, %v6282
  %v6284 = vand.u32 %v6283, 4294901760
  %6285 = vmatprep.subr.mxu0 %v6284
  %v6286 = vand.u32 %v649, 4294901760
  %v6287 = vsub.f32 %v649, %v6286
  %v6288 = vand.u32 %v6287, 4294901760
  %6289 = vmatpush1.msra.mxu0 %v6288
  %v6290 = vand.u32 %v654, 4294901760
  %v6291 = vsub.f32 %v654, %v6290
  %v6292 = vand.u32 %v6291, 4294901760
  %6293 = vmatprep.subr.mxu0 %v6292
  %v6294 = vand.u32 %v653, 4294901760
  %v6295 = vsub.f32 %v653, %v6294
  %v6296 = vand.u32 %v6295, 4294901760
  %6297 = vmatpush1.msra.mxu0 %v6296
  %v6298 = vand.u32 %v658, 4294901760
  %v6299 = vsub.f32 %v658, %v6298
  %v6300 = vand.u32 %v6299, 4294901760
  %6301 = vmatprep.subr.mxu0 %v6300
  %v6302 = vand.u32 %v657, 4294901760
  %v6303 = vsub.f32 %v657, %v6302
  %v6304 = vand.u32 %v6303, 4294901760
  %6305 = vmatpush1.msra.mxu0 %v6304
  %v6306 = vand.u32 %v662, 4294901760
  %v6307 = vsub.f32 %v662, %v6306
  %v6308 = vand.u32 %v6307, 4294901760
  %6309 = vmatprep.subr.mxu0 %v6308
  %v6310 = vand.u32 %v661, 4294901760
  %v6311 = vsub.f32 %v661, %v6310
  %v6312 = vand.u32 %v6311, 4294901760
  %6313 = vmatpush1.msra.mxu0 %v6312
  %v6314 = vand.u32 %v666, 4294901760
  %v6315 = vsub.f32 %v666, %v6314
  %v6316 = vand.u32 %v6315, 4294901760
  %6317 = vmatprep.subr.mxu0 %v6316
  %v6318 = vand.u32 %v665, 4294901760
  %v6319 = vsub.f32 %v665, %v6318
  %v6320 = vand.u32 %v6319, 4294901760
  %6321 = vmatpush1.msra.mxu0 %v6320
  %v6322 = vand.u32 %v670, 4294901760
  %v6323 = vsub.f32 %v670, %v6322
  %v6324 = vand.u32 %v6323, 4294901760
  %6325 = vmatprep.subr.mxu0 %v6324
  %v6326 = vand.u32 %v669, 4294901760
  %v6327 = vsub.f32 %v669, %v6326
  %v6328 = vand.u32 %v6327, 4294901760
  %6329 = vmatpush1.msra.mxu0 %v6328
  %v6330 = vand.u32 %v674, 4294901760
  %v6331 = vsub.f32 %v674, %v6330
  %v6332 = vand.u32 %v6331, 4294901760
  %6333 = vmatprep.subr.mxu0 %v6332
  %v6334 = vand.u32 %v673, 4294901760
  %v6335 = vsub.f32 %v673, %v6334
  %v6336 = vand.u32 %v6335, 4294901760
  %6337 = vmatpush1.msra.mxu0 %v6336
  %v6338 = vand.u32 %v678, 4294901760
  %v6339 = vsub.f32 %v678, %v6338
  %v6340 = vand.u32 %v6339, 4294901760
  %6341 = vmatprep.subr.mxu0 %v6340
  %v6342 = vand.u32 %v677, 4294901760
  %v6343 = vsub.f32 %v677, %v6342
  %v6344 = vand.u32 %v6343, 4294901760
  %6345 = vmatpush1.msra.mxu0 %v6344
  %v6346 = vand.u32 %v682, 4294901760
  %v6347 = vsub.f32 %v682, %v6346
  %v6348 = vand.u32 %v6347, 4294901760
  %6349 = vmatprep.subr.mxu0 %v6348
  %v6350 = vand.u32 %v681, 4294901760
  %v6351 = vsub.f32 %v681, %v6350
  %v6352 = vand.u32 %v6351, 4294901760
  %6353 = vmatpush1.msra.mxu0 %v6352
  %v6354 = vand.u32 %v686, 4294901760
  %v6355 = vsub.f32 %v686, %v6354
  %v6356 = vand.u32 %v6355, 4294901760
  %6357 = vmatprep.subr.mxu0 %v6356
  %v6358 = vand.u32 %v685, 4294901760
  %v6359 = vsub.f32 %v685, %v6358
  %v6360 = vand.u32 %v6359, 4294901760
  %6361 = vmatpush1.msra.mxu0 %v6360
  %6362 = vmatprep.subr.mxu0 0.0
  %6363 = vmatpush1.msra.mxu0 0.0
  %6364 = vmatprep.subr.mxu0 0.0
  %6365 = vmatpush1.msra.mxu0 0.0
  %6366 = vmatprep.subr.mxu0 0.0
  %6367 = vmatpush1.msra.mxu0 0.0
  %6368 = vmatprep.subr.mxu0 0.0
  %6369 = vmatpush1.msra.mxu0 0.0
  %6370 = vmatprep.subr.mxu0 0.0
  %6371 = vmatpush1.msra.mxu0 0.0
  %6372 = vmatprep.subr.mxu0 0.0
  %6373 = vmatpush1.msra.mxu0 0.0
  %6374 = vmatprep.subr.mxu0 0.0
  %6375 = vmatpush1.msra.mxu0 0.0
  %6376 = vmatprep.subr.mxu0 0.0
  %6377 = vmatpush1.msra.mxu0 0.0
  %6378 = vmatprep.subr.mxu0 0.0
  %6379 = vmatpush1.msra.mxu0 0.0
  %6380 = vmatprep.subr.mxu0 0.0
  %6381 = vmatpush1.msra.mxu0 0.0
  %6382 = vmatprep.subr.mxu0 0.0
  %6383 = vmatpush1.msra.mxu0 0.0
  %6384 = vmatprep.subr.mxu0 0.0
  %6385 = vmatpush1.msra.mxu0 0.0
  %6386 = vmatprep.subr.mxu0 0.0
  %6387 = vmatpush1.msra.mxu0 0.0
  %6388 = vmatprep.subr.mxu0 0.0
  %6389 = vmatpush1.msra.mxu0 0.0
  %v6390 = vand.u32 %v688, 4294901760
  %6391 = vmatprep.mubr.f32.mxu0 %v6390
  %v6392 = vand.u32 %v461, 4294901760
  %6393 = vmatmul.mubr.f32.gmra.mrb[0].mxu0 %v6392
  %v6394 = vpop.f32.mrb[0].mxu0
  %v6395 = vadd.f32 %v6142, %v6394
  %v6396 = vpop.f32.mrb[0].mxu0
  %v6397 = vadd.f32 %v6144, %v6396
  %v6398 = vand.u32 %v691, 4294901760
  %6399 = vmatprep.mubr.f32.mxu0 %v6398
  %v6400 = vand.u32 %v465, 4294901760
  %6401 = vmatmul.mubr.f32.gmra.mrb[0].mxu0 %v6400
  %v6402 = vpop.f32.mrb[0].mxu0
  %v6403 = vadd.f32 %v6154, %v6402
  %v6404 = vpop.f32.mrb[0].mxu0
  %v6405 = vadd.f32 %v6156, %v6404
  %v6406 = vand.u32 %v694, 4294901760
  %6407 = vmatprep.mubr.f32.mxu0 %v6406
  %v6408 = vand.u32 %v469, 4294901760
  %6409 = vmatmul.mubr.f32.gmra.mrb[0].mxu0 %v6408
  %v6410 = vpop.f32.mrb[0].mxu0
  %v6411 = vadd.f32 %v6166, %v6410
  %v6412 = vpop.f32.mrb[0].mxu0
  %v6413 = vadd.f32 %v6168, %v6412
  %v6414 = vand.u32 %v697, 4294901760
  %6415 = vmatprep.mubr.f32.mxu0 %v6414
  %v6416 = vand.u32 %v473, 4294901760
  %6417 = vmatmul.mubr.f32.gmra.mrb[0].mxu0 %v6416
  %v6418 = vpop.f32.mrb[0].mxu0
  %v6419 = vadd.f32 %v6178, %v6418
  %v6420 = vpop.f32.mrb[0].mxu0
  %v6421 = vadd.f32 %v6180, %v6420
  %v6422 = vand.u32 %v700, 4294901760
  %6423 = vmatprep.mubr.f32.mxu0 %v6422
  %v6424 = vand.u32 %v477, 4294901760
  %6425 = vmatmul.mubr.f32.gmra.mrb[0].mxu0 %v6424
  %v6426 = vpop.f32.mrb[0].mxu0
  %v6427 = vadd.f32 %v6190, %v6426
  %v6428 = vpop.f32.mrb[0].mxu0
  %v6429 = vadd.f32 %v6192, %v6428
  %v6430 = vand.u32 %v703, 4294901760
  %6431 = vmatprep.mubr.f32.mxu0 %v6430
  %v6432 = vand.u32 %v481, 4294901760
  %6433 = vmatmul.mubr.f32.gmra.mrb[0].mxu0 %v6432
  %v6434 = vpop.f32.mrb[0].mxu0
  %v6435 = vadd.f32 %v6202, %v6434
  %v6436 = vpop.f32.mrb[0].mxu0
  %v6437 = vadd.f32 %v6204, %v6436
  %v6438 = vand.u32 %v706, 4294901760
  %6439 = vmatprep.mubr.f32.mxu0 %v6438
  %v6440 = vand.u32 %v485, 4294901760
  %6441 = vmatmul.mubr.f32.gmra.mrb[0].mxu0 %v6440
  %v6442 = vpop.f32.mrb[0].mxu0
  %v6443 = vadd.f32 %v6214, %v6442
  %v6444 = vpop.f32.mrb[0].mxu0
  %v6445 = vadd.f32 %v6216, %v6444
  %6446 = vdwg.mxu0
  %v6447 = vand.u32 %v618, 4294901760
  %6448 = vmatprep.subr.mxu0 %v6447
  %v6449 = vand.u32 %v617, 4294901760
  %6450 = vmatpush1.msra.mxu0 %v6449
  %v6451 = vand.u32 %v622, 4294901760
  %6452 = vmatprep.subr.mxu0 %v6451
  %v6453 = vand.u32 %v621, 4294901760
  %6454 = vmatpush1.msra.mxu0 %v6453
  %v6455 = vand.u32 %v626, 4294901760
  %6456 = vmatprep.subr.mxu0 %v6455
  %v6457 = vand.u32 %v625, 4294901760
  %6458 = vmatpush1.msra.mxu0 %v6457
  %v6459 = vand.u32 %v630, 4294901760
  %6460 = vmatprep.subr.mxu0 %v6459
  %v6461 = vand.u32 %v629, 4294901760
  %6462 = vmatpush1.msra.mxu0 %v6461
  %v6463 = vand.u32 %v634, 4294901760
  %6464 = vmatprep.subr.mxu0 %v6463
  %v6465 = vand.u32 %v633, 4294901760
  %6466 = vmatpush1.msra.mxu0 %v6465
  %v6467 = vand.u32 %v638, 4294901760
  %6468 = vmatprep.subr.mxu0 %v6467
  %v6469 = vand.u32 %v637, 4294901760
  %6470 = vmatpush1.msra.mxu0 %v6469
  %v6471 = vand.u32 %v642, 4294901760
  %6472 = vmatprep.subr.mxu0 %v6471
  %v6473 = vand.u32 %v641, 4294901760
  %6474 = vmatpush1.msra.mxu0 %v6473
  %v6475 = vand.u32 %v646, 4294901760
  %6476 = vmatprep.subr.mxu0 %v6475
  %v6477 = vand.u32 %v645, 4294901760
  %6478 = vmatpush1.msra.mxu0 %v6477
  %v6479 = vand.u32 %v650, 4294901760
  %6480 = vmatprep.subr.mxu0 %v6479
  %v6481 = vand.u32 %v649, 4294901760
  %6482 = vmatpush1.msra.mxu0 %v6481
  %v6483 = vand.u32 %v654, 4294901760
  %6484 = vmatprep.subr.mxu0 %v6483
  %v6485 = vand.u32 %v653, 4294901760
  %6486 = vmatpush1.msra.mxu0 %v6485
  %v6487 = vand.u32 %v658, 4294901760
  %6488 = vmatprep.subr.mxu0 %v6487
  %v6489 = vand.u32 %v657, 4294901760
  %6490 = vmatpush1.msra.mxu0 %v6489
  %v6491 = vand.u32 %v662, 4294901760
  %6492 = vmatprep.subr.mxu0 %v6491
  %v6493 = vand.u32 %v661, 4294901760
  %6494 = vmatpush1.msra.mxu0 %v6493
  %v6495 = vand.u32 %v666, 4294901760
  %6496 = vmatprep.subr.mxu0 %v6495
  %v6497 = vand.u32 %v665, 4294901760
  %6498 = vmatpush1.msra.mxu0 %v6497
  %v6499 = vand.u32 %v670, 4294901760
  %6500 = vmatprep.subr.mxu0 %v6499
  %v6501 = vand.u32 %v669, 4294901760
  %6502 = vmatpush1.msra.mxu0 %v6501
  %v6503 = vand.u32 %v674, 4294901760
  %6504 = vmatprep.subr.mxu0 %v6503
  %v6505 = vand.u32 %v673, 4294901760
  %6506 = vmatpush1.msra.mxu0 %v6505
  %v6507 = vand.u32 %v678, 4294901760
  %6508 = vmatprep.subr.mxu0 %v6507
  %v6509 = vand.u32 %v677, 4294901760
  %6510 = vmatpush1.msra.mxu0 %v6509
  %v6511 = vand.u32 %v682, 4294901760
  %6512 = vmatprep.subr.mxu0 %v6511
  %v6513 = vand.u32 %v681, 4294901760
  %6514 = vmatpush1.msra.mxu0 %v6513
  %v6515 = vand.u32 %v686, 4294901760
  %6516 = vmatprep.subr.mxu0 %v6515
  %v6517 = vand.u32 %v685, 4294901760
  %6518 = vmatpush1.msra.mxu0 %v6517
  %6519 = vmatprep.subr.mxu0 0.0
  %6520 = vmatpush1.msra.mxu0 0.0
  %6521 = vmatprep.subr.mxu0 0.0
  %6522 = vmatpush1.msra.mxu0 0.0
  %6523 = vmatprep.subr.mxu0 0.0
  %6524 = vmatpush1.msra.mxu0 0.0
  %6525 = vmatprep.subr.mxu0 0.0
  %6526 = vmatpush1.msra.mxu0 0.0
  %6527 = vmatprep.subr.mxu0 0.0
  %6528 = vmatpush1.msra.mxu0 0.0
  %6529 = vmatprep.subr.mxu0 0.0
  %6530 = vmatpush1.msra.mxu0 0.0
  %6531 = vmatprep.subr.mxu0 0.0
  %6532 = vmatpush1.msra.mxu0 0.0
  %6533 = vmatprep.subr.mxu0 0.0
  %6534 = vmatpush1.msra.mxu0 0.0
  %6535 = vmatprep.subr.mxu0 0.0
  %6536 = vmatpush1.msra.mxu0 0.0
  %6537 = vmatprep.subr.mxu0 0.0
  %6538 = vmatpush1.msra.mxu0 0.0
  %6539 = vmatprep.subr.mxu0 0.0
  %6540 = vmatpush1.msra.mxu0 0.0
  %6541 = vmatprep.subr.mxu0 0.0
  %6542 = vmatpush1.msra.mxu0 0.0
  %6543 = vmatprep.subr.mxu0 0.0
  %6544 = vmatpush1.msra.mxu0 0.0
  %6545 = vmatprep.subr.mxu0 0.0
  %6546 = vmatpush1.msra.mxu0 0.0
  %v6547 = vand.u32 %v688, 4294901760
  %6548 = vmatprep.mubr.f32.mxu0 %v6547
  %v6549 = vand.u32 %v461, 4294901760
  %6550 = vmatmul.mubr.f32.gmra.mrb[0].mxu0 %v6549
  %v6551 = vpop.f32.mrb[0].mxu0
  %v6552 = vadd.f32 %v6395, %v6551
  %v6553 = vpop.f32.mrb[0].mxu0
  %v6554 = vadd.f32 %v6397, %v6553
  %v6555 = vand.u32 %v691, 4294901760
  %6556 = vmatprep.mubr.f32.mxu0 %v6555
  %v6557 = vand.u32 %v465, 4294901760
  %6558 = vmatmul.mubr.f32.gmra.mrb[0].mxu0 %v6557
  %v6559 = vpop.f32.mrb[0].mxu0
  %v6560 = vadd.f32 %v6403, %v6559
  %v6561 = vpop.f32.mrb[0].mxu0
  %v6562 = vadd.f32 %v6405, %v6561
  %v6563 = vand.u32 %v694, 4294901760
  %6564 = vmatprep.mubr.f32.mxu0 %v6563
  %v6565 = vand.u32 %v469, 4294901760
  %6566 = vmatmul.mubr.f32.gmra.mrb[0].mxu0 %v6565
  %v6567 = vpop.f32.mrb[0].mxu0
  %v6568 = vadd.f32 %v6411, %v6567
  %v6569 = vpop.f32.mrb[0].mxu0
  %v6570 = vadd.f32 %v6413, %v6569
  %v6571 = vand.u32 %v697, 4294901760
  %6572 = vmatprep.mubr.f32.mxu0 %v6571
  %v6573 = vand.u32 %v473, 4294901760
  %6574 = vmatmul.mubr.f32.gmra.mrb[0].mxu0 %v6573
  %v6575 = vpop.f32.mrb[0].mxu0
  %v6576 = vadd.f32 %v6419, %v6575
  %v6577 = vpop.f32.mrb[0].mxu0
  %v6578 = vadd.f32 %v6421, %v6577
  %v6579 = vand.u32 %v700, 4294901760
  %6580 = vmatprep.mubr.f32.mxu0 %v6579
  %v6581 = vand.u32 %v477, 4294901760
  %6582 = vmatmul.mubr.f32.gmra.mrb[0].mxu0 %v6581
  %v6583 = vpop.f32.mrb[0].mxu0
  %v6584 = vadd.f32 %v6427, %v6583
  %v6585 = vpop.f32.mrb[0].mxu0
  %v6586 = vadd.f32 %v6429, %v6585
  %v6587 = vand.u32 %v703, 4294901760
  %6588 = vmatprep.mubr.f32.mxu0 %v6587
  %v6589 = vand.u32 %v481, 4294901760
  %6590 = vmatmul.mubr.f32.gmra.mrb[0].mxu0 %v6589
  %v6591 = vpop.f32.mrb[0].mxu0
  %v6592 = vadd.f32 %v6435, %v6591
  %v6593 = vpop.f32.mrb[0].mxu0
  %v6594 = vadd.f32 %v6437, %v6593
  %v6595 = vand.u32 %v706, 4294901760
  %6596 = vmatprep.mubr.f32.mxu0 %v6595
  %v6597 = vand.u32 %v485, 4294901760
  %6598 = vmatmul.mubr.f32.gmra.mrb[0].mxu0 %v6597
  %v6599 = vpop.f32.mrb[0].mxu0
  %v6600 = vadd.f32 %v6443, %v6599
  %v6601 = vpop.f32.mrb[0].mxu0
  %v6602 = vadd.f32 %v6445, %v6601
  %6603 = vdwg.mxu0
  %6604 = vst [vmem:[%s5] sm:$0xff] %v3604
  %6605 = vst [vmem:[%s5 + $0x8] sm:$0xff] %v3606
  %6606 = vst [vmem:[%s5 + $0x10] sm:$0xff] %v6552
  %6607 = vst.msk [vmem:[%s5 + $0x18] sm:$0xff] %vm88, %v6554
  %6608 = vst [vmem:[%s5 + $0x20] sm:$0xff] %v3612
  %6609 = vst [vmem:[%s5 + $0x28] sm:$0xff] %v3614
  %6610 = vst [vmem:[%s5 + $0x30] sm:$0xff] %v6560
  %6611 = vst.msk [vmem:[%s5 + $0x38] sm:$0xff] %vm88, %v6562
  %6612 = vst [vmem:[%s5 + $0x40] sm:$0xff] %v3620
  %6613 = vst [vmem:[%s5 + $0x48] sm:$0xff] %v3622
  %6614 = vst [vmem:[%s5 + $0x50] sm:$0xff] %v6568
  %6615 = vst.msk [vmem:[%s5 + $0x58] sm:$0xff] %vm88, %v6570
  %6616 = vst [vmem:[%s5 + $0x60] sm:$0xff] %v3628
  %6617 = vst [vmem:[%s5 + $0x68] sm:$0xff] %v3630
  %6618 = vst [vmem:[%s5 + $0x70] sm:$0xff] %v6576
  %6619 = vst.msk [vmem:[%s5 + $0x78] sm:$0xff] %vm88, %v6578
  %6620 = vst [vmem:[%s5 + $0x80] sm:$0xff] %v3636
  %6621 = vst [vmem:[%s5 + $0x88] sm:$0xff] %v3638
  %6622 = vst [vmem:[%s5 + $0x90] sm:$0xff] %v6584
  %6623 = vst.msk [vmem:[%s5 + $0x98] sm:$0xff] %vm88, %v6586
  %6624 = vst [vmem:[%s5 + $0xa0] sm:$0xff] %v3644
  %6625 = vst [vmem:[%s5 + $0xa8] sm:$0xff] %v3646
  %6626 = vst [vmem:[%s5 + $0xb0] sm:$0xff] %v6592
  %6627 = vst.msk [vmem:[%s5 + $0xb8] sm:$0xff] %vm88, %v6594
  %6628 = vst [vmem:[%s5 + $0xc0] sm:$0x1] %v3652
  %6629 = vst [vmem:[%s5 + $0xc8] sm:$0x1] %v3654
  %6630 = vst [vmem:[%s5 + $0xd0] sm:$0x1] %v6600
  %6631 = vst.msk [vmem:[%s5 + $0xd8] sm:$0x1] %vm100, %v6602
  // Predicated region
  $region22: #{fused_forward.1} parent=0 // pred_check
    _
  $region23: #{fused_forward.1} parent=0 // pred_check_branch
    %6633 = sbr.rel (0) target = $region25
  $region24: #{fused_forward.1} parent=0 // pred_region
    _
  $region25: #{fused_forward.1} parent=0 // pred_fallthru
    _
  // Predicated region
  $region26: #{fused_forward.1} parent=0 // pred_check
    _
  $region27: #{fused_forward.1} parent=0 // pred_check_branch
    %6635 = sbr.rel (0) target = $region29
  $region28: #{fused_forward.1} parent=0 // pred_region
    _
  $region29: #{fused_forward.1} parent=0 // pred_fallthru
    _

</llo_original>
